<compile_context>
chip_gen: v6e
topology: v6e:2x2x1
jax: 0.10.0
libtpu: 0.0.40
codegen_flags: <defaults>
</compile_context>

<pallas_src>
import functools

import jax
import jax.numpy as jnp
from jax import lax
from jax.experimental import pallas as pl
from jax.experimental.pallas import tpu as pltpu


def _round_up(v, m):
  return (v + m - 1) // m * m


def _refinement_kernel(x_ref, w1_ref, b1_ref,
                       w2_ref, s2_ref, t2_ref,
                       w3_ref, s3_ref, t3_ref,
                       out_ref, pad_ref, buf_ref=None,
                       *, band_rows, use_direct_taps=False):
  # x_ref:   (1, H, W, Ci)     f32  input block (true channel count, no pad)
  # w1_ref:  (Ci, Cp)          bf16 1x1 conv weight (out channels lane-padded)
  # b1_ref:  (1, Cp)           f32  1x1 conv bias
  # w2/w3:   (9*Cp, Cp)        bf16 3x3 weights, rows ordered (ky, kx, cin)
  # s*/t*:   (1, Cp)           f32  folded-BN scale / shift (conv bias absorbed)
  # out_ref: (1, H, W, Cp)     bf16 lane-padded output block
  # pad_ref: (H+4, W+4, Cp)    bf16 zero-ringed feature scratch
  # buf_ref: ((H+4)*W, 3*Cp)   bf16 3-slab im2col scratch (None in direct mode)
  _, H, W, Ci = x_ref.shape
  Cp = w1_ref.shape[1]
  Hp, Wp = H + 4, W + 4

  # Zero only the 2-wide padding ring (the interior is overwritten before each
  # conv).  Re-zeroed every grid step so each megacore owns a valid scratch.
  pad_ref[0:2, :, :] = jnp.zeros((2, Wp, Cp), pad_ref.dtype)
  pad_ref[2 + H:Hp, :, :] = jnp.zeros((2, Wp, Cp), pad_ref.dtype)
  pad_ref[:, 0:2, :] = jnp.zeros((Hp, 2, Cp), pad_ref.dtype)
  pad_ref[:, 2 + W:Wp, :] = jnp.zeros((Hp, 2, Cp), pad_ref.dtype)

  # ---- initial = ReLU(x @ w1 + b1): banded 1x1 conv -----------------------
  for h0 in range(0, H, band_rows):
    hb = min(band_rows, H - h0)
    xb = x_ref[0, h0:h0 + hb].reshape(hb * W, Ci).astype(jnp.bfloat16)
    yb = jnp.dot(xb, w1_ref[...], preferred_element_type=jnp.float32)
    ib = jnp.maximum(yb + b1_ref[...], 0.0).reshape(hb, W, Cp)
    ib16 = ib.astype(jnp.bfloat16)
    out_ref[0, h0:h0 + hb] = ib16                    # stage for the residual
    pad_ref[2 + h0:2 + h0 + hb, 2:2 + W, :] = ib16   # feed the trunk

  def conv3x3_bn_relu(w_ref, scale, shift, dil, write_out):
    # 3x3 conv (+ folded BN + ReLU) on the feature held in pad_ref's interior.
    # write_out=False: result replaces pad_ref's interior (next conv input).
    # write_out=True:  result is residual-added into out_ref (f32 add).
    if not use_direct_taps:
      # Compact the 3 W-shifted slabs once; these are the only sublane-
      # misaligned extracts of the conv.  The 3 ky taps then become sublane-
      # aligned row slices (r0 multiple of W, W % 8 == 0).
      for kx in range(3):
        c0 = 2 - dil + kx * dil
        buf_ref[:, kx * Cp:(kx + 1) * Cp] = (
            pad_ref[:, c0:c0 + W, :].reshape(Hp * W, Cp))

    pending = []
    for h0 in range(0, H, band_rows):
      hb = min(band_rows, H - h0)
      m0, mb = h0 * W, hb * W
      acc = jnp.zeros((mb, Cp), jnp.float32)
      if use_direct_taps:
        # v5e-style direct 9-tap accumulation (K = Cp), no im2col buffer.
        for ky in range(3):
          r0 = 2 - dil + ky * dil
          for kx in range(3):
            c0 = 2 - dil + kx * dil
            t = ky * 3 + kx
            lhs = pad_ref[r0 + h0:r0 + h0 + hb, c0:c0 + W, :].reshape(mb, Cp)
            acc += jnp.dot(lhs, w_ref[t * Cp:(t + 1) * Cp, :],
                           preferred_element_type=jnp.float32)
      else:
        # 3 matmuls with K = 3*Cp (v6e/v7x 256-deep MXU friendly).
        for ky in range(3):
          r0 = (2 - dil + ky * dil) * W + m0
          acc += jnp.dot(buf_ref[r0:r0 + mb, :],
                         w_ref[ky * 3 * Cp:(ky + 1) * 3 * Cp, :],
                         preferred_element_type=jnp.float32)
      yb = jnp.maximum(acc * scale + shift, 0.0).reshape(hb, W, Cp)
      if write_out:
        # out = initial + trunk(initial); f32 add, lane-dense bf16 store.
        res = out_ref[0, h0:h0 + hb].astype(jnp.float32) + yb
        out_ref[0, h0:h0 + hb] = res.astype(out_ref.dtype)
      elif use_direct_taps:
        # Direct-tap mode reads pad_ref in place: defer the interior rewrite
        # until all bands are computed (taps reach into neighbouring bands).
        pending.append((h0, hb, yb.astype(pad_ref.dtype)))
      else:
        # im2col mode snapshotted pad_ref into buf_ref: safe to overwrite now.
        pad_ref[2 + h0:2 + h0 + hb, 2:2 + W, :] = yb.astype(pad_ref.dtype)
    for h0, hb, v in pending:
      pad_ref[2 + h0:2 + h0 + hb, 2:2 + W, :] = v

  conv3x3_bn_relu(w2_ref, s2_ref[...], t2_ref[...], dil=1, write_out=False)
  conv3x3_bn_relu(w3_ref, s3_ref[...], t3_ref[...], dil=2, write_out=True)


def _prepare_params(params, lane=128):
  """Lane-pad OUTPUT channels to a multiple of 128, cast MXU operands to bf16
  and flatten 3x3 weights to (9*Cp, Cp) with rows ordered (ky, kx, cin).  The
  1x1 conv keeps its true input-channel count (K of the first matmul)."""
  Ci, Co = params["w1"].shape
  Cp = _round_up(Co, lane)

  w1 = jnp.zeros((Ci, Cp), jnp.bfloat16).at[:, :Co].set(
      params["w1"].astype(jnp.bfloat16))
  b1 = jnp.zeros((1, Cp), jnp.float32).at[:, :Co].set(
      params["b1"].reshape(1, Co))

  def w3x3(w):
    wp = jnp.zeros((3, 3, Cp, Cp), jnp.bfloat16).at[:, :, :Co, :Co].set(
        w.astype(jnp.bfloat16))
    return wp.reshape(9 * Cp, Cp)          # rows ordered (ky, kx, cin)

  def vec(v):
    return jnp.zeros((1, Cp), jnp.float32).at[:, :Co].set(v.reshape(1, Co))

  return dict(Ci=Ci, Co=Co, Cp=Cp, w1=w1, b1=b1,
              w2=w3x3(params["w2"]), s2=vec(params["s2"]), t2=vec(params["t2"]),
              w3=w3x3(params["w3"]), s3=vec(params["s3"]), t3=vec(params["t3"]))


def refinement_stage_block_nhwc(x_nhwc, params, *, use_direct_taps=False,
                                slice_channels=True):
  """Native NHWC entry point: (N, H, W, Cin) -> bf16 (N, H, W, Cout[/Cp]).

  With slice_channels=False the lane-padded (Cp) map is returned directly --
  zero post-kernel cost when Cout is already 128-aligned (production)."""
  N, H, W, Ci = x_nhwc.shape
  # Sublane-aligned im2col row slices need W % 8 == 0; pad width at the caller
  # (e.g. 46 -> 48) to keep the aligned fast path (correctness never depends
  # on it, only layout efficiency).
  assert W % 8 == 0, f"W={W}: pad width to a multiple of 8 before calling"
  p = _prepare_params(params)
  assert p["Ci"] == Ci
  Cp, Co = p["Cp"], p["Co"]
  Hp, Wp = H + 4, W + 4

  # Band the matmul M dimension (~256 rows/band) so live f32 results stay near
  # the vreg file instead of spilling at production sizes (1 band at 16x16).
  band_rows = max(1, min(H, 256 // W))

  scratch = [pltpu.VMEM((Hp, Wp, Cp), jnp.bfloat16)]            # zero-ringed map
  if not use_direct_taps:
    scratch.append(pltpu.VMEM((Hp * W, 3 * Cp), jnp.bfloat16))  # 3-slab im2col

  # Explicit VMEM budget: weights + double-buffered x/out blocks + scratch.
  w_bytes = (Ci * Cp + 2 * 9 * Cp * Cp) * 2 + 5 * Cp * 4
  blk_bytes = H * W * Ci * 4 + H * W * Cp * 2
  scratch_bytes = (Hp * Wp * Cp * 2
                   + (0 if use_direct_taps else Hp * W * 3 * Cp * 2))
  vmem_limit = int(min(64 << 20,
                       max(32 << 20, 2 * (2 * (w_bytes + blk_bytes)
                                          + scratch_bytes))))

  full = lambda shape: pl.BlockSpec(shape, lambda n: (0,) * len(shape))
  kernel = functools.partial(_refinement_kernel, band_rows=band_rows,
                             use_direct_taps=use_direct_taps)

  out_padded = pl.pallas_call(
      kernel,
      out_shape=jax.ShapeDtypeStruct((N, H, W, Cp), jnp.bfloat16),
      grid_spec=pltpu.PrefetchScalarGridSpec(
          num_scalar_prefetch=0,
          grid=(N,),
          in_specs=[
              pl.BlockSpec((1, H, W, Ci), lambda n: (n, 0, 0, 0)),  # x (f32)
              full((Ci, Cp)),            # w1
              full((1, Cp)),             # b1
              full((9 * Cp, Cp)),        # w2 (im2col flattened)
              full((1, Cp)),             # s2
              full((1, Cp)),             # t2
              full((9 * Cp, Cp)),        # w3 (im2col flattened)
              full((1, Cp)),             # s3
              full((1, Cp)),             # t3
          ],
          out_specs=pl.BlockSpec((1, H, W, Cp), lambda n: (n, 0, 0, 0)),
          scratch_shapes=scratch,
      ),
      compiler_params=pltpu.CompilerParams(
          dimension_semantics=("parallel",),
          vmem_limit_bytes=vmem_limit),
  )(x_nhwc.astype(jnp.float32), p["w1"], p["b1"],
    p["w2"], p["s2"], p["t2"], p["w3"], p["s3"], p["t3"])

  return out_padded[..., :Co] if slice_channels else out_padded


def refinement_stage_block(x_nchw, params):
  """NCHW compatibility wrapper (PyTorch layout, f32 output).  The channel
  slice, f32 cast and layout transpose fuse into a single XLA op; in a full
  NHWC network call refinement_stage_block_nhwc directly."""
  Co = params["w1"].shape[1]
  x_nhwc = jnp.transpose(x_nchw, (0, 2, 3, 1)).astype(jnp.float32)
  out_nhwc = refinement_stage_block_nhwc(x_nhwc, params, slice_channels=False)
  return jnp.transpose(out_nhwc[..., :Co].astype(jnp.float32), (0, 3, 1, 2))


def make_params(key, in_channels, out_channels):
  """Deterministic synthetic parameters.  BN (eval mode) is folded into
  scale/shift (shift also absorbs the conv bias)."""
  ks = jax.random.split(key, 14)
  eps = 1e-5

  w1 = 0.2 * jax.random.normal(ks[0], (in_channels, out_channels), jnp.float32)
  b1 = 0.1 * jax.random.normal(ks[1], (1, out_channels), jnp.float32)

  def conv_bn(kw, kb, kg, kbeta, kmean, kvar):
    w = 0.1 * jax.random.normal(kw, (3, 3, out_channels, out_channels),
                                jnp.float32)
    b = 0.1 * jax.random.normal(kb, (out_channels,), jnp.float32)
    gamma = 1.0 + 0.1 * jax.random.normal(kg, (out_channels,), jnp.float32)
    beta = 0.05 * jax.random.normal(kbeta, (out_channels,), jnp.float32)
    mean = 0.1 * jax.random.normal(kmean, (out_channels,), jnp.float32)
    var = 0.5 + 0.2 * jnp.abs(jax.random.normal(kvar, (out_channels,),
                                                jnp.float32))
    scale = gamma / jnp.sqrt(var + eps)
    shift = scale * (b - mean) + beta
    return w, scale.reshape(1, -1), shift.reshape(1, -1)

  w2, s2, t2 = conv_bn(*ks[2:8])
  w3, s3, t3 = conv_bn(*ks[8:14])

  return dict(w1=w1, b1=b1, w2=w2, s2=s2, t2=t2, w3=w3, s3=s3, t3=t3)


def reference_forward(x_nchw, params):
  """Pure-JAX (lax.conv, f32) reference of the same fused-BN forward pass."""
  x = jnp.transpose(x_nchw, (0, 2, 3, 1)).astype(jnp.float32)  # NHWC
  dn = ("NHWC", "HWIO", "NHWC")
  Ci, Co = params["w1"].shape

  init = lax.conv_general_dilated(
      x, params["w1"].reshape(1, 1, Ci, Co), (1, 1), [(0, 0), (0, 0)],
      dimension_numbers=dn) + params["b1"].reshape(1, 1, 1, Co)
  init = jnp.maximum(init, 0.0)

  def trunk_conv(feat, w, s, t, dil):
    y = lax.conv_general_dilated(
        feat, w, (1, 1), [(dil, dil), (dil, dil)],
        rhs_dilation=(dil, dil), dimension_numbers=dn)
    return jnp.maximum(y * s.reshape(1, 1, 1, Co) + t.reshape(1, 1, 1, Co), 0.0)

  t1 = trunk_conv(init, params["w2"], params["s2"], params["t2"], 1)
  t2 = trunk_conv(t1, params["w3"], params["s3"], params["t3"], 2)
  return jnp.transpose(init + t2, (0, 3, 1, 2))


if __name__ == "__main__":
  key = jax.random.PRNGKey(0)
  k_x, k_p = jax.random.split(key)

  N, Cin, Cout, H, W = 2, 4, 8, 16, 16
  x = jax.random.normal(k_x, (N, Cin, H, W), jnp.float32)
  params = make_params(k_p, Cin, Cout)

  fwd = jax.jit(functools.partial(refinement_stage_block, params=params))
  out = fwd(x)
  jax.block_until_ready(out)

  ref = reference_forward(x, params)
  assert out.shape == (N, Cout, H, W), out.shape
  max_err = float(jnp.max(jnp.abs(out - ref)))
  # bf16 MXU operands + bf16 output with f32 accumulation: small numeric slack.
  assert jnp.allclose(out, ref, atol=3e-2, rtol=3e-2), max_err

  # Also validate the v5e-oriented direct-9-tap variant (no im2col buffer).
  x_nhwc = jnp.transpose(x, (0, 2, 3, 1))
  out_d = refinement_stage_block_nhwc(x_nhwc, params, use_direct_taps=True)
  jax.block_until_ready(out_d)
  ref_nhwc = jnp.transpose(ref, (0, 2, 3, 1))
  max_err_d = float(jnp.max(jnp.abs(out_d.astype(jnp.float32) - ref_nhwc)))
  assert jnp.allclose(out_d.astype(jnp.float32), ref_nhwc,
                      atol=3e-2, rtol=3e-2), max_err_d

  print("KERNEL_OK")
</pallas_src>

<mosaic_0001>
module attributes {stable_mosaic.version = 11 : i64} {
  func.func @_refinement_kernel(%arg0: i32, %arg1: memref<1x16x16x4xf32, #tpu.memory_space<vmem>>, %arg2: memref<4x128xbf16, #tpu.memory_space<vmem>>, %arg3: memref<1x128xf32, #tpu.memory_space<vmem>>, %arg4: memref<1152x128xbf16, #tpu.memory_space<vmem>>, %arg5: memref<1x128xf32, #tpu.memory_space<vmem>>, %arg6: memref<1x128xf32, #tpu.memory_space<vmem>>, %arg7: memref<1152x128xbf16, #tpu.memory_space<vmem>>, %arg8: memref<1x128xf32, #tpu.memory_space<vmem>>, %arg9: memref<1x128xf32, #tpu.memory_space<vmem>>, %arg10: memref<1x16x16x128xbf16, #tpu.memory_space<vmem>>, %arg11: memref<20x20x128xbf16, #tpu.memory_space<vmem>>, %arg12: memref<320x384xbf16, #tpu.memory_space<vmem>>) attributes {dimension_semantics = [#tpu.dimension_semantics<parallel>], iteration_bounds = array<i64: 2>, scalar_prefetch = 0 : i64, scratch_operands = 2 : i64, tpu.core_type = #tpu.core_type<tc>, window_params = [{transform_indices = @transform_0, window_bounds = array<i64: 1, 16, 16, 4>}, {pipeline_mode = #tpu.pipeline_mode<synchronous>, transform_indices = @transform_1, window_bounds = array<i64: 4, 128>}, {pipeline_mode = #tpu.pipeline_mode<synchronous>, transform_indices = @transform_2, window_bounds = array<i64: 1, 128>}, {pipeline_mode = #tpu.pipeline_mode<synchronous>, transform_indices = @transform_3, window_bounds = array<i64: 1152, 128>}, {pipeline_mode = #tpu.pipeline_mode<synchronous>, transform_indices = @transform_4, window_bounds = array<i64: 1, 128>}, {pipeline_mode = #tpu.pipeline_mode<synchronous>, transform_indices = @transform_5, window_bounds = array<i64: 1, 128>}, {pipeline_mode = #tpu.pipeline_mode<synchronous>, transform_indices = @transform_6, window_bounds = array<i64: 1152, 128>}, {pipeline_mode = #tpu.pipeline_mode<synchronous>, transform_indices = @transform_7, window_bounds = array<i64: 1, 128>}, {pipeline_mode = #tpu.pipeline_mode<synchronous>, transform_indices = @transform_8, window_bounds = array<i64: 1, 128>}, {transform_indices = @transform_9, window_bounds = array<i64: 1, 16, 16, 128>}]} {
    %cst = arith.constant 0.000000e+00 : bf16
    %0 = vector.broadcast %cst : bf16 to vector<2x20x128xbf16>
    %c0 = arith.constant 0 : index
    %c0_0 = arith.constant 0 : index
    %c0_1 = arith.constant 0 : index
    %1 = vector.load %arg11[%c0, %c0_0, %c0_1] : memref<20x20x128xbf16, #tpu.memory_space<vmem>>, vector<2x20x128xbf16>
    tpu.vector_store %arg11[%c0, %c0_0, %c0_1], %0 {strides = array<i32>} : memref<20x20x128xbf16, #tpu.memory_space<vmem>>, vector<2x20x128xbf16>,
    %cst_2 = arith.constant 0.000000e+00 : bf16
    %2 = vector.broadcast %cst_2 : bf16 to vector<2x20x128xbf16>
    %c18 = arith.constant 18 : index
    %c0_3 = arith.constant 0 : index
    %c0_4 = arith.constant 0 : index
    %3 = vector.load %arg11[%c18, %c0_3, %c0_4] : memref<20x20x128xbf16, #tpu.memory_space<vmem>>, vector<2x20x128xbf16>
    tpu.vector_store %arg11[%c18, %c0_3, %c0_4], %2 {strides = array<i32>} : memref<20x20x128xbf16, #tpu.memory_space<vmem>>, vector<2x20x128xbf16>,
    %cst_5 = arith.constant 0.000000e+00 : bf16
    %4 = vector.broadcast %cst_5 : bf16 to vector<20x2x128xbf16>
    %c0_6 = arith.constant 0 : index
    %c0_7 = arith.constant 0 : index
    %c0_8 = arith.constant 0 : index
    %5 = vector.load %arg11[%c0_6, %c0_7, %c0_8] : memref<20x20x128xbf16, #tpu.memory_space<vmem>>, vector<20x2x128xbf16>
    tpu.vector_store %arg11[%c0_6, %c0_7, %c0_8], %4 {strides = array<i32>} : memref<20x20x128xbf16, #tpu.memory_space<vmem>>, vector<20x2x128xbf16>,
    %cst_9 = arith.constant 0.000000e+00 : bf16
    %6 = vector.broadcast %cst_9 : bf16 to vector<20x2x128xbf16>
    %c0_10 = arith.constant 0 : index
    %c18_11 = arith.constant 18 : index
    %c0_12 = arith.constant 0 : index
    %7 = vector.load %arg11[%c0_10, %c18_11, %c0_12] : memref<20x20x128xbf16, #tpu.memory_space<vmem>>, vector<20x2x128xbf16>
    tpu.vector_store %arg11[%c0_10, %c18_11, %c0_12], %6 {strides = array<i32>} : memref<20x20x128xbf16, #tpu.memory_space<vmem>>, vector<20x2x128xbf16>,
    %c0_13 = arith.constant 0 : index
    %c0_14 = arith.constant 0 : index
    %c0_15 = arith.constant 0 : index
    %c0_16 = arith.constant 0 : index
    %8 = vector.load %arg1[%c0_13, %c0_14, %c0_15, %c0_16] : memref<1x16x16x4xf32, #tpu.memory_space<vmem>>, vector<1x16x16x4xf32>
    %9 = vector.shape_cast %8 : vector<1x16x16x4xf32> to vector<16x16x4xf32>
    %10 = vector.shape_cast %9 : vector<16x16x4xf32> to vector<256x4xf32>
    %11 = arith.truncf %10 : vector<256x4xf32> to vector<256x4xbf16>
    %c0_17 = arith.constant 0 : index
    %c0_18 = arith.constant 0 : index
    %12 = vector.load %arg2[%c0_17, %c0_18] : memref<4x128xbf16, #tpu.memory_space<vmem>>, vector<4x128xbf16>
    %cst_19 = arith.constant dense<0.000000e+00> : vector<256x128xf32>
    %13 = tpu.matmul %11, %12, %cst_19 {dimension_numbers = #tpu.dot_dimension_numbers<[1], [0], [0], [1], [0, 0, 1, 1], [], []>} : vector<256x4xbf16>, vector<4x128xbf16>, vector<256x128xf32> -> vector<256x128xf32>
    %c0_20 = arith.constant 0 : index
    %c0_21 = arith.constant 0 : index
    %14 = vector.load %arg3[%c0_20, %c0_21] : memref<1x128xf32, #tpu.memory_space<vmem>>, vector<1x128xf32>
    %15 = vector.broadcast %14 : vector<1x128xf32> to vector<256x128xf32>
    %16 = arith.addf %13, %15 : vector<256x128xf32>
    %cst_22 = arith.constant 0.000000e+00 : f32
    %17 = vector.broadcast %cst_22 : f32 to vector<256x128xf32>
    %18 = arith.maximumf %16, %17 : vector<256x128xf32>
    %19 = vector.shape_cast %18 : vector<256x128xf32> to vector<16x16x128xf32>
    %20 = arith.truncf %19 : vector<16x16x128xf32> to vector<16x16x128xbf16>
    %c0_23 = arith.constant 0 : index
    %c0_24 = arith.constant 0 : index
    %c0_25 = arith.constant 0 : index
    %c0_26 = arith.constant 0 : index
    %21 = vector.load %arg10[%c0_23, %c0_24, %c0_25, %c0_26] : memref<1x16x16x128xbf16, #tpu.memory_space<vmem>>, vector<1x16x16x128xbf16>
    %22 = vector.shape_cast %21 : vector<1x16x16x128xbf16> to vector<16x16x128xbf16>
    %23 = vector.shape_cast %20 : vector<16x16x128xbf16> to vector<1x16x16x128xbf16>
    tpu.vector_store %arg10[%c0_23, %c0_24, %c0_25, %c0_26], %23 {strides = array<i32>} : memref<1x16x16x128xbf16, #tpu.memory_space<vmem>>, vector<1x16x16x128xbf16>,
    %c2 = arith.constant 2 : index
    %c2_27 = arith.constant 2 : index
    %c0_28 = arith.constant 0 : index
    %24 = vector.load %arg11[%c2, %c2_27, %c0_28] : memref<20x20x128xbf16, #tpu.memory_space<vmem>>, vector<16x16x128xbf16>
    tpu.vector_store %arg11[%c2, %c2_27, %c0_28], %20 {strides = array<i32>} : memref<20x20x128xbf16, #tpu.memory_space<vmem>>, vector<16x16x128xbf16>,
    %c0_29 = arith.constant 0 : index
    %c0_30 = arith.constant 0 : index
    %25 = vector.load %arg5[%c0_29, %c0_30] : memref<1x128xf32, #tpu.memory_space<vmem>>, vector<1x128xf32>
    %c0_31 = arith.constant 0 : index
    %c0_32 = arith.constant 0 : index
    %26 = vector.load %arg6[%c0_31, %c0_32] : memref<1x128xf32, #tpu.memory_space<vmem>>, vector<1x128xf32>
    %c0_33 = arith.constant 0 : index
    %c1 = arith.constant 1 : index
    %c0_34 = arith.constant 0 : index
    %27 = vector.load %arg11[%c0_33, %c1, %c0_34] : memref<20x20x128xbf16, #tpu.memory_space<vmem>>, vector<20x16x128xbf16>
    %28 = vector.shape_cast %27 : vector<20x16x128xbf16> to vector<320x128xbf16>
    %c0_35 = arith.constant 0 : index
    %c0_36 = arith.constant 0 : index
    %29 = vector.load %arg12[%c0_35, %c0_36] : memref<320x384xbf16, #tpu.memory_space<vmem>>, vector<320x128xbf16>
    tpu.vector_store %arg12[%c0_35, %c0_36], %28 {strides = array<i32>} : memref<320x384xbf16, #tpu.memory_space<vmem>>, vector<320x128xbf16>,
    %c0_37 = arith.constant 0 : index
    %c2_38 = arith.constant 2 : index
    %c0_39 = arith.constant 0 : index
    %30 = vector.load %arg11[%c0_37, %c2_38, %c0_39] : memref<20x20x128xbf16, #tpu.memory_space<vmem>>, vector<20x16x128xbf16>
    %31 = vector.shape_cast %30 : vector<20x16x128xbf16> to vector<320x128xbf16>
    %c0_40 = arith.constant 0 : index
    %c128 = arith.constant 128 : index
    %32 = vector.load %arg12[%c0_40, %c128] : memref<320x384xbf16, #tpu.memory_space<vmem>>, vector<320x128xbf16>
    tpu.vector_store %arg12[%c0_40, %c128], %31 {strides = array<i32>} : memref<320x384xbf16, #tpu.memory_space<vmem>>, vector<320x128xbf16>,
    %c0_41 = arith.constant 0 : index
    %c3 = arith.constant 3 : index
    %c0_42 = arith.constant 0 : index
    %33 = vector.load %arg11[%c0_41, %c3, %c0_42] : memref<20x20x128xbf16, #tpu.memory_space<vmem>>, vector<20x16x128xbf16>
    %34 = vector.shape_cast %33 : vector<20x16x128xbf16> to vector<320x128xbf16>
    %c0_43 = arith.constant 0 : index
    %c256 = arith.constant 256 : index
    %35 = vector.load %arg12[%c0_43, %c256] : memref<320x384xbf16, #tpu.memory_space<vmem>>, vector<320x128xbf16>
    tpu.vector_store %arg12[%c0_43, %c256], %34 {strides = array<i32>} : memref<320x384xbf16, #tpu.memory_space<vmem>>, vector<320x128xbf16>,
    %cst_44 = arith.constant 0.000000e+00 : f32
    %36 = vector.broadcast %cst_44 : f32 to vector<256x128xf32>
    %c16 = arith.constant 16 : index
    %c0_45 = arith.constant 0 : index
    %37 = vector.load %arg12[%c16, %c0_45] : memref<320x384xbf16, #tpu.memory_space<vmem>>, vector<256x384xbf16>
    %c0_46 = arith.constant 0 : index
    %c0_47 = arith.constant 0 : index
    %38 = vector.load %arg4[%c0_46, %c0_47] : memref<1152x128xbf16, #tpu.memory_space<vmem>>, vector<384x128xbf16>
    %cst_48 = arith.constant dense<0.000000e+00> : vector<256x128xf32>
    %39 = tpu.matmul %37, %38, %cst_48 {dimension_numbers = #tpu.dot_dimension_numbers<[1], [0], [0], [1], [0, 0, 1, 1], [], []>} : vector<256x384xbf16>, vector<384x128xbf16>, vector<256x128xf32> -> vector<256x128xf32>
    %40 = arith.addf %36, %39 : vector<256x128xf32>
    %c32 = arith.constant 32 : index
    %c0_49 = arith.constant 0 : index
    %41 = vector.load %arg12[%c32, %c0_49] : memref<320x384xbf16, #tpu.memory_space<vmem>>, vector<256x384xbf16>
    %c384 = arith.constant 384 : index
    %c0_50 = arith.constant 0 : index
    %42 = vector.load %arg4[%c384, %c0_50] : memref<1152x128xbf16, #tpu.memory_space<vmem>>, vector<384x128xbf16>
    %cst_51 = arith.constant dense<0.000000e+00> : vector<256x128xf32>
    %43 = tpu.matmul %41, %42, %cst_51 {dimension_numbers = #tpu.dot_dimension_numbers<[1], [0], [0], [1], [0, 0, 1, 1], [], []>} : vector<256x384xbf16>, vector<384x128xbf16>, vector<256x128xf32> -> vector<256x128xf32>
    %44 = arith.addf %40, %43 : vector<256x128xf32>
    %c48 = arith.constant 48 : index
    %c0_52 = arith.constant 0 : index
    %45 = vector.load %arg12[%c48, %c0_52] : memref<320x384xbf16, #tpu.memory_space<vmem>>, vector<256x384xbf16>
    %c768 = arith.constant 768 : index
    %c0_53 = arith.constant 0 : index
    %46 = vector.load %arg4[%c768, %c0_53] : memref<1152x128xbf16, #tpu.memory_space<vmem>>, vector<384x128xbf16>
    %cst_54 = arith.constant dense<0.000000e+00> : vector<256x128xf32>
    %47 = tpu.matmul %45, %46, %cst_54 {dimension_numbers = #tpu.dot_dimension_numbers<[1], [0], [0], [1], [0, 0, 1, 1], [], []>} : vector<256x384xbf16>, vector<384x128xbf16>, vector<256x128xf32> -> vector<256x128xf32>
    %48 = arith.addf %44, %47 : vector<256x128xf32>
    %49 = vector.broadcast %25 : vector<1x128xf32> to vector<256x128xf32>
    %50 = arith.mulf %48, %49 : vector<256x128xf32>
    %51 = vector.broadcast %26 : vector<1x128xf32> to vector<256x128xf32>
    %52 = arith.addf %50, %51 : vector<256x128xf32>
    %cst_55 = arith.constant 0.000000e+00 : f32
    %53 = vector.broadcast %cst_55 : f32 to vector<256x128xf32>
    %54 = arith.maximumf %52, %53 : vector<256x128xf32>
    %55 = vector.shape_cast %54 : vector<256x128xf32> to vector<16x16x128xf32>
    %56 = arith.truncf %55 : vector<16x16x128xf32> to vector<16x16x128xbf16>
    %c2_56 = arith.constant 2 : index
    %c2_57 = arith.constant 2 : index
    %c0_58 = arith.constant 0 : index
    %57 = vector.load %arg11[%c2_56, %c2_57, %c0_58] : memref<20x20x128xbf16, #tpu.memory_space<vmem>>, vector<16x16x128xbf16>
    tpu.vector_store %arg11[%c2_56, %c2_57, %c0_58], %56 {strides = array<i32>} : memref<20x20x128xbf16, #tpu.memory_space<vmem>>, vector<16x16x128xbf16>,
    %c0_59 = arith.constant 0 : index
    %c0_60 = arith.constant 0 : index
    %58 = vector.load %arg8[%c0_59, %c0_60] : memref<1x128xf32, #tpu.memory_space<vmem>>, vector<1x128xf32>
    %c0_61 = arith.constant 0 : index
    %c0_62 = arith.constant 0 : index
    %59 = vector.load %arg9[%c0_61, %c0_62] : memref<1x128xf32, #tpu.memory_space<vmem>>, vector<1x128xf32>
    %c0_63 = arith.constant 0 : index
    %c0_64 = arith.constant 0 : index
    %c0_65 = arith.constant 0 : index
    %60 = vector.load %arg11[%c0_63, %c0_64, %c0_65] : memref<20x20x128xbf16, #tpu.memory_space<vmem>>, vector<20x16x128xbf16>
    %61 = vector.shape_cast %60 : vector<20x16x128xbf16> to vector<320x128xbf16>
    %c0_66 = arith.constant 0 : index
    %c0_67 = arith.constant 0 : index
    %62 = vector.load %arg12[%c0_66, %c0_67] : memref<320x384xbf16, #tpu.memory_space<vmem>>, vector<320x128xbf16>
    tpu.vector_store %arg12[%c0_66, %c0_67], %61 {strides = array<i32>} : memref<320x384xbf16, #tpu.memory_space<vmem>>, vector<320x128xbf16>,
    %c0_68 = arith.constant 0 : index
    %c2_69 = arith.constant 2 : index
    %c0_70 = arith.constant 0 : index
    %63 = vector.load %arg11[%c0_68, %c2_69, %c0_70] : memref<20x20x128xbf16, #tpu.memory_space<vmem>>, vector<20x16x128xbf16>
    %64 = vector.shape_cast %63 : vector<20x16x128xbf16> to vector<320x128xbf16>
    %c0_71 = arith.constant 0 : index
    %c128_72 = arith.constant 128 : index
    %65 = vector.load %arg12[%c0_71, %c128_72] : memref<320x384xbf16, #tpu.memory_space<vmem>>, vector<320x128xbf16>
    tpu.vector_store %arg12[%c0_71, %c128_72], %64 {strides = array<i32>} : memref<320x384xbf16, #tpu.memory_space<vmem>>, vector<320x128xbf16>,
    %c0_73 = arith.constant 0 : index
    %c4 = arith.constant 4 : index
    %c0_74 = arith.constant 0 : index
    %66 = vector.load %arg11[%c0_73, %c4, %c0_74] : memref<20x20x128xbf16, #tpu.memory_space<vmem>>, vector<20x16x128xbf16>
    %67 = vector.shape_cast %66 : vector<20x16x128xbf16> to vector<320x128xbf16>
    %c0_75 = arith.constant 0 : index
    %c256_76 = arith.constant 256 : index
    %68 = vector.load %arg12[%c0_75, %c256_76] : memref<320x384xbf16, #tpu.memory_space<vmem>>, vector<320x128xbf16>
    tpu.vector_store %arg12[%c0_75, %c256_76], %67 {strides = array<i32>} : memref<320x384xbf16, #tpu.memory_space<vmem>>, vector<320x128xbf16>,
    %cst_77 = arith.constant 0.000000e+00 : f32
    %69 = vector.broadcast %cst_77 : f32 to vector<256x128xf32>
    %c0_78 = arith.constant 0 : index
    %c0_79 = arith.constant 0 : index
    %70 = vector.load %arg12[%c0_78, %c0_79] : memref<320x384xbf16, #tpu.memory_space<vmem>>, vector<256x384xbf16>
    %c0_80 = arith.constant 0 : index
    %c0_81 = arith.constant 0 : index
    %71 = vector.load %arg7[%c0_80, %c0_81] : memref<1152x128xbf16, #tpu.memory_space<vmem>>, vector<384x128xbf16>
    %cst_82 = arith.constant dense<0.000000e+00> : vector<256x128xf32>
    %72 = tpu.matmul %70, %71, %cst_82 {dimension_numbers = #tpu.dot_dimension_numbers<[1], [0], [0], [1], [0, 0, 1, 1], [], []>} : vector<256x384xbf16>, vector<384x128xbf16>, vector<256x128xf32> -> vector<256x128xf32>
    %73 = arith.addf %69, %72 : vector<256x128xf32>
    %c32_83 = arith.constant 32 : index
    %c0_84 = arith.constant 0 : index
    %74 = vector.load %arg12[%c32_83, %c0_84] : memref<320x384xbf16, #tpu.memory_space<vmem>>, vector<256x384xbf16>
    %c384_85 = arith.constant 384 : index
    %c0_86 = arith.constant 0 : index
    %75 = vector.load %arg7[%c384_85, %c0_86] : memref<1152x128xbf16, #tpu.memory_space<vmem>>, vector<384x128xbf16>
    %cst_87 = arith.constant dense<0.000000e+00> : vector<256x128xf32>
    %76 = tpu.matmul %74, %75, %cst_87 {dimension_numbers = #tpu.dot_dimension_numbers<[1], [0], [0], [1], [0, 0, 1, 1], [], []>} : vector<256x384xbf16>, vector<384x128xbf16>, vector<256x128xf32> -> vector<256x128xf32>
    %77 = arith.addf %73, %76 : vector<256x128xf32>
    %c64 = arith.constant 64 : index
    %c0_88 = arith.constant 0 : index
    %78 = vector.load %arg12[%c64, %c0_88] : memref<320x384xbf16, #tpu.memory_space<vmem>>, vector<256x384xbf16>
    %c768_89 = arith.constant 768 : index
    %c0_90 = arith.constant 0 : index
    %79 = vector.load %arg7[%c768_89, %c0_90] : memref<1152x128xbf16, #tpu.memory_space<vmem>>, vector<384x128xbf16>
    %cst_91 = arith.constant dense<0.000000e+00> : vector<256x128xf32>
    %80 = tpu.matmul %78, %79, %cst_91 {dimension_numbers = #tpu.dot_dimension_numbers<[1], [0], [0], [1], [0, 0, 1, 1], [], []>} : vector<256x384xbf16>, vector<384x128xbf16>, vector<256x128xf32> -> vector<256x128xf32>
    %81 = arith.addf %77, %80 : vector<256x128xf32>
    %82 = vector.broadcast %58 : vector<1x128xf32> to vector<256x128xf32>
    %83 = arith.mulf %81, %82 : vector<256x128xf32>
    %84 = vector.broadcast %59 : vector<1x128xf32> to vector<256x128xf32>
    %85 = arith.addf %83, %84 : vector<256x128xf32>
    %cst_92 = arith.constant 0.000000e+00 : f32
    %86 = vector.broadcast %cst_92 : f32 to vector<256x128xf32>
    %87 = arith.maximumf %85, %86 : vector<256x128xf32>
    %88 = vector.shape_cast %87 : vector<256x128xf32> to vector<16x16x128xf32>
    %c0_93 = arith.constant 0 : index
    %c0_94 = arith.constant 0 : index
    %c0_95 = arith.constant 0 : index
    %c0_96 = arith.constant 0 : index
    %89 = vector.load %arg10[%c0_93, %c0_94, %c0_95, %c0_96] : memref<1x16x16x128xbf16, #tpu.memory_space<vmem>>, vector<1x16x16x128xbf16>
    %90 = vector.shape_cast %89 : vector<1x16x16x128xbf16> to vector<16x16x128xbf16>
    %91 = arith.extf %90 : vector<16x16x128xbf16> to vector<16x16x128xf32>
    %92 = arith.addf %91, %88 : vector<16x16x128xf32>
    %93 = arith.truncf %92 : vector<16x16x128xf32> to vector<16x16x128xbf16>
    %c0_97 = arith.constant 0 : index
    %c0_98 = arith.constant 0 : index
    %c0_99 = arith.constant 0 : index
    %c0_100 = arith.constant 0 : index
    %94 = vector.load %arg10[%c0_97, %c0_98, %c0_99, %c0_100] : memref<1x16x16x128xbf16, #tpu.memory_space<vmem>>, vector<1x16x16x128xbf16>
    %95 = vector.shape_cast %94 : vector<1x16x16x128xbf16> to vector<16x16x128xbf16>
    %96 = vector.shape_cast %93 : vector<16x16x128xbf16> to vector<1x16x16x128xbf16>
    tpu.vector_store %arg10[%c0_97, %c0_98, %c0_99, %c0_100], %96 {strides = array<i32>} : memref<1x16x16x128xbf16, #tpu.memory_space<vmem>>, vector<1x16x16x128xbf16>,
    return
  }
  func.func @transform_0(%arg0: i32) -> (i32, i32, i32, i32) {
    %c0_i32 = arith.constant 0 : i32
    %c0_i32_0 = arith.constant 0 : i32
    %c0_i32_1 = arith.constant 0 : i32
    %c0_i32_2 = arith.constant 0 : i32
    return %arg0, %c0_i32, %c0_i32_0, %c0_i32_1 : i32, i32, i32, i32
  }
  func.func @transform_1(%arg0: i32) -> (i32, i32) {
    %c0_i32 = arith.constant 0 : i32
    %c0_i32_0 = arith.constant 0 : i32
    %c0_i32_1 = arith.constant 0 : i32
    return %c0_i32, %c0_i32_0 : i32, i32
  }
  func.func @transform_2(%arg0: i32) -> (i32, i32) {
    %c0_i32 = arith.constant 0 : i32
    %c0_i32_0 = arith.constant 0 : i32
    %c0_i32_1 = arith.constant 0 : i32
    return %c0_i32, %c0_i32_0 : i32, i32
  }
  func.func @transform_3(%arg0: i32) -> (i32, i32) {
    %c0_i32 = arith.constant 0 : i32
    %c0_i32_0 = arith.constant 0 : i32
    %c0_i32_1 = arith.constant 0 : i32
    return %c0_i32, %c0_i32_0 : i32, i32
  }
  func.func @transform_4(%arg0: i32) -> (i32, i32) {
    %c0_i32 = arith.constant 0 : i32
    %c0_i32_0 = arith.constant 0 : i32
    %c0_i32_1 = arith.constant 0 : i32
    return %c0_i32, %c0_i32_0 : i32, i32
  }
  func.func @transform_5(%arg0: i32) -> (i32, i32) {
    %c0_i32 = arith.constant 0 : i32
    %c0_i32_0 = arith.constant 0 : i32
    %c0_i32_1 = arith.constant 0 : i32
    return %c0_i32, %c0_i32_0 : i32, i32
  }
  func.func @transform_6(%arg0: i32) -> (i32, i32) {
    %c0_i32 = arith.constant 0 : i32
    %c0_i32_0 = arith.constant 0 : i32
    %c0_i32_1 = arith.constant 0 : i32
    return %c0_i32, %c0_i32_0 : i32, i32
  }
  func.func @transform_7(%arg0: i32) -> (i32, i32) {
    %c0_i32 = arith.constant 0 : i32
    %c0_i32_0 = arith.constant 0 : i32
    %c0_i32_1 = arith.constant 0 : i32
    return %c0_i32, %c0_i32_0 : i32, i32
  }
  func.func @transform_8(%arg0: i32) -> (i32, i32) {
    %c0_i32 = arith.constant 0 : i32
    %c0_i32_0 = arith.constant 0 : i32
    %c0_i32_1 = arith.constant 0 : i32
    return %c0_i32, %c0_i32_0 : i32, i32
  }
  func.func @transform_9(%arg0: i32) -> (i32, i32, i32, i32) {
    %c0_i32 = arith.constant 0 : i32
    %c0_i32_0 = arith.constant 0 : i32
    %c0_i32_1 = arith.constant 0 : i32
    %c0_i32_2 = arith.constant 0 : i32
    return %arg0, %c0_i32, %c0_i32_0, %c0_i32_1 : i32, i32, i32, i32
  }
}

</mosaic_0001>

<llo_original>
// kernel: refinement_stage_block.1
$region0: #{refinement_stage_block.1}
  #allocation0 [shape = 'u32[]', space=smem, size = 0x4, offset = 0x4, fixed_abs, tag = 'smem constant byte address 0x4 - core index']
  #allocation1 [shape = 'u32[144,128]{1,0:T(1,128)}', space=vmem, size = 0x12000, scoped, tag = 'internal scratch']
  #allocation2 [shape = 'bf16[20,20,128]{2,1,0:T(8,128)(2,1)}', space=vmem, size = 0x1e000, scoped, tag = 'scratch operand']
  #allocation3 [shape = 'bf16[320,384]{1,0:T(8,128)(2,1)}', space=vmem, size = 0x3c000, scoped, tag = 'scratch operand']
  %s0 = inlined_call_operand.vmem [shape: f32[2,16,16,4], index: 0, kind: input, shape index: {}]
  %s1 = inlined_call_operand.vmem [shape: bf16[4,128], index: 1, kind: input, shape index: {}]
  %s2 = inlined_call_operand.vmem [shape: f32[1,128], index: 2, kind: input, shape index: {}]
  %s3 = inlined_call_operand.hbm [shape: bf16[1152,128], index: 3, kind: input, shape index: {}]
  %s4 = inlined_call_operand.vmem [shape: f32[1,128], index: 4, kind: input, shape index: {}]
  %s5 = inlined_call_operand.vmem [shape: f32[1,128], index: 5, kind: input, shape index: {}]
  %s6 = inlined_call_operand.vmem [shape: bf16[1152,128], index: 6, kind: input, shape index: {}]
  %s7 = inlined_call_operand.vmem [shape: f32[1,128], index: 7, kind: input, shape index: {}]
  %s8 = inlined_call_operand.vmem [shape: f32[1,128], index: 8, kind: input, shape index: {}]
  %s9 = inlined_call_operand.vmem [shape: bf16[2,16,16,128], index: 9, kind: output, shape index: {}]
  %s10 = sld [smem:[#allocation0]]
  $region73: #{refinement_stage_block.1} parent=0
    _
  %s12 = ssub.s32 1, %s10
  %s13 = scalar_select 0, %s12, %s10
  $region1: #{refinement_stage_block.1} parent=0
    #allocation4 [shape = 'u8[294912]{0}', space=vmem, size = 0x48000, scoped, tag = 'input window, operand 3, single buffered']
    #allocation5 [shape = 's32[2]{0}', space=sflag, size = 0x8, scoped, tag = 'scoped memory for refinement_stage_block.1']
    %14 = vsyncpa [#allocation5], 0
    loop: start=0, step=1, limit=4
    $region2: #{refinement_stage_block.1} parent=1 // loop_pre_header
      _
    $region3: #{refinement_stage_block.1} parent=1 // loop_header
      %s16 = sphi 0, %s20
      %p17 = scmp.ge.s32.totalorder %s16, 4
      %s26 = sphi 0, %s28
      %s29 = sphi 0, %s26
      %s30 = sphi 0, %s29
      %s46 = sphi 0, %s30
      %s50 = sphi 0, %s50
      %s52 = sphi 0, %s50
      %s53 = sphi 0, %s52
      %s67 = sphi 0, %s53
      %s71 = sphi 0, %s71
      %s73 = sphi 0, %s71
      %s74 = sphi 0, %s73
      %s88 = sphi 0, %s74
      %s92 = sphi 0, %s92
      %s94 = sphi 0, %s92
      %s95 = sphi 0, %s94
      %s109 = sphi 0, %s95
      %s113 = sphi 0, %s113
      %s115 = sphi 0, %s113
      %s116 = sphi 0, %s115
      %s130 = sphi 0, %s116
      %s134 = sphi 0, %s134
      %s136 = sphi 0, %s134
      %s137 = sphi 0, %s136
      %s151 = sphi 0, %s137
      %s155 = sphi 0, %s155
      %s157 = sphi 0, %s155
      %s158 = sphi 0, %s157
      %s172 = sphi 0, %s158
      %s176 = sphi 0, %s176
      %s178 = sphi 0, %s176
      %s179 = sphi 0, %s178
      %s193 = sphi 0, %s179
      %s197 = sphi 0, %s197
      %s199 = sphi 0, %s197
      %s200 = sphi 0, %s199
      %s214 = sphi 0, %s200
      %s220 = sphi 0, %s222
      %s223 = sphi 0, %s220
      %s224 = sphi 0, %s223
      %s240 = sphi 0, %s224
    $region4: #{refinement_stage_block.1} parent=1 // loop_header_branch
      %19 = sbr.rel (%p17) target = $region8
    $region5: #{refinement_stage_block.1} parent=1 // loop_body
      %s21 = ssub.s32 %s16, 1
      %s22 = ssub.s32 %s16, 2
      %s23 = sadd.s32 %s16, 1
      %s24 = ssub.s32 %s16, %s23
      %p25 = scmp.eq.s32.totalorder %s24, 0
      %s27 = sadd.s32 %s26, 1
      %s28 = scalar_select %p25, %s26, %s27
      %p31 = pneg %p25
      %p32 = scmp.eq.s32.totalorder %s16, 1
      %p33 = por %p31, %p32
      %p34 = scmp.ne.s32.totalorder %s26, %s29
      %p35 = scmp.eq.s32.totalorder %s16, 0
      %p36 = por %p34, %p35
      %p37 = scmp.ne.s32.totalorder %s26, %s29
      %p38 = scmp.eq.s32.totalorder %s21, 1
      %p39 = por %p37, %p38
      %p40 = scmp.ne.s32.totalorder %s29, %s30
      %p41 = scmp.eq.s32.totalorder %s21, 0
      %p42 = por %p40, %p41
      %p43 = scmp.ne.s32.totalorder %s29, %s30
      %p44 = scmp.eq.s32.totalorder %s22, 1
      %p45 = por %p43, %p44
      %p47 = scmp.ne.s32.totalorder %s30, %s46
      %p48 = scmp.eq.s32.totalorder %s22, 0
      %p49 = por %p47, %p48
      %s51 = sadd.s32 %s50, 1
      %p54 = scmp.eq.s32.totalorder %s16, 1
      %p55 = scmp.ne.s32.totalorder %s50, %s52
      %p56 = scmp.eq.s32.totalorder %s16, 0
      %p57 = por %p55, %p56
      %p58 = scmp.ne.s32.totalorder %s50, %s52
      %p59 = scmp.eq.s32.totalorder %s21, 1
      %p60 = por %p58, %p59
      %p61 = scmp.ne.s32.totalorder %s52, %s53
      %p62 = scmp.eq.s32.totalorder %s21, 0
      %p63 = por %p61, %p62
      %p64 = scmp.ne.s32.totalorder %s52, %s53
      %p65 = scmp.eq.s32.totalorder %s22, 1
      %p66 = por %p64, %p65
      %p68 = scmp.ne.s32.totalorder %s53, %s67
      %p69 = scmp.eq.s32.totalorder %s22, 0
      %p70 = por %p68, %p69
      %s72 = sadd.s32 %s71, 1
      %p75 = scmp.eq.s32.totalorder %s16, 1
      %p76 = scmp.ne.s32.totalorder %s71, %s73
      %p77 = scmp.eq.s32.totalorder %s16, 0
      %p78 = por %p76, %p77
      %p79 = scmp.ne.s32.totalorder %s71, %s73
      %p80 = scmp.eq.s32.totalorder %s21, 1
      %p81 = por %p79, %p80
      %p82 = scmp.ne.s32.totalorder %s73, %s74
      %p83 = scmp.eq.s32.totalorder %s21, 0
      %p84 = por %p82, %p83
      %p85 = scmp.ne.s32.totalorder %s73, %s74
      %p86 = scmp.eq.s32.totalorder %s22, 1
      %p87 = por %p85, %p86
      %p89 = scmp.ne.s32.totalorder %s74, %s88
      %p90 = scmp.eq.s32.totalorder %s22, 0
      %p91 = por %p89, %p90
      %s93 = sadd.s32 %s92, 1
      %p96 = scmp.eq.s32.totalorder %s16, 1
      %p97 = scmp.ne.s32.totalorder %s92, %s94
      %p98 = scmp.eq.s32.totalorder %s16, 0
      %p99 = por %p97, %p98
      %p100 = scmp.ne.s32.totalorder %s92, %s94
      %p101 = scmp.eq.s32.totalorder %s21, 1
      %p102 = por %p100, %p101
      %p103 = scmp.ne.s32.totalorder %s94, %s95
      %p104 = scmp.eq.s32.totalorder %s21, 0
      %p105 = por %p103, %p104
      %p106 = scmp.ne.s32.totalorder %s94, %s95
      %p107 = scmp.eq.s32.totalorder %s22, 1
      %p108 = por %p106, %p107
      %p110 = scmp.ne.s32.totalorder %s95, %s109
      %p111 = scmp.eq.s32.totalorder %s22, 0
      %p112 = por %p110, %p111
      %s114 = sadd.s32 %s113, 1
      %p117 = scmp.eq.s32.totalorder %s16, 1
      %p118 = scmp.ne.s32.totalorder %s113, %s115
      %p119 = scmp.eq.s32.totalorder %s16, 0
      %p120 = por %p118, %p119
      %p121 = scmp.ne.s32.totalorder %s113, %s115
      %p122 = scmp.eq.s32.totalorder %s21, 1
      %p123 = por %p121, %p122
      %p124 = scmp.ne.s32.totalorder %s115, %s116
      %p125 = scmp.eq.s32.totalorder %s21, 0
      %p126 = por %p124, %p125
      %p127 = scmp.ne.s32.totalorder %s115, %s116
      %p128 = scmp.eq.s32.totalorder %s22, 1
      %p129 = por %p127, %p128
      %p131 = scmp.ne.s32.totalorder %s116, %s130
      %p132 = scmp.eq.s32.totalorder %s22, 0
      %p133 = por %p131, %p132
      %s135 = sadd.s32 %s134, 1
      %p138 = scmp.eq.s32.totalorder %s16, 1
      %p139 = scmp.ne.s32.totalorder %s134, %s136
      %p140 = scmp.eq.s32.totalorder %s16, 0
      %p141 = por %p139, %p140
      %p142 = scmp.ne.s32.totalorder %s134, %s136
      %p143 = scmp.eq.s32.totalorder %s21, 1
      %p144 = por %p142, %p143
      %p145 = scmp.ne.s32.totalorder %s136, %s137
      %p146 = scmp.eq.s32.totalorder %s21, 0
      %p147 = por %p145, %p146
      %p148 = scmp.ne.s32.totalorder %s136, %s137
      %p149 = scmp.eq.s32.totalorder %s22, 1
      %p150 = por %p148, %p149
      %p152 = scmp.ne.s32.totalorder %s137, %s151
      %p153 = scmp.eq.s32.totalorder %s22, 0
      %p154 = por %p152, %p153
      %s156 = sadd.s32 %s155, 1
      %p159 = scmp.eq.s32.totalorder %s16, 1
      %p160 = scmp.ne.s32.totalorder %s155, %s157
      %p161 = scmp.eq.s32.totalorder %s16, 0
      %p162 = por %p160, %p161
      %p163 = scmp.ne.s32.totalorder %s155, %s157
      %p164 = scmp.eq.s32.totalorder %s21, 1
      %p165 = por %p163, %p164
      %p166 = scmp.ne.s32.totalorder %s157, %s158
      %p167 = scmp.eq.s32.totalorder %s21, 0
      %p168 = por %p166, %p167
      %p169 = scmp.ne.s32.totalorder %s157, %s158
      %p170 = scmp.eq.s32.totalorder %s22, 1
      %p171 = por %p169, %p170
      %p173 = scmp.ne.s32.totalorder %s158, %s172
      %p174 = scmp.eq.s32.totalorder %s22, 0
      %p175 = por %p173, %p174
      %s177 = sadd.s32 %s176, 1
      %p180 = scmp.eq.s32.totalorder %s16, 1
      %p181 = scmp.ne.s32.totalorder %s176, %s178
      %p182 = scmp.eq.s32.totalorder %s16, 0
      %p183 = por %p181, %p182
      %p184 = scmp.ne.s32.totalorder %s176, %s178
      %p185 = scmp.eq.s32.totalorder %s21, 1
      %p186 = por %p184, %p185
      %p187 = scmp.ne.s32.totalorder %s178, %s179
      %p188 = scmp.eq.s32.totalorder %s21, 0
      %p189 = por %p187, %p188
      %p190 = scmp.ne.s32.totalorder %s178, %s179
      %p191 = scmp.eq.s32.totalorder %s22, 1
      %p192 = por %p190, %p191
      %p194 = scmp.ne.s32.totalorder %s179, %s193
      %p195 = scmp.eq.s32.totalorder %s22, 0
      %p196 = por %p194, %p195
      %s198 = sadd.s32 %s197, 1
      %p201 = scmp.eq.s32.totalorder %s16, 1
      %p202 = scmp.ne.s32.totalorder %s197, %s199
      %p203 = scmp.eq.s32.totalorder %s16, 0
      %p204 = por %p202, %p203
      %p205 = scmp.ne.s32.totalorder %s197, %s199
      %p206 = scmp.eq.s32.totalorder %s21, 1
      %p207 = por %p205, %p206
      %p208 = scmp.ne.s32.totalorder %s199, %s200
      %p209 = scmp.eq.s32.totalorder %s21, 0
      %p210 = por %p208, %p209
      %p211 = scmp.ne.s32.totalorder %s199, %s200
      %p212 = scmp.eq.s32.totalorder %s22, 1
      %p213 = por %p211, %p212
      %p215 = scmp.ne.s32.totalorder %s200, %s214
      %p216 = scmp.eq.s32.totalorder %s22, 0
      %p217 = por %p215, %p216
      %s218 = ssub.s32 %s16, %s23
      %p219 = scmp.eq.s32.totalorder %s218, 0
      %s221 = sadd.s32 %s220, 1
      %s222 = scalar_select %p219, %s220, %s221
      %p225 = pneg %p219
      %p226 = scmp.eq.s32.totalorder %s16, 1
      %p227 = por %p225, %p226
      %p228 = scmp.ne.s32.totalorder %s220, %s223
      %p229 = scmp.eq.s32.totalorder %s16, 0
      %p230 = por %p228, %p229
      %p231 = scmp.ne.s32.totalorder %s220, %s223
      %p232 = scmp.eq.s32.totalorder %s21, 1
      %p233 = por %p231, %p232
      %p234 = scmp.ne.s32.totalorder %s223, %s224
      %p235 = scmp.eq.s32.totalorder %s21, 0
      %p236 = por %p234, %p235
      %p237 = scmp.ne.s32.totalorder %s223, %s224
      %p238 = scmp.eq.s32.totalorder %s22, 1
      %p239 = por %p237, %p238
      %p241 = scmp.ne.s32.totalorder %s224, %s240
      %p242 = scmp.eq.s32.totalorder %s22, 0
      %p243 = por %p241, %p242
      %p244 = scmp.le.s32.totalorder 1, %s16
      %p245 = scmp.lt.s32.totalorder %s16, 3
      %p246 = pnand %p244, %p245
      %p247 = pneg %p246
      // Predicated region
      $region9: #{refinement_stage_block.1} parent=5 // pred_check
        _
      $region10: #{refinement_stage_block.1} parent=5 // pred_check_branch
        %249 = sbr.rel (%p246) target = $region12
      $region11: #{refinement_stage_block.1} parent=5 // pred_region
        %s250 = ssub.s32 %s16, 1
        // Predicated region
        $region13: #{refinement_stage_block.1} parent=11 // pred_check
          %p251 = pneg %p63
        $region14: #{refinement_stage_block.1} parent=11 // pred_check_branch
          %253 = sbr.rel (%p251) target = $region16
        $region15: #{refinement_stage_block.1} parent=11 // pred_region
          _
        $region16: #{refinement_stage_block.1} parent=11 // pred_fallthru
          _
        // Predicated region
        $region17: #{refinement_stage_block.1} parent=11 // pred_check
          %p254 = pneg %p84
        $region18: #{refinement_stage_block.1} parent=11 // pred_check_branch
          %256 = sbr.rel (%p254) target = $region20
        $region19: #{refinement_stage_block.1} parent=11 // pred_region
          _
        $region20: #{refinement_stage_block.1} parent=11 // pred_fallthru
          _
        // Predicated region
        $region21: #{refinement_stage_block.1} parent=11 // pred_check
          %p257 = pneg %p105
        $region22: #{refinement_stage_block.1} parent=11 // pred_check_branch
          %259 = sbr.rel (%p257) target = $region24
        $region23: #{refinement_stage_block.1} parent=11 // pred_region
          %s261 = ssub.s32 9216, 9216
          %262 = vsyncadd [#allocation5], %s261
          %s263 = sshll.u32 [#allocation4], 4
          %s264 = int_to_ptr.vmem [resolvable:$true] %s263
          %269 = dma.hbm_to_vmem [thread:$0]  %s3, 9216, %s264, [#allocation5], 64, 64, 4
        $region24: #{refinement_stage_block.1} parent=11 // pred_fallthru
          _
        // Predicated region
        $region25: #{refinement_stage_block.1} parent=11 // pred_check
          %p270 = pneg %p126
        $region26: #{refinement_stage_block.1} parent=11 // pred_check_branch
          %272 = sbr.rel (%p270) target = $region28
        $region27: #{refinement_stage_block.1} parent=11 // pred_region
          _
        $region28: #{refinement_stage_block.1} parent=11 // pred_fallthru
          _
        // Predicated region
        $region29: #{refinement_stage_block.1} parent=11 // pred_check
          %p273 = pneg %p147
        $region30: #{refinement_stage_block.1} parent=11 // pred_check_branch
          %275 = sbr.rel (%p273) target = $region32
        $region31: #{refinement_stage_block.1} parent=11 // pred_region
          _
        $region32: #{refinement_stage_block.1} parent=11 // pred_fallthru
          _
        // Predicated region
        $region33: #{refinement_stage_block.1} parent=11 // pred_check
          %p276 = pneg %p168
        $region34: #{refinement_stage_block.1} parent=11 // pred_check_branch
          %278 = sbr.rel (%p276) target = $region36
        $region35: #{refinement_stage_block.1} parent=11 // pred_region
          _
        $region36: #{refinement_stage_block.1} parent=11 // pred_fallthru
          _
        // Predicated region
        $region37: #{refinement_stage_block.1} parent=11 // pred_check
          %p279 = pneg %p189
        $region38: #{refinement_stage_block.1} parent=11 // pred_check_branch
          %281 = sbr.rel (%p279) target = $region40
        $region39: #{refinement_stage_block.1} parent=11 // pred_region
          _
        $region40: #{refinement_stage_block.1} parent=11 // pred_fallthru
          _
        // Predicated region
        $region41: #{refinement_stage_block.1} parent=11 // pred_check
          %p282 = pneg %p210
        $region42: #{refinement_stage_block.1} parent=11 // pred_check_branch
          %284 = sbr.rel (%p282) target = $region44
        $region43: #{refinement_stage_block.1} parent=11 // pred_region
          _
        $region44: #{refinement_stage_block.1} parent=11 // pred_fallthru
          _
      $region12: #{refinement_stage_block.1} parent=5 // pred_fallthru
        _
      %p285 = scmp.lt.s32.totalorder %s16, 2
      // Predicated region
      $region45: #{refinement_stage_block.1} parent=5 // pred_check
        %p286 = pneg %p285
      $region46: #{refinement_stage_block.1} parent=5 // pred_check_branch
        %288 = sbr.rel (%p286) target = $region48
      $region47: #{refinement_stage_block.1} parent=5 // pred_region
        // Predicated region
        $region49: #{refinement_stage_block.1} parent=47 // pred_check
          %p289 = pneg %p36
        $region50: #{refinement_stage_block.1} parent=47 // pred_check_branch
          %291 = sbr.rel (%p289) target = $region52
        $region51: #{refinement_stage_block.1} parent=47 // pred_region
          %p292 = scmp.lt.s32.totalorder %s16, 1
          %s293 = scalar_select %p292, %s16, 1
          %s294 = smul.addr %s293, 32
          %s295 = smul.addr %s294, 8
          %s296 = scalar_lea.vmem %s0, %s295
        $region52: #{refinement_stage_block.1} parent=47 // pred_fallthru
          _
      $region48: #{refinement_stage_block.1} parent=5 // pred_fallthru
        _
      %p297 = scmp.le.s32.totalorder 1, %s16
      %p298 = scmp.lt.s32.totalorder %s16, 3
      %p299 = pnand %p297, %p298
      %p300 = pneg %p299
      // Predicated region
      $region53: #{refinement_stage_block.1} parent=5 // pred_check
        _
      $region54: #{refinement_stage_block.1} parent=5 // pred_check_branch
        %302 = sbr.rel (%p299) target = $region56
      $region55: #{refinement_stage_block.1} parent=5 // pred_region
        %s303 = ssub.s32 %s16, 1
        // Predicated region
        $region57: #{refinement_stage_block.1} parent=55 // pred_check
          %p304 = pneg %p105
        $region58: #{refinement_stage_block.1} parent=55 // pred_check_branch
          %306 = sbr.rel (%p304) target = $region60
        $region59: #{refinement_stage_block.1} parent=55 // pred_region
          %307 = dma.done [#allocation5], 9216
        $region60: #{refinement_stage_block.1} parent=55 // pred_fallthru
          _
        %p308 = scmp.lt.s32.totalorder %s21, 1
        %s309 = scalar_select %p308, %s21, 1
        %s310 = smul.addr %s309, 32
        %s311 = smul.addr %s310, 8
        %s312 = scalar_lea.vmem %s0, %s311
        %p313 = pneg %p42
        %p314 = pneg %p39
        %p315 = pneg %p63
        %p316 = pneg %p60
        %p317 = pneg %p84
        %p318 = pneg %p81
        %p319 = pneg %p105
        %p320 = pneg %p102
        %p321 = pneg %p126
        %p322 = pneg %p123
        %p323 = pneg %p147
        %p324 = pneg %p144
        %p325 = pneg %p168
        %p326 = pneg %p165
        %p327 = pneg %p189
        %p328 = pneg %p186
        %p329 = pneg %p210
        %p330 = pneg %p207
        %p331 = pneg %p236
        %p332 = pneg %p233
        %p333 = scmp.lt.s32.totalorder %s21, 1
        %s334 = scalar_select %p333, %s21, 1
        %s335 = smul.addr %s334, 32
        %s336 = smul.addr %s335, 4
        %s337 = scalar_lea.vmem %s9, %s336
        %p338 = scmp.lt.s32.totalorder %s21, 1
        %s339 = scalar_select %p338, %s21, 1
        %s340 = smul.addr %s339, 32
        %s341 = smul.addr %s340, 8
        %s342 = scalar_lea.vmem %s0, %s341
        %p343 = scmp.lt.s32.totalorder %s21, 1
        %s344 = scalar_select %p343, %s21, 1
        %s345 = smul.addr %s344, 32
        %s346 = smul.addr %s345, 4
        %s347 = scalar_lea.vmem %s9, %s346
        %349 = vst [vmem:[#allocation2] sm:$0xf] 0
        %350 = vst [vmem:[#allocation2 + $0x4] sm:$0xf] 0
        %351 = vst [vmem:[#allocation2 + $0x8] sm:$0x3] 0
        %352 = vst [vmem:[#allocation2 + $0xc] sm:$0xf] 0
        %353 = vst [vmem:[#allocation2 + $0x10] sm:$0xf] 0
        %354 = vst [vmem:[#allocation2 + $0x14] sm:$0x3] 0
        %s355 = scalar_lea.vmem [#allocation2], 216
        %356 = vst [vmem:[%s355] sm:$0xf] 0
        %357 = vst [vmem:[%s355 + $0x4] sm:$0xf] 0
        %358 = vst [vmem:[%s355 + $0x8] sm:$0x3] 0
        %359 = vst [vmem:[%s355 + $0xc] sm:$0xf] 0
        %360 = vst [vmem:[%s355 + $0x10] sm:$0xf] 0
        %361 = vst [vmem:[%s355 + $0x14] sm:$0x3] 0
        %362 = vst [vmem:[#allocation2] sm:$0x1] 0
        %363 = vst [vmem:[#allocation2 + $0xc] sm:$0x1] 0
        %364 = vst [vmem:[#allocation2 + $0x18] sm:$0x1] 0
        %365 = vst [vmem:[#allocation2 + $0x24] sm:$0x1] 0
        %366 = vst [vmem:[#allocation2 + $0x30] sm:$0x1] 0
        %367 = vst [vmem:[#allocation2 + $0x3c] sm:$0x1] 0
        %368 = vst [vmem:[#allocation2 + $0x48] sm:$0x1] 0
        %369 = vst [vmem:[#allocation2 + $0x54] sm:$0x1] 0
        %370 = vst [vmem:[#allocation2 + $0x60] sm:$0x1] 0
        %371 = vst [vmem:[#allocation2 + $0x6c] sm:$0x1] 0
        %372 = vst [vmem:[#allocation2 + $0x78] sm:$0x1] 0
        %373 = vst [vmem:[#allocation2 + $0x84] sm:$0x1] 0
        %374 = vst [vmem:[#allocation2 + $0x90] sm:$0x1] 0
        %375 = vst [vmem:[#allocation2 + $0x9c] sm:$0x1] 0
        %376 = vst [vmem:[#allocation2 + $0xa8] sm:$0x1] 0
        %377 = vst [vmem:[#allocation2 + $0xb4] sm:$0x1] 0
        %378 = vst [vmem:[#allocation2 + $0xc0] sm:$0x1] 0
        %379 = vst [vmem:[#allocation2 + $0xcc] sm:$0x1] 0
        %380 = vst [vmem:[#allocation2 + $0xd8] sm:$0x1] 0
        %381 = vst [vmem:[#allocation2 + $0xe4] sm:$0x1] 0
        %382 = vst [vmem:[#allocation2 + $0x8] sm:$0x2] 0
        %383 = vst [vmem:[#allocation2 + $0x14] sm:$0x2] 0
        %384 = vst [vmem:[#allocation2 + $0x20] sm:$0x2] 0
        %385 = vst [vmem:[#allocation2 + $0x2c] sm:$0x2] 0
        %386 = vst [vmem:[#allocation2 + $0x38] sm:$0x2] 0
        %387 = vst [vmem:[#allocation2 + $0x44] sm:$0x2] 0
        %388 = vst [vmem:[#allocation2 + $0x50] sm:$0x2] 0
        %389 = vst [vmem:[#allocation2 + $0x5c] sm:$0x2] 0
        %390 = vst [vmem:[#allocation2 + $0x68] sm:$0x2] 0
        %391 = vst [vmem:[#allocation2 + $0x74] sm:$0x2] 0
        %392 = vst [vmem:[#allocation2 + $0x80] sm:$0x2] 0
        %393 = vst [vmem:[#allocation2 + $0x8c] sm:$0x2] 0
        %394 = vst [vmem:[#allocation2 + $0x98] sm:$0x2] 0
        %395 = vst [vmem:[#allocation2 + $0xa4] sm:$0x2] 0
        %396 = vst [vmem:[#allocation2 + $0xb0] sm:$0x2] 0
        %397 = vst [vmem:[#allocation2 + $0xbc] sm:$0x2] 0
        %398 = vst [vmem:[#allocation2 + $0xc8] sm:$0x2] 0
        %399 = vst [vmem:[#allocation2 + $0xd4] sm:$0x2] 0
        %400 = vst [vmem:[#allocation2 + $0xe0] sm:$0x2] 0
        %401 = vst [vmem:[#allocation2 + $0xec] sm:$0x2] 0
        %v402 = vld [vmem:[%s342] sm:$0xff]
        %v403 = vld [vmem:[%s342 + $0x8] sm:$0xff]
        %v404 = vld [vmem:[%s342 + $0x10] sm:$0xff]
        %v405 = vld [vmem:[%s342 + $0x18] sm:$0xff]
        %v406 = vld [vmem:[%s342 + $0x20] sm:$0xff]
        %v407 = vld [vmem:[%s342 + $0x28] sm:$0xff]
        %v408 = vld [vmem:[%s342 + $0x30] sm:$0xff]
        %v409 = vld [vmem:[%s342 + $0x38] sm:$0xff]
        %v410 = vld [vmem:[%s342 + $0x40] sm:$0xff]
        %v411 = vld [vmem:[%s342 + $0x48] sm:$0xff]
        %v412 = vld [vmem:[%s342 + $0x50] sm:$0xff]
        %v413 = vld [vmem:[%s342 + $0x58] sm:$0xff]
        %v414 = vld [vmem:[%s342 + $0x60] sm:$0xff]
        %v415 = vld [vmem:[%s342 + $0x68] sm:$0xff]
        %v416 = vld [vmem:[%s342 + $0x70] sm:$0xff]
        %v417 = vld [vmem:[%s342 + $0x78] sm:$0xff]
        %v418 = vld [vmem:[%s342 + $0x80] sm:$0xff]
        %v419 = vld [vmem:[%s342 + $0x88] sm:$0xff]
        %v420 = vld [vmem:[%s342 + $0x90] sm:$0xff]
        %v421 = vld [vmem:[%s342 + $0x98] sm:$0xff]
        %v422 = vld [vmem:[%s342 + $0xa0] sm:$0xff]
        %v423 = vld [vmem:[%s342 + $0xa8] sm:$0xff]
        %v424 = vld [vmem:[%s342 + $0xb0] sm:$0xff]
        %v425 = vld [vmem:[%s342 + $0xb8] sm:$0xff]
        %v426 = vld [vmem:[%s342 + $0xc0] sm:$0xff]
        %v427 = vld [vmem:[%s342 + $0xc8] sm:$0xff]
        %v428 = vld [vmem:[%s342 + $0xd0] sm:$0xff]
        %v429 = vld [vmem:[%s342 + $0xd8] sm:$0xff]
        %v430 = vld [vmem:[%s342 + $0xe0] sm:$0xff]
        %v431 = vld [vmem:[%s342 + $0xe8] sm:$0xff]
        %v432 = vld [vmem:[%s342 + $0xf0] sm:$0xff]
        %v433 = vld [vmem:[%s342 + $0xf8] sm:$0xff]
        %v434 = vpack.c.bf16 %v403, %v402
        %v435 = vpack.c.bf16 %v405, %v404
        %v436 = vpack.c.bf16 %v407, %v406
        %v437 = vpack.c.bf16 %v409, %v408
        %v438 = vpack.c.bf16 %v411, %v410
        %v439 = vpack.c.bf16 %v413, %v412
        %v440 = vpack.c.bf16 %v415, %v414
        %v441 = vpack.c.bf16 %v417, %v416
        %v442 = vpack.c.bf16 %v419, %v418
        %v443 = vpack.c.bf16 %v421, %v420
        %v444 = vpack.c.bf16 %v423, %v422
        %v445 = vpack.c.bf16 %v425, %v424
        %v446 = vpack.c.bf16 %v427, %v426
        %v447 = vpack.c.bf16 %v429, %v428
        %v448 = vpack.c.bf16 %v431, %v430
        %v449 = vpack.c.bf16 %v433, %v432
        %v450 = vld [vmem:[%s1] sm:$0x3]
        %v451 = vld [vmem:[%s2] sm:$0x1]
        %v453 = vlaneseq
        %v454 = vshrl.u32 %v453, 7
        %v455 = vsub.s32 0, %v454
        %v456 = vrot.slane %v451, %v455
        %vm458 = vcmask 31744
        %v460 = vsel %vm458, %v434, 0
        %v463 = vsel %vm458, %v435, 0
        %v466 = vsel %vm458, %v436, 0
        %v469 = vsel %vm458, %v437, 0
        %v472 = vsel %vm458, %v438, 0
        %v475 = vsel %vm458, %v439, 0
        %v478 = vsel %vm458, %v440, 0
        %v481 = vsel %vm458, %v441, 0
        %v484 = vsel %vm458, %v442, 0
        %v487 = vsel %vm458, %v443, 0
        %v490 = vsel %vm458, %v444, 0
        %v493 = vsel %vm458, %v445, 0
        %v496 = vsel %vm458, %v446, 0
        %v499 = vsel %vm458, %v447, 0
        %v502 = vsel %vm458, %v448, 0
        %v505 = vsel %vm458, %v449, 0
        %vm507 = vcmask 1041408
        %v509 = vsel %vm507, %v450, 0
        %511 = vmatprep.subr.bf16.mxu0 0
        %512 = vmatpush1.bf16.msra.mxu0 0
        %513 = vmatprep.subr.bf16.mxu0 0
        %514 = vmatpush1.bf16.msra.mxu0 0
        %515 = vmatprep.subr.bf16.mxu0 0
        %516 = vmatpush1.bf16.msra.mxu0 0
        %517 = vmatprep.subr.bf16.mxu0 0
        %518 = vmatpush1.bf16.msra.mxu0 0
        %519 = vmatprep.subr.bf16.mxu0 0
        %520 = vmatpush1.bf16.msra.mxu0 0
        %521 = vmatprep.subr.bf16.mxu0 0
        %522 = vmatpush1.bf16.msra.mxu0 0
        %523 = vmatprep.subr.bf16.mxu0 0
        %524 = vmatpush1.bf16.msra.mxu0 0
        %525 = vmatprep.subr.bf16.mxu0 0
        %526 = vmatpush1.bf16.msra.mxu0 %v509
        %527 = vmatprep.subr.bf16.mxu0 0
        %528 = vmatpush2.bf16.msra.mxu0 0
        %529 = vmatprep.subr.bf16.mxu0 0
        %530 = vmatpush2.bf16.msra.mxu0 0
        %531 = vmatprep.subr.bf16.mxu0 0
        %532 = vmatpush2.bf16.msra.mxu0 0
        %533 = vmatprep.subr.bf16.mxu0 0
        %534 = vmatpush2.bf16.msra.mxu0 0
        %535 = vmatprep.subr.bf16.mxu0 0
        %536 = vmatpush2.bf16.msra.mxu0 0
        %537 = vmatprep.subr.bf16.mxu0 0
        %538 = vmatpush2.bf16.msra.mxu0 0
        %539 = vmatprep.subr.bf16.mxu0 0
        %540 = vmatpush2.bf16.msra.mxu0 0
        %541 = vmatprep.subr.bf16.mxu0 0
        %542 = vmatpush2.bf16.msra.mxu0 0
        %543 = vmatprep.mubr.bf16.mxu0 0
        %544 = vmatmul.mubr.bf16.gmra.mxu0 %v460
        %v545 = vpop.f32.mrf.mxu0
        %v546 = vadd.f32 %v456, %v545
        %v547 = vpop.f32.mrf.mxu0
        %v548 = vpop.f32.mrf.mxu0
        %v549 = vadd.f32 %v456, %v548
        %v550 = vpop.f32.mrf.mxu0
        %551 = vmatprep.mubr.bf16.mxu0 0
        %552 = vmatmul.mubr.bf16.gmra.mxu0 %v463
        %v553 = vpop.f32.mrf.mxu0
        %v554 = vadd.f32 %v456, %v553
        %v555 = vpop.f32.mrf.mxu0
        %v556 = vpop.f32.mrf.mxu0
        %v557 = vadd.f32 %v456, %v556
        %v558 = vpop.f32.mrf.mxu0
        %559 = vmatprep.mubr.bf16.mxu0 0
        %560 = vmatmul.mubr.bf16.gmra.mxu0 %v466
        %v561 = vpop.f32.mrf.mxu0
        %v562 = vadd.f32 %v456, %v561
        %v563 = vpop.f32.mrf.mxu0
        %v564 = vpop.f32.mrf.mxu0
        %v565 = vadd.f32 %v456, %v564
        %v566 = vpop.f32.mrf.mxu0
        %567 = vmatprep.mubr.bf16.mxu0 0
        %568 = vmatmul.mubr.bf16.gmra.mxu0 %v469
        %v569 = vpop.f32.mrf.mxu0
        %v570 = vadd.f32 %v456, %v569
        %v571 = vpop.f32.mrf.mxu0
        %v572 = vpop.f32.mrf.mxu0
        %v573 = vadd.f32 %v456, %v572
        %v574 = vpop.f32.mrf.mxu0
        %575 = vmatprep.mubr.bf16.mxu0 0
        %576 = vmatmul.mubr.bf16.gmra.mxu0 %v472
        %v577 = vpop.f32.mrf.mxu0
        %v578 = vadd.f32 %v456, %v577
        %v579 = vpop.f32.mrf.mxu0
        %v580 = vpop.f32.mrf.mxu0
        %v581 = vadd.f32 %v456, %v580
        %v582 = vpop.f32.mrf.mxu0
        %583 = vmatprep.mubr.bf16.mxu0 0
        %584 = vmatmul.mubr.bf16.gmra.mxu0 %v475
        %v585 = vpop.f32.mrf.mxu0
        %v586 = vadd.f32 %v456, %v585
        %v587 = vpop.f32.mrf.mxu0
        %v588 = vpop.f32.mrf.mxu0
        %v589 = vadd.f32 %v456, %v588
        %v590 = vpop.f32.mrf.mxu0
        %591 = vmatprep.mubr.bf16.mxu0 0
        %592 = vmatmul.mubr.bf16.gmra.mxu0 %v478
        %v593 = vpop.f32.mrf.mxu0
        %v594 = vadd.f32 %v456, %v593
        %v595 = vpop.f32.mrf.mxu0
        %v596 = vpop.f32.mrf.mxu0
        %v597 = vadd.f32 %v456, %v596
        %v598 = vpop.f32.mrf.mxu0
        %599 = vmatprep.mubr.bf16.mxu0 0
        %600 = vmatmul.mubr.bf16.gmra.mxu0 %v481
        %v601 = vpop.f32.mrf.mxu0
        %v602 = vadd.f32 %v456, %v601
        %v603 = vpop.f32.mrf.mxu0
        %v604 = vpop.f32.mrf.mxu0
        %v605 = vadd.f32 %v456, %v604
        %v606 = vpop.f32.mrf.mxu0
        %607 = vmatprep.mubr.bf16.mxu0 0
        %608 = vmatmul.mubr.bf16.gmra.mxu0 %v484
        %v609 = vpop.f32.mrf.mxu0
        %v610 = vadd.f32 %v456, %v609
        %v611 = vpop.f32.mrf.mxu0
        %v612 = vpop.f32.mrf.mxu0
        %v613 = vadd.f32 %v456, %v612
        %v614 = vpop.f32.mrf.mxu0
        %615 = vmatprep.mubr.bf16.mxu0 0
        %616 = vmatmul.mubr.bf16.gmra.mxu0 %v487
        %v617 = vpop.f32.mrf.mxu0
        %v618 = vadd.f32 %v456, %v617
        %v619 = vpop.f32.mrf.mxu0
        %v620 = vpop.f32.mrf.mxu0
        %v621 = vadd.f32 %v456, %v620
        %v622 = vpop.f32.mrf.mxu0
        %623 = vmatprep.mubr.bf16.mxu0 0
        %624 = vmatmul.mubr.bf16.gmra.mxu0 %v490
        %v625 = vpop.f32.mrf.mxu0
        %v626 = vadd.f32 %v456, %v625
        %v627 = vpop.f32.mrf.mxu0
        %v628 = vpop.f32.mrf.mxu0
        %v629 = vadd.f32 %v456, %v628
        %v630 = vpop.f32.mrf.mxu0
        %631 = vmatprep.mubr.bf16.mxu0 0
        %632 = vmatmul.mubr.bf16.gmra.mxu0 %v493
        %v633 = vpop.f32.mrf.mxu0
        %v634 = vadd.f32 %v456, %v633
        %v635 = vpop.f32.mrf.mxu0
        %v636 = vpop.f32.mrf.mxu0
        %v637 = vadd.f32 %v456, %v636
        %v638 = vpop.f32.mrf.mxu0
        %639 = vmatprep.mubr.bf16.mxu0 0
        %640 = vmatmul.mubr.bf16.gmra.mxu0 %v496
        %v641 = vpop.f32.mrf.mxu0
        %v642 = vadd.f32 %v456, %v641
        %v643 = vpop.f32.mrf.mxu0
        %v644 = vpop.f32.mrf.mxu0
        %v645 = vadd.f32 %v456, %v644
        %v646 = vpop.f32.mrf.mxu0
        %647 = vmatprep.mubr.bf16.mxu0 0
        %648 = vmatmul.mubr.bf16.gmra.mxu0 %v499
        %v649 = vpop.f32.mrf.mxu0
        %v650 = vadd.f32 %v456, %v649
        %v651 = vpop.f32.mrf.mxu0
        %v652 = vpop.f32.mrf.mxu0
        %v653 = vadd.f32 %v456, %v652
        %v654 = vpop.f32.mrf.mxu0
        %655 = vmatprep.mubr.bf16.mxu0 0
        %656 = vmatmul.mubr.bf16.gmra.mxu0 %v502
        %v657 = vpop.f32.mrf.mxu0
        %v658 = vadd.f32 %v456, %v657
        %v659 = vpop.f32.mrf.mxu0
        %v660 = vpop.f32.mrf.mxu0
        %v661 = vadd.f32 %v456, %v660
        %v662 = vpop.f32.mrf.mxu0
        %663 = vmatprep.mubr.bf16.mxu0 0
        %664 = vmatmul.mubr.bf16.gmra.mxu0 %v505
        %v665 = vpop.f32.mrf.mxu0
        %v666 = vadd.f32 %v456, %v665
        %v667 = vpop.f32.mrf.mxu0
        %v668 = vpop.f32.mrf.mxu0
        %v669 = vadd.f32 %v456, %v668
        %v670 = vpop.f32.mrf.mxu0
        %671 = vdwg.mxu0
        %v672 = vmax.f32 %v546, 0.0
        %v673 = vmax.f32 %v549, 0.0
        %v674 = vmax.f32 %v554, 0.0
        %v675 = vmax.f32 %v557, 0.0
        %v676 = vmax.f32 %v562, 0.0
        %v677 = vmax.f32 %v565, 0.0
        %v678 = vmax.f32 %v570, 0.0
        %v679 = vmax.f32 %v573, 0.0
        %v680 = vmax.f32 %v578, 0.0
        %v681 = vmax.f32 %v581, 0.0
        %v682 = vmax.f32 %v586, 0.0
        %v683 = vmax.f32 %v589, 0.0
        %v684 = vmax.f32 %v594, 0.0
        %v685 = vmax.f32 %v597, 0.0
        %v686 = vmax.f32 %v602, 0.0
        %v687 = vmax.f32 %v605, 0.0
        %v688 = vmax.f32 %v610, 0.0
        %v689 = vmax.f32 %v613, 0.0
        %v690 = vmax.f32 %v618, 0.0
        %v691 = vmax.f32 %v621, 0.0
        %v692 = vmax.f32 %v626, 0.0
        %v693 = vmax.f32 %v629, 0.0
        %v694 = vmax.f32 %v634, 0.0
        %v695 = vmax.f32 %v637, 0.0
        %v696 = vmax.f32 %v642, 0.0
        %v697 = vmax.f32 %v645, 0.0
        %v698 = vmax.f32 %v650, 0.0
        %v699 = vmax.f32 %v653, 0.0
        %v700 = vmax.f32 %v658, 0.0
        %v701 = vmax.f32 %v661, 0.0
        %v702 = vmax.f32 %v666, 0.0
        %v703 = vmax.f32 %v669, 0.0
        %v704 = vpack.c.bf16 %v673, %v672
        %v705 = vpack.c.bf16 %v675, %v674
        %v706 = vpack.c.bf16 %v677, %v676
        %v707 = vpack.c.bf16 %v679, %v678
        %v708 = vpack.c.bf16 %v681, %v680
        %v709 = vpack.c.bf16 %v683, %v682
        %v710 = vpack.c.bf16 %v685, %v684
        %v711 = vpack.c.bf16 %v687, %v686
        %v712 = vpack.c.bf16 %v689, %v688
        %v713 = vpack.c.bf16 %v691, %v690
        %v714 = vpack.c.bf16 %v693, %v692
        %v715 = vpack.c.bf16 %v695, %v694
        %v716 = vpack.c.bf16 %v697, %v696
        %v717 = vpack.c.bf16 %v699, %v698
        %v718 = vpack.c.bf16 %v701, %v700
        %v719 = vpack.c.bf16 %v703, %v702
        %v736 = vunpack.c.l.b16 %v704
        %v737 = vunpack.c.h.b16 %v704
        %v738 = vunpack.c.l.b16 %v705
        %v739 = vunpack.c.h.b16 %v705
        %v740 = vunpack.c.l.b16 %v706
        %v741 = vunpack.c.h.b16 %v706
        %v742 = vunpack.c.l.b16 %v707
        %v743 = vunpack.c.h.b16 %v707
        %v744 = vunpack.c.l.b16 %v708
        %v745 = vunpack.c.h.b16 %v708
        %v746 = vunpack.c.l.b16 %v709
        %v747 = vunpack.c.h.b16 %v709
        %v748 = vunpack.c.l.b16 %v710
        %v749 = vunpack.c.h.b16 %v710
        %v750 = vunpack.c.l.b16 %v711
        %v751 = vunpack.c.h.b16 %v711
        %v752 = vunpack.c.l.b16 %v712
        %v753 = vunpack.c.h.b16 %v712
        %v754 = vunpack.c.l.b16 %v713
        %v755 = vunpack.c.h.b16 %v713
        %v756 = vunpack.c.l.b16 %v714
        %v757 = vunpack.c.h.b16 %v714
        %v758 = vunpack.c.l.b16 %v715
        %v759 = vunpack.c.h.b16 %v715
        %v760 = vunpack.c.l.b16 %v716
        %v761 = vunpack.c.h.b16 %v716
        %v762 = vunpack.c.l.b16 %v717
        %v763 = vunpack.c.h.b16 %v717
        %v764 = vunpack.c.l.b16 %v718
        %v765 = vunpack.c.h.b16 %v718
        %v766 = vunpack.c.l.b16 %v719
        %v767 = vunpack.c.h.b16 %v719
        %v768 = vpack.c.b16 %v736, %v736
        %v769 = vpack.c.b16 %v737, %v737
        %v770 = vpack.c.b16 %v738, %v738
        %v771 = vpack.c.b16 %v739, %v739
        %v772 = vpack.c.b16 %v740, %v740
        %v773 = vpack.c.b16 %v741, %v741
        %v774 = vpack.c.b16 %v742, %v742
        %v775 = vpack.c.b16 %v743, %v743
        %v776 = vpack.c.b16 %v744, %v744
        %v777 = vpack.c.b16 %v745, %v745
        %v778 = vpack.c.b16 %v746, %v746
        %v779 = vpack.c.b16 %v747, %v747
        %v780 = vpack.c.b16 %v748, %v748
        %v781 = vpack.c.b16 %v749, %v749
        %v782 = vpack.c.b16 %v750, %v750
        %v783 = vpack.c.b16 %v751, %v751
        %v784 = vpack.c.b16 %v752, %v752
        %v785 = vpack.c.b16 %v753, %v753
        %v786 = vpack.c.b16 %v754, %v754
        %v787 = vpack.c.b16 %v755, %v755
        %v788 = vpack.c.b16 %v756, %v756
        %v789 = vpack.c.b16 %v757, %v757
        %v790 = vpack.c.b16 %v758, %v758
        %v791 = vpack.c.b16 %v759, %v759
        %v792 = vpack.c.b16 %v760, %v760
        %v793 = vpack.c.b16 %v761, %v761
        %v794 = vpack.c.b16 %v762, %v762
        %v795 = vpack.c.b16 %v763, %v763
        %v796 = vpack.c.b16 %v764, %v764
        %v797 = vpack.c.b16 %v765, %v765
        %v798 = vpack.c.b16 %v766, %v766
        %v799 = vpack.c.b16 %v767, %v767
        %832 = vst [vmem:[%s347] sm:$0xf] %v768
        %833 = vst [vmem:[%s347 + $0x4] sm:$0xf] %v769
        %834 = vst [vmem:[%s347 + $0x8] sm:$0xf] %v770
        %835 = vst [vmem:[%s347 + $0xc] sm:$0xf] %v771
        %836 = vst [vmem:[%s347 + $0x10] sm:$0xf] %v772
        %837 = vst [vmem:[%s347 + $0x14] sm:$0xf] %v773
        %838 = vst [vmem:[%s347 + $0x18] sm:$0xf] %v774
        %839 = vst [vmem:[%s347 + $0x1c] sm:$0xf] %v775
        %840 = vst [vmem:[%s347 + $0x20] sm:$0xf] %v776
        %841 = vst [vmem:[%s347 + $0x24] sm:$0xf] %v777
        %842 = vst [vmem:[%s347 + $0x28] sm:$0xf] %v778
        %843 = vst [vmem:[%s347 + $0x2c] sm:$0xf] %v779
        %844 = vst [vmem:[%s347 + $0x30] sm:$0xf] %v780
        %845 = vst [vmem:[%s347 + $0x34] sm:$0xf] %v781
        %846 = vst [vmem:[%s347 + $0x38] sm:$0xf] %v782
        %847 = vst [vmem:[%s347 + $0x3c] sm:$0xf] %v783
        %848 = vst [vmem:[%s347 + $0x40] sm:$0xf] %v784
        %849 = vst [vmem:[%s347 + $0x44] sm:$0xf] %v785
        %850 = vst [vmem:[%s347 + $0x48] sm:$0xf] %v786
        %851 = vst [vmem:[%s347 + $0x4c] sm:$0xf] %v787
        %852 = vst [vmem:[%s347 + $0x50] sm:$0xf] %v788
        %853 = vst [vmem:[%s347 + $0x54] sm:$0xf] %v789
        %854 = vst [vmem:[%s347 + $0x58] sm:$0xf] %v790
        %855 = vst [vmem:[%s347 + $0x5c] sm:$0xf] %v791
        %856 = vst [vmem:[%s347 + $0x60] sm:$0xf] %v792
        %857 = vst [vmem:[%s347 + $0x64] sm:$0xf] %v793
        %858 = vst [vmem:[%s347 + $0x68] sm:$0xf] %v794
        %859 = vst [vmem:[%s347 + $0x6c] sm:$0xf] %v795
        %860 = vst [vmem:[%s347 + $0x70] sm:$0xf] %v796
        %861 = vst [vmem:[%s347 + $0x74] sm:$0xf] %v797
        %862 = vst [vmem:[%s347 + $0x78] sm:$0xf] %v798
        %863 = vst [vmem:[%s347 + $0x7c] sm:$0xf] %v799
        %vm864 = vcmask 1040384
        %vm865 = vcmask 1044484
        %vm866 = vmor %vm864, %vm865
        %v867 = vrot.slane %v768, 7
        %v868 = vrot.slane %v867, 4
        %v869 = vrot.slane %v769, 7
        %v870 = vsel %vm866, %v868, %v869
        %v871 = vrot.slane %v869, 4
        %v872 = vrot.slane %v770, 7
        %v873 = vrot.slane %v872, 4
        %v874 = vrot.slane %v771, 7
        %v875 = vsel %vm866, %v873, %v874
        %v876 = vrot.slane %v874, 4
        %v877 = vrot.slane %v772, 7
        %v878 = vrot.slane %v877, 4
        %v879 = vrot.slane %v773, 7
        %v880 = vsel %vm866, %v878, %v879
        %v881 = vrot.slane %v879, 4
        %v882 = vrot.slane %v774, 7
        %v883 = vrot.slane %v882, 4
        %v884 = vrot.slane %v775, 7
        %v885 = vsel %vm866, %v883, %v884
        %v886 = vrot.slane %v884, 4
        %v887 = vrot.slane %v776, 7
        %v888 = vrot.slane %v887, 4
        %v889 = vrot.slane %v777, 7
        %v890 = vsel %vm866, %v888, %v889
        %v891 = vrot.slane %v889, 4
        %v892 = vrot.slane %v778, 7
        %v893 = vrot.slane %v892, 4
        %v894 = vrot.slane %v779, 7
        %v895 = vsel %vm866, %v893, %v894
        %v896 = vrot.slane %v894, 4
        %v897 = vrot.slane %v780, 7
        %v898 = vrot.slane %v897, 4
        %v899 = vrot.slane %v781, 7
        %v900 = vsel %vm866, %v898, %v899
        %v901 = vrot.slane %v899, 4
        %v902 = vrot.slane %v782, 7
        %v903 = vrot.slane %v902, 4
        %v904 = vrot.slane %v783, 7
        %v905 = vsel %vm866, %v903, %v904
        %v906 = vrot.slane %v904, 4
        %v907 = vrot.slane %v784, 7
        %v908 = vrot.slane %v907, 4
        %v909 = vrot.slane %v785, 7
        %v910 = vsel %vm866, %v908, %v909
        %v911 = vrot.slane %v909, 4
        %v912 = vrot.slane %v786, 7
        %v913 = vrot.slane %v912, 4
        %v914 = vrot.slane %v787, 7
        %v915 = vsel %vm866, %v913, %v914
        %v916 = vrot.slane %v914, 4
        %v917 = vrot.slane %v788, 7
        %v918 = vrot.slane %v917, 4
        %v919 = vrot.slane %v789, 7
        %v920 = vsel %vm866, %v918, %v919
        %v921 = vrot.slane %v919, 4
        %v922 = vrot.slane %v790, 7
        %v923 = vrot.slane %v922, 4
        %v924 = vrot.slane %v791, 7
        %v925 = vsel %vm866, %v923, %v924
        %v926 = vrot.slane %v924, 4
        %v927 = vrot.slane %v792, 7
        %v928 = vrot.slane %v927, 4
        %v929 = vrot.slane %v793, 7
        %v930 = vsel %vm866, %v928, %v929
        %v931 = vrot.slane %v929, 4
        %v932 = vrot.slane %v794, 7
        %v933 = vrot.slane %v932, 4
        %v934 = vrot.slane %v795, 7
        %v935 = vsel %vm866, %v933, %v934
        %v936 = vrot.slane %v934, 4
        %v937 = vrot.slane %v796, 7
        %v938 = vrot.slane %v937, 4
        %v939 = vrot.slane %v797, 7
        %v940 = vsel %vm866, %v938, %v939
        %v941 = vrot.slane %v939, 4
        %v942 = vrot.slane %v798, 7
        %v943 = vrot.slane %v942, 4
        %v944 = vrot.slane %v799, 7
        %v945 = vsel %vm866, %v943, %v944
        %v946 = vrot.slane %v944, 4
        %s995 = scalar_lea.vmem [#allocation2], 24
        %996 = vst [vmem:[%s995] sm:$0xe] %v867
        %997 = vst [vmem:[%s995 + $0x4] sm:$0xf] %v870
        %998 = vst [vmem:[%s995 + $0x8] sm:$0x1] %v871
        %999 = vst [vmem:[%s995 + $0xc] sm:$0xe] %v872
        %1000 = vst [vmem:[%s995 + $0x10] sm:$0xf] %v875
        %1001 = vst [vmem:[%s995 + $0x14] sm:$0x1] %v876
        %1002 = vst [vmem:[%s995 + $0x18] sm:$0xe] %v877
        %1003 = vst [vmem:[%s995 + $0x1c] sm:$0xf] %v880
        %1004 = vst [vmem:[%s995 + $0x20] sm:$0x1] %v881
        %1005 = vst [vmem:[%s995 + $0x24] sm:$0xe] %v882
        %1006 = vst [vmem:[%s995 + $0x28] sm:$0xf] %v885
        %1007 = vst [vmem:[%s995 + $0x2c] sm:$0x1] %v886
        %1008 = vst [vmem:[%s995 + $0x30] sm:$0xe] %v887
        %1009 = vst [vmem:[%s995 + $0x34] sm:$0xf] %v890
        %1010 = vst [vmem:[%s995 + $0x38] sm:$0x1] %v891
        %1011 = vst [vmem:[%s995 + $0x3c] sm:$0xe] %v892
        %1012 = vst [vmem:[%s995 + $0x40] sm:$0xf] %v895
        %1013 = vst [vmem:[%s995 + $0x44] sm:$0x1] %v896
        %1014 = vst [vmem:[%s995 + $0x48] sm:$0xe] %v897
        %1015 = vst [vmem:[%s995 + $0x4c] sm:$0xf] %v900
        %1016 = vst [vmem:[%s995 + $0x50] sm:$0x1] %v901
        %1017 = vst [vmem:[%s995 + $0x54] sm:$0xe] %v902
        %1018 = vst [vmem:[%s995 + $0x58] sm:$0xf] %v905
        %1019 = vst [vmem:[%s995 + $0x5c] sm:$0x1] %v906
        %1020 = vst [vmem:[%s995 + $0x60] sm:$0xe] %v907
        %1021 = vst [vmem:[%s995 + $0x64] sm:$0xf] %v910
        %1022 = vst [vmem:[%s995 + $0x68] sm:$0x1] %v911
        %1023 = vst [vmem:[%s995 + $0x6c] sm:$0xe] %v912
        %1024 = vst [vmem:[%s995 + $0x70] sm:$0xf] %v915
        %1025 = vst [vmem:[%s995 + $0x74] sm:$0x1] %v916
        %1026 = vst [vmem:[%s995 + $0x78] sm:$0xe] %v917
        %1027 = vst [vmem:[%s995 + $0x7c] sm:$0xf] %v920
        %1028 = vst [vmem:[%s995 + $0x80] sm:$0x1] %v921
        %1029 = vst [vmem:[%s995 + $0x84] sm:$0xe] %v922
        %1030 = vst [vmem:[%s995 + $0x88] sm:$0xf] %v925
        %1031 = vst [vmem:[%s995 + $0x8c] sm:$0x1] %v926
        %1032 = vst [vmem:[%s995 + $0x90] sm:$0xe] %v927
        %1033 = vst [vmem:[%s995 + $0x94] sm:$0xf] %v930
        %1034 = vst [vmem:[%s995 + $0x98] sm:$0x1] %v931
        %1035 = vst [vmem:[%s995 + $0x9c] sm:$0xe] %v932
        %1036 = vst [vmem:[%s995 + $0xa0] sm:$0xf] %v935
        %1037 = vst [vmem:[%s995 + $0xa4] sm:$0x1] %v936
        %1038 = vst [vmem:[%s995 + $0xa8] sm:$0xe] %v937
        %1039 = vst [vmem:[%s995 + $0xac] sm:$0xf] %v940
        %1040 = vst [vmem:[%s995 + $0xb0] sm:$0x1] %v941
        %1041 = vst [vmem:[%s995 + $0xb4] sm:$0xe] %v942
        %1042 = vst [vmem:[%s995 + $0xb8] sm:$0xf] %v945
        %1043 = vst [vmem:[%s995 + $0xbc] sm:$0x1] %v946
        %v1044 = vld [vmem:[%s4] sm:$0x1]
        %v1045 = vld [vmem:[%s5] sm:$0x1]
        %v1046 = vld [vmem:[#allocation2] sm:$0xf]
        %v1047 = vld [vmem:[#allocation2 + $0x4] sm:$0xf]
        %v1048 = vld [vmem:[#allocation2 + $0x8] sm:$0x1]
        %v1049 = vld [vmem:[#allocation2 + $0xc] sm:$0xf]
        %v1050 = vld [vmem:[#allocation2 + $0x10] sm:$0xf]
        %v1051 = vld [vmem:[#allocation2 + $0x14] sm:$0x1]
        %v1052 = vld [vmem:[#allocation2 + $0x18] sm:$0xf]
        %v1053 = vld [vmem:[#allocation2 + $0x1c] sm:$0xf]
        %v1054 = vld [vmem:[#allocation2 + $0x20] sm:$0x1]
        %v1055 = vld [vmem:[#allocation2 + $0x24] sm:$0xf]
        %v1056 = vld [vmem:[#allocation2 + $0x28] sm:$0xf]
        %v1057 = vld [vmem:[#allocation2 + $0x2c] sm:$0x1]
        %v1058 = vld [vmem:[#allocation2 + $0x30] sm:$0xf]
        %v1059 = vld [vmem:[#allocation2 + $0x34] sm:$0xf]
        %v1060 = vld [vmem:[#allocation2 + $0x38] sm:$0x1]
        %v1061 = vld [vmem:[#allocation2 + $0x3c] sm:$0xf]
        %v1062 = vld [vmem:[#allocation2 + $0x40] sm:$0xf]
        %v1063 = vld [vmem:[#allocation2 + $0x44] sm:$0x1]
        %v1064 = vld [vmem:[#allocation2 + $0x48] sm:$0xf]
        %v1065 = vld [vmem:[#allocation2 + $0x4c] sm:$0xf]
        %v1066 = vld [vmem:[#allocation2 + $0x50] sm:$0x1]
        %v1067 = vld [vmem:[#allocation2 + $0x54] sm:$0xf]
        %v1068 = vld [vmem:[#allocation2 + $0x58] sm:$0xf]
        %v1069 = vld [vmem:[#allocation2 + $0x5c] sm:$0x1]
        %v1070 = vld [vmem:[#allocation2 + $0x60] sm:$0xf]
        %v1071 = vld [vmem:[#allocation2 + $0x64] sm:$0xf]
        %v1072 = vld [vmem:[#allocation2 + $0x68] sm:$0x1]
        %v1073 = vld [vmem:[#allocation2 + $0x6c] sm:$0xf]
        %v1074 = vld [vmem:[#allocation2 + $0x70] sm:$0xf]
        %v1075 = vld [vmem:[#allocation2 + $0x74] sm:$0x1]
        %v1076 = vld [vmem:[#allocation2 + $0x78] sm:$0xf]
        %v1077 = vld [vmem:[#allocation2 + $0x7c] sm:$0xf]
        %v1078 = vld [vmem:[#allocation2 + $0x80] sm:$0x1]
        %v1079 = vld [vmem:[#allocation2 + $0x84] sm:$0xf]
        %v1080 = vld [vmem:[#allocation2 + $0x88] sm:$0xf]
        %v1081 = vld [vmem:[#allocation2 + $0x8c] sm:$0x1]
        %v1082 = vld [vmem:[#allocation2 + $0x90] sm:$0xf]
        %v1083 = vld [vmem:[#allocation2 + $0x94] sm:$0xf]
        %v1084 = vld [vmem:[#allocation2 + $0x98] sm:$0x1]
        %v1085 = vld [vmem:[#allocation2 + $0x9c] sm:$0xf]
        %v1086 = vld [vmem:[#allocation2 + $0xa0] sm:$0xf]
        %v1087 = vld [vmem:[#allocation2 + $0xa4] sm:$0x1]
        %v1088 = vld [vmem:[#allocation2 + $0xa8] sm:$0xf]
        %v1089 = vld [vmem:[#allocation2 + $0xac] sm:$0xf]
        %v1090 = vld [vmem:[#allocation2 + $0xb0] sm:$0x1]
        %v1091 = vld [vmem:[#allocation2 + $0xb4] sm:$0xf]
        %v1092 = vld [vmem:[#allocation2 + $0xb8] sm:$0xf]
        %v1093 = vld [vmem:[#allocation2 + $0xbc] sm:$0x1]
        %v1094 = vld [vmem:[#allocation2 + $0xc0] sm:$0xf]
        %v1095 = vld [vmem:[#allocation2 + $0xc4] sm:$0xf]
        %v1096 = vld [vmem:[#allocation2 + $0xc8] sm:$0x1]
        %v1097 = vld [vmem:[#allocation2 + $0xcc] sm:$0xf]
        %v1098 = vld [vmem:[#allocation2 + $0xd0] sm:$0xf]
        %v1099 = vld [vmem:[#allocation2 + $0xd4] sm:$0x1]
        %v1100 = vld [vmem:[#allocation2 + $0xd8] sm:$0xf]
        %v1101 = vld [vmem:[#allocation2 + $0xdc] sm:$0xf]
        %v1102 = vld [vmem:[#allocation2 + $0xe0] sm:$0x1]
        %v1103 = vld [vmem:[#allocation2 + $0xe4] sm:$0xf]
        %v1104 = vld [vmem:[#allocation2 + $0xe8] sm:$0xf]
        %v1105 = vld [vmem:[#allocation2 + $0xec] sm:$0x1]
        %vm1106 = vsmask.f32 3328
        %vm1107 = vsmask.f32 7440
        %vm1108 = vmor %vm1106, %vm1107
        %v1110 = vshrl.u32 %v1046, 16
        %v1112 = vrot.slane %v1110, 4
        %v1113 = vshll.u32 %v1046, 16
        %v1115 = vrot.slane %v1113, 5
        %v1116 = vor.u32 %v1112, %v1115
        %v1117 = vrot.slane %v1116, 4
        %v1119 = vshll.u32 %v1047, 16
        %v1121 = vrot.slane %v1119, 5
        %v1122 = vsel %vm1108, %v1117, %v1121
        %v1123 = vshrl.u32 %v1047, 16
        %v1125 = vrot.slane %v1123, 4
        %v1126 = vor.u32 %v1125, %v1121
        %v1127 = vrot.slane %v1126, 4
        %v1129 = vshll.u32 %v1048, 16
        %v1131 = vrot.slane %v1129, 5
        %v1132 = vsel %vm1108, %v1127, %v1131
        %v1134 = vshrl.u32 %v1049, 16
        %v1136 = vrot.slane %v1134, 4
        %v1137 = vshll.u32 %v1049, 16
        %v1139 = vrot.slane %v1137, 5
        %v1140 = vor.u32 %v1136, %v1139
        %v1141 = vrot.slane %v1140, 4
        %v1143 = vshll.u32 %v1050, 16
        %v1145 = vrot.slane %v1143, 5
        %v1146 = vsel %vm1108, %v1141, %v1145
        %v1147 = vshrl.u32 %v1050, 16
        %v1149 = vrot.slane %v1147, 4
        %v1150 = vor.u32 %v1149, %v1145
        %v1151 = vrot.slane %v1150, 4
        %v1153 = vshll.u32 %v1051, 16
        %v1155 = vrot.slane %v1153, 5
        %v1156 = vsel %vm1108, %v1151, %v1155
        %v1158 = vshrl.u32 %v1052, 16
        %v1160 = vrot.slane %v1158, 4
        %v1161 = vshll.u32 %v1052, 16
        %v1163 = vrot.slane %v1161, 5
        %v1164 = vor.u32 %v1160, %v1163
        %v1165 = vrot.slane %v1164, 4
        %v1167 = vshll.u32 %v1053, 16
        %v1169 = vrot.slane %v1167, 5
        %v1170 = vsel %vm1108, %v1165, %v1169
        %v1171 = vshrl.u32 %v1053, 16
        %v1173 = vrot.slane %v1171, 4
        %v1174 = vor.u32 %v1173, %v1169
        %v1175 = vrot.slane %v1174, 4
        %v1177 = vshll.u32 %v1054, 16
        %v1179 = vrot.slane %v1177, 5
        %v1180 = vsel %vm1108, %v1175, %v1179
        %v1182 = vshrl.u32 %v1055, 16
        %v1184 = vrot.slane %v1182, 4
        %v1185 = vshll.u32 %v1055, 16
        %v1187 = vrot.slane %v1185, 5
        %v1188 = vor.u32 %v1184, %v1187
        %v1189 = vrot.slane %v1188, 4
        %v1191 = vshll.u32 %v1056, 16
        %v1193 = vrot.slane %v1191, 5
        %v1194 = vsel %vm1108, %v1189, %v1193
        %v1195 = vshrl.u32 %v1056, 16
        %v1197 = vrot.slane %v1195, 4
        %v1198 = vor.u32 %v1197, %v1193
        %v1199 = vrot.slane %v1198, 4
        %v1201 = vshll.u32 %v1057, 16
        %v1203 = vrot.slane %v1201, 5
        %v1204 = vsel %vm1108, %v1199, %v1203
        %v1206 = vshrl.u32 %v1058, 16
        %v1208 = vrot.slane %v1206, 4
        %v1209 = vshll.u32 %v1058, 16
        %v1211 = vrot.slane %v1209, 5
        %v1212 = vor.u32 %v1208, %v1211
        %v1213 = vrot.slane %v1212, 4
        %v1215 = vshll.u32 %v1059, 16
        %v1217 = vrot.slane %v1215, 5
        %v1218 = vsel %vm1108, %v1213, %v1217
        %v1219 = vshrl.u32 %v1059, 16
        %v1221 = vrot.slane %v1219, 4
        %v1222 = vor.u32 %v1221, %v1217
        %v1223 = vrot.slane %v1222, 4
        %v1225 = vshll.u32 %v1060, 16
        %v1227 = vrot.slane %v1225, 5
        %v1228 = vsel %vm1108, %v1223, %v1227
        %v1230 = vshrl.u32 %v1061, 16
        %v1232 = vrot.slane %v1230, 4
        %v1233 = vshll.u32 %v1061, 16
        %v1235 = vrot.slane %v1233, 5
        %v1236 = vor.u32 %v1232, %v1235
        %v1237 = vrot.slane %v1236, 4
        %v1239 = vshll.u32 %v1062, 16
        %v1241 = vrot.slane %v1239, 5
        %v1242 = vsel %vm1108, %v1237, %v1241
        %v1243 = vshrl.u32 %v1062, 16
        %v1245 = vrot.slane %v1243, 4
        %v1246 = vor.u32 %v1245, %v1241
        %v1247 = vrot.slane %v1246, 4
        %v1249 = vshll.u32 %v1063, 16
        %v1251 = vrot.slane %v1249, 5
        %v1252 = vsel %vm1108, %v1247, %v1251
        %v1254 = vshrl.u32 %v1064, 16
        %v1256 = vrot.slane %v1254, 4
        %v1257 = vshll.u32 %v1064, 16
        %v1259 = vrot.slane %v1257, 5
        %v1260 = vor.u32 %v1256, %v1259
        %v1261 = vrot.slane %v1260, 4
        %v1263 = vshll.u32 %v1065, 16
        %v1265 = vrot.slane %v1263, 5
        %v1266 = vsel %vm1108, %v1261, %v1265
        %v1267 = vshrl.u32 %v1065, 16
        %v1269 = vrot.slane %v1267, 4
        %v1270 = vor.u32 %v1269, %v1265
        %v1271 = vrot.slane %v1270, 4
        %v1273 = vshll.u32 %v1066, 16
        %v1275 = vrot.slane %v1273, 5
        %v1276 = vsel %vm1108, %v1271, %v1275
        %v1278 = vshrl.u32 %v1067, 16
        %v1280 = vrot.slane %v1278, 4
        %v1281 = vshll.u32 %v1067, 16
        %v1283 = vrot.slane %v1281, 5
        %v1284 = vor.u32 %v1280, %v1283
        %v1285 = vrot.slane %v1284, 4
        %v1287 = vshll.u32 %v1068, 16
        %v1289 = vrot.slane %v1287, 5
        %v1290 = vsel %vm1108, %v1285, %v1289
        %v1291 = vshrl.u32 %v1068, 16
        %v1293 = vrot.slane %v1291, 4
        %v1294 = vor.u32 %v1293, %v1289
        %v1295 = vrot.slane %v1294, 4
        %v1297 = vshll.u32 %v1069, 16
        %v1299 = vrot.slane %v1297, 5
        %v1300 = vsel %vm1108, %v1295, %v1299
        %v1302 = vshrl.u32 %v1070, 16
        %v1304 = vrot.slane %v1302, 4
        %v1305 = vshll.u32 %v1070, 16
        %v1307 = vrot.slane %v1305, 5
        %v1308 = vor.u32 %v1304, %v1307
        %v1309 = vrot.slane %v1308, 4
        %v1311 = vshll.u32 %v1071, 16
        %v1313 = vrot.slane %v1311, 5
        %v1314 = vsel %vm1108, %v1309, %v1313
        %v1315 = vshrl.u32 %v1071, 16
        %v1317 = vrot.slane %v1315, 4
        %v1318 = vor.u32 %v1317, %v1313
        %v1319 = vrot.slane %v1318, 4
        %v1321 = vshll.u32 %v1072, 16
        %v1323 = vrot.slane %v1321, 5
        %v1324 = vsel %vm1108, %v1319, %v1323
        %v1326 = vshrl.u32 %v1073, 16
        %v1328 = vrot.slane %v1326, 4
        %v1329 = vshll.u32 %v1073, 16
        %v1331 = vrot.slane %v1329, 5
        %v1332 = vor.u32 %v1328, %v1331
        %v1333 = vrot.slane %v1332, 4
        %v1335 = vshll.u32 %v1074, 16
        %v1337 = vrot.slane %v1335, 5
        %v1338 = vsel %vm1108, %v1333, %v1337
        %v1339 = vshrl.u32 %v1074, 16
        %v1341 = vrot.slane %v1339, 4
        %v1342 = vor.u32 %v1341, %v1337
        %v1343 = vrot.slane %v1342, 4
        %v1345 = vshll.u32 %v1075, 16
        %v1347 = vrot.slane %v1345, 5
        %v1348 = vsel %vm1108, %v1343, %v1347
        %v1350 = vshrl.u32 %v1076, 16
        %v1352 = vrot.slane %v1350, 4
        %v1353 = vshll.u32 %v1076, 16
        %v1355 = vrot.slane %v1353, 5
        %v1356 = vor.u32 %v1352, %v1355
        %v1357 = vrot.slane %v1356, 4
        %v1359 = vshll.u32 %v1077, 16
        %v1361 = vrot.slane %v1359, 5
        %v1362 = vsel %vm1108, %v1357, %v1361
        %v1363 = vshrl.u32 %v1077, 16
        %v1365 = vrot.slane %v1363, 4
        %v1366 = vor.u32 %v1365, %v1361
        %v1367 = vrot.slane %v1366, 4
        %v1369 = vshll.u32 %v1078, 16
        %v1371 = vrot.slane %v1369, 5
        %v1372 = vsel %vm1108, %v1367, %v1371
        %v1374 = vshrl.u32 %v1079, 16
        %v1376 = vrot.slane %v1374, 4
        %v1377 = vshll.u32 %v1079, 16
        %v1379 = vrot.slane %v1377, 5
        %v1380 = vor.u32 %v1376, %v1379
        %v1381 = vrot.slane %v1380, 4
        %v1383 = vshll.u32 %v1080, 16
        %v1385 = vrot.slane %v1383, 5
        %v1386 = vsel %vm1108, %v1381, %v1385
        %v1387 = vshrl.u32 %v1080, 16
        %v1389 = vrot.slane %v1387, 4
        %v1390 = vor.u32 %v1389, %v1385
        %v1391 = vrot.slane %v1390, 4
        %v1393 = vshll.u32 %v1081, 16
        %v1395 = vrot.slane %v1393, 5
        %v1396 = vsel %vm1108, %v1391, %v1395
        %v1398 = vshrl.u32 %v1082, 16
        %v1400 = vrot.slane %v1398, 4
        %v1401 = vshll.u32 %v1082, 16
        %v1403 = vrot.slane %v1401, 5
        %v1404 = vor.u32 %v1400, %v1403
        %v1405 = vrot.slane %v1404, 4
        %v1407 = vshll.u32 %v1083, 16
        %v1409 = vrot.slane %v1407, 5
        %v1410 = vsel %vm1108, %v1405, %v1409
        %v1411 = vshrl.u32 %v1083, 16
        %v1413 = vrot.slane %v1411, 4
        %v1414 = vor.u32 %v1413, %v1409
        %v1415 = vrot.slane %v1414, 4
        %v1417 = vshll.u32 %v1084, 16
        %v1419 = vrot.slane %v1417, 5
        %v1420 = vsel %vm1108, %v1415, %v1419
        %v1422 = vshrl.u32 %v1085, 16
        %v1424 = vrot.slane %v1422, 4
        %v1425 = vshll.u32 %v1085, 16
        %v1427 = vrot.slane %v1425, 5
        %v1428 = vor.u32 %v1424, %v1427
        %v1429 = vrot.slane %v1428, 4
        %v1431 = vshll.u32 %v1086, 16
        %v1433 = vrot.slane %v1431, 5
        %v1434 = vsel %vm1108, %v1429, %v1433
        %v1435 = vshrl.u32 %v1086, 16
        %v1437 = vrot.slane %v1435, 4
        %v1438 = vor.u32 %v1437, %v1433
        %v1439 = vrot.slane %v1438, 4
        %v1441 = vshll.u32 %v1087, 16
        %v1443 = vrot.slane %v1441, 5
        %v1444 = vsel %vm1108, %v1439, %v1443
        %v1446 = vshrl.u32 %v1088, 16
        %v1448 = vrot.slane %v1446, 4
        %v1449 = vshll.u32 %v1088, 16
        %v1451 = vrot.slane %v1449, 5
        %v1452 = vor.u32 %v1448, %v1451
        %v1453 = vrot.slane %v1452, 4
        %v1455 = vshll.u32 %v1089, 16
        %v1457 = vrot.slane %v1455, 5
        %v1458 = vsel %vm1108, %v1453, %v1457
        %v1459 = vshrl.u32 %v1089, 16
        %v1461 = vrot.slane %v1459, 4
        %v1462 = vor.u32 %v1461, %v1457
        %v1463 = vrot.slane %v1462, 4
        %v1465 = vshll.u32 %v1090, 16
        %v1467 = vrot.slane %v1465, 5
        %v1468 = vsel %vm1108, %v1463, %v1467
        %v1470 = vshrl.u32 %v1091, 16
        %v1472 = vrot.slane %v1470, 4
        %v1473 = vshll.u32 %v1091, 16
        %v1475 = vrot.slane %v1473, 5
        %v1476 = vor.u32 %v1472, %v1475
        %v1477 = vrot.slane %v1476, 4
        %v1479 = vshll.u32 %v1092, 16
        %v1481 = vrot.slane %v1479, 5
        %v1482 = vsel %vm1108, %v1477, %v1481
        %v1483 = vshrl.u32 %v1092, 16
        %v1485 = vrot.slane %v1483, 4
        %v1486 = vor.u32 %v1485, %v1481
        %v1487 = vrot.slane %v1486, 4
        %v1489 = vshll.u32 %v1093, 16
        %v1491 = vrot.slane %v1489, 5
        %v1492 = vsel %vm1108, %v1487, %v1491
        %v1494 = vshrl.u32 %v1094, 16
        %v1496 = vrot.slane %v1494, 4
        %v1497 = vshll.u32 %v1094, 16
        %v1499 = vrot.slane %v1497, 5
        %v1500 = vor.u32 %v1496, %v1499
        %v1501 = vrot.slane %v1500, 4
        %v1503 = vshll.u32 %v1095, 16
        %v1505 = vrot.slane %v1503, 5
        %v1506 = vsel %vm1108, %v1501, %v1505
        %v1507 = vshrl.u32 %v1095, 16
        %v1509 = vrot.slane %v1507, 4
        %v1510 = vor.u32 %v1509, %v1505
        %v1511 = vrot.slane %v1510, 4
        %v1513 = vshll.u32 %v1096, 16
        %v1515 = vrot.slane %v1513, 5
        %v1516 = vsel %vm1108, %v1511, %v1515
        %v1518 = vshrl.u32 %v1097, 16
        %v1520 = vrot.slane %v1518, 4
        %v1521 = vshll.u32 %v1097, 16
        %v1523 = vrot.slane %v1521, 5
        %v1524 = vor.u32 %v1520, %v1523
        %v1525 = vrot.slane %v1524, 4
        %v1527 = vshll.u32 %v1098, 16
        %v1529 = vrot.slane %v1527, 5
        %v1530 = vsel %vm1108, %v1525, %v1529
        %v1531 = vshrl.u32 %v1098, 16
        %v1533 = vrot.slane %v1531, 4
        %v1534 = vor.u32 %v1533, %v1529
        %v1535 = vrot.slane %v1534, 4
        %v1537 = vshll.u32 %v1099, 16
        %v1539 = vrot.slane %v1537, 5
        %v1540 = vsel %vm1108, %v1535, %v1539
        %v1542 = vshrl.u32 %v1100, 16
        %v1544 = vrot.slane %v1542, 4
        %v1545 = vshll.u32 %v1100, 16
        %v1547 = vrot.slane %v1545, 5
        %v1548 = vor.u32 %v1544, %v1547
        %v1549 = vrot.slane %v1548, 4
        %v1551 = vshll.u32 %v1101, 16
        %v1553 = vrot.slane %v1551, 5
        %v1554 = vsel %vm1108, %v1549, %v1553
        %v1555 = vshrl.u32 %v1101, 16
        %v1557 = vrot.slane %v1555, 4
        %v1558 = vor.u32 %v1557, %v1553
        %v1559 = vrot.slane %v1558, 4
        %v1561 = vshll.u32 %v1102, 16
        %v1563 = vrot.slane %v1561, 5
        %v1564 = vsel %vm1108, %v1559, %v1563
        %v1566 = vshrl.u32 %v1103, 16
        %v1568 = vrot.slane %v1566, 4
        %v1569 = vshll.u32 %v1103, 16
        %v1571 = vrot.slane %v1569, 5
        %v1572 = vor.u32 %v1568, %v1571
        %v1573 = vrot.slane %v1572, 4
        %v1575 = vshll.u32 %v1104, 16
        %v1577 = vrot.slane %v1575, 5
        %v1578 = vsel %vm1108, %v1573, %v1577
        %v1579 = vshrl.u32 %v1104, 16
        %v1581 = vrot.slane %v1579, 4
        %v1582 = vor.u32 %v1581, %v1577
        %v1583 = vrot.slane %v1582, 4
        %v1585 = vshll.u32 %v1105, 16
        %v1587 = vrot.slane %v1585, 5
        %v1588 = vsel %vm1108, %v1583, %v1587
        %1629 = vst [vmem:[#allocation3] sm:$0xf] %v1122
        %1630 = vst [vmem:[#allocation3 + $0xc] sm:$0xf] %v1132
        %1631 = vst [vmem:[#allocation3 + $0x18] sm:$0xf] %v1146
        %1632 = vst [vmem:[#allocation3 + $0x24] sm:$0xf] %v1156
        %1633 = vst [vmem:[#allocation3 + $0x30] sm:$0xf] %v1170
        %1634 = vst [vmem:[#allocation3 + $0x3c] sm:$0xf] %v1180
        %1635 = vst [vmem:[#allocation3 + $0x48] sm:$0xf] %v1194
        %1636 = vst [vmem:[#allocation3 + $0x54] sm:$0xf] %v1204
        %1637 = vst [vmem:[#allocation3 + $0x60] sm:$0xf] %v1218
        %1638 = vst [vmem:[#allocation3 + $0x6c] sm:$0xf] %v1228
        %1639 = vst [vmem:[#allocation3 + $0x78] sm:$0xf] %v1242
        %1640 = vst [vmem:[#allocation3 + $0x84] sm:$0xf] %v1252
        %1641 = vst [vmem:[#allocation3 + $0x90] sm:$0xf] %v1266
        %1642 = vst [vmem:[#allocation3 + $0x9c] sm:$0xf] %v1276
        %1643 = vst [vmem:[#allocation3 + $0xa8] sm:$0xf] %v1290
        %1644 = vst [vmem:[#allocation3 + $0xb4] sm:$0xf] %v1300
        %1645 = vst [vmem:[#allocation3 + $0xc0] sm:$0xf] %v1314
        %1646 = vst [vmem:[#allocation3 + $0xcc] sm:$0xf] %v1324
        %1647 = vst [vmem:[#allocation3 + $0xd8] sm:$0xf] %v1338
        %1648 = vst [vmem:[#allocation3 + $0xe4] sm:$0xf] %v1348
        %1649 = vst [vmem:[#allocation3 + $0xf0] sm:$0xf] %v1362
        %1650 = vst [vmem:[#allocation3 + $0xfc] sm:$0xf] %v1372
        %1651 = vst [vmem:[#allocation3 + $0x108] sm:$0xf] %v1386
        %1652 = vst [vmem:[#allocation3 + $0x114] sm:$0xf] %v1396
        %1653 = vst [vmem:[#allocation3 + $0x120] sm:$0xf] %v1410
        %1654 = vst [vmem:[#allocation3 + $0x12c] sm:$0xf] %v1420
        %1655 = vst [vmem:[#allocation3 + $0x138] sm:$0xf] %v1434
        %1656 = vst [vmem:[#allocation3 + $0x144] sm:$0xf] %v1444
        %1657 = vst [vmem:[#allocation3 + $0x150] sm:$0xf] %v1458
        %1658 = vst [vmem:[#allocation3 + $0x15c] sm:$0xf] %v1468
        %1659 = vst [vmem:[#allocation3 + $0x168] sm:$0xf] %v1482
        %1660 = vst [vmem:[#allocation3 + $0x174] sm:$0xf] %v1492
        %1661 = vst [vmem:[#allocation3 + $0x180] sm:$0xf] %v1506
        %1662 = vst [vmem:[#allocation3 + $0x18c] sm:$0xf] %v1516
        %1663 = vst [vmem:[#allocation3 + $0x198] sm:$0xf] %v1530
        %1664 = vst [vmem:[#allocation3 + $0x1a4] sm:$0xf] %v1540
        %1665 = vst [vmem:[#allocation3 + $0x1b0] sm:$0xf] %v1554
        %1666 = vst [vmem:[#allocation3 + $0x1bc] sm:$0xf] %v1564
        %1667 = vst [vmem:[#allocation3 + $0x1c8] sm:$0xf] %v1578
        %1668 = vst [vmem:[#allocation3 + $0x1d4] sm:$0xf] %v1588
        %v1669 = vld [vmem:[#allocation2] sm:$0xe]
        %v1670 = vld [vmem:[#allocation2 + $0x4] sm:$0xf]
        %v1671 = vld [vmem:[#allocation2 + $0x8] sm:$0x1]
        %v1672 = vld [vmem:[#allocation2 + $0xc] sm:$0xe]
        %v1673 = vld [vmem:[#allocation2 + $0x10] sm:$0xf]
        %v1674 = vld [vmem:[#allocation2 + $0x14] sm:$0x1]
        %v1675 = vld [vmem:[#allocation2 + $0x18] sm:$0xe]
        %v1676 = vld [vmem:[#allocation2 + $0x1c] sm:$0xf]
        %v1677 = vld [vmem:[#allocation2 + $0x20] sm:$0x1]
        %v1678 = vld [vmem:[#allocation2 + $0x24] sm:$0xe]
        %v1679 = vld [vmem:[#allocation2 + $0x28] sm:$0xf]
        %v1680 = vld [vmem:[#allocation2 + $0x2c] sm:$0x1]
        %v1681 = vld [vmem:[#allocation2 + $0x30] sm:$0xe]
        %v1682 = vld [vmem:[#allocation2 + $0x34] sm:$0xf]
        %v1683 = vld [vmem:[#allocation2 + $0x38] sm:$0x1]
        %v1684 = vld [vmem:[#allocation2 + $0x3c] sm:$0xe]
        %v1685 = vld [vmem:[#allocation2 + $0x40] sm:$0xf]
        %v1686 = vld [vmem:[#allocation2 + $0x44] sm:$0x1]
        %v1687 = vld [vmem:[#allocation2 + $0x48] sm:$0xe]
        %v1688 = vld [vmem:[#allocation2 + $0x4c] sm:$0xf]
        %v1689 = vld [vmem:[#allocation2 + $0x50] sm:$0x1]
        %v1690 = vld [vmem:[#allocation2 + $0x54] sm:$0xe]
        %v1691 = vld [vmem:[#allocation2 + $0x58] sm:$0xf]
        %v1692 = vld [vmem:[#allocation2 + $0x5c] sm:$0x1]
        %v1693 = vld [vmem:[#allocation2 + $0x60] sm:$0xe]
        %v1694 = vld [vmem:[#allocation2 + $0x64] sm:$0xf]
        %v1695 = vld [vmem:[#allocation2 + $0x68] sm:$0x1]
        %v1696 = vld [vmem:[#allocation2 + $0x6c] sm:$0xe]
        %v1697 = vld [vmem:[#allocation2 + $0x70] sm:$0xf]
        %v1698 = vld [vmem:[#allocation2 + $0x74] sm:$0x1]
        %v1699 = vld [vmem:[#allocation2 + $0x78] sm:$0xe]
        %v1700 = vld [vmem:[#allocation2 + $0x7c] sm:$0xf]
        %v1701 = vld [vmem:[#allocation2 + $0x80] sm:$0x1]
        %v1702 = vld [vmem:[#allocation2 + $0x84] sm:$0xe]
        %v1703 = vld [vmem:[#allocation2 + $0x88] sm:$0xf]
        %v1704 = vld [vmem:[#allocation2 + $0x8c] sm:$0x1]
        %v1705 = vld [vmem:[#allocation2 + $0x90] sm:$0xe]
        %v1706 = vld [vmem:[#allocation2 + $0x94] sm:$0xf]
        %v1707 = vld [vmem:[#allocation2 + $0x98] sm:$0x1]
        %v1708 = vld [vmem:[#allocation2 + $0x9c] sm:$0xe]
        %v1709 = vld [vmem:[#allocation2 + $0xa0] sm:$0xf]
        %v1710 = vld [vmem:[#allocation2 + $0xa4] sm:$0x1]
        %v1711 = vld [vmem:[#allocation2 + $0xa8] sm:$0xe]
        %v1712 = vld [vmem:[#allocation2 + $0xac] sm:$0xf]
        %v1713 = vld [vmem:[#allocation2 + $0xb0] sm:$0x1]
        %v1714 = vld [vmem:[#allocation2 + $0xb4] sm:$0xe]
        %v1715 = vld [vmem:[#allocation2 + $0xb8] sm:$0xf]
        %v1716 = vld [vmem:[#allocation2 + $0xbc] sm:$0x1]
        %v1717 = vld [vmem:[#allocation2 + $0xc0] sm:$0xe]
        %v1718 = vld [vmem:[#allocation2 + $0xc4] sm:$0xf]
        %v1719 = vld [vmem:[#allocation2 + $0xc8] sm:$0x1]
        %v1720 = vld [vmem:[#allocation2 + $0xcc] sm:$0xe]
        %v1721 = vld [vmem:[#allocation2 + $0xd0] sm:$0xf]
        %v1722 = vld [vmem:[#allocation2 + $0xd4] sm:$0x1]
        %v1723 = vld [vmem:[#allocation2 + $0xd8] sm:$0xe]
        %v1724 = vld [vmem:[#allocation2 + $0xdc] sm:$0xf]
        %v1725 = vld [vmem:[#allocation2 + $0xe0] sm:$0x1]
        %v1726 = vld [vmem:[#allocation2 + $0xe4] sm:$0xe]
        %v1727 = vld [vmem:[#allocation2 + $0xe8] sm:$0xf]
        %v1728 = vld [vmem:[#allocation2 + $0xec] sm:$0x1]
        %vm1789 = vcmask 1042432
        %vm1790 = vcmask 1046532
        %vm1791 = vmor %vm1789, %vm1790
        %v1792 = vrot.slane %v1669, 5
        %v1793 = vrot.slane %v1792, 4
        %v1794 = vrot.slane %v1670, 5
        %v1795 = vsel %vm1791, %v1793, %v1794
        %v1796 = vrot.slane %v1794, 4
        %v1797 = vrot.slane %v1671, 5
        %v1798 = vsel %vm1791, %v1796, %v1797
        %v1799 = vrot.slane %v1672, 5
        %v1800 = vrot.slane %v1799, 4
        %v1801 = vrot.slane %v1673, 5
        %v1802 = vsel %vm1791, %v1800, %v1801
        %v1803 = vrot.slane %v1801, 4
        %v1804 = vrot.slane %v1674, 5
        %v1805 = vsel %vm1791, %v1803, %v1804
        %v1806 = vrot.slane %v1675, 5
        %v1807 = vrot.slane %v1806, 4
        %v1808 = vrot.slane %v1676, 5
        %v1809 = vsel %vm1791, %v1807, %v1808
        %v1810 = vrot.slane %v1808, 4
        %v1811 = vrot.slane %v1677, 5
        %v1812 = vsel %vm1791, %v1810, %v1811
        %v1813 = vrot.slane %v1678, 5
        %v1814 = vrot.slane %v1813, 4
        %v1815 = vrot.slane %v1679, 5
        %v1816 = vsel %vm1791, %v1814, %v1815
        %v1817 = vrot.slane %v1815, 4
        %v1818 = vrot.slane %v1680, 5
        %v1819 = vsel %vm1791, %v1817, %v1818
        %v1820 = vrot.slane %v1681, 5
        %v1821 = vrot.slane %v1820, 4
        %v1822 = vrot.slane %v1682, 5
        %v1823 = vsel %vm1791, %v1821, %v1822
        %v1824 = vrot.slane %v1822, 4
        %v1825 = vrot.slane %v1683, 5
        %v1826 = vsel %vm1791, %v1824, %v1825
        %v1827 = vrot.slane %v1684, 5
        %v1828 = vrot.slane %v1827, 4
        %v1829 = vrot.slane %v1685, 5
        %v1830 = vsel %vm1791, %v1828, %v1829
        %v1831 = vrot.slane %v1829, 4
        %v1832 = vrot.slane %v1686, 5
        %v1833 = vsel %vm1791, %v1831, %v1832
        %v1834 = vrot.slane %v1687, 5
        %v1835 = vrot.slane %v1834, 4
        %v1836 = vrot.slane %v1688, 5
        %v1837 = vsel %vm1791, %v1835, %v1836
        %v1838 = vrot.slane %v1836, 4
        %v1839 = vrot.slane %v1689, 5
        %v1840 = vsel %vm1791, %v1838, %v1839
        %v1841 = vrot.slane %v1690, 5
        %v1842 = vrot.slane %v1841, 4
        %v1843 = vrot.slane %v1691, 5
        %v1844 = vsel %vm1791, %v1842, %v1843
        %v1845 = vrot.slane %v1843, 4
        %v1846 = vrot.slane %v1692, 5
        %v1847 = vsel %vm1791, %v1845, %v1846
        %v1848 = vrot.slane %v1693, 5
        %v1849 = vrot.slane %v1848, 4
        %v1850 = vrot.slane %v1694, 5
        %v1851 = vsel %vm1791, %v1849, %v1850
        %v1852 = vrot.slane %v1850, 4
        %v1853 = vrot.slane %v1695, 5
        %v1854 = vsel %vm1791, %v1852, %v1853
        %v1855 = vrot.slane %v1696, 5
        %v1856 = vrot.slane %v1855, 4
        %v1857 = vrot.slane %v1697, 5
        %v1858 = vsel %vm1791, %v1856, %v1857
        %v1859 = vrot.slane %v1857, 4
        %v1860 = vrot.slane %v1698, 5
        %v1861 = vsel %vm1791, %v1859, %v1860
        %v1862 = vrot.slane %v1699, 5
        %v1863 = vrot.slane %v1862, 4
        %v1864 = vrot.slane %v1700, 5
        %v1865 = vsel %vm1791, %v1863, %v1864
        %v1866 = vrot.slane %v1864, 4
        %v1867 = vrot.slane %v1701, 5
        %v1868 = vsel %vm1791, %v1866, %v1867
        %v1869 = vrot.slane %v1702, 5
        %v1870 = vrot.slane %v1869, 4
        %v1871 = vrot.slane %v1703, 5
        %v1872 = vsel %vm1791, %v1870, %v1871
        %v1873 = vrot.slane %v1871, 4
        %v1874 = vrot.slane %v1704, 5
        %v1875 = vsel %vm1791, %v1873, %v1874
        %v1876 = vrot.slane %v1705, 5
        %v1877 = vrot.slane %v1876, 4
        %v1878 = vrot.slane %v1706, 5
        %v1879 = vsel %vm1791, %v1877, %v1878
        %v1880 = vrot.slane %v1878, 4
        %v1881 = vrot.slane %v1707, 5
        %v1882 = vsel %vm1791, %v1880, %v1881
        %v1883 = vrot.slane %v1708, 5
        %v1884 = vrot.slane %v1883, 4
        %v1885 = vrot.slane %v1709, 5
        %v1886 = vsel %vm1791, %v1884, %v1885
        %v1887 = vrot.slane %v1885, 4
        %v1888 = vrot.slane %v1710, 5
        %v1889 = vsel %vm1791, %v1887, %v1888
        %v1890 = vrot.slane %v1711, 5
        %v1891 = vrot.slane %v1890, 4
        %v1892 = vrot.slane %v1712, 5
        %v1893 = vsel %vm1791, %v1891, %v1892
        %v1894 = vrot.slane %v1892, 4
        %v1895 = vrot.slane %v1713, 5
        %v1896 = vsel %vm1791, %v1894, %v1895
        %v1897 = vrot.slane %v1714, 5
        %v1898 = vrot.slane %v1897, 4
        %v1899 = vrot.slane %v1715, 5
        %v1900 = vsel %vm1791, %v1898, %v1899
        %v1901 = vrot.slane %v1899, 4
        %v1902 = vrot.slane %v1716, 5
        %v1903 = vsel %vm1791, %v1901, %v1902
        %v1904 = vrot.slane %v1717, 5
        %v1905 = vrot.slane %v1904, 4
        %v1906 = vrot.slane %v1718, 5
        %v1907 = vsel %vm1791, %v1905, %v1906
        %v1908 = vrot.slane %v1906, 4
        %v1909 = vrot.slane %v1719, 5
        %v1910 = vsel %vm1791, %v1908, %v1909
        %v1911 = vrot.slane %v1720, 5
        %v1912 = vrot.slane %v1911, 4
        %v1913 = vrot.slane %v1721, 5
        %v1914 = vsel %vm1791, %v1912, %v1913
        %v1915 = vrot.slane %v1913, 4
        %v1916 = vrot.slane %v1722, 5
        %v1917 = vsel %vm1791, %v1915, %v1916
        %v1918 = vrot.slane %v1723, 5
        %v1919 = vrot.slane %v1918, 4
        %v1920 = vrot.slane %v1724, 5
        %v1921 = vsel %vm1791, %v1919, %v1920
        %v1922 = vrot.slane %v1920, 4
        %v1923 = vrot.slane %v1725, 5
        %v1924 = vsel %vm1791, %v1922, %v1923
        %v1925 = vrot.slane %v1726, 5
        %v1926 = vrot.slane %v1925, 4
        %v1927 = vrot.slane %v1727, 5
        %v1928 = vsel %vm1791, %v1926, %v1927
        %v1929 = vrot.slane %v1927, 4
        %v1930 = vrot.slane %v1728, 5
        %v1931 = vsel %vm1791, %v1929, %v1930
        %1972 = vst [vmem:[#allocation3 + $0x4] sm:$0xf] %v1795
        %1973 = vst [vmem:[#allocation3 + $0x10] sm:$0xf] %v1798
        %1974 = vst [vmem:[#allocation3 + $0x1c] sm:$0xf] %v1802
        %1975 = vst [vmem:[#allocation3 + $0x28] sm:$0xf] %v1805
        %1976 = vst [vmem:[#allocation3 + $0x34] sm:$0xf] %v1809
        %1977 = vst [vmem:[#allocation3 + $0x40] sm:$0xf] %v1812
        %1978 = vst [vmem:[#allocation3 + $0x4c] sm:$0xf] %v1816
        %1979 = vst [vmem:[#allocation3 + $0x58] sm:$0xf] %v1819
        %1980 = vst [vmem:[#allocation3 + $0x64] sm:$0xf] %v1823
        %1981 = vst [vmem:[#allocation3 + $0x70] sm:$0xf] %v1826
        %1982 = vst [vmem:[#allocation3 + $0x7c] sm:$0xf] %v1830
        %1983 = vst [vmem:[#allocation3 + $0x88] sm:$0xf] %v1833
        %1984 = vst [vmem:[#allocation3 + $0x94] sm:$0xf] %v1837
        %1985 = vst [vmem:[#allocation3 + $0xa0] sm:$0xf] %v1840
        %1986 = vst [vmem:[#allocation3 + $0xac] sm:$0xf] %v1844
        %1987 = vst [vmem:[#allocation3 + $0xb8] sm:$0xf] %v1847
        %1988 = vst [vmem:[#allocation3 + $0xc4] sm:$0xf] %v1851
        %1989 = vst [vmem:[#allocation3 + $0xd0] sm:$0xf] %v1854
        %1990 = vst [vmem:[#allocation3 + $0xdc] sm:$0xf] %v1858
        %1991 = vst [vmem:[#allocation3 + $0xe8] sm:$0xf] %v1861
        %1992 = vst [vmem:[#allocation3 + $0xf4] sm:$0xf] %v1865
        %1993 = vst [vmem:[#allocation3 + $0x100] sm:$0xf] %v1868
        %1994 = vst [vmem:[#allocation3 + $0x10c] sm:$0xf] %v1872
        %1995 = vst [vmem:[#allocation3 + $0x118] sm:$0xf] %v1875
        %1996 = vst [vmem:[#allocation3 + $0x124] sm:$0xf] %v1879
        %1997 = vst [vmem:[#allocation3 + $0x130] sm:$0xf] %v1882
        %1998 = vst [vmem:[#allocation3 + $0x13c] sm:$0xf] %v1886
        %1999 = vst [vmem:[#allocation3 + $0x148] sm:$0xf] %v1889
        %2000 = vst [vmem:[#allocation3 + $0x154] sm:$0xf] %v1893
        %2001 = vst [vmem:[#allocation3 + $0x160] sm:$0xf] %v1896
        %2002 = vst [vmem:[#allocation3 + $0x16c] sm:$0xf] %v1900
        %2003 = vst [vmem:[#allocation3 + $0x178] sm:$0xf] %v1903
        %2004 = vst [vmem:[#allocation3 + $0x184] sm:$0xf] %v1907
        %2005 = vst [vmem:[#allocation3 + $0x190] sm:$0xf] %v1910
        %2006 = vst [vmem:[#allocation3 + $0x19c] sm:$0xf] %v1914
        %2007 = vst [vmem:[#allocation3 + $0x1a8] sm:$0xf] %v1917
        %2008 = vst [vmem:[#allocation3 + $0x1b4] sm:$0xf] %v1921
        %2009 = vst [vmem:[#allocation3 + $0x1c0] sm:$0xf] %v1924
        %2010 = vst [vmem:[#allocation3 + $0x1cc] sm:$0xf] %v1928
        %2011 = vst [vmem:[#allocation3 + $0x1d8] sm:$0xf] %v1931
        %v2012 = vld [vmem:[#allocation2] sm:$0xe]
        %v2013 = vld [vmem:[#allocation2 + $0x4] sm:$0xf]
        %v2014 = vld [vmem:[#allocation2 + $0x8] sm:$0x3]
        %v2015 = vld [vmem:[#allocation2 + $0xc] sm:$0xe]
        %v2016 = vld [vmem:[#allocation2 + $0x10] sm:$0xf]
        %v2017 = vld [vmem:[#allocation2 + $0x14] sm:$0x3]
        %v2018 = vld [vmem:[#allocation2 + $0x18] sm:$0xe]
        %v2019 = vld [vmem:[#allocation2 + $0x1c] sm:$0xf]
        %v2020 = vld [vmem:[#allocation2 + $0x20] sm:$0x3]
        %v2021 = vld [vmem:[#allocation2 + $0x24] sm:$0xe]
        %v2022 = vld [vmem:[#allocation2 + $0x28] sm:$0xf]
        %v2023 = vld [vmem:[#allocation2 + $0x2c] sm:$0x3]
        %v2024 = vld [vmem:[#allocation2 + $0x30] sm:$0xe]
        %v2025 = vld [vmem:[#allocation2 + $0x34] sm:$0xf]
        %v2026 = vld [vmem:[#allocation2 + $0x38] sm:$0x3]
        %v2027 = vld [vmem:[#allocation2 + $0x3c] sm:$0xe]
        %v2028 = vld [vmem:[#allocation2 + $0x40] sm:$0xf]
        %v2029 = vld [vmem:[#allocation2 + $0x44] sm:$0x3]
        %v2030 = vld [vmem:[#allocation2 + $0x48] sm:$0xe]
        %v2031 = vld [vmem:[#allocation2 + $0x4c] sm:$0xf]
        %v2032 = vld [vmem:[#allocation2 + $0x50] sm:$0x3]
        %v2033 = vld [vmem:[#allocation2 + $0x54] sm:$0xe]
        %v2034 = vld [vmem:[#allocation2 + $0x58] sm:$0xf]
        %v2035 = vld [vmem:[#allocation2 + $0x5c] sm:$0x3]
        %v2036 = vld [vmem:[#allocation2 + $0x60] sm:$0xe]
        %v2037 = vld [vmem:[#allocation2 + $0x64] sm:$0xf]
        %v2038 = vld [vmem:[#allocation2 + $0x68] sm:$0x3]
        %v2039 = vld [vmem:[#allocation2 + $0x6c] sm:$0xe]
        %v2040 = vld [vmem:[#allocation2 + $0x70] sm:$0xf]
        %v2041 = vld [vmem:[#allocation2 + $0x74] sm:$0x3]
        %v2042 = vld [vmem:[#allocation2 + $0x78] sm:$0xe]
        %v2043 = vld [vmem:[#allocation2 + $0x7c] sm:$0xf]
        %v2044 = vld [vmem:[#allocation2 + $0x80] sm:$0x3]
        %v2045 = vld [vmem:[#allocation2 + $0x84] sm:$0xe]
        %v2046 = vld [vmem:[#allocation2 + $0x88] sm:$0xf]
        %v2047 = vld [vmem:[#allocation2 + $0x8c] sm:$0x3]
        %v2048 = vld [vmem:[#allocation2 + $0x90] sm:$0xe]
        %v2049 = vld [vmem:[#allocation2 + $0x94] sm:$0xf]
        %v2050 = vld [vmem:[#allocation2 + $0x98] sm:$0x3]
        %v2051 = vld [vmem:[#allocation2 + $0x9c] sm:$0xe]
        %v2052 = vld [vmem:[#allocation2 + $0xa0] sm:$0xf]
        %v2053 = vld [vmem:[#allocation2 + $0xa4] sm:$0x3]
        %v2054 = vld [vmem:[#allocation2 + $0xa8] sm:$0xe]
        %v2055 = vld [vmem:[#allocation2 + $0xac] sm:$0xf]
        %v2056 = vld [vmem:[#allocation2 + $0xb0] sm:$0x3]
        %v2057 = vld [vmem:[#allocation2 + $0xb4] sm:$0xe]
        %v2058 = vld [vmem:[#allocation2 + $0xb8] sm:$0xf]
        %v2059 = vld [vmem:[#allocation2 + $0xbc] sm:$0x3]
        %v2060 = vld [vmem:[#allocation2 + $0xc0] sm:$0xe]
        %v2061 = vld [vmem:[#allocation2 + $0xc4] sm:$0xf]
        %v2062 = vld [vmem:[#allocation2 + $0xc8] sm:$0x3]
        %v2063 = vld [vmem:[#allocation2 + $0xcc] sm:$0xe]
        %v2064 = vld [vmem:[#allocation2 + $0xd0] sm:$0xf]
        %v2065 = vld [vmem:[#allocation2 + $0xd4] sm:$0x3]
        %v2066 = vld [vmem:[#allocation2 + $0xd8] sm:$0xe]
        %v2067 = vld [vmem:[#allocation2 + $0xdc] sm:$0xf]
        %v2068 = vld [vmem:[#allocation2 + $0xe0] sm:$0x3]
        %v2069 = vld [vmem:[#allocation2 + $0xe4] sm:$0xe]
        %v2070 = vld [vmem:[#allocation2 + $0xe8] sm:$0xf]
        %v2071 = vld [vmem:[#allocation2 + $0xec] sm:$0x3]
        %vm2072 = vsmask.f32 2304
        %vm2073 = vsmask.f32 6416
        %vm2074 = vmor %vm2072, %vm2073
        %v2076 = vshrl.u32 %v2012, 16
        %v2078 = vrot.slane %v2076, 5
        %v2079 = vshll.u32 %v2012, 16
        %v2081 = vrot.slane %v2079, 6
        %v2082 = vor.u32 %v2078, %v2081
        %v2083 = vrot.slane %v2082, 4
        %v2085 = vshrl.u32 %v2013, 16
        %v2087 = vrot.slane %v2085, 5
        %v2088 = vshll.u32 %v2013, 16
        %v2090 = vrot.slane %v2088, 6
        %v2091 = vor.u32 %v2087, %v2090
        %v2092 = vsel %vm2074, %v2083, %v2091
        %v2093 = vrot.slane %v2091, 4
        %v2095 = vshrl.u32 %v2014, 16
        %v2097 = vrot.slane %v2095, 5
        %v2098 = vshll.u32 %v2014, 16
        %v2100 = vrot.slane %v2098, 6
        %v2101 = vor.u32 %v2097, %v2100
        %v2102 = vsel %vm2074, %v2093, %v2101
        %v2104 = vshrl.u32 %v2015, 16
        %v2106 = vrot.slane %v2104, 5
        %v2107 = vshll.u32 %v2015, 16
        %v2109 = vrot.slane %v2107, 6
        %v2110 = vor.u32 %v2106, %v2109
        %v2111 = vrot.slane %v2110, 4
        %v2113 = vshrl.u32 %v2016, 16
        %v2115 = vrot.slane %v2113, 5
        %v2116 = vshll.u32 %v2016, 16
        %v2118 = vrot.slane %v2116, 6
        %v2119 = vor.u32 %v2115, %v2118
        %v2120 = vsel %vm2074, %v2111, %v2119
        %v2121 = vrot.slane %v2119, 4
        %v2123 = vshrl.u32 %v2017, 16
        %v2125 = vrot.slane %v2123, 5
        %v2126 = vshll.u32 %v2017, 16
        %v2128 = vrot.slane %v2126, 6
        %v2129 = vor.u32 %v2125, %v2128
        %v2130 = vsel %vm2074, %v2121, %v2129
        %v2132 = vshrl.u32 %v2018, 16
        %v2134 = vrot.slane %v2132, 5
        %v2135 = vshll.u32 %v2018, 16
        %v2137 = vrot.slane %v2135, 6
        %v2138 = vor.u32 %v2134, %v2137
        %v2139 = vrot.slane %v2138, 4
        %v2141 = vshrl.u32 %v2019, 16
        %v2143 = vrot.slane %v2141, 5
        %v2144 = vshll.u32 %v2019, 16
        %v2146 = vrot.slane %v2144, 6
        %v2147 = vor.u32 %v2143, %v2146
        %v2148 = vsel %vm2074, %v2139, %v2147
        %v2149 = vrot.slane %v2147, 4
        %v2151 = vshrl.u32 %v2020, 16
        %v2153 = vrot.slane %v2151, 5
        %v2154 = vshll.u32 %v2020, 16
        %v2156 = vrot.slane %v2154, 6
        %v2157 = vor.u32 %v2153, %v2156
        %v2158 = vsel %vm2074, %v2149, %v2157
        %v2160 = vshrl.u32 %v2021, 16
        %v2162 = vrot.slane %v2160, 5
        %v2163 = vshll.u32 %v2021, 16
        %v2165 = vrot.slane %v2163, 6
        %v2166 = vor.u32 %v2162, %v2165
        %v2167 = vrot.slane %v2166, 4
        %v2169 = vshrl.u32 %v2022, 16
        %v2171 = vrot.slane %v2169, 5
        %v2172 = vshll.u32 %v2022, 16
        %v2174 = vrot.slane %v2172, 6
        %v2175 = vor.u32 %v2171, %v2174
        %v2176 = vsel %vm2074, %v2167, %v2175
        %v2177 = vrot.slane %v2175, 4
        %v2179 = vshrl.u32 %v2023, 16
        %v2181 = vrot.slane %v2179, 5
        %v2182 = vshll.u32 %v2023, 16
        %v2184 = vrot.slane %v2182, 6
        %v2185 = vor.u32 %v2181, %v2184
        %v2186 = vsel %vm2074, %v2177, %v2185
        %v2188 = vshrl.u32 %v2024, 16
        %v2190 = vrot.slane %v2188, 5
        %v2191 = vshll.u32 %v2024, 16
        %v2193 = vrot.slane %v2191, 6
        %v2194 = vor.u32 %v2190, %v2193
        %v2195 = vrot.slane %v2194, 4
        %v2197 = vshrl.u32 %v2025, 16
        %v2199 = vrot.slane %v2197, 5
        %v2200 = vshll.u32 %v2025, 16
        %v2202 = vrot.slane %v2200, 6
        %v2203 = vor.u32 %v2199, %v2202
        %v2204 = vsel %vm2074, %v2195, %v2203
        %v2205 = vrot.slane %v2203, 4
        %v2207 = vshrl.u32 %v2026, 16
        %v2209 = vrot.slane %v2207, 5
        %v2210 = vshll.u32 %v2026, 16
        %v2212 = vrot.slane %v2210, 6
        %v2213 = vor.u32 %v2209, %v2212
        %v2214 = vsel %vm2074, %v2205, %v2213
        %v2216 = vshrl.u32 %v2027, 16
        %v2218 = vrot.slane %v2216, 5
        %v2219 = vshll.u32 %v2027, 16
        %v2221 = vrot.slane %v2219, 6
        %v2222 = vor.u32 %v2218, %v2221
        %v2223 = vrot.slane %v2222, 4
        %v2225 = vshrl.u32 %v2028, 16
        %v2227 = vrot.slane %v2225, 5
        %v2228 = vshll.u32 %v2028, 16
        %v2230 = vrot.slane %v2228, 6
        %v2231 = vor.u32 %v2227, %v2230
        %v2232 = vsel %vm2074, %v2223, %v2231
        %v2233 = vrot.slane %v2231, 4
        %v2235 = vshrl.u32 %v2029, 16
        %v2237 = vrot.slane %v2235, 5
        %v2238 = vshll.u32 %v2029, 16
        %v2240 = vrot.slane %v2238, 6
        %v2241 = vor.u32 %v2237, %v2240
        %v2242 = vsel %vm2074, %v2233, %v2241
        %v2244 = vshrl.u32 %v2030, 16
        %v2246 = vrot.slane %v2244, 5
        %v2247 = vshll.u32 %v2030, 16
        %v2249 = vrot.slane %v2247, 6
        %v2250 = vor.u32 %v2246, %v2249
        %v2251 = vrot.slane %v2250, 4
        %v2253 = vshrl.u32 %v2031, 16
        %v2255 = vrot.slane %v2253, 5
        %v2256 = vshll.u32 %v2031, 16
        %v2258 = vrot.slane %v2256, 6
        %v2259 = vor.u32 %v2255, %v2258
        %v2260 = vsel %vm2074, %v2251, %v2259
        %v2261 = vrot.slane %v2259, 4
        %v2263 = vshrl.u32 %v2032, 16
        %v2265 = vrot.slane %v2263, 5
        %v2266 = vshll.u32 %v2032, 16
        %v2268 = vrot.slane %v2266, 6
        %v2269 = vor.u32 %v2265, %v2268
        %v2270 = vsel %vm2074, %v2261, %v2269
        %v2272 = vshrl.u32 %v2033, 16
        %v2274 = vrot.slane %v2272, 5
        %v2275 = vshll.u32 %v2033, 16
        %v2277 = vrot.slane %v2275, 6
        %v2278 = vor.u32 %v2274, %v2277
        %v2279 = vrot.slane %v2278, 4
        %v2281 = vshrl.u32 %v2034, 16
        %v2283 = vrot.slane %v2281, 5
        %v2284 = vshll.u32 %v2034, 16
        %v2286 = vrot.slane %v2284, 6
        %v2287 = vor.u32 %v2283, %v2286
        %v2288 = vsel %vm2074, %v2279, %v2287
        %v2289 = vrot.slane %v2287, 4
        %v2291 = vshrl.u32 %v2035, 16
        %v2293 = vrot.slane %v2291, 5
        %v2294 = vshll.u32 %v2035, 16
        %v2296 = vrot.slane %v2294, 6
        %v2297 = vor.u32 %v2293, %v2296
        %v2298 = vsel %vm2074, %v2289, %v2297
        %v2300 = vshrl.u32 %v2036, 16
        %v2302 = vrot.slane %v2300, 5
        %v2303 = vshll.u32 %v2036, 16
        %v2305 = vrot.slane %v2303, 6
        %v2306 = vor.u32 %v2302, %v2305
        %v2307 = vrot.slane %v2306, 4
        %v2309 = vshrl.u32 %v2037, 16
        %v2311 = vrot.slane %v2309, 5
        %v2312 = vshll.u32 %v2037, 16
        %v2314 = vrot.slane %v2312, 6
        %v2315 = vor.u32 %v2311, %v2314
        %v2316 = vsel %vm2074, %v2307, %v2315
        %v2317 = vrot.slane %v2315, 4
        %v2319 = vshrl.u32 %v2038, 16
        %v2321 = vrot.slane %v2319, 5
        %v2322 = vshll.u32 %v2038, 16
        %v2324 = vrot.slane %v2322, 6
        %v2325 = vor.u32 %v2321, %v2324
        %v2326 = vsel %vm2074, %v2317, %v2325
        %v2328 = vshrl.u32 %v2039, 16
        %v2330 = vrot.slane %v2328, 5
        %v2331 = vshll.u32 %v2039, 16
        %v2333 = vrot.slane %v2331, 6
        %v2334 = vor.u32 %v2330, %v2333
        %v2335 = vrot.slane %v2334, 4
        %v2337 = vshrl.u32 %v2040, 16
        %v2339 = vrot.slane %v2337, 5
        %v2340 = vshll.u32 %v2040, 16
        %v2342 = vrot.slane %v2340, 6
        %v2343 = vor.u32 %v2339, %v2342
        %v2344 = vsel %vm2074, %v2335, %v2343
        %v2345 = vrot.slane %v2343, 4
        %v2347 = vshrl.u32 %v2041, 16
        %v2349 = vrot.slane %v2347, 5
        %v2350 = vshll.u32 %v2041, 16
        %v2352 = vrot.slane %v2350, 6
        %v2353 = vor.u32 %v2349, %v2352
        %v2354 = vsel %vm2074, %v2345, %v2353
        %v2356 = vshrl.u32 %v2042, 16
        %v2358 = vrot.slane %v2356, 5
        %v2359 = vshll.u32 %v2042, 16
        %v2361 = vrot.slane %v2359, 6
        %v2362 = vor.u32 %v2358, %v2361
        %v2363 = vrot.slane %v2362, 4
        %v2365 = vshrl.u32 %v2043, 16
        %v2367 = vrot.slane %v2365, 5
        %v2368 = vshll.u32 %v2043, 16
        %v2370 = vrot.slane %v2368, 6
        %v2371 = vor.u32 %v2367, %v2370
        %v2372 = vsel %vm2074, %v2363, %v2371
        %v2373 = vrot.slane %v2371, 4
        %v2375 = vshrl.u32 %v2044, 16
        %v2377 = vrot.slane %v2375, 5
        %v2378 = vshll.u32 %v2044, 16
        %v2380 = vrot.slane %v2378, 6
        %v2381 = vor.u32 %v2377, %v2380
        %v2382 = vsel %vm2074, %v2373, %v2381
        %v2384 = vshrl.u32 %v2045, 16
        %v2386 = vrot.slane %v2384, 5
        %v2387 = vshll.u32 %v2045, 16
        %v2389 = vrot.slane %v2387, 6
        %v2390 = vor.u32 %v2386, %v2389
        %v2391 = vrot.slane %v2390, 4
        %v2393 = vshrl.u32 %v2046, 16
        %v2395 = vrot.slane %v2393, 5
        %v2396 = vshll.u32 %v2046, 16
        %v2398 = vrot.slane %v2396, 6
        %v2399 = vor.u32 %v2395, %v2398
        %v2400 = vsel %vm2074, %v2391, %v2399
        %v2401 = vrot.slane %v2399, 4
        %v2403 = vshrl.u32 %v2047, 16
        %v2405 = vrot.slane %v2403, 5
        %v2406 = vshll.u32 %v2047, 16
        %v2408 = vrot.slane %v2406, 6
        %v2409 = vor.u32 %v2405, %v2408
        %v2410 = vsel %vm2074, %v2401, %v2409
        %v2412 = vshrl.u32 %v2048, 16
        %v2414 = vrot.slane %v2412, 5
        %v2415 = vshll.u32 %v2048, 16
        %v2417 = vrot.slane %v2415, 6
        %v2418 = vor.u32 %v2414, %v2417
        %v2419 = vrot.slane %v2418, 4
        %v2421 = vshrl.u32 %v2049, 16
        %v2423 = vrot.slane %v2421, 5
        %v2424 = vshll.u32 %v2049, 16
        %v2426 = vrot.slane %v2424, 6
        %v2427 = vor.u32 %v2423, %v2426
        %v2428 = vsel %vm2074, %v2419, %v2427
        %v2429 = vrot.slane %v2427, 4
        %v2431 = vshrl.u32 %v2050, 16
        %v2433 = vrot.slane %v2431, 5
        %v2434 = vshll.u32 %v2050, 16
        %v2436 = vrot.slane %v2434, 6
        %v2437 = vor.u32 %v2433, %v2436
        %v2438 = vsel %vm2074, %v2429, %v2437
        %v2440 = vshrl.u32 %v2051, 16
        %v2442 = vrot.slane %v2440, 5
        %v2443 = vshll.u32 %v2051, 16
        %v2445 = vrot.slane %v2443, 6
        %v2446 = vor.u32 %v2442, %v2445
        %v2447 = vrot.slane %v2446, 4
        %v2449 = vshrl.u32 %v2052, 16
        %v2451 = vrot.slane %v2449, 5
        %v2452 = vshll.u32 %v2052, 16
        %v2454 = vrot.slane %v2452, 6
        %v2455 = vor.u32 %v2451, %v2454
        %v2456 = vsel %vm2074, %v2447, %v2455
        %v2457 = vrot.slane %v2455, 4
        %v2459 = vshrl.u32 %v2053, 16
        %v2461 = vrot.slane %v2459, 5
        %v2462 = vshll.u32 %v2053, 16
        %v2464 = vrot.slane %v2462, 6
        %v2465 = vor.u32 %v2461, %v2464
        %v2466 = vsel %vm2074, %v2457, %v2465
        %v2468 = vshrl.u32 %v2054, 16
        %v2470 = vrot.slane %v2468, 5
        %v2471 = vshll.u32 %v2054, 16
        %v2473 = vrot.slane %v2471, 6
        %v2474 = vor.u32 %v2470, %v2473
        %v2475 = vrot.slane %v2474, 4
        %v2477 = vshrl.u32 %v2055, 16
        %v2479 = vrot.slane %v2477, 5
        %v2480 = vshll.u32 %v2055, 16
        %v2482 = vrot.slane %v2480, 6
        %v2483 = vor.u32 %v2479, %v2482
        %v2484 = vsel %vm2074, %v2475, %v2483
        %v2485 = vrot.slane %v2483, 4
        %v2487 = vshrl.u32 %v2056, 16
        %v2489 = vrot.slane %v2487, 5
        %v2490 = vshll.u32 %v2056, 16
        %v2492 = vrot.slane %v2490, 6
        %v2493 = vor.u32 %v2489, %v2492
        %v2494 = vsel %vm2074, %v2485, %v2493
        %v2496 = vshrl.u32 %v2057, 16
        %v2498 = vrot.slane %v2496, 5
        %v2499 = vshll.u32 %v2057, 16
        %v2501 = vrot.slane %v2499, 6
        %v2502 = vor.u32 %v2498, %v2501
        %v2503 = vrot.slane %v2502, 4
        %v2505 = vshrl.u32 %v2058, 16
        %v2507 = vrot.slane %v2505, 5
        %v2508 = vshll.u32 %v2058, 16
        %v2510 = vrot.slane %v2508, 6
        %v2511 = vor.u32 %v2507, %v2510
        %v2512 = vsel %vm2074, %v2503, %v2511
        %v2513 = vrot.slane %v2511, 4
        %v2515 = vshrl.u32 %v2059, 16
        %v2517 = vrot.slane %v2515, 5
        %v2518 = vshll.u32 %v2059, 16
        %v2520 = vrot.slane %v2518, 6
        %v2521 = vor.u32 %v2517, %v2520
        %v2522 = vsel %vm2074, %v2513, %v2521
        %v2524 = vshrl.u32 %v2060, 16
        %v2526 = vrot.slane %v2524, 5
        %v2527 = vshll.u32 %v2060, 16
        %v2529 = vrot.slane %v2527, 6
        %v2530 = vor.u32 %v2526, %v2529
        %v2531 = vrot.slane %v2530, 4
        %v2533 = vshrl.u32 %v2061, 16
        %v2535 = vrot.slane %v2533, 5
        %v2536 = vshll.u32 %v2061, 16
        %v2538 = vrot.slane %v2536, 6
        %v2539 = vor.u32 %v2535, %v2538
        %v2540 = vsel %vm2074, %v2531, %v2539
        %v2541 = vrot.slane %v2539, 4
        %v2543 = vshrl.u32 %v2062, 16
        %v2545 = vrot.slane %v2543, 5
        %v2546 = vshll.u32 %v2062, 16
        %v2548 = vrot.slane %v2546, 6
        %v2549 = vor.u32 %v2545, %v2548
        %v2550 = vsel %vm2074, %v2541, %v2549
        %v2552 = vshrl.u32 %v2063, 16
        %v2554 = vrot.slane %v2552, 5
        %v2555 = vshll.u32 %v2063, 16
        %v2557 = vrot.slane %v2555, 6
        %v2558 = vor.u32 %v2554, %v2557
        %v2559 = vrot.slane %v2558, 4
        %v2561 = vshrl.u32 %v2064, 16
        %v2563 = vrot.slane %v2561, 5
        %v2564 = vshll.u32 %v2064, 16
        %v2566 = vrot.slane %v2564, 6
        %v2567 = vor.u32 %v2563, %v2566
        %v2568 = vsel %vm2074, %v2559, %v2567
        %v2569 = vrot.slane %v2567, 4
        %v2571 = vshrl.u32 %v2065, 16
        %v2573 = vrot.slane %v2571, 5
        %v2574 = vshll.u32 %v2065, 16
        %v2576 = vrot.slane %v2574, 6
        %v2577 = vor.u32 %v2573, %v2576
        %v2578 = vsel %vm2074, %v2569, %v2577
        %v2580 = vshrl.u32 %v2066, 16
        %v2582 = vrot.slane %v2580, 5
        %v2583 = vshll.u32 %v2066, 16
        %v2585 = vrot.slane %v2583, 6
        %v2586 = vor.u32 %v2582, %v2585
        %v2587 = vrot.slane %v2586, 4
        %v2589 = vshrl.u32 %v2067, 16
        %v2591 = vrot.slane %v2589, 5
        %v2592 = vshll.u32 %v2067, 16
        %v2594 = vrot.slane %v2592, 6
        %v2595 = vor.u32 %v2591, %v2594
        %v2596 = vsel %vm2074, %v2587, %v2595
        %v2597 = vrot.slane %v2595, 4
        %v2599 = vshrl.u32 %v2068, 16
        %v2601 = vrot.slane %v2599, 5
        %v2602 = vshll.u32 %v2068, 16
        %v2604 = vrot.slane %v2602, 6
        %v2605 = vor.u32 %v2601, %v2604
        %v2606 = vsel %vm2074, %v2597, %v2605
        %v2608 = vshrl.u32 %v2069, 16
        %v2610 = vrot.slane %v2608, 5
        %v2611 = vshll.u32 %v2069, 16
        %v2613 = vrot.slane %v2611, 6
        %v2614 = vor.u32 %v2610, %v2613
        %v2615 = vrot.slane %v2614, 4
        %v2617 = vshrl.u32 %v2070, 16
        %v2619 = vrot.slane %v2617, 5
        %v2620 = vshll.u32 %v2070, 16
        %v2622 = vrot.slane %v2620, 6
        %v2623 = vor.u32 %v2619, %v2622
        %v2624 = vsel %vm2074, %v2615, %v2623
        %v2625 = vrot.slane %v2623, 4
        %v2627 = vshrl.u32 %v2071, 16
        %v2629 = vrot.slane %v2627, 5
        %v2630 = vshll.u32 %v2071, 16
        %v2632 = vrot.slane %v2630, 6
        %v2633 = vor.u32 %v2629, %v2632
        %v2634 = vsel %vm2074, %v2625, %v2633
        %2675 = vst [vmem:[#allocation3 + $0x8] sm:$0xf] %v2092
        %2676 = vst [vmem:[#allocation3 + $0x14] sm:$0xf] %v2102
        %2677 = vst [vmem:[#allocation3 + $0x20] sm:$0xf] %v2120
        %2678 = vst [vmem:[#allocation3 + $0x2c] sm:$0xf] %v2130
        %2679 = vst [vmem:[#allocation3 + $0x38] sm:$0xf] %v2148
        %2680 = vst [vmem:[#allocation3 + $0x44] sm:$0xf] %v2158
        %2681 = vst [vmem:[#allocation3 + $0x50] sm:$0xf] %v2176
        %2682 = vst [vmem:[#allocation3 + $0x5c] sm:$0xf] %v2186
        %2683 = vst [vmem:[#allocation3 + $0x68] sm:$0xf] %v2204
        %2684 = vst [vmem:[#allocation3 + $0x74] sm:$0xf] %v2214
        %2685 = vst [vmem:[#allocation3 + $0x80] sm:$0xf] %v2232
        %2686 = vst [vmem:[#allocation3 + $0x8c] sm:$0xf] %v2242
        %2687 = vst [vmem:[#allocation3 + $0x98] sm:$0xf] %v2260
        %2688 = vst [vmem:[#allocation3 + $0xa4] sm:$0xf] %v2270
        %2689 = vst [vmem:[#allocation3 + $0xb0] sm:$0xf] %v2288
        %2690 = vst [vmem:[#allocation3 + $0xbc] sm:$0xf] %v2298
        %2691 = vst [vmem:[#allocation3 + $0xc8] sm:$0xf] %v2316
        %2692 = vst [vmem:[#allocation3 + $0xd4] sm:$0xf] %v2326
        %2693 = vst [vmem:[#allocation3 + $0xe0] sm:$0xf] %v2344
        %2694 = vst [vmem:[#allocation3 + $0xec] sm:$0xf] %v2354
        %2695 = vst [vmem:[#allocation3 + $0xf8] sm:$0xf] %v2372
        %2696 = vst [vmem:[#allocation3 + $0x104] sm:$0xf] %v2382
        %2697 = vst [vmem:[#allocation3 + $0x110] sm:$0xf] %v2400
        %2698 = vst [vmem:[#allocation3 + $0x11c] sm:$0xf] %v2410
        %2699 = vst [vmem:[#allocation3 + $0x128] sm:$0xf] %v2428
        %2700 = vst [vmem:[#allocation3 + $0x134] sm:$0xf] %v2438
        %2701 = vst [vmem:[#allocation3 + $0x140] sm:$0xf] %v2456
        %2702 = vst [vmem:[#allocation3 + $0x14c] sm:$0xf] %v2466
        %2703 = vst [vmem:[#allocation3 + $0x158] sm:$0xf] %v2484
        %2704 = vst [vmem:[#allocation3 + $0x164] sm:$0xf] %v2494
        %2705 = vst [vmem:[#allocation3 + $0x170] sm:$0xf] %v2512
        %2706 = vst [vmem:[#allocation3 + $0x17c] sm:$0xf] %v2522
        %2707 = vst [vmem:[#allocation3 + $0x188] sm:$0xf] %v2540
        %2708 = vst [vmem:[#allocation3 + $0x194] sm:$0xf] %v2550
        %2709 = vst [vmem:[#allocation3 + $0x1a0] sm:$0xf] %v2568
        %2710 = vst [vmem:[#allocation3 + $0x1ac] sm:$0xf] %v2578
        %2711 = vst [vmem:[#allocation3 + $0x1b8] sm:$0xf] %v2596
        %2712 = vst [vmem:[#allocation3 + $0x1c4] sm:$0xf] %v2606
        %2713 = vst [vmem:[#allocation3 + $0x1d0] sm:$0xf] %v2624
        %2714 = vst [vmem:[#allocation3 + $0x1dc] sm:$0xf] %v2634
        %v2715 = vld [vmem:[#allocation3 + $0x18] sm:$0xff]
        %v2716 = vld [vmem:[#allocation3 + $0x20] sm:$0xf]
        %v2717 = vld [vmem:[#allocation3 + $0x24] sm:$0xff]
        %v2718 = vld [vmem:[#allocation3 + $0x2c] sm:$0xf]
        %v2719 = vld [vmem:[#allocation3 + $0x30] sm:$0xff]
        %v2720 = vld [vmem:[#allocation3 + $0x38] sm:$0xf]
        %v2721 = vld [vmem:[#allocation3 + $0x3c] sm:$0xff]
        %v2722 = vld [vmem:[#allocation3 + $0x44] sm:$0xf]
        %v2723 = vld [vmem:[#allocation3 + $0x48] sm:$0xff]
        %v2724 = vld [vmem:[#allocation3 + $0x50] sm:$0xf]
        %v2725 = vld [vmem:[#allocation3 + $0x54] sm:$0xff]
        %v2726 = vld [vmem:[#allocation3 + $0x5c] sm:$0xf]
        %v2727 = vld [vmem:[#allocation3 + $0x60] sm:$0xff]
        %v2728 = vld [vmem:[#allocation3 + $0x68] sm:$0xf]
        %v2729 = vld [vmem:[#allocation3 + $0x6c] sm:$0xff]
        %v2730 = vld [vmem:[#allocation3 + $0x74] sm:$0xf]
        %v2731 = vld [vmem:[#allocation3 + $0x78] sm:$0xff]
        %v2732 = vld [vmem:[#allocation3 + $0x80] sm:$0xf]
        %v2733 = vld [vmem:[#allocation3 + $0x84] sm:$0xff]
        %v2734 = vld [vmem:[#allocation3 + $0x8c] sm:$0xf]
        %v2735 = vld [vmem:[#allocation3 + $0x90] sm:$0xff]
        %v2736 = vld [vmem:[#allocation3 + $0x98] sm:$0xf]
        %v2737 = vld [vmem:[#allocation3 + $0x9c] sm:$0xff]
        %v2738 = vld [vmem:[#allocation3 + $0xa4] sm:$0xf]
        %v2739 = vld [vmem:[#allocation3 + $0xa8] sm:$0xff]
        %v2740 = vld [vmem:[#allocation3 + $0xb0] sm:$0xf]
        %v2741 = vld [vmem:[#allocation3 + $0xb4] sm:$0xff]
        %v2742 = vld [vmem:[#allocation3 + $0xbc] sm:$0xf]
        %v2743 = vld [vmem:[#allocation3 + $0xc0] sm:$0xff]
        %v2744 = vld [vmem:[#allocation3 + $0xc8] sm:$0xf]
        %v2745 = vld [vmem:[#allocation3 + $0xcc] sm:$0xff]
        %v2746 = vld [vmem:[#allocation3 + $0xd4] sm:$0xf]
        %v2747 = vld [vmem:[#allocation3 + $0xd8] sm:$0xff]
        %v2748 = vld [vmem:[#allocation3 + $0xe0] sm:$0xf]
        %v2749 = vld [vmem:[#allocation3 + $0xe4] sm:$0xff]
        %v2750 = vld [vmem:[#allocation3 + $0xec] sm:$0xf]
        %v2751 = vld [vmem:[#allocation3 + $0xf0] sm:$0xff]
        %v2752 = vld [vmem:[#allocation3 + $0xf8] sm:$0xf]
        %v2753 = vld [vmem:[#allocation3 + $0xfc] sm:$0xff]
        %v2754 = vld [vmem:[#allocation3 + $0x104] sm:$0xf]
        %v2755 = vld [vmem:[#allocation3 + $0x108] sm:$0xff]
        %v2756 = vld [vmem:[#allocation3 + $0x110] sm:$0xf]
        %v2757 = vld [vmem:[#allocation3 + $0x114] sm:$0xff]
        %v2758 = vld [vmem:[#allocation3 + $0x11c] sm:$0xf]
        %v2759 = vld [vmem:[#allocation3 + $0x120] sm:$0xff]
        %v2760 = vld [vmem:[#allocation3 + $0x128] sm:$0xf]
        %v2761 = vld [vmem:[#allocation3 + $0x12c] sm:$0xff]
        %v2762 = vld [vmem:[#allocation3 + $0x134] sm:$0xf]
        %v2763 = vld [vmem:[#allocation3 + $0x138] sm:$0xff]
        %v2764 = vld [vmem:[#allocation3 + $0x140] sm:$0xf]
        %v2765 = vld [vmem:[#allocation3 + $0x144] sm:$0xff]
        %v2766 = vld [vmem:[#allocation3 + $0x14c] sm:$0xf]
        %v2767 = vld [vmem:[#allocation3 + $0x150] sm:$0xff]
        %v2768 = vld [vmem:[#allocation3 + $0x158] sm:$0xf]
        %v2769 = vld [vmem:[#allocation3 + $0x15c] sm:$0xff]
        %v2770 = vld [vmem:[#allocation3 + $0x164] sm:$0xf]
        %v2771 = vld [vmem:[#allocation3 + $0x168] sm:$0xff]
        %v2772 = vld [vmem:[#allocation3 + $0x170] sm:$0xf]
        %v2773 = vld [vmem:[#allocation3 + $0x174] sm:$0xff]
        %v2774 = vld [vmem:[#allocation3 + $0x17c] sm:$0xf]
        %v2775 = vld [vmem:[#allocation3 + $0x180] sm:$0xff]
        %v2776 = vld [vmem:[#allocation3 + $0x188] sm:$0xf]
        %v2777 = vld [vmem:[#allocation3 + $0x18c] sm:$0xff]
        %v2778 = vld [vmem:[#allocation3 + $0x194] sm:$0xf]
        %v2779 = vld [vmem:[#allocation4] sm:$0xf]
        %v2780 = vld [vmem:[#allocation4 + $0x4] sm:$0xf]
        %v2781 = vld [vmem:[#allocation4 + $0x8] sm:$0xf]
        %v2782 = vld [vmem:[#allocation4 + $0xc] sm:$0xf]
        %v2783 = vld [vmem:[#allocation4 + $0x10] sm:$0xf]
        %v2784 = vld [vmem:[#allocation4 + $0x14] sm:$0xf]
        %v2785 = vld [vmem:[#allocation4 + $0x18] sm:$0xf]
        %v2786 = vld [vmem:[#allocation4 + $0x1c] sm:$0xf]
        %v2787 = vld [vmem:[#allocation4 + $0x20] sm:$0xf]
        %v2788 = vld [vmem:[#allocation4 + $0x24] sm:$0xf]
        %v2789 = vld [vmem:[#allocation4 + $0x28] sm:$0xf]
        %v2790 = vld [vmem:[#allocation4 + $0x2c] sm:$0xf]
        %v2791 = vld [vmem:[#allocation4 + $0x30] sm:$0xf]
        %v2792 = vld [vmem:[#allocation4 + $0x34] sm:$0xf]
        %v2793 = vld [vmem:[#allocation4 + $0x38] sm:$0xf]
        %v2794 = vld [vmem:[#allocation4 + $0x3c] sm:$0xf]
        %v2795 = vld [vmem:[#allocation4 + $0x40] sm:$0xf]
        %v2796 = vld [vmem:[#allocation4 + $0x44] sm:$0xf]
        %v2797 = vld [vmem:[#allocation4 + $0x48] sm:$0xf]
        %v2798 = vld [vmem:[#allocation4 + $0x4c] sm:$0xf]
        %v2799 = vld [vmem:[#allocation4 + $0x50] sm:$0xf]
        %v2800 = vld [vmem:[#allocation4 + $0x54] sm:$0xf]
        %v2801 = vld [vmem:[#allocation4 + $0x58] sm:$0xf]
        %v2802 = vld [vmem:[#allocation4 + $0x5c] sm:$0xf]
        %v2803 = vld [vmem:[#allocation4 + $0x60] sm:$0xf]
        %v2804 = vld [vmem:[#allocation4 + $0x64] sm:$0xf]
        %v2805 = vld [vmem:[#allocation4 + $0x68] sm:$0xf]
        %v2806 = vld [vmem:[#allocation4 + $0x6c] sm:$0xf]
        %v2807 = vld [vmem:[#allocation4 + $0x70] sm:$0xf]
        %v2808 = vld [vmem:[#allocation4 + $0x74] sm:$0xf]
        %v2809 = vld [vmem:[#allocation4 + $0x78] sm:$0xf]
        %v2810 = vld [vmem:[#allocation4 + $0x7c] sm:$0xf]
        %v2811 = vld [vmem:[#allocation4 + $0x80] sm:$0xf]
        %v2812 = vld [vmem:[#allocation4 + $0x84] sm:$0xf]
        %v2813 = vld [vmem:[#allocation4 + $0x88] sm:$0xf]
        %v2814 = vld [vmem:[#allocation4 + $0x8c] sm:$0xf]
        %v2815 = vld [vmem:[#allocation4 + $0x90] sm:$0xf]
        %v2816 = vld [vmem:[#allocation4 + $0x94] sm:$0xf]
        %v2817 = vld [vmem:[#allocation4 + $0x98] sm:$0xf]
        %v2818 = vld [vmem:[#allocation4 + $0x9c] sm:$0xf]
        %v2819 = vld [vmem:[#allocation4 + $0xa0] sm:$0xf]
        %v2820 = vld [vmem:[#allocation4 + $0xa4] sm:$0xf]
        %v2821 = vld [vmem:[#allocation4 + $0xa8] sm:$0xf]
        %v2822 = vld [vmem:[#allocation4 + $0xac] sm:$0xf]
        %v2823 = vld [vmem:[#allocation4 + $0xb0] sm:$0xf]
        %v2824 = vld [vmem:[#allocation4 + $0xb4] sm:$0xf]
        %v2825 = vld [vmem:[#allocation4 + $0xb8] sm:$0xf]
        %v2826 = vld [vmem:[#allocation4 + $0xbc] sm:$0xf]
        %v2827 = vld [vmem:[#allocation3 + $0x198] sm:$0xff]
        %v2828 = vld [vmem:[#allocation3 + $0x1a0] sm:$0xf]
        %v2829 = vld [vmem:[#allocation3 + $0x1a4] sm:$0xff]
        %v2830 = vld [vmem:[#allocation3 + $0x1ac] sm:$0xf]
        %v2831 = vld [vmem:[#allocation4 + $0xc0] sm:$0xf]
        %v2832 = vld [vmem:[#allocation4 + $0xc4] sm:$0xf]
        %v2833 = vld [vmem:[#allocation4 + $0xc8] sm:$0xf]
        %v2834 = vld [vmem:[#allocation4 + $0xcc] sm:$0xf]
        %v2835 = vld [vmem:[#allocation4 + $0xd0] sm:$0xf]
        %v2836 = vld [vmem:[#allocation4 + $0xd4] sm:$0xf]
        %v2837 = vld [vmem:[#allocation4 + $0xd8] sm:$0xf]
        %v2838 = vld [vmem:[#allocation4 + $0xdc] sm:$0xf]
        %v2839 = vld [vmem:[#allocation4 + $0xe0] sm:$0xf]
        %v2840 = vld [vmem:[#allocation4 + $0xe4] sm:$0xf]
        %v2841 = vld [vmem:[#allocation4 + $0xe8] sm:$0xf]
        %v2842 = vld [vmem:[#allocation4 + $0xec] sm:$0xf]
        %v2843 = vld [vmem:[#allocation4 + $0xf0] sm:$0xf]
        %v2844 = vld [vmem:[#allocation4 + $0xf4] sm:$0xf]
        %v2845 = vld [vmem:[#allocation4 + $0xf8] sm:$0xf]
        %v2846 = vld [vmem:[#allocation4 + $0xfc] sm:$0xf]
        %v2847 = vld [vmem:[#allocation4 + $0x100] sm:$0xf]
        %v2848 = vld [vmem:[#allocation4 + $0x104] sm:$0xf]
        %v2849 = vld [vmem:[#allocation4 + $0x108] sm:$0xf]
        %v2850 = vld [vmem:[#allocation4 + $0x10c] sm:$0xf]
        %v2851 = vld [vmem:[#allocation4 + $0x110] sm:$0xf]
        %v2852 = vld [vmem:[#allocation4 + $0x114] sm:$0xf]
        %v2853 = vld [vmem:[#allocation4 + $0x118] sm:$0xf]
        %v2854 = vld [vmem:[#allocation4 + $0x11c] sm:$0xf]
        %v2855 = vld [vmem:[#allocation4 + $0x120] sm:$0xf]
        %v2856 = vld [vmem:[#allocation4 + $0x124] sm:$0xf]
        %v2857 = vld [vmem:[#allocation4 + $0x128] sm:$0xf]
        %v2858 = vld [vmem:[#allocation4 + $0x12c] sm:$0xf]
        %v2859 = vld [vmem:[#allocation4 + $0x130] sm:$0xf]
        %v2860 = vld [vmem:[#allocation4 + $0x134] sm:$0xf]
        %v2861 = vld [vmem:[#allocation4 + $0x138] sm:$0xf]
        %v2862 = vld [vmem:[#allocation4 + $0x13c] sm:$0xf]
        %v2863 = vld [vmem:[#allocation4 + $0x140] sm:$0xf]
        %v2864 = vld [vmem:[#allocation4 + $0x144] sm:$0xf]
        %v2865 = vld [vmem:[#allocation4 + $0x148] sm:$0xf]
        %v2866 = vld [vmem:[#allocation4 + $0x14c] sm:$0xf]
        %v2867 = vld [vmem:[#allocation4 + $0x150] sm:$0xf]
        %v2868 = vld [vmem:[#allocation4 + $0x154] sm:$0xf]
        %v2869 = vld [vmem:[#allocation4 + $0x158] sm:$0xf]
        %v2870 = vld [vmem:[#allocation4 + $0x15c] sm:$0xf]
        %v2871 = vld [vmem:[#allocation4 + $0x160] sm:$0xf]
        %v2872 = vld [vmem:[#allocation4 + $0x164] sm:$0xf]
        %v2873 = vld [vmem:[#allocation4 + $0x168] sm:$0xf]
        %v2874 = vld [vmem:[#allocation4 + $0x16c] sm:$0xf]
        %v2875 = vld [vmem:[#allocation4 + $0x170] sm:$0xf]
        %v2876 = vld [vmem:[#allocation4 + $0x174] sm:$0xf]
        %v2877 = vld [vmem:[#allocation4 + $0x178] sm:$0xf]
        %v2878 = vld [vmem:[#allocation4 + $0x17c] sm:$0xf]
        %v2943 = vunpack.c.l.b16 %v2719
        %v2944 = vunpack.c.h.b16 %v2719
        %v2945 = vunpack.c.l.b16 %v2720
        %v2946 = vunpack.c.l.b16 %v2721
        %v2947 = vunpack.c.h.b16 %v2721
        %v2948 = vunpack.c.l.b16 %v2722
        %v2949 = vunpack.c.l.b16 %v2723
        %v2950 = vunpack.c.h.b16 %v2723
        %v2951 = vunpack.c.l.b16 %v2724
        %v2952 = vunpack.c.l.b16 %v2725
        %v2953 = vunpack.c.h.b16 %v2725
        %v2954 = vunpack.c.l.b16 %v2726
        %v2955 = vunpack.c.l.b16 %v2727
        %v2956 = vunpack.c.h.b16 %v2727
        %v2957 = vunpack.c.l.b16 %v2728
        %v2958 = vunpack.c.l.b16 %v2729
        %v2959 = vunpack.c.h.b16 %v2729
        %v2960 = vunpack.c.l.b16 %v2730
        %v2961 = vunpack.c.l.b16 %v2731
        %v2962 = vunpack.c.h.b16 %v2731
        %v2963 = vunpack.c.l.b16 %v2732
        %v2964 = vunpack.c.l.b16 %v2733
        %v2965 = vunpack.c.h.b16 %v2733
        %v2966 = vunpack.c.l.b16 %v2734
        %v2967 = vunpack.c.l.b16 %v2735
        %v2968 = vunpack.c.h.b16 %v2735
        %v2969 = vunpack.c.l.b16 %v2736
        %v2970 = vunpack.c.l.b16 %v2737
        %v2971 = vunpack.c.h.b16 %v2737
        %v2972 = vunpack.c.l.b16 %v2738
        %v2973 = vunpack.c.l.b16 %v2739
        %v2974 = vunpack.c.h.b16 %v2739
        %v2975 = vunpack.c.l.b16 %v2740
        %v2976 = vunpack.c.l.b16 %v2741
        %v2977 = vunpack.c.h.b16 %v2741
        %v2978 = vunpack.c.l.b16 %v2742
        %v2979 = vunpack.c.l.b16 %v2743
        %v2980 = vunpack.c.h.b16 %v2743
        %v2981 = vunpack.c.l.b16 %v2744
        %v2982 = vunpack.c.l.b16 %v2745
        %v2983 = vunpack.c.h.b16 %v2745
        %v2984 = vunpack.c.l.b16 %v2746
        %v2985 = vunpack.c.l.b16 %v2747
        %v2986 = vunpack.c.h.b16 %v2747
        %v2987 = vunpack.c.l.b16 %v2748
        %v2988 = vunpack.c.l.b16 %v2749
        %v2989 = vunpack.c.h.b16 %v2749
        %v2990 = vunpack.c.l.b16 %v2750
        %v2991 = vunpack.c.l.b16 %v2751
        %v2992 = vunpack.c.h.b16 %v2751
        %v2993 = vunpack.c.l.b16 %v2752
        %v2994 = vunpack.c.l.b16 %v2753
        %v2995 = vunpack.c.h.b16 %v2753
        %v2996 = vunpack.c.l.b16 %v2754
        %v2997 = vunpack.c.l.b16 %v2755
        %v2998 = vunpack.c.h.b16 %v2755
        %v2999 = vunpack.c.l.b16 %v2756
        %v3000 = vunpack.c.l.b16 %v2757
        %v3001 = vunpack.c.h.b16 %v2757
        %v3002 = vunpack.c.l.b16 %v2758
        %v3003 = vunpack.c.l.b16 %v2759
        %v3004 = vunpack.c.h.b16 %v2759
        %v3005 = vunpack.c.l.b16 %v2760
        %v3006 = vunpack.c.l.b16 %v2761
        %v3007 = vunpack.c.h.b16 %v2761
        %v3008 = vunpack.c.l.b16 %v2762
        %v3009 = vunpack.c.l.b16 %v2763
        %v3010 = vunpack.c.h.b16 %v2763
        %v3011 = vunpack.c.l.b16 %v2764
        %v3012 = vunpack.c.l.b16 %v2765
        %v3013 = vunpack.c.h.b16 %v2765
        %v3014 = vunpack.c.l.b16 %v2766
        %v3015 = vunpack.c.l.b16 %v2767
        %v3016 = vunpack.c.h.b16 %v2767
        %v3017 = vunpack.c.l.b16 %v2768
        %v3018 = vunpack.c.l.b16 %v2769
        %v3019 = vunpack.c.h.b16 %v2769
        %v3020 = vunpack.c.l.b16 %v2770
        %v3021 = vunpack.c.l.b16 %v2771
        %v3022 = vunpack.c.h.b16 %v2771
        %v3023 = vunpack.c.l.b16 %v2772
        %v3024 = vunpack.c.l.b16 %v2773
        %v3025 = vunpack.c.h.b16 %v2773
        %v3026 = vunpack.c.l.b16 %v2774
        %v3027 = vunpack.c.l.b16 %v2775
        %v3028 = vunpack.c.h.b16 %v2775
        %v3029 = vunpack.c.l.b16 %v2776
        %v3030 = vunpack.c.l.b16 %v2777
        %v3031 = vunpack.c.h.b16 %v2777
        %v3032 = vunpack.c.l.b16 %v2778
        %v3033 = vunpack.c.l.b16 %v2827
        %v3034 = vunpack.c.h.b16 %v2827
        %v3035 = vunpack.c.l.b16 %v2828
        %v3036 = vunpack.c.l.b16 %v2829
        %v3037 = vunpack.c.h.b16 %v2829
        %v3038 = vunpack.c.l.b16 %v2830
        %v3039 = vpack.c.b16 %v2946, %v2943
        %v3040 = vpack.c.b16 %v2947, %v2944
        %v3041 = vpack.c.b16 %v2948, %v2945
        %v3042 = vpack.c.b16 %v2952, %v2949
        %v3043 = vpack.c.b16 %v2953, %v2950
        %v3044 = vpack.c.b16 %v2954, %v2951
        %v3045 = vpack.c.b16 %v2958, %v2955
        %v3046 = vpack.c.b16 %v2959, %v2956
        %v3047 = vpack.c.b16 %v2960, %v2957
        %v3048 = vpack.c.b16 %v2964, %v2961
        %v3049 = vpack.c.b16 %v2965, %v2962
        %v3050 = vpack.c.b16 %v2966, %v2963
        %v3051 = vpack.c.b16 %v2970, %v2967
        %v3052 = vpack.c.b16 %v2971, %v2968
        %v3053 = vpack.c.b16 %v2972, %v2969
        %v3054 = vpack.c.b16 %v2976, %v2973
        %v3055 = vpack.c.b16 %v2977, %v2974
        %v3056 = vpack.c.b16 %v2978, %v2975
        %v3057 = vpack.c.b16 %v2982, %v2979
        %v3058 = vpack.c.b16 %v2983, %v2980
        %v3059 = vpack.c.b16 %v2984, %v2981
        %v3060 = vpack.c.b16 %v2988, %v2985
        %v3061 = vpack.c.b16 %v2989, %v2986
        %v3062 = vpack.c.b16 %v2990, %v2987
        %v3063 = vpack.c.b16 %v2994, %v2991
        %v3064 = vpack.c.b16 %v2995, %v2992
        %v3065 = vpack.c.b16 %v2996, %v2993
        %v3066 = vpack.c.b16 %v3000, %v2997
        %v3067 = vpack.c.b16 %v3001, %v2998
        %v3068 = vpack.c.b16 %v3002, %v2999
        %v3069 = vpack.c.b16 %v3006, %v3003
        %v3070 = vpack.c.b16 %v3007, %v3004
        %v3071 = vpack.c.b16 %v3008, %v3005
        %v3072 = vpack.c.b16 %v3012, %v3009
        %v3073 = vpack.c.b16 %v3013, %v3010
        %v3074 = vpack.c.b16 %v3014, %v3011
        %v3075 = vpack.c.b16 %v3018, %v3015
        %v3076 = vpack.c.b16 %v3019, %v3016
        %v3077 = vpack.c.b16 %v3020, %v3017
        %v3078 = vpack.c.b16 %v3024, %v3021
        %v3079 = vpack.c.b16 %v3025, %v3022
        %v3080 = vpack.c.b16 %v3026, %v3023
        %v3081 = vpack.c.b16 %v3030, %v3027
        %v3082 = vpack.c.b16 %v3031, %v3028
        %v3083 = vpack.c.b16 %v3032, %v3029
        %v3084 = vpack.c.b16 %v3036, %v3033
        %v3085 = vpack.c.b16 %v3037, %v3034
        %v3086 = vpack.c.b16 %v3038, %v3035
        %v3183 = vunpack.c.l.b16 %v2831
        %v3184 = vunpack.c.l.b16 %v2832
        %v3185 = vunpack.c.l.b16 %v2833
        %v3186 = vunpack.c.l.b16 %v2834
        %v3187 = vunpack.c.l.b16 %v2835
        %v3188 = vunpack.c.l.b16 %v2836
        %v3189 = vunpack.c.l.b16 %v2837
        %v3190 = vunpack.c.l.b16 %v2838
        %v3191 = vunpack.c.l.b16 %v2839
        %v3192 = vunpack.c.l.b16 %v2840
        %v3193 = vunpack.c.l.b16 %v2841
        %v3194 = vunpack.c.l.b16 %v2842
        %v3195 = vunpack.c.l.b16 %v2843
        %v3196 = vunpack.c.l.b16 %v2844
        %v3197 = vunpack.c.l.b16 %v2845
        %v3198 = vunpack.c.l.b16 %v2846
        %v3199 = vunpack.c.l.b16 %v2847
        %v3200 = vunpack.c.l.b16 %v2848
        %v3201 = vunpack.c.l.b16 %v2849
        %v3202 = vunpack.c.l.b16 %v2850
        %v3203 = vunpack.c.l.b16 %v2851
        %v3204 = vunpack.c.l.b16 %v2852
        %v3205 = vunpack.c.l.b16 %v2853
        %v3206 = vunpack.c.l.b16 %v2854
        %v3207 = vunpack.c.l.b16 %v2855
        %v3208 = vunpack.c.l.b16 %v2856
        %v3209 = vunpack.c.l.b16 %v2857
        %v3210 = vunpack.c.l.b16 %v2858
        %v3211 = vunpack.c.l.b16 %v2859
        %v3212 = vunpack.c.l.b16 %v2860
        %v3213 = vunpack.c.l.b16 %v2861
        %v3214 = vunpack.c.l.b16 %v2862
        %v3215 = vunpack.c.l.b16 %v2863
        %v3216 = vunpack.c.l.b16 %v2864
        %v3217 = vunpack.c.l.b16 %v2865
        %v3218 = vunpack.c.l.b16 %v2866
        %v3219 = vunpack.c.l.b16 %v2867
        %v3220 = vunpack.c.l.b16 %v2868
        %v3221 = vunpack.c.l.b16 %v2869
        %v3222 = vunpack.c.l.b16 %v2870
        %v3223 = vunpack.c.l.b16 %v2871
        %v3224 = vunpack.c.l.b16 %v2872
        %v3225 = vunpack.c.l.b16 %v2873
        %v3226 = vunpack.c.l.b16 %v2874
        %v3227 = vunpack.c.l.b16 %v2875
        %v3228 = vunpack.c.l.b16 %v2876
        %v3229 = vunpack.c.l.b16 %v2877
        %v3230 = vunpack.c.l.b16 %v2878
        %v3231 = vpack.c.b16 %v3184, %v3183
        %v3232 = vpack.c.b16 %v3186, %v3185
        %v3233 = vpack.c.b16 %v3188, %v3187
        %v3234 = vpack.c.b16 %v3190, %v3189
        %v3235 = vpack.c.b16 %v3192, %v3191
        %v3236 = vpack.c.b16 %v3194, %v3193
        %v3237 = vpack.c.b16 %v3196, %v3195
        %v3238 = vpack.c.b16 %v3198, %v3197
        %v3239 = vpack.c.b16 %v3200, %v3199
        %v3240 = vpack.c.b16 %v3202, %v3201
        %v3241 = vpack.c.b16 %v3204, %v3203
        %v3242 = vpack.c.b16 %v3206, %v3205
        %v3243 = vpack.c.b16 %v3208, %v3207
        %v3244 = vpack.c.b16 %v3210, %v3209
        %v3245 = vpack.c.b16 %v3212, %v3211
        %v3246 = vpack.c.b16 %v3214, %v3213
        %v3247 = vpack.c.b16 %v3216, %v3215
        %v3248 = vpack.c.b16 %v3218, %v3217
        %v3249 = vpack.c.b16 %v3220, %v3219
        %v3250 = vpack.c.b16 %v3222, %v3221
        %v3251 = vpack.c.b16 %v3224, %v3223
        %v3252 = vpack.c.b16 %v3226, %v3225
        %v3253 = vpack.c.b16 %v3228, %v3227
        %v3254 = vpack.c.b16 %v3230, %v3229
        %3279 = vmatprep.subr.bf16.mxu0 0
        %3280 = vmatpush1.bf16.msra.mxu0 %v3238
        %3281 = vmatprep.subr.bf16.mxu0 0
        %3282 = vmatpush1.bf16.msra.mxu0 %v3237
        %3283 = vmatprep.subr.bf16.mxu0 0
        %3284 = vmatpush1.bf16.msra.mxu0 %v3236
        %3285 = vmatprep.subr.bf16.mxu0 0
        %3286 = vmatpush1.bf16.msra.mxu0 %v3235
        %3287 = vmatprep.subr.bf16.mxu0 0
        %3288 = vmatpush1.bf16.msra.mxu0 %v3234
        %3289 = vmatprep.subr.bf16.mxu0 0
        %3290 = vmatpush1.bf16.msra.mxu0 %v3233
        %3291 = vmatprep.subr.bf16.mxu0 0
        %3292 = vmatpush1.bf16.msra.mxu0 %v3232
        %3293 = vmatprep.subr.bf16.mxu0 0
        %3294 = vmatpush1.bf16.msra.mxu0 %v3231
        %3295 = vmatprep.subr.bf16.mxu0 0
        %3296 = vmatpush2.bf16.msra.mxu0 %v3246
        %3297 = vmatprep.subr.bf16.mxu0 0
        %3298 = vmatpush2.bf16.msra.mxu0 %v3245
        %3299 = vmatprep.subr.bf16.mxu0 0
        %3300 = vmatpush2.bf16.msra.mxu0 %v3244
        %3301 = vmatprep.subr.bf16.mxu0 0
        %3302 = vmatpush2.bf16.msra.mxu0 %v3243
        %3303 = vmatprep.subr.bf16.mxu0 0
        %3304 = vmatpush2.bf16.msra.mxu0 %v3242
        %3305 = vmatprep.subr.bf16.mxu0 0
        %3306 = vmatpush2.bf16.msra.mxu0 %v3241
        %3307 = vmatprep.subr.bf16.mxu0 0
        %3308 = vmatpush2.bf16.msra.mxu0 %v3240
        %3309 = vmatprep.subr.bf16.mxu0 0
        %3310 = vmatpush2.bf16.msra.mxu0 %v3239
        %3311 = vmatprep.mubr.bf16.mxu0 %v3040
        %3312 = vmatmul.mubr.bf16.gmra.mxu0 %v3039
        %v3313 = vpop.f32.mrf.mxu0
        %v3314 = vadd.f32 0.0, %v3313
        %v3315 = vpop.f32.mrf.mxu0
        %v3316 = vpop.f32.mrf.mxu0
        %v3317 = vadd.f32 0.0, %v3316
        %v3318 = vpop.f32.mrf.mxu0
        %3319 = vmatprep.mubr.bf16.mxu0 %v3043
        %3320 = vmatmul.mubr.bf16.gmra.mxu0 %v3042
        %v3321 = vpop.f32.mrf.mxu0
        %v3322 = vadd.f32 0.0, %v3321
        %v3323 = vpop.f32.mrf.mxu0
        %v3324 = vpop.f32.mrf.mxu0
        %v3325 = vadd.f32 0.0, %v3324
        %v3326 = vpop.f32.mrf.mxu0
        %3327 = vmatprep.mubr.bf16.mxu0 %v3046
        %3328 = vmatmul.mubr.bf16.gmra.mxu0 %v3045
        %v3329 = vpop.f32.mrf.mxu0
        %v3330 = vadd.f32 0.0, %v3329
        %v3331 = vpop.f32.mrf.mxu0
        %v3332 = vpop.f32.mrf.mxu0
        %v3333 = vadd.f32 0.0, %v3332
        %v3334 = vpop.f32.mrf.mxu0
        %3335 = vmatprep.mubr.bf16.mxu0 %v3049
        %3336 = vmatmul.mubr.bf16.gmra.mxu0 %v3048
        %v3337 = vpop.f32.mrf.mxu0
        %v3338 = vadd.f32 0.0, %v3337
        %v3339 = vpop.f32.mrf.mxu0
        %v3340 = vpop.f32.mrf.mxu0
        %v3341 = vadd.f32 0.0, %v3340
        %v3342 = vpop.f32.mrf.mxu0
        %3343 = vmatprep.mubr.bf16.mxu0 %v3052
        %3344 = vmatmul.mubr.bf16.gmra.mxu0 %v3051
        %v3345 = vpop.f32.mrf.mxu0
        %v3346 = vadd.f32 0.0, %v3345
        %v3347 = vpop.f32.mrf.mxu0
        %v3348 = vpop.f32.mrf.mxu0
        %v3349 = vadd.f32 0.0, %v3348
        %v3350 = vpop.f32.mrf.mxu0
        %3351 = vmatprep.mubr.bf16.mxu0 %v3055
        %3352 = vmatmul.mubr.bf16.gmra.mxu0 %v3054
        %v3353 = vpop.f32.mrf.mxu0
        %v3354 = vadd.f32 0.0, %v3353
        %v3355 = vpop.f32.mrf.mxu0
        %v3356 = vpop.f32.mrf.mxu0
        %v3357 = vadd.f32 0.0, %v3356
        %v3358 = vpop.f32.mrf.mxu0
        %3359 = vmatprep.mubr.bf16.mxu0 %v3058
        %3360 = vmatmul.mubr.bf16.gmra.mxu0 %v3057
        %v3361 = vpop.f32.mrf.mxu0
        %v3362 = vadd.f32 0.0, %v3361
        %v3363 = vpop.f32.mrf.mxu0
        %v3364 = vpop.f32.mrf.mxu0
        %v3365 = vadd.f32 0.0, %v3364
        %v3366 = vpop.f32.mrf.mxu0
        %3367 = vmatprep.mubr.bf16.mxu0 %v3061
        %3368 = vmatmul.mubr.bf16.gmra.mxu0 %v3060
        %v3369 = vpop.f32.mrf.mxu0
        %v3370 = vadd.f32 0.0, %v3369
        %v3371 = vpop.f32.mrf.mxu0
        %v3372 = vpop.f32.mrf.mxu0
        %v3373 = vadd.f32 0.0, %v3372
        %v3374 = vpop.f32.mrf.mxu0
        %3375 = vmatprep.mubr.bf16.mxu0 %v3064
        %3376 = vmatmul.mubr.bf16.gmra.mxu0 %v3063
        %v3377 = vpop.f32.mrf.mxu0
        %v3378 = vadd.f32 0.0, %v3377
        %v3379 = vpop.f32.mrf.mxu0
        %v3380 = vpop.f32.mrf.mxu0
        %v3381 = vadd.f32 0.0, %v3380
        %v3382 = vpop.f32.mrf.mxu0
        %3383 = vmatprep.mubr.bf16.mxu0 %v3067
        %3384 = vmatmul.mubr.bf16.gmra.mxu0 %v3066
        %v3385 = vpop.f32.mrf.mxu0
        %v3386 = vadd.f32 0.0, %v3385
        %v3387 = vpop.f32.mrf.mxu0
        %v3388 = vpop.f32.mrf.mxu0
        %v3389 = vadd.f32 0.0, %v3388
        %v3390 = vpop.f32.mrf.mxu0
        %3391 = vmatprep.mubr.bf16.mxu0 %v3070
        %3392 = vmatmul.mubr.bf16.gmra.mxu0 %v3069
        %v3393 = vpop.f32.mrf.mxu0
        %v3394 = vadd.f32 0.0, %v3393
        %v3395 = vpop.f32.mrf.mxu0
        %v3396 = vpop.f32.mrf.mxu0
        %v3397 = vadd.f32 0.0, %v3396
        %v3398 = vpop.f32.mrf.mxu0
        %3399 = vmatprep.mubr.bf16.mxu0 %v3073
        %3400 = vmatmul.mubr.bf16.gmra.mxu0 %v3072
        %v3401 = vpop.f32.mrf.mxu0
        %v3402 = vadd.f32 0.0, %v3401
        %v3403 = vpop.f32.mrf.mxu0
        %v3404 = vpop.f32.mrf.mxu0
        %v3405 = vadd.f32 0.0, %v3404
        %v3406 = vpop.f32.mrf.mxu0
        %3407 = vmatprep.mubr.bf16.mxu0 %v3076
        %3408 = vmatmul.mubr.bf16.gmra.mxu0 %v3075
        %v3409 = vpop.f32.mrf.mxu0
        %v3410 = vadd.f32 0.0, %v3409
        %v3411 = vpop.f32.mrf.mxu0
        %v3412 = vpop.f32.mrf.mxu0
        %v3413 = vadd.f32 0.0, %v3412
        %v3414 = vpop.f32.mrf.mxu0
        %3415 = vmatprep.mubr.bf16.mxu0 %v3079
        %3416 = vmatmul.mubr.bf16.gmra.mxu0 %v3078
        %v3417 = vpop.f32.mrf.mxu0
        %v3418 = vadd.f32 0.0, %v3417
        %v3419 = vpop.f32.mrf.mxu0
        %v3420 = vpop.f32.mrf.mxu0
        %v3421 = vadd.f32 0.0, %v3420
        %v3422 = vpop.f32.mrf.mxu0
        %3423 = vmatprep.mubr.bf16.mxu0 %v3082
        %3424 = vmatmul.mubr.bf16.gmra.mxu0 %v3081
        %v3425 = vpop.f32.mrf.mxu0
        %v3426 = vadd.f32 0.0, %v3425
        %v3427 = vpop.f32.mrf.mxu0
        %v3428 = vpop.f32.mrf.mxu0
        %v3429 = vadd.f32 0.0, %v3428
        %v3430 = vpop.f32.mrf.mxu0
        %3431 = vmatprep.mubr.bf16.mxu0 %v3085
        %3432 = vmatmul.mubr.bf16.gmra.mxu0 %v3084
        %v3433 = vpop.f32.mrf.mxu0
        %v3434 = vadd.f32 0.0, %v3433
        %v3435 = vpop.f32.mrf.mxu0
        %v3436 = vpop.f32.mrf.mxu0
        %v3437 = vadd.f32 0.0, %v3436
        %v3438 = vpop.f32.mrf.mxu0
        %3439 = vdwg.mxu0
        %3440 = vmatprep.subr.bf16.mxu0 0
        %3441 = vmatpush1.bf16.msra.mxu0 %v3254
        %3442 = vmatprep.subr.bf16.mxu0 0
        %3443 = vmatpush1.bf16.msra.mxu0 %v3253
        %3444 = vmatprep.subr.bf16.mxu0 0
        %3445 = vmatpush1.bf16.msra.mxu0 %v3252
        %3446 = vmatprep.subr.bf16.mxu0 0
        %3447 = vmatpush1.bf16.msra.mxu0 %v3251
        %3448 = vmatprep.subr.bf16.mxu0 0
        %3449 = vmatpush1.bf16.msra.mxu0 %v3250
        %3450 = vmatprep.subr.bf16.mxu0 0
        %3451 = vmatpush1.bf16.msra.mxu0 %v3249
        %3452 = vmatprep.subr.bf16.mxu0 0
        %3453 = vmatpush1.bf16.msra.mxu0 %v3248
        %3454 = vmatprep.subr.bf16.mxu0 0
        %3455 = vmatpush1.bf16.msra.mxu0 %v3247
        %3456 = vmatprep.subr.bf16.mxu0 0
        %3457 = vmatpush2.bf16.msra.mxu0 0
        %3458 = vmatprep.subr.bf16.mxu0 0
        %3459 = vmatpush2.bf16.msra.mxu0 0
        %3460 = vmatprep.subr.bf16.mxu0 0
        %3461 = vmatpush2.bf16.msra.mxu0 0
        %3462 = vmatprep.subr.bf16.mxu0 0
        %3463 = vmatpush2.bf16.msra.mxu0 0
        %3464 = vmatprep.subr.bf16.mxu0 0
        %3465 = vmatpush2.bf16.msra.mxu0 0
        %3466 = vmatprep.subr.bf16.mxu0 0
        %3467 = vmatpush2.bf16.msra.mxu0 0
        %3468 = vmatprep.subr.bf16.mxu0 0
        %3469 = vmatpush2.bf16.msra.mxu0 0
        %3470 = vmatprep.subr.bf16.mxu0 0
        %3471 = vmatpush2.bf16.msra.mxu0 0
        %3472 = vmatprep.mubr.bf16.mxu0 0
        %3473 = vmatmul.mubr.bf16.gmra.mxu0 %v3041
        %v3474 = vpop.f32.mrf.mxu0
        %v3475 = vadd.f32 %v3314, %v3474
        %v3476 = vpop.f32.mrf.mxu0
        %v3477 = vpop.f32.mrf.mxu0
        %v3478 = vadd.f32 %v3317, %v3477
        %v3479 = vpop.f32.mrf.mxu0
        %3480 = vmatprep.mubr.bf16.mxu0 0
        %3481 = vmatmul.mubr.bf16.gmra.mxu0 %v3044
        %v3482 = vpop.f32.mrf.mxu0
        %v3483 = vadd.f32 %v3322, %v3482
        %v3484 = vpop.f32.mrf.mxu0
        %v3485 = vpop.f32.mrf.mxu0
        %v3486 = vadd.f32 %v3325, %v3485
        %v3487 = vpop.f32.mrf.mxu0
        %3488 = vmatprep.mubr.bf16.mxu0 0
        %3489 = vmatmul.mubr.bf16.gmra.mxu0 %v3047
        %v3490 = vpop.f32.mrf.mxu0
        %v3491 = vadd.f32 %v3330, %v3490
        %v3492 = vpop.f32.mrf.mxu0
        %v3493 = vpop.f32.mrf.mxu0
        %v3494 = vadd.f32 %v3333, %v3493
        %v3495 = vpop.f32.mrf.mxu0
        %3496 = vmatprep.mubr.bf16.mxu0 0
        %3497 = vmatmul.mubr.bf16.gmra.mxu0 %v3050
        %v3498 = vpop.f32.mrf.mxu0
        %v3499 = vadd.f32 %v3338, %v3498
        %v3500 = vpop.f32.mrf.mxu0
        %v3501 = vpop.f32.mrf.mxu0
        %v3502 = vadd.f32 %v3341, %v3501
        %v3503 = vpop.f32.mrf.mxu0
        %3504 = vmatprep.mubr.bf16.mxu0 0
        %3505 = vmatmul.mubr.bf16.gmra.mxu0 %v3053
        %v3506 = vpop.f32.mrf.mxu0
        %v3507 = vadd.f32 %v3346, %v3506
        %v3508 = vpop.f32.mrf.mxu0
        %v3509 = vpop.f32.mrf.mxu0
        %v3510 = vadd.f32 %v3349, %v3509
        %v3511 = vpop.f32.mrf.mxu0
        %3512 = vmatprep.mubr.bf16.mxu0 0
        %3513 = vmatmul.mubr.bf16.gmra.mxu0 %v3056
        %v3514 = vpop.f32.mrf.mxu0
        %v3515 = vadd.f32 %v3354, %v3514
        %v3516 = vpop.f32.mrf.mxu0
        %v3517 = vpop.f32.mrf.mxu0
        %v3518 = vadd.f32 %v3357, %v3517
        %v3519 = vpop.f32.mrf.mxu0
        %3520 = vmatprep.mubr.bf16.mxu0 0
        %3521 = vmatmul.mubr.bf16.gmra.mxu0 %v3059
        %v3522 = vpop.f32.mrf.mxu0
        %v3523 = vadd.f32 %v3362, %v3522
        %v3524 = vpop.f32.mrf.mxu0
        %v3525 = vpop.f32.mrf.mxu0
        %v3526 = vadd.f32 %v3365, %v3525
        %v3527 = vpop.f32.mrf.mxu0
        %3528 = vmatprep.mubr.bf16.mxu0 0
        %3529 = vmatmul.mubr.bf16.gmra.mxu0 %v3062
        %v3530 = vpop.f32.mrf.mxu0
        %v3531 = vadd.f32 %v3370, %v3530
        %v3532 = vpop.f32.mrf.mxu0
        %v3533 = vpop.f32.mrf.mxu0
        %v3534 = vadd.f32 %v3373, %v3533
        %v3535 = vpop.f32.mrf.mxu0
        %3536 = vmatprep.mubr.bf16.mxu0 0
        %3537 = vmatmul.mubr.bf16.gmra.mxu0 %v3065
        %v3538 = vpop.f32.mrf.mxu0
        %v3539 = vadd.f32 %v3378, %v3538
        %v3540 = vpop.f32.mrf.mxu0
        %v3541 = vpop.f32.mrf.mxu0
        %v3542 = vadd.f32 %v3381, %v3541
        %v3543 = vpop.f32.mrf.mxu0
        %3544 = vmatprep.mubr.bf16.mxu0 0
        %3545 = vmatmul.mubr.bf16.gmra.mxu0 %v3068
        %v3546 = vpop.f32.mrf.mxu0
        %v3547 = vadd.f32 %v3386, %v3546
        %v3548 = vpop.f32.mrf.mxu0
        %v3549 = vpop.f32.mrf.mxu0
        %v3550 = vadd.f32 %v3389, %v3549
        %v3551 = vpop.f32.mrf.mxu0
        %3552 = vmatprep.mubr.bf16.mxu0 0
        %3553 = vmatmul.mubr.bf16.gmra.mxu0 %v3071
        %v3554 = vpop.f32.mrf.mxu0
        %v3555 = vadd.f32 %v3394, %v3554
        %v3556 = vpop.f32.mrf.mxu0
        %v3557 = vpop.f32.mrf.mxu0
        %v3558 = vadd.f32 %v3397, %v3557
        %v3559 = vpop.f32.mrf.mxu0
        %3560 = vmatprep.mubr.bf16.mxu0 0
        %3561 = vmatmul.mubr.bf16.gmra.mxu0 %v3074
        %v3562 = vpop.f32.mrf.mxu0
        %v3563 = vadd.f32 %v3402, %v3562
        %v3564 = vpop.f32.mrf.mxu0
        %v3565 = vpop.f32.mrf.mxu0
        %v3566 = vadd.f32 %v3405, %v3565
        %v3567 = vpop.f32.mrf.mxu0
        %3568 = vmatprep.mubr.bf16.mxu0 0
        %3569 = vmatmul.mubr.bf16.gmra.mxu0 %v3077
        %v3570 = vpop.f32.mrf.mxu0
        %v3571 = vadd.f32 %v3410, %v3570
        %v3572 = vpop.f32.mrf.mxu0
        %v3573 = vpop.f32.mrf.mxu0
        %v3574 = vadd.f32 %v3413, %v3573
        %v3575 = vpop.f32.mrf.mxu0
        %3576 = vmatprep.mubr.bf16.mxu0 0
        %3577 = vmatmul.mubr.bf16.gmra.mxu0 %v3080
        %v3578 = vpop.f32.mrf.mxu0
        %v3579 = vadd.f32 %v3418, %v3578
        %v3580 = vpop.f32.mrf.mxu0
        %v3581 = vpop.f32.mrf.mxu0
        %v3582 = vadd.f32 %v3421, %v3581
        %v3583 = vpop.f32.mrf.mxu0
        %3584 = vmatprep.mubr.bf16.mxu0 0
        %3585 = vmatmul.mubr.bf16.gmra.mxu0 %v3083
        %v3586 = vpop.f32.mrf.mxu0
        %v3587 = vadd.f32 %v3426, %v3586
        %v3588 = vpop.f32.mrf.mxu0
        %v3589 = vpop.f32.mrf.mxu0
        %v3590 = vadd.f32 %v3429, %v3589
        %v3591 = vpop.f32.mrf.mxu0
        %3592 = vmatprep.mubr.bf16.mxu0 0
        %3593 = vmatmul.mubr.bf16.gmra.mxu0 %v3086
        %v3594 = vpop.f32.mrf.mxu0
        %v3595 = vadd.f32 %v3434, %v3594
        %v3596 = vpop.f32.mrf.mxu0
        %v3597 = vpop.f32.mrf.mxu0
        %v3598 = vadd.f32 %v3437, %v3597
        %v3599 = vpop.f32.mrf.mxu0
        %3600 = vdwg.mxu0
        %v3605 = vunpack.c.l.b16 %v2715
        %v3606 = vunpack.c.h.b16 %v2715
        %v3607 = vunpack.c.l.b16 %v2716
        %v3608 = vunpack.c.l.b16 %v2717
        %v3609 = vunpack.c.h.b16 %v2717
        %v3610 = vunpack.c.l.b16 %v2718
        %v3611 = vpack.c.b16 %v3608, %v3605
        %v3612 = vpack.c.b16 %v3609, %v3606
        %v3613 = vpack.c.b16 %v3610, %v3607
        %v3665 = vunpack.c.l.b16 %v2779
        %v3666 = vunpack.c.l.b16 %v2780
        %v3667 = vunpack.c.l.b16 %v2781
        %v3668 = vunpack.c.l.b16 %v2782
        %v3669 = vunpack.c.l.b16 %v2783
        %v3670 = vunpack.c.l.b16 %v2784
        %v3671 = vunpack.c.l.b16 %v2785
        %v3672 = vunpack.c.l.b16 %v2786
        %v3673 = vunpack.c.l.b16 %v2787
        %v3674 = vunpack.c.l.b16 %v2788
        %v3675 = vunpack.c.l.b16 %v2789
        %v3676 = vunpack.c.l.b16 %v2790
        %v3677 = vunpack.c.l.b16 %v2791
        %v3678 = vunpack.c.l.b16 %v2792
        %v3679 = vunpack.c.l.b16 %v2793
        %v3680 = vunpack.c.l.b16 %v2794
        %v3681 = vunpack.c.l.b16 %v2795
        %v3682 = vunpack.c.l.b16 %v2796
        %v3683 = vunpack.c.l.b16 %v2797
        %v3684 = vunpack.c.l.b16 %v2798
        %v3685 = vunpack.c.l.b16 %v2799
        %v3686 = vunpack.c.l.b16 %v2800
        %v3687 = vunpack.c.l.b16 %v2801
        %v3688 = vunpack.c.l.b16 %v2802
        %v3689 = vunpack.c.l.b16 %v2803
        %v3690 = vunpack.c.l.b16 %v2804
        %v3691 = vunpack.c.l.b16 %v2805
        %v3692 = vunpack.c.l.b16 %v2806
        %v3693 = vunpack.c.l.b16 %v2807
        %v3694 = vunpack.c.l.b16 %v2808
        %v3695 = vunpack.c.l.b16 %v2809
        %v3696 = vunpack.c.l.b16 %v2810
        %v3697 = vunpack.c.l.b16 %v2811
        %v3698 = vunpack.c.l.b16 %v2812
        %v3699 = vunpack.c.l.b16 %v2813
        %v3700 = vunpack.c.l.b16 %v2814
        %v3701 = vunpack.c.l.b16 %v2815
        %v3702 = vunpack.c.l.b16 %v2816
        %v3703 = vunpack.c.l.b16 %v2817
        %v3704 = vunpack.c.l.b16 %v2818
        %v3705 = vunpack.c.l.b16 %v2819
        %v3706 = vunpack.c.l.b16 %v2820
        %v3707 = vunpack.c.l.b16 %v2821
        %v3708 = vunpack.c.l.b16 %v2822
        %v3709 = vunpack.c.l.b16 %v2823
        %v3710 = vunpack.c.l.b16 %v2824
        %v3711 = vunpack.c.l.b16 %v2825
        %v3712 = vunpack.c.l.b16 %v2826
        %v3713 = vpack.c.b16 %v3666, %v3665
        %v3714 = vpack.c.b16 %v3668, %v3667
        %v3715 = vpack.c.b16 %v3670, %v3669
        %v3716 = vpack.c.b16 %v3672, %v3671
        %v3717 = vpack.c.b16 %v3674, %v3673
        %v3718 = vpack.c.b16 %v3676, %v3675
        %v3719 = vpack.c.b16 %v3678, %v3677
        %v3720 = vpack.c.b16 %v3680, %v3679
        %v3721 = vpack.c.b16 %v3682, %v3681
        %v3722 = vpack.c.b16 %v3684, %v3683
        %v3723 = vpack.c.b16 %v3686, %v3685
        %v3724 = vpack.c.b16 %v3688, %v3687
        %v3725 = vpack.c.b16 %v3690, %v3689
        %v3726 = vpack.c.b16 %v3692, %v3691
        %v3727 = vpack.c.b16 %v3694, %v3693
        %v3728 = vpack.c.b16 %v3696, %v3695
        %v3729 = vpack.c.b16 %v3698, %v3697
        %v3730 = vpack.c.b16 %v3700, %v3699
        %v3731 = vpack.c.b16 %v3702, %v3701
        %v3732 = vpack.c.b16 %v3704, %v3703
        %v3733 = vpack.c.b16 %v3706, %v3705
        %v3734 = vpack.c.b16 %v3708, %v3707
        %v3735 = vpack.c.b16 %v3710, %v3709
        %v3736 = vpack.c.b16 %v3712, %v3711
        %3761 = vmatprep.subr.bf16.mxu0 0
        %3762 = vmatpush1.bf16.msra.mxu0 %v3720
        %3763 = vmatprep.subr.bf16.mxu0 0
        %3764 = vmatpush1.bf16.msra.mxu0 %v3719
        %3765 = vmatprep.subr.bf16.mxu0 0
        %3766 = vmatpush1.bf16.msra.mxu0 %v3718
        %3767 = vmatprep.subr.bf16.mxu0 0
        %3768 = vmatpush1.bf16.msra.mxu0 %v3717
        %3769 = vmatprep.subr.bf16.mxu0 0
        %3770 = vmatpush1.bf16.msra.mxu0 %v3716
        %3771 = vmatprep.subr.bf16.mxu0 0
        %3772 = vmatpush1.bf16.msra.mxu0 %v3715
        %3773 = vmatprep.subr.bf16.mxu0 0
        %3774 = vmatpush1.bf16.msra.mxu0 %v3714
        %3775 = vmatprep.subr.bf16.mxu0 0
        %3776 = vmatpush1.bf16.msra.mxu0 %v3713
        %3777 = vmatprep.subr.bf16.mxu0 0
        %3778 = vmatpush2.bf16.msra.mxu0 %v3728
        %3779 = vmatprep.subr.bf16.mxu0 0
        %3780 = vmatpush2.bf16.msra.mxu0 %v3727
        %3781 = vmatprep.subr.bf16.mxu0 0
        %3782 = vmatpush2.bf16.msra.mxu0 %v3726
        %3783 = vmatprep.subr.bf16.mxu0 0
        %3784 = vmatpush2.bf16.msra.mxu0 %v3725
        %3785 = vmatprep.subr.bf16.mxu0 0
        %3786 = vmatpush2.bf16.msra.mxu0 %v3724
        %3787 = vmatprep.subr.bf16.mxu0 0
        %3788 = vmatpush2.bf16.msra.mxu0 %v3723
        %3789 = vmatprep.subr.bf16.mxu0 0
        %3790 = vmatpush2.bf16.msra.mxu0 %v3722
        %3791 = vmatprep.subr.bf16.mxu0 0
        %3792 = vmatpush2.bf16.msra.mxu0 %v3721
        %3793 = vmatprep.mubr.bf16.mxu0 %v3612
        %3794 = vmatmul.mubr.bf16.gmra.mxu0 %v3611
        %v3795 = vpop.f32.mrf.mxu0
        %v3796 = vadd.f32 %v3475, %v3795
        %v3797 = vpop.f32.mrf.mxu0
        %v3798 = vpop.f32.mrf.mxu0
        %v3799 = vadd.f32 %v3478, %v3798
        %v3800 = vpop.f32.mrf.mxu0
        %3801 = vmatprep.mubr.bf16.mxu0 %v3040
        %3802 = vmatmul.mubr.bf16.gmra.mxu0 %v3039
        %v3803 = vpop.f32.mrf.mxu0
        %v3804 = vadd.f32 %v3483, %v3803
        %v3805 = vpop.f32.mrf.mxu0
        %v3806 = vpop.f32.mrf.mxu0
        %v3807 = vadd.f32 %v3486, %v3806
        %v3808 = vpop.f32.mrf.mxu0
        %3809 = vmatprep.mubr.bf16.mxu0 %v3043
        %3810 = vmatmul.mubr.bf16.gmra.mxu0 %v3042
        %v3811 = vpop.f32.mrf.mxu0
        %v3812 = vadd.f32 %v3491, %v3811
        %v3813 = vpop.f32.mrf.mxu0
        %v3814 = vpop.f32.mrf.mxu0
        %v3815 = vadd.f32 %v3494, %v3814
        %v3816 = vpop.f32.mrf.mxu0
        %3817 = vmatprep.mubr.bf16.mxu0 %v3046
        %3818 = vmatmul.mubr.bf16.gmra.mxu0 %v3045
        %v3819 = vpop.f32.mrf.mxu0
        %v3820 = vadd.f32 %v3499, %v3819
        %v3821 = vpop.f32.mrf.mxu0
        %v3822 = vpop.f32.mrf.mxu0
        %v3823 = vadd.f32 %v3502, %v3822
        %v3824 = vpop.f32.mrf.mxu0
        %3825 = vmatprep.mubr.bf16.mxu0 %v3049
        %3826 = vmatmul.mubr.bf16.gmra.mxu0 %v3048
        %v3827 = vpop.f32.mrf.mxu0
        %v3828 = vadd.f32 %v3507, %v3827
        %v3829 = vpop.f32.mrf.mxu0
        %v3830 = vpop.f32.mrf.mxu0
        %v3831 = vadd.f32 %v3510, %v3830
        %v3832 = vpop.f32.mrf.mxu0
        %3833 = vmatprep.mubr.bf16.mxu0 %v3052
        %3834 = vmatmul.mubr.bf16.gmra.mxu0 %v3051
        %v3835 = vpop.f32.mrf.mxu0
        %v3836 = vadd.f32 %v3515, %v3835
        %v3837 = vpop.f32.mrf.mxu0
        %v3838 = vpop.f32.mrf.mxu0
        %v3839 = vadd.f32 %v3518, %v3838
        %v3840 = vpop.f32.mrf.mxu0
        %3841 = vmatprep.mubr.bf16.mxu0 %v3055
        %3842 = vmatmul.mubr.bf16.gmra.mxu0 %v3054
        %v3843 = vpop.f32.mrf.mxu0
        %v3844 = vadd.f32 %v3523, %v3843
        %v3845 = vpop.f32.mrf.mxu0
        %v3846 = vpop.f32.mrf.mxu0
        %v3847 = vadd.f32 %v3526, %v3846
        %v3848 = vpop.f32.mrf.mxu0
        %3849 = vmatprep.mubr.bf16.mxu0 %v3058
        %3850 = vmatmul.mubr.bf16.gmra.mxu0 %v3057
        %v3851 = vpop.f32.mrf.mxu0
        %v3852 = vadd.f32 %v3531, %v3851
        %v3853 = vpop.f32.mrf.mxu0
        %v3854 = vpop.f32.mrf.mxu0
        %v3855 = vadd.f32 %v3534, %v3854
        %v3856 = vpop.f32.mrf.mxu0
        %3857 = vmatprep.mubr.bf16.mxu0 %v3061
        %3858 = vmatmul.mubr.bf16.gmra.mxu0 %v3060
        %v3859 = vpop.f32.mrf.mxu0
        %v3860 = vadd.f32 %v3539, %v3859
        %v3861 = vpop.f32.mrf.mxu0
        %v3862 = vpop.f32.mrf.mxu0
        %v3863 = vadd.f32 %v3542, %v3862
        %v3864 = vpop.f32.mrf.mxu0
        %3865 = vmatprep.mubr.bf16.mxu0 %v3064
        %3866 = vmatmul.mubr.bf16.gmra.mxu0 %v3063
        %v3867 = vpop.f32.mrf.mxu0
        %v3868 = vadd.f32 %v3547, %v3867
        %v3869 = vpop.f32.mrf.mxu0
        %v3870 = vpop.f32.mrf.mxu0
        %v3871 = vadd.f32 %v3550, %v3870
        %v3872 = vpop.f32.mrf.mxu0
        %3873 = vmatprep.mubr.bf16.mxu0 %v3067
        %3874 = vmatmul.mubr.bf16.gmra.mxu0 %v3066
        %v3875 = vpop.f32.mrf.mxu0
        %v3876 = vadd.f32 %v3555, %v3875
        %v3877 = vpop.f32.mrf.mxu0
        %v3878 = vpop.f32.mrf.mxu0
        %v3879 = vadd.f32 %v3558, %v3878
        %v3880 = vpop.f32.mrf.mxu0
        %3881 = vmatprep.mubr.bf16.mxu0 %v3070
        %3882 = vmatmul.mubr.bf16.gmra.mxu0 %v3069
        %v3883 = vpop.f32.mrf.mxu0
        %v3884 = vadd.f32 %v3563, %v3883
        %v3885 = vpop.f32.mrf.mxu0
        %v3886 = vpop.f32.mrf.mxu0
        %v3887 = vadd.f32 %v3566, %v3886
        %v3888 = vpop.f32.mrf.mxu0
        %3889 = vmatprep.mubr.bf16.mxu0 %v3073
        %3890 = vmatmul.mubr.bf16.gmra.mxu0 %v3072
        %v3891 = vpop.f32.mrf.mxu0
        %v3892 = vadd.f32 %v3571, %v3891
        %v3893 = vpop.f32.mrf.mxu0
        %v3894 = vpop.f32.mrf.mxu0
        %v3895 = vadd.f32 %v3574, %v3894
        %v3896 = vpop.f32.mrf.mxu0
        %3897 = vmatprep.mubr.bf16.mxu0 %v3076
        %3898 = vmatmul.mubr.bf16.gmra.mxu0 %v3075
        %v3899 = vpop.f32.mrf.mxu0
        %v3900 = vadd.f32 %v3579, %v3899
        %v3901 = vpop.f32.mrf.mxu0
        %v3902 = vpop.f32.mrf.mxu0
        %v3903 = vadd.f32 %v3582, %v3902
        %v3904 = vpop.f32.mrf.mxu0
        %3905 = vmatprep.mubr.bf16.mxu0 %v3079
        %3906 = vmatmul.mubr.bf16.gmra.mxu0 %v3078
        %v3907 = vpop.f32.mrf.mxu0
        %v3908 = vadd.f32 %v3587, %v3907
        %v3909 = vpop.f32.mrf.mxu0
        %v3910 = vpop.f32.mrf.mxu0
        %v3911 = vadd.f32 %v3590, %v3910
        %v3912 = vpop.f32.mrf.mxu0
        %3913 = vmatprep.mubr.bf16.mxu0 %v3082
        %3914 = vmatmul.mubr.bf16.gmra.mxu0 %v3081
        %v3915 = vpop.f32.mrf.mxu0
        %v3916 = vadd.f32 %v3595, %v3915
        %v3917 = vpop.f32.mrf.mxu0
        %v3918 = vpop.f32.mrf.mxu0
        %v3919 = vadd.f32 %v3598, %v3918
        %v3920 = vpop.f32.mrf.mxu0
        %3921 = vdwg.mxu0
        %3922 = vmatprep.subr.bf16.mxu0 0
        %3923 = vmatpush1.bf16.msra.mxu0 %v3736
        %3924 = vmatprep.subr.bf16.mxu0 0
        %3925 = vmatpush1.bf16.msra.mxu0 %v3735
        %3926 = vmatprep.subr.bf16.mxu0 0
        %3927 = vmatpush1.bf16.msra.mxu0 %v3734
        %3928 = vmatprep.subr.bf16.mxu0 0
        %3929 = vmatpush1.bf16.msra.mxu0 %v3733
        %3930 = vmatprep.subr.bf16.mxu0 0
        %3931 = vmatpush1.bf16.msra.mxu0 %v3732
        %3932 = vmatprep.subr.bf16.mxu0 0
        %3933 = vmatpush1.bf16.msra.mxu0 %v3731
        %3934 = vmatprep.subr.bf16.mxu0 0
        %3935 = vmatpush1.bf16.msra.mxu0 %v3730
        %3936 = vmatprep.subr.bf16.mxu0 0
        %3937 = vmatpush1.bf16.msra.mxu0 %v3729
        %3938 = vmatprep.subr.bf16.mxu0 0
        %3939 = vmatpush2.bf16.msra.mxu0 0
        %3940 = vmatprep.subr.bf16.mxu0 0
        %3941 = vmatpush2.bf16.msra.mxu0 0
        %3942 = vmatprep.subr.bf16.mxu0 0
        %3943 = vmatpush2.bf16.msra.mxu0 0
        %3944 = vmatprep.subr.bf16.mxu0 0
        %3945 = vmatpush2.bf16.msra.mxu0 0
        %3946 = vmatprep.subr.bf16.mxu0 0
        %3947 = vmatpush2.bf16.msra.mxu0 0
        %3948 = vmatprep.subr.bf16.mxu0 0
        %3949 = vmatpush2.bf16.msra.mxu0 0
        %3950 = vmatprep.subr.bf16.mxu0 0
        %3951 = vmatpush2.bf16.msra.mxu0 0
        %3952 = vmatprep.subr.bf16.mxu0 0
        %3953 = vmatpush2.bf16.msra.mxu0 0
        %3954 = vmatprep.mubr.bf16.mxu0 0
        %3955 = vmatmul.mubr.bf16.gmra.mxu0 %v3613
        %v3956 = vpop.f32.mrf.mxu0
        %v3957 = vadd.f32 %v3796, %v3956
        %v3958 = vpop.f32.mrf.mxu0
        %v3959 = vpop.f32.mrf.mxu0
        %v3960 = vadd.f32 %v3799, %v3959
        %v3961 = vpop.f32.mrf.mxu0
        %3962 = vmatprep.mubr.bf16.mxu0 0
        %3963 = vmatmul.mubr.bf16.gmra.mxu0 %v3041
        %v3964 = vpop.f32.mrf.mxu0
        %v3965 = vadd.f32 %v3804, %v3964
        %v3966 = vpop.f32.mrf.mxu0
        %v3967 = vpop.f32.mrf.mxu0
        %v3968 = vadd.f32 %v3807, %v3967
        %v3969 = vpop.f32.mrf.mxu0
        %3970 = vmatprep.mubr.bf16.mxu0 0
        %3971 = vmatmul.mubr.bf16.gmra.mxu0 %v3044
        %v3972 = vpop.f32.mrf.mxu0
        %v3973 = vadd.f32 %v3812, %v3972
        %v3974 = vpop.f32.mrf.mxu0
        %v3975 = vpop.f32.mrf.mxu0
        %v3976 = vadd.f32 %v3815, %v3975
        %v3977 = vpop.f32.mrf.mxu0
        %3978 = vmatprep.mubr.bf16.mxu0 0
        %3979 = vmatmul.mubr.bf16.gmra.mxu0 %v3047
        %v3980 = vpop.f32.mrf.mxu0
        %v3981 = vadd.f32 %v3820, %v3980
        %v3982 = vpop.f32.mrf.mxu0
        %v3983 = vpop.f32.mrf.mxu0
        %v3984 = vadd.f32 %v3823, %v3983
        %v3985 = vpop.f32.mrf.mxu0
        %3986 = vmatprep.mubr.bf16.mxu0 0
        %3987 = vmatmul.mubr.bf16.gmra.mxu0 %v3050
        %v3988 = vpop.f32.mrf.mxu0
        %v3989 = vadd.f32 %v3828, %v3988
        %v3990 = vpop.f32.mrf.mxu0
        %v3991 = vpop.f32.mrf.mxu0
        %v3992 = vadd.f32 %v3831, %v3991
        %v3993 = vpop.f32.mrf.mxu0
        %3994 = vmatprep.mubr.bf16.mxu0 0
        %3995 = vmatmul.mubr.bf16.gmra.mxu0 %v3053
        %v3996 = vpop.f32.mrf.mxu0
        %v3997 = vadd.f32 %v3836, %v3996
        %v3998 = vpop.f32.mrf.mxu0
        %v3999 = vpop.f32.mrf.mxu0
        %v4000 = vadd.f32 %v3839, %v3999
        %v4001 = vpop.f32.mrf.mxu0
        %4002 = vmatprep.mubr.bf16.mxu0 0
        %4003 = vmatmul.mubr.bf16.gmra.mxu0 %v3056
        %v4004 = vpop.f32.mrf.mxu0
        %v4005 = vadd.f32 %v3844, %v4004
        %v4006 = vpop.f32.mrf.mxu0
        %v4007 = vpop.f32.mrf.mxu0
        %v4008 = vadd.f32 %v3847, %v4007
        %v4009 = vpop.f32.mrf.mxu0
        %4010 = vmatprep.mubr.bf16.mxu0 0
        %4011 = vmatmul.mubr.bf16.gmra.mxu0 %v3059
        %v4012 = vpop.f32.mrf.mxu0
        %v4013 = vadd.f32 %v3852, %v4012
        %v4014 = vpop.f32.mrf.mxu0
        %v4015 = vpop.f32.mrf.mxu0
        %v4016 = vadd.f32 %v3855, %v4015
        %v4017 = vpop.f32.mrf.mxu0
        %4018 = vmatprep.mubr.bf16.mxu0 0
        %4019 = vmatmul.mubr.bf16.gmra.mxu0 %v3062
        %v4020 = vpop.f32.mrf.mxu0
        %v4021 = vadd.f32 %v3860, %v4020
        %v4022 = vpop.f32.mrf.mxu0
        %v4023 = vpop.f32.mrf.mxu0
        %v4024 = vadd.f32 %v3863, %v4023
        %v4025 = vpop.f32.mrf.mxu0
        %4026 = vmatprep.mubr.bf16.mxu0 0
        %4027 = vmatmul.mubr.bf16.gmra.mxu0 %v3065
        %v4028 = vpop.f32.mrf.mxu0
        %v4029 = vadd.f32 %v3868, %v4028
        %v4030 = vpop.f32.mrf.mxu0
        %v4031 = vpop.f32.mrf.mxu0
        %v4032 = vadd.f32 %v3871, %v4031
        %v4033 = vpop.f32.mrf.mxu0
        %4034 = vmatprep.mubr.bf16.mxu0 0
        %4035 = vmatmul.mubr.bf16.gmra.mxu0 %v3068
        %v4036 = vpop.f32.mrf.mxu0
        %v4037 = vadd.f32 %v3876, %v4036
        %v4038 = vpop.f32.mrf.mxu0
        %v4039 = vpop.f32.mrf.mxu0
        %v4040 = vadd.f32 %v3879, %v4039
        %v4041 = vpop.f32.mrf.mxu0
        %4042 = vmatprep.mubr.bf16.mxu0 0
        %4043 = vmatmul.mubr.bf16.gmra.mxu0 %v3071
        %v4044 = vpop.f32.mrf.mxu0
        %v4045 = vadd.f32 %v3884, %v4044
        %v4046 = vpop.f32.mrf.mxu0
        %v4047 = vpop.f32.mrf.mxu0
        %v4048 = vadd.f32 %v3887, %v4047
        %v4049 = vpop.f32.mrf.mxu0
        %4050 = vmatprep.mubr.bf16.mxu0 0
        %4051 = vmatmul.mubr.bf16.gmra.mxu0 %v3074
        %v4052 = vpop.f32.mrf.mxu0
        %v4053 = vadd.f32 %v3892, %v4052
        %v4054 = vpop.f32.mrf.mxu0
        %v4055 = vpop.f32.mrf.mxu0
        %v4056 = vadd.f32 %v3895, %v4055
        %v4057 = vpop.f32.mrf.mxu0
        %4058 = vmatprep.mubr.bf16.mxu0 0
        %4059 = vmatmul.mubr.bf16.gmra.mxu0 %v3077
        %v4060 = vpop.f32.mrf.mxu0
        %v4061 = vadd.f32 %v3900, %v4060
        %v4062 = vpop.f32.mrf.mxu0
        %v4063 = vpop.f32.mrf.mxu0
        %v4064 = vadd.f32 %v3903, %v4063
        %v4065 = vpop.f32.mrf.mxu0
        %4066 = vmatprep.mubr.bf16.mxu0 0
        %4067 = vmatmul.mubr.bf16.gmra.mxu0 %v3080
        %v4068 = vpop.f32.mrf.mxu0
        %v4069 = vadd.f32 %v3908, %v4068
        %v4070 = vpop.f32.mrf.mxu0
        %v4071 = vpop.f32.mrf.mxu0
        %v4072 = vadd.f32 %v3911, %v4071
        %v4073 = vpop.f32.mrf.mxu0
        %4074 = vmatprep.mubr.bf16.mxu0 0
        %4075 = vmatmul.mubr.bf16.gmra.mxu0 %v3083
        %v4076 = vpop.f32.mrf.mxu0
        %v4077 = vadd.f32 %v3916, %v4076
        %v4078 = vpop.f32.mrf.mxu0
        %v4079 = vpop.f32.mrf.mxu0
        %v4080 = vadd.f32 %v3919, %v4079
        %v4081 = vpop.f32.mrf.mxu0
        %4082 = vdwg.mxu0
        %v4083 = vld [vmem:[#allocation3 + $0x48] sm:$0xff]
        %v4084 = vld [vmem:[#allocation3 + $0x50] sm:$0xf]
        %v4085 = vld [vmem:[#allocation3 + $0x54] sm:$0xff]
        %v4086 = vld [vmem:[#allocation3 + $0x5c] sm:$0xf]
        %v4087 = vld [vmem:[#allocation3 + $0x60] sm:$0xff]
        %v4088 = vld [vmem:[#allocation3 + $0x68] sm:$0xf]
        %v4089 = vld [vmem:[#allocation3 + $0x6c] sm:$0xff]
        %v4090 = vld [vmem:[#allocation3 + $0x74] sm:$0xf]
        %v4091 = vld [vmem:[#allocation3 + $0x78] sm:$0xff]
        %v4092 = vld [vmem:[#allocation3 + $0x80] sm:$0xf]
        %v4093 = vld [vmem:[#allocation3 + $0x84] sm:$0xff]
        %v4094 = vld [vmem:[#allocation3 + $0x8c] sm:$0xf]
        %v4095 = vld [vmem:[#allocation3 + $0x90] sm:$0xff]
        %v4096 = vld [vmem:[#allocation3 + $0x98] sm:$0xf]
        %v4097 = vld [vmem:[#allocation3 + $0x9c] sm:$0xff]
        %v4098 = vld [vmem:[#allocation3 + $0xa4] sm:$0xf]
        %v4099 = vld [vmem:[#allocation3 + $0xa8] sm:$0xff]
        %v4100 = vld [vmem:[#allocation3 + $0xb0] sm:$0xf]
        %v4101 = vld [vmem:[#allocation3 + $0xb4] sm:$0xff]
        %v4102 = vld [vmem:[#allocation3 + $0xbc] sm:$0xf]
        %v4103 = vld [vmem:[#allocation3 + $0xc0] sm:$0xff]
        %v4104 = vld [vmem:[#allocation3 + $0xc8] sm:$0xf]
        %v4105 = vld [vmem:[#allocation3 + $0xcc] sm:$0xff]
        %v4106 = vld [vmem:[#allocation3 + $0xd4] sm:$0xf]
        %v4107 = vld [vmem:[#allocation3 + $0xd8] sm:$0xff]
        %v4108 = vld [vmem:[#allocation3 + $0xe0] sm:$0xf]
        %v4109 = vld [vmem:[#allocation3 + $0xe4] sm:$0xff]
        %v4110 = vld [vmem:[#allocation3 + $0xec] sm:$0xf]
        %v4111 = vld [vmem:[#allocation3 + $0xf0] sm:$0xff]
        %v4112 = vld [vmem:[#allocation3 + $0xf8] sm:$0xf]
        %v4113 = vld [vmem:[#allocation3 + $0xfc] sm:$0xff]
        %v4114 = vld [vmem:[#allocation3 + $0x104] sm:$0xf]
        %v4115 = vld [vmem:[#allocation3 + $0x108] sm:$0xff]
        %v4116 = vld [vmem:[#allocation3 + $0x110] sm:$0xf]
        %v4117 = vld [vmem:[#allocation3 + $0x114] sm:$0xff]
        %v4118 = vld [vmem:[#allocation3 + $0x11c] sm:$0xf]
        %v4119 = vld [vmem:[#allocation3 + $0x120] sm:$0xff]
        %v4120 = vld [vmem:[#allocation3 + $0x128] sm:$0xf]
        %v4121 = vld [vmem:[#allocation3 + $0x12c] sm:$0xff]
        %v4122 = vld [vmem:[#allocation3 + $0x134] sm:$0xf]
        %v4123 = vld [vmem:[#allocation3 + $0x138] sm:$0xff]
        %v4124 = vld [vmem:[#allocation3 + $0x140] sm:$0xf]
        %v4125 = vld [vmem:[#allocation3 + $0x144] sm:$0xff]
        %v4126 = vld [vmem:[#allocation3 + $0x14c] sm:$0xf]
        %v4127 = vld [vmem:[#allocation3 + $0x150] sm:$0xff]
        %v4128 = vld [vmem:[#allocation3 + $0x158] sm:$0xf]
        %v4129 = vld [vmem:[#allocation3 + $0x15c] sm:$0xff]
        %v4130 = vld [vmem:[#allocation3 + $0x164] sm:$0xf]
        %v4131 = vld [vmem:[#allocation3 + $0x168] sm:$0xff]
        %v4132 = vld [vmem:[#allocation3 + $0x170] sm:$0xf]
        %v4133 = vld [vmem:[#allocation3 + $0x174] sm:$0xff]
        %v4134 = vld [vmem:[#allocation3 + $0x17c] sm:$0xf]
        %v4135 = vld [vmem:[#allocation3 + $0x180] sm:$0xff]
        %v4136 = vld [vmem:[#allocation3 + $0x188] sm:$0xf]
        %v4137 = vld [vmem:[#allocation3 + $0x18c] sm:$0xff]
        %v4138 = vld [vmem:[#allocation3 + $0x194] sm:$0xf]
        %v4139 = vld [vmem:[#allocation3 + $0x198] sm:$0xff]
        %v4140 = vld [vmem:[#allocation3 + $0x1a0] sm:$0xf]
        %v4141 = vld [vmem:[#allocation3 + $0x1a4] sm:$0xff]
        %v4142 = vld [vmem:[#allocation3 + $0x1ac] sm:$0xf]
        %v4143 = vld [vmem:[#allocation3 + $0x1b0] sm:$0xff]
        %v4144 = vld [vmem:[#allocation3 + $0x1b8] sm:$0xf]
        %v4145 = vld [vmem:[#allocation3 + $0x1bc] sm:$0xff]
        %v4146 = vld [vmem:[#allocation3 + $0x1c4] sm:$0xf]
        %v4147 = vld [vmem:[#allocation4 + $0x180] sm:$0xf]
        %v4148 = vld [vmem:[#allocation4 + $0x184] sm:$0xf]
        %v4149 = vld [vmem:[#allocation4 + $0x188] sm:$0xf]
        %v4150 = vld [vmem:[#allocation4 + $0x18c] sm:$0xf]
        %v4151 = vld [vmem:[#allocation4 + $0x190] sm:$0xf]
        %v4152 = vld [vmem:[#allocation4 + $0x194] sm:$0xf]
        %v4153 = vld [vmem:[#allocation4 + $0x198] sm:$0xf]
        %v4154 = vld [vmem:[#allocation4 + $0x19c] sm:$0xf]
        %v4155 = vld [vmem:[#allocation4 + $0x1a0] sm:$0xf]
        %v4156 = vld [vmem:[#allocation4 + $0x1a4] sm:$0xf]
        %v4157 = vld [vmem:[#allocation4 + $0x1a8] sm:$0xf]
        %v4158 = vld [vmem:[#allocation4 + $0x1ac] sm:$0xf]
        %v4159 = vld [vmem:[#allocation4 + $0x1b0] sm:$0xf]
        %v4160 = vld [vmem:[#allocation4 + $0x1b4] sm:$0xf]
        %v4161 = vld [vmem:[#allocation4 + $0x1b8] sm:$0xf]
        %v4162 = vld [vmem:[#allocation4 + $0x1bc] sm:$0xf]
        %v4163 = vld [vmem:[#allocation4 + $0x1c0] sm:$0xf]
        %v4164 = vld [vmem:[#allocation4 + $0x1c4] sm:$0xf]
        %v4165 = vld [vmem:[#allocation4 + $0x1c8] sm:$0xf]
        %v4166 = vld [vmem:[#allocation4 + $0x1cc] sm:$0xf]
        %v4167 = vld [vmem:[#allocation4 + $0x1d0] sm:$0xf]
        %v4168 = vld [vmem:[#allocation4 + $0x1d4] sm:$0xf]
        %v4169 = vld [vmem:[#allocation4 + $0x1d8] sm:$0xf]
        %v4170 = vld [vmem:[#allocation4 + $0x1dc] sm:$0xf]
        %v4171 = vld [vmem:[#allocation4 + $0x1e0] sm:$0xf]
        %v4172 = vld [vmem:[#allocation4 + $0x1e4] sm:$0xf]
        %v4173 = vld [vmem:[#allocation4 + $0x1e8] sm:$0xf]
        %v4174 = vld [vmem:[#allocation4 + $0x1ec] sm:$0xf]
        %v4175 = vld [vmem:[#allocation4 + $0x1f0] sm:$0xf]
        %v4176 = vld [vmem:[#allocation4 + $0x1f4] sm:$0xf]
        %v4177 = vld [vmem:[#allocation4 + $0x1f8] sm:$0xf]
        %v4178 = vld [vmem:[#allocation4 + $0x1fc] sm:$0xf]
        %v4179 = vld [vmem:[#allocation4 + $0x200] sm:$0xf]
        %v4180 = vld [vmem:[#allocation4 + $0x204] sm:$0xf]
        %v4181 = vld [vmem:[#allocation4 + $0x208] sm:$0xf]
        %v4182 = vld [vmem:[#allocation4 + $0x20c] sm:$0xf]
        %v4183 = vld [vmem:[#allocation4 + $0x210] sm:$0xf]
        %v4184 = vld [vmem:[#allocation4 + $0x214] sm:$0xf]
        %v4185 = vld [vmem:[#allocation4 + $0x218] sm:$0xf]
        %v4186 = vld [vmem:[#allocation4 + $0x21c] sm:$0xf]
        %v4187 = vld [vmem:[#allocation4 + $0x220] sm:$0xf]
        %v4188 = vld [vmem:[#allocation4 + $0x224] sm:$0xf]
        %v4189 = vld [vmem:[#allocation4 + $0x228] sm:$0xf]
        %v4190 = vld [vmem:[#allocation4 + $0x22c] sm:$0xf]
        %v4191 = vld [vmem:[#allocation4 + $0x230] sm:$0xf]
        %v4192 = vld [vmem:[#allocation4 + $0x234] sm:$0xf]
        %v4193 = vld [vmem:[#allocation4 + $0x238] sm:$0xf]
        %v4194 = vld [vmem:[#allocation4 + $0x23c] sm:$0xf]
        %v4259 = vunpack.c.l.b16 %v4083
        %v4260 = vunpack.c.h.b16 %v4083
        %v4261 = vunpack.c.l.b16 %v4084
        %v4262 = vunpack.c.l.b16 %v4085
        %v4263 = vunpack.c.h.b16 %v4085
        %v4264 = vunpack.c.l.b16 %v4086
        %v4265 = vunpack.c.l.b16 %v4087
        %v4266 = vunpack.c.h.b16 %v4087
        %v4267 = vunpack.c.l.b16 %v4088
        %v4268 = vunpack.c.l.b16 %v4089
        %v4269 = vunpack.c.h.b16 %v4089
        %v4270 = vunpack.c.l.b16 %v4090
        %v4271 = vunpack.c.l.b16 %v4091
        %v4272 = vunpack.c.h.b16 %v4091
        %v4273 = vunpack.c.l.b16 %v4092
        %v4274 = vunpack.c.l.b16 %v4093
        %v4275 = vunpack.c.h.b16 %v4093
        %v4276 = vunpack.c.l.b16 %v4094
        %v4277 = vunpack.c.l.b16 %v4095
        %v4278 = vunpack.c.h.b16 %v4095
        %v4279 = vunpack.c.l.b16 %v4096
        %v4280 = vunpack.c.l.b16 %v4097
        %v4281 = vunpack.c.h.b16 %v4097
        %v4282 = vunpack.c.l.b16 %v4098
        %v4283 = vunpack.c.l.b16 %v4099
        %v4284 = vunpack.c.h.b16 %v4099
        %v4285 = vunpack.c.l.b16 %v4100
        %v4286 = vunpack.c.l.b16 %v4101
        %v4287 = vunpack.c.h.b16 %v4101
        %v4288 = vunpack.c.l.b16 %v4102
        %v4289 = vunpack.c.l.b16 %v4103
        %v4290 = vunpack.c.h.b16 %v4103
        %v4291 = vunpack.c.l.b16 %v4104
        %v4292 = vunpack.c.l.b16 %v4105
        %v4293 = vunpack.c.h.b16 %v4105
        %v4294 = vunpack.c.l.b16 %v4106
        %v4295 = vunpack.c.l.b16 %v4107
        %v4296 = vunpack.c.h.b16 %v4107
        %v4297 = vunpack.c.l.b16 %v4108
        %v4298 = vunpack.c.l.b16 %v4109
        %v4299 = vunpack.c.h.b16 %v4109
        %v4300 = vunpack.c.l.b16 %v4110
        %v4301 = vunpack.c.l.b16 %v4111
        %v4302 = vunpack.c.h.b16 %v4111
        %v4303 = vunpack.c.l.b16 %v4112
        %v4304 = vunpack.c.l.b16 %v4113
        %v4305 = vunpack.c.h.b16 %v4113
        %v4306 = vunpack.c.l.b16 %v4114
        %v4307 = vunpack.c.l.b16 %v4115
        %v4308 = vunpack.c.h.b16 %v4115
        %v4309 = vunpack.c.l.b16 %v4116
        %v4310 = vunpack.c.l.b16 %v4117
        %v4311 = vunpack.c.h.b16 %v4117
        %v4312 = vunpack.c.l.b16 %v4118
        %v4313 = vunpack.c.l.b16 %v4119
        %v4314 = vunpack.c.h.b16 %v4119
        %v4315 = vunpack.c.l.b16 %v4120
        %v4316 = vunpack.c.l.b16 %v4121
        %v4317 = vunpack.c.h.b16 %v4121
        %v4318 = vunpack.c.l.b16 %v4122
        %v4319 = vunpack.c.l.b16 %v4123
        %v4320 = vunpack.c.h.b16 %v4123
        %v4321 = vunpack.c.l.b16 %v4124
        %v4322 = vunpack.c.l.b16 %v4125
        %v4323 = vunpack.c.h.b16 %v4125
        %v4324 = vunpack.c.l.b16 %v4126
        %v4325 = vunpack.c.l.b16 %v4127
        %v4326 = vunpack.c.h.b16 %v4127
        %v4327 = vunpack.c.l.b16 %v4128
        %v4328 = vunpack.c.l.b16 %v4129
        %v4329 = vunpack.c.h.b16 %v4129
        %v4330 = vunpack.c.l.b16 %v4130
        %v4331 = vunpack.c.l.b16 %v4131
        %v4332 = vunpack.c.h.b16 %v4131
        %v4333 = vunpack.c.l.b16 %v4132
        %v4334 = vunpack.c.l.b16 %v4133
        %v4335 = vunpack.c.h.b16 %v4133
        %v4336 = vunpack.c.l.b16 %v4134
        %v4337 = vunpack.c.l.b16 %v4135
        %v4338 = vunpack.c.h.b16 %v4135
        %v4339 = vunpack.c.l.b16 %v4136
        %v4340 = vunpack.c.l.b16 %v4137
        %v4341 = vunpack.c.h.b16 %v4137
        %v4342 = vunpack.c.l.b16 %v4138
        %v4343 = vunpack.c.l.b16 %v4139
        %v4344 = vunpack.c.h.b16 %v4139
        %v4345 = vunpack.c.l.b16 %v4140
        %v4346 = vunpack.c.l.b16 %v4141
        %v4347 = vunpack.c.h.b16 %v4141
        %v4348 = vunpack.c.l.b16 %v4142
        %v4349 = vunpack.c.l.b16 %v4143
        %v4350 = vunpack.c.h.b16 %v4143
        %v4351 = vunpack.c.l.b16 %v4144
        %v4352 = vunpack.c.l.b16 %v4145
        %v4353 = vunpack.c.h.b16 %v4145
        %v4354 = vunpack.c.l.b16 %v4146
        %v4355 = vpack.c.b16 %v4262, %v4259
        %v4356 = vpack.c.b16 %v4263, %v4260
        %v4357 = vpack.c.b16 %v4264, %v4261
        %v4358 = vpack.c.b16 %v4268, %v4265
        %v4359 = vpack.c.b16 %v4269, %v4266
        %v4360 = vpack.c.b16 %v4270, %v4267
        %v4361 = vpack.c.b16 %v4274, %v4271
        %v4362 = vpack.c.b16 %v4275, %v4272
        %v4363 = vpack.c.b16 %v4276, %v4273
        %v4364 = vpack.c.b16 %v4280, %v4277
        %v4365 = vpack.c.b16 %v4281, %v4278
        %v4366 = vpack.c.b16 %v4282, %v4279
        %v4367 = vpack.c.b16 %v4286, %v4283
        %v4368 = vpack.c.b16 %v4287, %v4284
        %v4369 = vpack.c.b16 %v4288, %v4285
        %v4370 = vpack.c.b16 %v4292, %v4289
        %v4371 = vpack.c.b16 %v4293, %v4290
        %v4372 = vpack.c.b16 %v4294, %v4291
        %v4373 = vpack.c.b16 %v4298, %v4295
        %v4374 = vpack.c.b16 %v4299, %v4296
        %v4375 = vpack.c.b16 %v4300, %v4297
        %v4376 = vpack.c.b16 %v4304, %v4301
        %v4377 = vpack.c.b16 %v4305, %v4302
        %v4378 = vpack.c.b16 %v4306, %v4303
        %v4379 = vpack.c.b16 %v4310, %v4307
        %v4380 = vpack.c.b16 %v4311, %v4308
        %v4381 = vpack.c.b16 %v4312, %v4309
        %v4382 = vpack.c.b16 %v4316, %v4313
        %v4383 = vpack.c.b16 %v4317, %v4314
        %v4384 = vpack.c.b16 %v4318, %v4315
        %v4385 = vpack.c.b16 %v4322, %v4319
        %v4386 = vpack.c.b16 %v4323, %v4320
        %v4387 = vpack.c.b16 %v4324, %v4321
        %v4388 = vpack.c.b16 %v4328, %v4325
        %v4389 = vpack.c.b16 %v4329, %v4326
        %v4390 = vpack.c.b16 %v4330, %v4327
        %v4391 = vpack.c.b16 %v4334, %v4331
        %v4392 = vpack.c.b16 %v4335, %v4332
        %v4393 = vpack.c.b16 %v4336, %v4333
        %v4394 = vpack.c.b16 %v4340, %v4337
        %v4395 = vpack.c.b16 %v4341, %v4338
        %v4396 = vpack.c.b16 %v4342, %v4339
        %v4397 = vpack.c.b16 %v4346, %v4343
        %v4398 = vpack.c.b16 %v4347, %v4344
        %v4399 = vpack.c.b16 %v4348, %v4345
        %v4400 = vpack.c.b16 %v4352, %v4349
        %v4401 = vpack.c.b16 %v4353, %v4350
        %v4402 = vpack.c.b16 %v4354, %v4351
        %v4499 = vunpack.c.l.b16 %v4147
        %v4500 = vunpack.c.l.b16 %v4148
        %v4501 = vunpack.c.l.b16 %v4149
        %v4502 = vunpack.c.l.b16 %v4150
        %v4503 = vunpack.c.l.b16 %v4151
        %v4504 = vunpack.c.l.b16 %v4152
        %v4505 = vunpack.c.l.b16 %v4153
        %v4506 = vunpack.c.l.b16 %v4154
        %v4507 = vunpack.c.l.b16 %v4155
        %v4508 = vunpack.c.l.b16 %v4156
        %v4509 = vunpack.c.l.b16 %v4157
        %v4510 = vunpack.c.l.b16 %v4158
        %v4511 = vunpack.c.l.b16 %v4159
        %v4512 = vunpack.c.l.b16 %v4160
        %v4513 = vunpack.c.l.b16 %v4161
        %v4514 = vunpack.c.l.b16 %v4162
        %v4515 = vunpack.c.l.b16 %v4163
        %v4516 = vunpack.c.l.b16 %v4164
        %v4517 = vunpack.c.l.b16 %v4165
        %v4518 = vunpack.c.l.b16 %v4166
        %v4519 = vunpack.c.l.b16 %v4167
        %v4520 = vunpack.c.l.b16 %v4168
        %v4521 = vunpack.c.l.b16 %v4169
        %v4522 = vunpack.c.l.b16 %v4170
        %v4523 = vunpack.c.l.b16 %v4171
        %v4524 = vunpack.c.l.b16 %v4172
        %v4525 = vunpack.c.l.b16 %v4173
        %v4526 = vunpack.c.l.b16 %v4174
        %v4527 = vunpack.c.l.b16 %v4175
        %v4528 = vunpack.c.l.b16 %v4176
        %v4529 = vunpack.c.l.b16 %v4177
        %v4530 = vunpack.c.l.b16 %v4178
        %v4531 = vunpack.c.l.b16 %v4179
        %v4532 = vunpack.c.l.b16 %v4180
        %v4533 = vunpack.c.l.b16 %v4181
        %v4534 = vunpack.c.l.b16 %v4182
        %v4535 = vunpack.c.l.b16 %v4183
        %v4536 = vunpack.c.l.b16 %v4184
        %v4537 = vunpack.c.l.b16 %v4185
        %v4538 = vunpack.c.l.b16 %v4186
        %v4539 = vunpack.c.l.b16 %v4187
        %v4540 = vunpack.c.l.b16 %v4188
        %v4541 = vunpack.c.l.b16 %v4189
        %v4542 = vunpack.c.l.b16 %v4190
        %v4543 = vunpack.c.l.b16 %v4191
        %v4544 = vunpack.c.l.b16 %v4192
        %v4545 = vunpack.c.l.b16 %v4193
        %v4546 = vunpack.c.l.b16 %v4194
        %v4547 = vpack.c.b16 %v4500, %v4499
        %v4548 = vpack.c.b16 %v4502, %v4501
        %v4549 = vpack.c.b16 %v4504, %v4503
        %v4550 = vpack.c.b16 %v4506, %v4505
        %v4551 = vpack.c.b16 %v4508, %v4507
        %v4552 = vpack.c.b16 %v4510, %v4509
        %v4553 = vpack.c.b16 %v4512, %v4511
        %v4554 = vpack.c.b16 %v4514, %v4513
        %v4555 = vpack.c.b16 %v4516, %v4515
        %v4556 = vpack.c.b16 %v4518, %v4517
        %v4557 = vpack.c.b16 %v4520, %v4519
        %v4558 = vpack.c.b16 %v4522, %v4521
        %v4559 = vpack.c.b16 %v4524, %v4523
        %v4560 = vpack.c.b16 %v4526, %v4525
        %v4561 = vpack.c.b16 %v4528, %v4527
        %v4562 = vpack.c.b16 %v4530, %v4529
        %v4563 = vpack.c.b16 %v4532, %v4531
        %v4564 = vpack.c.b16 %v4534, %v4533
        %v4565 = vpack.c.b16 %v4536, %v4535
        %v4566 = vpack.c.b16 %v4538, %v4537
        %v4567 = vpack.c.b16 %v4540, %v4539
        %v4568 = vpack.c.b16 %v4542, %v4541
        %v4569 = vpack.c.b16 %v4544, %v4543
        %v4570 = vpack.c.b16 %v4546, %v4545
        %4595 = vmatprep.subr.bf16.mxu0 0
        %4596 = vmatpush1.bf16.msra.mxu0 %v4554
        %4597 = vmatprep.subr.bf16.mxu0 0
        %4598 = vmatpush1.bf16.msra.mxu0 %v4553
        %4599 = vmatprep.subr.bf16.mxu0 0
        %4600 = vmatpush1.bf16.msra.mxu0 %v4552
        %4601 = vmatprep.subr.bf16.mxu0 0
        %4602 = vmatpush1.bf16.msra.mxu0 %v4551
        %4603 = vmatprep.subr.bf16.mxu0 0
        %4604 = vmatpush1.bf16.msra.mxu0 %v4550
        %4605 = vmatprep.subr.bf16.mxu0 0
        %4606 = vmatpush1.bf16.msra.mxu0 %v4549
        %4607 = vmatprep.subr.bf16.mxu0 0
        %4608 = vmatpush1.bf16.msra.mxu0 %v4548
        %4609 = vmatprep.subr.bf16.mxu0 0
        %4610 = vmatpush1.bf16.msra.mxu0 %v4547
        %4611 = vmatprep.subr.bf16.mxu0 0
        %4612 = vmatpush2.bf16.msra.mxu0 %v4562
        %4613 = vmatprep.subr.bf16.mxu0 0
        %4614 = vmatpush2.bf16.msra.mxu0 %v4561
        %4615 = vmatprep.subr.bf16.mxu0 0
        %4616 = vmatpush2.bf16.msra.mxu0 %v4560
        %4617 = vmatprep.subr.bf16.mxu0 0
        %4618 = vmatpush2.bf16.msra.mxu0 %v4559
        %4619 = vmatprep.subr.bf16.mxu0 0
        %4620 = vmatpush2.bf16.msra.mxu0 %v4558
        %4621 = vmatprep.subr.bf16.mxu0 0
        %4622 = vmatpush2.bf16.msra.mxu0 %v4557
        %4623 = vmatprep.subr.bf16.mxu0 0
        %4624 = vmatpush2.bf16.msra.mxu0 %v4556
        %4625 = vmatprep.subr.bf16.mxu0 0
        %4626 = vmatpush2.bf16.msra.mxu0 %v4555
        %4627 = vmatprep.mubr.bf16.mxu0 %v4356
        %4628 = vmatmul.mubr.bf16.gmra.mxu0 %v4355
        %v4629 = vpop.f32.mrf.mxu0
        %v4630 = vadd.f32 0.0, %v4629
        %v4631 = vpop.f32.mrf.mxu0
        %v4632 = vpop.f32.mrf.mxu0
        %v4633 = vadd.f32 0.0, %v4632
        %v4634 = vpop.f32.mrf.mxu0
        %4635 = vmatprep.mubr.bf16.mxu0 %v4359
        %4636 = vmatmul.mubr.bf16.gmra.mxu0 %v4358
        %v4637 = vpop.f32.mrf.mxu0
        %v4638 = vadd.f32 0.0, %v4637
        %v4639 = vpop.f32.mrf.mxu0
        %v4640 = vpop.f32.mrf.mxu0
        %v4641 = vadd.f32 0.0, %v4640
        %v4642 = vpop.f32.mrf.mxu0
        %4643 = vmatprep.mubr.bf16.mxu0 %v4362
        %4644 = vmatmul.mubr.bf16.gmra.mxu0 %v4361
        %v4645 = vpop.f32.mrf.mxu0
        %v4646 = vadd.f32 0.0, %v4645
        %v4647 = vpop.f32.mrf.mxu0
        %v4648 = vpop.f32.mrf.mxu0
        %v4649 = vadd.f32 0.0, %v4648
        %v4650 = vpop.f32.mrf.mxu0
        %4651 = vmatprep.mubr.bf16.mxu0 %v4365
        %4652 = vmatmul.mubr.bf16.gmra.mxu0 %v4364
        %v4653 = vpop.f32.mrf.mxu0
        %v4654 = vadd.f32 0.0, %v4653
        %v4655 = vpop.f32.mrf.mxu0
        %v4656 = vpop.f32.mrf.mxu0
        %v4657 = vadd.f32 0.0, %v4656
        %v4658 = vpop.f32.mrf.mxu0
        %4659 = vmatprep.mubr.bf16.mxu0 %v4368
        %4660 = vmatmul.mubr.bf16.gmra.mxu0 %v4367
        %v4661 = vpop.f32.mrf.mxu0
        %v4662 = vadd.f32 0.0, %v4661
        %v4663 = vpop.f32.mrf.mxu0
        %v4664 = vpop.f32.mrf.mxu0
        %v4665 = vadd.f32 0.0, %v4664
        %v4666 = vpop.f32.mrf.mxu0
        %4667 = vmatprep.mubr.bf16.mxu0 %v4371
        %4668 = vmatmul.mubr.bf16.gmra.mxu0 %v4370
        %v4669 = vpop.f32.mrf.mxu0
        %v4670 = vadd.f32 0.0, %v4669
        %v4671 = vpop.f32.mrf.mxu0
        %v4672 = vpop.f32.mrf.mxu0
        %v4673 = vadd.f32 0.0, %v4672
        %v4674 = vpop.f32.mrf.mxu0
        %4675 = vmatprep.mubr.bf16.mxu0 %v4374
        %4676 = vmatmul.mubr.bf16.gmra.mxu0 %v4373
        %v4677 = vpop.f32.mrf.mxu0
        %v4678 = vadd.f32 0.0, %v4677
        %v4679 = vpop.f32.mrf.mxu0
        %v4680 = vpop.f32.mrf.mxu0
        %v4681 = vadd.f32 0.0, %v4680
        %v4682 = vpop.f32.mrf.mxu0
        %4683 = vmatprep.mubr.bf16.mxu0 %v4377
        %4684 = vmatmul.mubr.bf16.gmra.mxu0 %v4376
        %v4685 = vpop.f32.mrf.mxu0
        %v4686 = vadd.f32 0.0, %v4685
        %v4687 = vpop.f32.mrf.mxu0
        %v4688 = vpop.f32.mrf.mxu0
        %v4689 = vadd.f32 0.0, %v4688
        %v4690 = vpop.f32.mrf.mxu0
        %4691 = vmatprep.mubr.bf16.mxu0 %v4380
        %4692 = vmatmul.mubr.bf16.gmra.mxu0 %v4379
        %v4693 = vpop.f32.mrf.mxu0
        %v4694 = vadd.f32 0.0, %v4693
        %v4695 = vpop.f32.mrf.mxu0
        %v4696 = vpop.f32.mrf.mxu0
        %v4697 = vadd.f32 0.0, %v4696
        %v4698 = vpop.f32.mrf.mxu0
        %4699 = vmatprep.mubr.bf16.mxu0 %v4383
        %4700 = vmatmul.mubr.bf16.gmra.mxu0 %v4382
        %v4701 = vpop.f32.mrf.mxu0
        %v4702 = vadd.f32 0.0, %v4701
        %v4703 = vpop.f32.mrf.mxu0
        %v4704 = vpop.f32.mrf.mxu0
        %v4705 = vadd.f32 0.0, %v4704
        %v4706 = vpop.f32.mrf.mxu0
        %4707 = vmatprep.mubr.bf16.mxu0 %v4386
        %4708 = vmatmul.mubr.bf16.gmra.mxu0 %v4385
        %v4709 = vpop.f32.mrf.mxu0
        %v4710 = vadd.f32 0.0, %v4709
        %v4711 = vpop.f32.mrf.mxu0
        %v4712 = vpop.f32.mrf.mxu0
        %v4713 = vadd.f32 0.0, %v4712
        %v4714 = vpop.f32.mrf.mxu0
        %4715 = vmatprep.mubr.bf16.mxu0 %v4389
        %4716 = vmatmul.mubr.bf16.gmra.mxu0 %v4388
        %v4717 = vpop.f32.mrf.mxu0
        %v4718 = vadd.f32 0.0, %v4717
        %v4719 = vpop.f32.mrf.mxu0
        %v4720 = vpop.f32.mrf.mxu0
        %v4721 = vadd.f32 0.0, %v4720
        %v4722 = vpop.f32.mrf.mxu0
        %4723 = vmatprep.mubr.bf16.mxu0 %v4392
        %4724 = vmatmul.mubr.bf16.gmra.mxu0 %v4391
        %v4725 = vpop.f32.mrf.mxu0
        %v4726 = vadd.f32 0.0, %v4725
        %v4727 = vpop.f32.mrf.mxu0
        %v4728 = vpop.f32.mrf.mxu0
        %v4729 = vadd.f32 0.0, %v4728
        %v4730 = vpop.f32.mrf.mxu0
        %4731 = vmatprep.mubr.bf16.mxu0 %v4395
        %4732 = vmatmul.mubr.bf16.gmra.mxu0 %v4394
        %v4733 = vpop.f32.mrf.mxu0
        %v4734 = vadd.f32 0.0, %v4733
        %v4735 = vpop.f32.mrf.mxu0
        %v4736 = vpop.f32.mrf.mxu0
        %v4737 = vadd.f32 0.0, %v4736
        %v4738 = vpop.f32.mrf.mxu0
        %4739 = vmatprep.mubr.bf16.mxu0 %v4398
        %4740 = vmatmul.mubr.bf16.gmra.mxu0 %v4397
        %v4741 = vpop.f32.mrf.mxu0
        %v4742 = vadd.f32 0.0, %v4741
        %v4743 = vpop.f32.mrf.mxu0
        %v4744 = vpop.f32.mrf.mxu0
        %v4745 = vadd.f32 0.0, %v4744
        %v4746 = vpop.f32.mrf.mxu0
        %4747 = vmatprep.mubr.bf16.mxu0 %v4401
        %4748 = vmatmul.mubr.bf16.gmra.mxu0 %v4400
        %v4749 = vpop.f32.mrf.mxu0
        %v4750 = vadd.f32 0.0, %v4749
        %v4751 = vpop.f32.mrf.mxu0
        %v4752 = vpop.f32.mrf.mxu0
        %v4753 = vadd.f32 0.0, %v4752
        %v4754 = vpop.f32.mrf.mxu0
        %4755 = vdwg.mxu0
        %4756 = vmatprep.subr.bf16.mxu0 0
        %4757 = vmatpush1.bf16.msra.mxu0 %v4570
        %4758 = vmatprep.subr.bf16.mxu0 0
        %4759 = vmatpush1.bf16.msra.mxu0 %v4569
        %4760 = vmatprep.subr.bf16.mxu0 0
        %4761 = vmatpush1.bf16.msra.mxu0 %v4568
        %4762 = vmatprep.subr.bf16.mxu0 0
        %4763 = vmatpush1.bf16.msra.mxu0 %v4567
        %4764 = vmatprep.subr.bf16.mxu0 0
        %4765 = vmatpush1.bf16.msra.mxu0 %v4566
        %4766 = vmatprep.subr.bf16.mxu0 0
        %4767 = vmatpush1.bf16.msra.mxu0 %v4565
        %4768 = vmatprep.subr.bf16.mxu0 0
        %4769 = vmatpush1.bf16.msra.mxu0 %v4564
        %4770 = vmatprep.subr.bf16.mxu0 0
        %4771 = vmatpush1.bf16.msra.mxu0 %v4563
        %4772 = vmatprep.subr.bf16.mxu0 0
        %4773 = vmatpush2.bf16.msra.mxu0 0
        %4774 = vmatprep.subr.bf16.mxu0 0
        %4775 = vmatpush2.bf16.msra.mxu0 0
        %4776 = vmatprep.subr.bf16.mxu0 0
        %4777 = vmatpush2.bf16.msra.mxu0 0
        %4778 = vmatprep.subr.bf16.mxu0 0
        %4779 = vmatpush2.bf16.msra.mxu0 0
        %4780 = vmatprep.subr.bf16.mxu0 0
        %4781 = vmatpush2.bf16.msra.mxu0 0
        %4782 = vmatprep.subr.bf16.mxu0 0
        %4783 = vmatpush2.bf16.msra.mxu0 0
        %4784 = vmatprep.subr.bf16.mxu0 0
        %4785 = vmatpush2.bf16.msra.mxu0 0
        %4786 = vmatprep.subr.bf16.mxu0 0
        %4787 = vmatpush2.bf16.msra.mxu0 0
        %4788 = vmatprep.mubr.bf16.mxu0 0
        %4789 = vmatmul.mubr.bf16.gmra.mxu0 %v4357
        %v4790 = vpop.f32.mrf.mxu0
        %v4791 = vadd.f32 %v4630, %v4790
        %v4792 = vpop.f32.mrf.mxu0
        %v4793 = vpop.f32.mrf.mxu0
        %v4794 = vadd.f32 %v4633, %v4793
        %v4795 = vpop.f32.mrf.mxu0
        %4796 = vmatprep.mubr.bf16.mxu0 0
        %4797 = vmatmul.mubr.bf16.gmra.mxu0 %v4360
        %v4798 = vpop.f32.mrf.mxu0
        %v4799 = vadd.f32 %v4638, %v4798
        %v4800 = vpop.f32.mrf.mxu0
        %v4801 = vpop.f32.mrf.mxu0
        %v4802 = vadd.f32 %v4641, %v4801
        %v4803 = vpop.f32.mrf.mxu0
        %4804 = vmatprep.mubr.bf16.mxu0 0
        %4805 = vmatmul.mubr.bf16.gmra.mxu0 %v4363
        %v4806 = vpop.f32.mrf.mxu0
        %v4807 = vadd.f32 %v4646, %v4806
        %v4808 = vpop.f32.mrf.mxu0
        %v4809 = vpop.f32.mrf.mxu0
        %v4810 = vadd.f32 %v4649, %v4809
        %v4811 = vpop.f32.mrf.mxu0
        %4812 = vmatprep.mubr.bf16.mxu0 0
        %4813 = vmatmul.mubr.bf16.gmra.mxu0 %v4366
        %v4814 = vpop.f32.mrf.mxu0
        %v4815 = vadd.f32 %v4654, %v4814
        %v4816 = vpop.f32.mrf.mxu0
        %v4817 = vpop.f32.mrf.mxu0
        %v4818 = vadd.f32 %v4657, %v4817
        %v4819 = vpop.f32.mrf.mxu0
        %4820 = vmatprep.mubr.bf16.mxu0 0
        %4821 = vmatmul.mubr.bf16.gmra.mxu0 %v4369
        %v4822 = vpop.f32.mrf.mxu0
        %v4823 = vadd.f32 %v4662, %v4822
        %v4824 = vpop.f32.mrf.mxu0
        %v4825 = vpop.f32.mrf.mxu0
        %v4826 = vadd.f32 %v4665, %v4825
        %v4827 = vpop.f32.mrf.mxu0
        %4828 = vmatprep.mubr.bf16.mxu0 0
        %4829 = vmatmul.mubr.bf16.gmra.mxu0 %v4372
        %v4830 = vpop.f32.mrf.mxu0
        %v4831 = vadd.f32 %v4670, %v4830
        %v4832 = vpop.f32.mrf.mxu0
        %v4833 = vpop.f32.mrf.mxu0
        %v4834 = vadd.f32 %v4673, %v4833
        %v4835 = vpop.f32.mrf.mxu0
        %4836 = vmatprep.mubr.bf16.mxu0 0
        %4837 = vmatmul.mubr.bf16.gmra.mxu0 %v4375
        %v4838 = vpop.f32.mrf.mxu0
        %v4839 = vadd.f32 %v4678, %v4838
        %v4840 = vpop.f32.mrf.mxu0
        %v4841 = vpop.f32.mrf.mxu0
        %v4842 = vadd.f32 %v4681, %v4841
        %v4843 = vpop.f32.mrf.mxu0
        %4844 = vmatprep.mubr.bf16.mxu0 0
        %4845 = vmatmul.mubr.bf16.gmra.mxu0 %v4378
        %v4846 = vpop.f32.mrf.mxu0
        %v4847 = vadd.f32 %v4686, %v4846
        %v4848 = vpop.f32.mrf.mxu0
        %v4849 = vpop.f32.mrf.mxu0
        %v4850 = vadd.f32 %v4689, %v4849
        %v4851 = vpop.f32.mrf.mxu0
        %4852 = vmatprep.mubr.bf16.mxu0 0
        %4853 = vmatmul.mubr.bf16.gmra.mxu0 %v4381
        %v4854 = vpop.f32.mrf.mxu0
        %v4855 = vadd.f32 %v4694, %v4854
        %v4856 = vpop.f32.mrf.mxu0
        %v4857 = vpop.f32.mrf.mxu0
        %v4858 = vadd.f32 %v4697, %v4857
        %v4859 = vpop.f32.mrf.mxu0
        %4860 = vmatprep.mubr.bf16.mxu0 0
        %4861 = vmatmul.mubr.bf16.gmra.mxu0 %v4384
        %v4862 = vpop.f32.mrf.mxu0
        %v4863 = vadd.f32 %v4702, %v4862
        %v4864 = vpop.f32.mrf.mxu0
        %v4865 = vpop.f32.mrf.mxu0
        %v4866 = vadd.f32 %v4705, %v4865
        %v4867 = vpop.f32.mrf.mxu0
        %4868 = vmatprep.mubr.bf16.mxu0 0
        %4869 = vmatmul.mubr.bf16.gmra.mxu0 %v4387
        %v4870 = vpop.f32.mrf.mxu0
        %v4871 = vadd.f32 %v4710, %v4870
        %v4872 = vpop.f32.mrf.mxu0
        %v4873 = vpop.f32.mrf.mxu0
        %v4874 = vadd.f32 %v4713, %v4873
        %v4875 = vpop.f32.mrf.mxu0
        %4876 = vmatprep.mubr.bf16.mxu0 0
        %4877 = vmatmul.mubr.bf16.gmra.mxu0 %v4390
        %v4878 = vpop.f32.mrf.mxu0
        %v4879 = vadd.f32 %v4718, %v4878
        %v4880 = vpop.f32.mrf.mxu0
        %v4881 = vpop.f32.mrf.mxu0
        %v4882 = vadd.f32 %v4721, %v4881
        %v4883 = vpop.f32.mrf.mxu0
        %4884 = vmatprep.mubr.bf16.mxu0 0
        %4885 = vmatmul.mubr.bf16.gmra.mxu0 %v4393
        %v4886 = vpop.f32.mrf.mxu0
        %v4887 = vadd.f32 %v4726, %v4886
        %v4888 = vpop.f32.mrf.mxu0
        %v4889 = vpop.f32.mrf.mxu0
        %v4890 = vadd.f32 %v4729, %v4889
        %v4891 = vpop.f32.mrf.mxu0
        %4892 = vmatprep.mubr.bf16.mxu0 0
        %4893 = vmatmul.mubr.bf16.gmra.mxu0 %v4396
        %v4894 = vpop.f32.mrf.mxu0
        %v4895 = vadd.f32 %v4734, %v4894
        %v4896 = vpop.f32.mrf.mxu0
        %v4897 = vpop.f32.mrf.mxu0
        %v4898 = vadd.f32 %v4737, %v4897
        %v4899 = vpop.f32.mrf.mxu0
        %4900 = vmatprep.mubr.bf16.mxu0 0
        %4901 = vmatmul.mubr.bf16.gmra.mxu0 %v4399
        %v4902 = vpop.f32.mrf.mxu0
        %v4903 = vadd.f32 %v4742, %v4902
        %v4904 = vpop.f32.mrf.mxu0
        %v4905 = vpop.f32.mrf.mxu0
        %v4906 = vadd.f32 %v4745, %v4905
        %v4907 = vpop.f32.mrf.mxu0
        %4908 = vmatprep.mubr.bf16.mxu0 0
        %4909 = vmatmul.mubr.bf16.gmra.mxu0 %v4402
        %v4910 = vpop.f32.mrf.mxu0
        %v4911 = vadd.f32 %v4750, %v4910
        %v4912 = vpop.f32.mrf.mxu0
        %v4913 = vpop.f32.mrf.mxu0
        %v4914 = vadd.f32 %v4753, %v4913
        %v4915 = vpop.f32.mrf.mxu0
        %4916 = vdwg.mxu0
        %v4917 = vadd.f32 %v3957, %v4791
        %v4918 = vadd.f32 %v3960, %v4794
        %v4919 = vadd.f32 %v3965, %v4799
        %v4920 = vadd.f32 %v3968, %v4802
        %v4921 = vadd.f32 %v3973, %v4807
        %v4922 = vadd.f32 %v3976, %v4810
        %v4923 = vadd.f32 %v3981, %v4815
        %v4924 = vadd.f32 %v3984, %v4818
        %v4925 = vadd.f32 %v3989, %v4823
        %v4926 = vadd.f32 %v3992, %v4826
        %v4927 = vadd.f32 %v3997, %v4831
        %v4928 = vadd.f32 %v4000, %v4834
        %v4929 = vadd.f32 %v4005, %v4839
        %v4930 = vadd.f32 %v4008, %v4842
        %v4931 = vadd.f32 %v4013, %v4847
        %v4932 = vadd.f32 %v4016, %v4850
        %v4933 = vadd.f32 %v4021, %v4855
        %v4934 = vadd.f32 %v4024, %v4858
        %v4935 = vadd.f32 %v4029, %v4863
        %v4936 = vadd.f32 %v4032, %v4866
        %v4937 = vadd.f32 %v4037, %v4871
        %v4938 = vadd.f32 %v4040, %v4874
        %v4939 = vadd.f32 %v4045, %v4879
        %v4940 = vadd.f32 %v4048, %v4882
        %v4941 = vadd.f32 %v4053, %v4887
        %v4942 = vadd.f32 %v4056, %v4890
        %v4943 = vadd.f32 %v4061, %v4895
        %v4944 = vadd.f32 %v4064, %v4898
        %v4945 = vadd.f32 %v4069, %v4903
        %v4946 = vadd.f32 %v4072, %v4906
        %v4947 = vadd.f32 %v4077, %v4911
        %v4948 = vadd.f32 %v4080, %v4914
        %v4950 = vlaneseq
        %v4951 = vshrl.u32 %v4950, 7
        %v4952 = vsub.s32 0, %v4951
        %v4953 = vrot.slane %v1044, %v4952
        %v4955 = vmul.f32 %v4917, %v4953
        %v4956 = vmul.f32 %v4918, %v4953
        %v4957 = vmul.f32 %v4919, %v4953
        %v4958 = vmul.f32 %v4920, %v4953
        %v4959 = vmul.f32 %v4921, %v4953
        %v4960 = vmul.f32 %v4922, %v4953
        %v4961 = vmul.f32 %v4923, %v4953
        %v4962 = vmul.f32 %v4924, %v4953
        %v4963 = vmul.f32 %v4925, %v4953
        %v4964 = vmul.f32 %v4926, %v4953
        %v4965 = vmul.f32 %v4927, %v4953
        %v4966 = vmul.f32 %v4928, %v4953
        %v4967 = vmul.f32 %v4929, %v4953
        %v4968 = vmul.f32 %v4930, %v4953
        %v4969 = vmul.f32 %v4931, %v4953
        %v4970 = vmul.f32 %v4932, %v4953
        %v4971 = vmul.f32 %v4933, %v4953
        %v4972 = vmul.f32 %v4934, %v4953
        %v4973 = vmul.f32 %v4935, %v4953
        %v4974 = vmul.f32 %v4936, %v4953
        %v4975 = vmul.f32 %v4937, %v4953
        %v4976 = vmul.f32 %v4938, %v4953
        %v4977 = vmul.f32 %v4939, %v4953
        %v4978 = vmul.f32 %v4940, %v4953
        %v4979 = vmul.f32 %v4941, %v4953
        %v4980 = vmul.f32 %v4942, %v4953
        %v4981 = vmul.f32 %v4943, %v4953
        %v4982 = vmul.f32 %v4944, %v4953
        %v4983 = vmul.f32 %v4945, %v4953
        %v4984 = vmul.f32 %v4946, %v4953
        %v4985 = vmul.f32 %v4947, %v4953
        %v4986 = vmul.f32 %v4948, %v4953
        %v4988 = vlaneseq
        %v4989 = vshrl.u32 %v4988, 7
        %v4990 = vsub.s32 0, %v4989
        %v4991 = vrot.slane %v1045, %v4990
        %v4993 = vadd.f32 %v4955, %v4991
        %v4994 = vadd.f32 %v4956, %v4991
        %v4995 = vadd.f32 %v4957, %v4991
        %v4996 = vadd.f32 %v4958, %v4991
        %v4997 = vadd.f32 %v4959, %v4991
        %v4998 = vadd.f32 %v4960, %v4991
        %v4999 = vadd.f32 %v4961, %v4991
        %v5000 = vadd.f32 %v4962, %v4991
        %v5001 = vadd.f32 %v4963, %v4991
        %v5002 = vadd.f32 %v4964, %v4991
        %v5003 = vadd.f32 %v4965, %v4991
        %v5004 = vadd.f32 %v4966, %v4991
        %v5005 = vadd.f32 %v4967, %v4991
        %v5006 = vadd.f32 %v4968, %v4991
        %v5007 = vadd.f32 %v4969, %v4991
        %v5008 = vadd.f32 %v4970, %v4991
        %v5009 = vadd.f32 %v4971, %v4991
        %v5010 = vadd.f32 %v4972, %v4991
        %v5011 = vadd.f32 %v4973, %v4991
        %v5012 = vadd.f32 %v4974, %v4991
        %v5013 = vadd.f32 %v4975, %v4991
        %v5014 = vadd.f32 %v4976, %v4991
        %v5015 = vadd.f32 %v4977, %v4991
        %v5016 = vadd.f32 %v4978, %v4991
        %v5017 = vadd.f32 %v4979, %v4991
        %v5018 = vadd.f32 %v4980, %v4991
        %v5019 = vadd.f32 %v4981, %v4991
        %v5020 = vadd.f32 %v4982, %v4991
        %v5021 = vadd.f32 %v4983, %v4991
        %v5022 = vadd.f32 %v4984, %v4991
        %v5023 = vadd.f32 %v4985, %v4991
        %v5024 = vadd.f32 %v4986, %v4991
        %v5025 = vmax.f32 %v4993, 0.0
        %v5026 = vmax.f32 %v4994, 0.0
        %v5027 = vmax.f32 %v4995, 0.0
        %v5028 = vmax.f32 %v4996, 0.0
        %v5029 = vmax.f32 %v4997, 0.0
        %v5030 = vmax.f32 %v4998, 0.0
        %v5031 = vmax.f32 %v4999, 0.0
        %v5032 = vmax.f32 %v5000, 0.0
        %v5033 = vmax.f32 %v5001, 0.0
        %v5034 = vmax.f32 %v5002, 0.0
        %v5035 = vmax.f32 %v5003, 0.0
        %v5036 = vmax.f32 %v5004, 0.0
        %v5037 = vmax.f32 %v5005, 0.0
        %v5038 = vmax.f32 %v5006, 0.0
        %v5039 = vmax.f32 %v5007, 0.0
        %v5040 = vmax.f32 %v5008, 0.0
        %v5041 = vmax.f32 %v5009, 0.0
        %v5042 = vmax.f32 %v5010, 0.0
        %v5043 = vmax.f32 %v5011, 0.0
        %v5044 = vmax.f32 %v5012, 0.0
        %v5045 = vmax.f32 %v5013, 0.0
        %v5046 = vmax.f32 %v5014, 0.0
        %v5047 = vmax.f32 %v5015, 0.0
        %v5048 = vmax.f32 %v5016, 0.0
        %v5049 = vmax.f32 %v5017, 0.0
        %v5050 = vmax.f32 %v5018, 0.0
        %v5051 = vmax.f32 %v5019, 0.0
        %v5052 = vmax.f32 %v5020, 0.0
        %v5053 = vmax.f32 %v5021, 0.0
        %v5054 = vmax.f32 %v5022, 0.0
        %v5055 = vmax.f32 %v5023, 0.0
        %v5056 = vmax.f32 %v5024, 0.0
        %v5057 = vpack.c.bf16 %v5026, %v5025
        %v5058 = vpack.c.bf16 %v5028, %v5027
        %v5059 = vpack.c.bf16 %v5030, %v5029
        %v5060 = vpack.c.bf16 %v5032, %v5031
        %v5061 = vpack.c.bf16 %v5034, %v5033
        %v5062 = vpack.c.bf16 %v5036, %v5035
        %v5063 = vpack.c.bf16 %v5038, %v5037
        %v5064 = vpack.c.bf16 %v5040, %v5039
        %v5065 = vpack.c.bf16 %v5042, %v5041
        %v5066 = vpack.c.bf16 %v5044, %v5043
        %v5067 = vpack.c.bf16 %v5046, %v5045
        %v5068 = vpack.c.bf16 %v5048, %v5047
        %v5069 = vpack.c.bf16 %v5050, %v5049
        %v5070 = vpack.c.bf16 %v5052, %v5051
        %v5071 = vpack.c.bf16 %v5054, %v5053
        %v5072 = vpack.c.bf16 %v5056, %v5055
        %v5089 = vunpack.c.l.b16 %v5057
        %v5090 = vunpack.c.h.b16 %v5057
        %v5091 = vunpack.c.l.b16 %v5058
        %v5092 = vunpack.c.h.b16 %v5058
        %v5093 = vunpack.c.l.b16 %v5059
        %v5094 = vunpack.c.h.b16 %v5059
        %v5095 = vunpack.c.l.b16 %v5060
        %v5096 = vunpack.c.h.b16 %v5060
        %v5097 = vunpack.c.l.b16 %v5061
        %v5098 = vunpack.c.h.b16 %v5061
        %v5099 = vunpack.c.l.b16 %v5062
        %v5100 = vunpack.c.h.b16 %v5062
        %v5101 = vunpack.c.l.b16 %v5063
        %v5102 = vunpack.c.h.b16 %v5063
        %v5103 = vunpack.c.l.b16 %v5064
        %v5104 = vunpack.c.h.b16 %v5064
        %v5105 = vunpack.c.l.b16 %v5065
        %v5106 = vunpack.c.h.b16 %v5065
        %v5107 = vunpack.c.l.b16 %v5066
        %v5108 = vunpack.c.h.b16 %v5066
        %v5109 = vunpack.c.l.b16 %v5067
        %v5110 = vunpack.c.h.b16 %v5067
        %v5111 = vunpack.c.l.b16 %v5068
        %v5112 = vunpack.c.h.b16 %v5068
        %v5113 = vunpack.c.l.b16 %v5069
        %v5114 = vunpack.c.h.b16 %v5069
        %v5115 = vunpack.c.l.b16 %v5070
        %v5116 = vunpack.c.h.b16 %v5070
        %v5117 = vunpack.c.l.b16 %v5071
        %v5118 = vunpack.c.h.b16 %v5071
        %v5119 = vunpack.c.l.b16 %v5072
        %v5120 = vunpack.c.h.b16 %v5072
        %v5121 = vpack.c.b16 %v5089, %v5089
        %v5122 = vpack.c.b16 %v5090, %v5090
        %v5123 = vpack.c.b16 %v5091, %v5091
        %v5124 = vpack.c.b16 %v5092, %v5092
        %v5125 = vpack.c.b16 %v5093, %v5093
        %v5126 = vpack.c.b16 %v5094, %v5094
        %v5127 = vpack.c.b16 %v5095, %v5095
        %v5128 = vpack.c.b16 %v5096, %v5096
        %v5129 = vpack.c.b16 %v5097, %v5097
        %v5130 = vpack.c.b16 %v5098, %v5098
        %v5131 = vpack.c.b16 %v5099, %v5099
        %v5132 = vpack.c.b16 %v5100, %v5100
        %v5133 = vpack.c.b16 %v5101, %v5101
        %v5134 = vpack.c.b16 %v5102, %v5102
        %v5135 = vpack.c.b16 %v5103, %v5103
        %v5136 = vpack.c.b16 %v5104, %v5104
        %v5137 = vpack.c.b16 %v5105, %v5105
        %v5138 = vpack.c.b16 %v5106, %v5106
        %v5139 = vpack.c.b16 %v5107, %v5107
        %v5140 = vpack.c.b16 %v5108, %v5108
        %v5141 = vpack.c.b16 %v5109, %v5109
        %v5142 = vpack.c.b16 %v5110, %v5110
        %v5143 = vpack.c.b16 %v5111, %v5111
        %v5144 = vpack.c.b16 %v5112, %v5112
        %v5145 = vpack.c.b16 %v5113, %v5113
        %v5146 = vpack.c.b16 %v5114, %v5114
        %v5147 = vpack.c.b16 %v5115, %v5115
        %v5148 = vpack.c.b16 %v5116, %v5116
        %v5149 = vpack.c.b16 %v5117, %v5117
        %v5150 = vpack.c.b16 %v5118, %v5118
        %v5151 = vpack.c.b16 %v5119, %v5119
        %v5152 = vpack.c.b16 %v5120, %v5120
        %v5153 = vrot.slane %v5121, 7
        %v5154 = vrot.slane %v5153, 4
        %v5155 = vrot.slane %v5122, 7
        %v5156 = vsel %vm866, %v5154, %v5155
        %v5157 = vrot.slane %v5155, 4
        %v5158 = vrot.slane %v5123, 7
        %v5159 = vrot.slane %v5158, 4
        %v5160 = vrot.slane %v5124, 7
        %v5161 = vsel %vm866, %v5159, %v5160
        %v5162 = vrot.slane %v5160, 4
        %v5163 = vrot.slane %v5125, 7
        %v5164 = vrot.slane %v5163, 4
        %v5165 = vrot.slane %v5126, 7
        %v5166 = vsel %vm866, %v5164, %v5165
        %v5167 = vrot.slane %v5165, 4
        %v5168 = vrot.slane %v5127, 7
        %v5169 = vrot.slane %v5168, 4
        %v5170 = vrot.slane %v5128, 7
        %v5171 = vsel %vm866, %v5169, %v5170
        %v5172 = vrot.slane %v5170, 4
        %v5173 = vrot.slane %v5129, 7
        %v5174 = vrot.slane %v5173, 4
        %v5175 = vrot.slane %v5130, 7
        %v5176 = vsel %vm866, %v5174, %v5175
        %v5177 = vrot.slane %v5175, 4
        %v5178 = vrot.slane %v5131, 7
        %v5179 = vrot.slane %v5178, 4
        %v5180 = vrot.slane %v5132, 7
        %v5181 = vsel %vm866, %v5179, %v5180
        %v5182 = vrot.slane %v5180, 4
        %v5183 = vrot.slane %v5133, 7
        %v5184 = vrot.slane %v5183, 4
        %v5185 = vrot.slane %v5134, 7
        %v5186 = vsel %vm866, %v5184, %v5185
        %v5187 = vrot.slane %v5185, 4
        %v5188 = vrot.slane %v5135, 7
        %v5189 = vrot.slane %v5188, 4
        %v5190 = vrot.slane %v5136, 7
        %v5191 = vsel %vm866, %v5189, %v5190
        %v5192 = vrot.slane %v5190, 4
        %v5193 = vrot.slane %v5137, 7
        %v5194 = vrot.slane %v5193, 4
        %v5195 = vrot.slane %v5138, 7
        %v5196 = vsel %vm866, %v5194, %v5195
        %v5197 = vrot.slane %v5195, 4
        %v5198 = vrot.slane %v5139, 7
        %v5199 = vrot.slane %v5198, 4
        %v5200 = vrot.slane %v5140, 7
        %v5201 = vsel %vm866, %v5199, %v5200
        %v5202 = vrot.slane %v5200, 4
        %v5203 = vrot.slane %v5141, 7
        %v5204 = vrot.slane %v5203, 4
        %v5205 = vrot.slane %v5142, 7
        %v5206 = vsel %vm866, %v5204, %v5205
        %v5207 = vrot.slane %v5205, 4
        %v5208 = vrot.slane %v5143, 7
        %v5209 = vrot.slane %v5208, 4
        %v5210 = vrot.slane %v5144, 7
        %v5211 = vsel %vm866, %v5209, %v5210
        %v5212 = vrot.slane %v5210, 4
        %v5213 = vrot.slane %v5145, 7
        %v5214 = vrot.slane %v5213, 4
        %v5215 = vrot.slane %v5146, 7
        %v5216 = vsel %vm866, %v5214, %v5215
        %v5217 = vrot.slane %v5215, 4
        %v5218 = vrot.slane %v5147, 7
        %v5219 = vrot.slane %v5218, 4
        %v5220 = vrot.slane %v5148, 7
        %v5221 = vsel %vm866, %v5219, %v5220
        %v5222 = vrot.slane %v5220, 4
        %v5223 = vrot.slane %v5149, 7
        %v5224 = vrot.slane %v5223, 4
        %v5225 = vrot.slane %v5150, 7
        %v5226 = vsel %vm866, %v5224, %v5225
        %v5227 = vrot.slane %v5225, 4
        %v5228 = vrot.slane %v5151, 7
        %v5229 = vrot.slane %v5228, 4
        %v5230 = vrot.slane %v5152, 7
        %v5231 = vsel %vm866, %v5229, %v5230
        %v5232 = vrot.slane %v5230, 4
        %5281 = vst [vmem:[%s995] sm:$0xe] %v5153
        %5282 = vst [vmem:[%s995 + $0x4] sm:$0xf] %v5156
        %5283 = vst [vmem:[%s995 + $0x8] sm:$0x1] %v5157
        %5284 = vst [vmem:[%s995 + $0xc] sm:$0xe] %v5158
        %5285 = vst [vmem:[%s995 + $0x10] sm:$0xf] %v5161
        %5286 = vst [vmem:[%s995 + $0x14] sm:$0x1] %v5162
        %5287 = vst [vmem:[%s995 + $0x18] sm:$0xe] %v5163
        %5288 = vst [vmem:[%s995 + $0x1c] sm:$0xf] %v5166
        %5289 = vst [vmem:[%s995 + $0x20] sm:$0x1] %v5167
        %5290 = vst [vmem:[%s995 + $0x24] sm:$0xe] %v5168
        %5291 = vst [vmem:[%s995 + $0x28] sm:$0xf] %v5171
        %5292 = vst [vmem:[%s995 + $0x2c] sm:$0x1] %v5172
        %5293 = vst [vmem:[%s995 + $0x30] sm:$0xe] %v5173
        %5294 = vst [vmem:[%s995 + $0x34] sm:$0xf] %v5176
        %5295 = vst [vmem:[%s995 + $0x38] sm:$0x1] %v5177
        %5296 = vst [vmem:[%s995 + $0x3c] sm:$0xe] %v5178
        %5297 = vst [vmem:[%s995 + $0x40] sm:$0xf] %v5181
        %5298 = vst [vmem:[%s995 + $0x44] sm:$0x1] %v5182
        %5299 = vst [vmem:[%s995 + $0x48] sm:$0xe] %v5183
        %5300 = vst [vmem:[%s995 + $0x4c] sm:$0xf] %v5186
        %5301 = vst [vmem:[%s995 + $0x50] sm:$0x1] %v5187
        %5302 = vst [vmem:[%s995 + $0x54] sm:$0xe] %v5188
        %5303 = vst [vmem:[%s995 + $0x58] sm:$0xf] %v5191
        %5304 = vst [vmem:[%s995 + $0x5c] sm:$0x1] %v5192
        %5305 = vst [vmem:[%s995 + $0x60] sm:$0xe] %v5193
        %5306 = vst [vmem:[%s995 + $0x64] sm:$0xf] %v5196
        %5307 = vst [vmem:[%s995 + $0x68] sm:$0x1] %v5197
        %5308 = vst [vmem:[%s995 + $0x6c] sm:$0xe] %v5198
        %5309 = vst [vmem:[%s995 + $0x70] sm:$0xf] %v5201
        %5310 = vst [vmem:[%s995 + $0x74] sm:$0x1] %v5202
        %5311 = vst [vmem:[%s995 + $0x78] sm:$0xe] %v5203
        %5312 = vst [vmem:[%s995 + $0x7c] sm:$0xf] %v5206
        %5313 = vst [vmem:[%s995 + $0x80] sm:$0x1] %v5207
        %5314 = vst [vmem:[%s995 + $0x84] sm:$0xe] %v5208
        %5315 = vst [vmem:[%s995 + $0x88] sm:$0xf] %v5211
        %5316 = vst [vmem:[%s995 + $0x8c] sm:$0x1] %v5212
        %5317 = vst [vmem:[%s995 + $0x90] sm:$0xe] %v5213
        %5318 = vst [vmem:[%s995 + $0x94] sm:$0xf] %v5216
        %5319 = vst [vmem:[%s995 + $0x98] sm:$0x1] %v5217
        %5320 = vst [vmem:[%s995 + $0x9c] sm:$0xe] %v5218
        %5321 = vst [vmem:[%s995 + $0xa0] sm:$0xf] %v5221
        %5322 = vst [vmem:[%s995 + $0xa4] sm:$0x1] %v5222
        %5323 = vst [vmem:[%s995 + $0xa8] sm:$0xe] %v5223
        %5324 = vst [vmem:[%s995 + $0xac] sm:$0xf] %v5226
        %5325 = vst [vmem:[%s995 + $0xb0] sm:$0x1] %v5227
        %5326 = vst [vmem:[%s995 + $0xb4] sm:$0xe] %v5228
        %5327 = vst [vmem:[%s995 + $0xb8] sm:$0xf] %v5231
        %5328 = vst [vmem:[%s995 + $0xbc] sm:$0x1] %v5232
        %v5329 = vld [vmem:[%s7] sm:$0x1]
        %v5330 = vld [vmem:[%s8] sm:$0x1]
        %v5331 = vld [vmem:[#allocation2] sm:$0xf]
        %v5332 = vld [vmem:[#allocation2 + $0x4] sm:$0xf]
        %v5333 = vld [vmem:[#allocation2 + $0xc] sm:$0xf]
        %v5334 = vld [vmem:[#allocation2 + $0x10] sm:$0xf]
        %v5335 = vld [vmem:[#allocation2 + $0x18] sm:$0xf]
        %v5336 = vld [vmem:[#allocation2 + $0x1c] sm:$0xf]
        %v5337 = vld [vmem:[#allocation2 + $0x24] sm:$0xf]
        %v5338 = vld [vmem:[#allocation2 + $0x28] sm:$0xf]
        %v5339 = vld [vmem:[#allocation2 + $0x30] sm:$0xf]
        %v5340 = vld [vmem:[#allocation2 + $0x34] sm:$0xf]
        %v5341 = vld [vmem:[#allocation2 + $0x3c] sm:$0xf]
        %v5342 = vld [vmem:[#allocation2 + $0x40] sm:$0xf]
        %v5343 = vld [vmem:[#allocation2 + $0x48] sm:$0xf]
        %v5344 = vld [vmem:[#allocation2 + $0x4c] sm:$0xf]
        %v5345 = vld [vmem:[#allocation2 + $0x54] sm:$0xf]
        %v5346 = vld [vmem:[#allocation2 + $0x58] sm:$0xf]
        %v5347 = vld [vmem:[#allocation2 + $0x60] sm:$0xf]
        %v5348 = vld [vmem:[#allocation2 + $0x64] sm:$0xf]
        %v5349 = vld [vmem:[#allocation2 + $0x6c] sm:$0xf]
        %v5350 = vld [vmem:[#allocation2 + $0x70] sm:$0xf]
        %v5351 = vld [vmem:[#allocation2 + $0x78] sm:$0xf]
        %v5352 = vld [vmem:[#allocation2 + $0x7c] sm:$0xf]
        %v5353 = vld [vmem:[#allocation2 + $0x84] sm:$0xf]
        %v5354 = vld [vmem:[#allocation2 + $0x88] sm:$0xf]
        %v5355 = vld [vmem:[#allocation2 + $0x90] sm:$0xf]
        %v5356 = vld [vmem:[#allocation2 + $0x94] sm:$0xf]
        %v5357 = vld [vmem:[#allocation2 + $0x9c] sm:$0xf]
        %v5358 = vld [vmem:[#allocation2 + $0xa0] sm:$0xf]
        %v5359 = vld [vmem:[#allocation2 + $0xa8] sm:$0xf]
        %v5360 = vld [vmem:[#allocation2 + $0xac] sm:$0xf]
        %v5361 = vld [vmem:[#allocation2 + $0xb4] sm:$0xf]
        %v5362 = vld [vmem:[#allocation2 + $0xb8] sm:$0xf]
        %v5363 = vld [vmem:[#allocation2 + $0xc0] sm:$0xf]
        %v5364 = vld [vmem:[#allocation2 + $0xc4] sm:$0xf]
        %v5365 = vld [vmem:[#allocation2 + $0xcc] sm:$0xf]
        %v5366 = vld [vmem:[#allocation2 + $0xd0] sm:$0xf]
        %v5367 = vld [vmem:[#allocation2 + $0xd8] sm:$0xf]
        %v5368 = vld [vmem:[#allocation2 + $0xdc] sm:$0xf]
        %v5369 = vld [vmem:[#allocation2 + $0xe4] sm:$0xf]
        %v5370 = vld [vmem:[#allocation2 + $0xe8] sm:$0xf]
        %5371 = vst [vmem:[#allocation3] sm:$0xf] %v5331
        %5372 = vst [vmem:[#allocation3 + $0xc] sm:$0xf] %v5332
        %5373 = vst [vmem:[#allocation3 + $0x18] sm:$0xf] %v5333
        %5374 = vst [vmem:[#allocation3 + $0x24] sm:$0xf] %v5334
        %5375 = vst [vmem:[#allocation3 + $0x30] sm:$0xf] %v5335
        %5376 = vst [vmem:[#allocation3 + $0x3c] sm:$0xf] %v5336
        %5377 = vst [vmem:[#allocation3 + $0x48] sm:$0xf] %v5337
        %5378 = vst [vmem:[#allocation3 + $0x54] sm:$0xf] %v5338
        %5379 = vst [vmem:[#allocation3 + $0x60] sm:$0xf] %v5339
        %5380 = vst [vmem:[#allocation3 + $0x6c] sm:$0xf] %v5340
        %5381 = vst [vmem:[#allocation3 + $0x78] sm:$0xf] %v5341
        %5382 = vst [vmem:[#allocation3 + $0x84] sm:$0xf] %v5342
        %5383 = vst [vmem:[#allocation3 + $0x90] sm:$0xf] %v5343
        %5384 = vst [vmem:[#allocation3 + $0x9c] sm:$0xf] %v5344
        %5385 = vst [vmem:[#allocation3 + $0xa8] sm:$0xf] %v5345
        %5386 = vst [vmem:[#allocation3 + $0xb4] sm:$0xf] %v5346
        %5387 = vst [vmem:[#allocation3 + $0xc0] sm:$0xf] %v5347
        %5388 = vst [vmem:[#allocation3 + $0xcc] sm:$0xf] %v5348
        %5389 = vst [vmem:[#allocation3 + $0xd8] sm:$0xf] %v5349
        %5390 = vst [vmem:[#allocation3 + $0xe4] sm:$0xf] %v5350
        %5391 = vst [vmem:[#allocation3 + $0xf0] sm:$0xf] %v5351
        %5392 = vst [vmem:[#allocation3 + $0xfc] sm:$0xf] %v5352
        %5393 = vst [vmem:[#allocation3 + $0x108] sm:$0xf] %v5353
        %5394 = vst [vmem:[#allocation3 + $0x114] sm:$0xf] %v5354
        %5395 = vst [vmem:[#allocation3 + $0x120] sm:$0xf] %v5355
        %5396 = vst [vmem:[#allocation3 + $0x12c] sm:$0xf] %v5356
        %5397 = vst [vmem:[#allocation3 + $0x138] sm:$0xf] %v5357
        %5398 = vst [vmem:[#allocation3 + $0x144] sm:$0xf] %v5358
        %5399 = vst [vmem:[#allocation3 + $0x150] sm:$0xf] %v5359
        %5400 = vst [vmem:[#allocation3 + $0x15c] sm:$0xf] %v5360
        %5401 = vst [vmem:[#allocation3 + $0x168] sm:$0xf] %v5361
        %5402 = vst [vmem:[#allocation3 + $0x174] sm:$0xf] %v5362
        %5403 = vst [vmem:[#allocation3 + $0x180] sm:$0xf] %v5363
        %5404 = vst [vmem:[#allocation3 + $0x18c] sm:$0xf] %v5364
        %5405 = vst [vmem:[#allocation3 + $0x198] sm:$0xf] %v5365
        %5406 = vst [vmem:[#allocation3 + $0x1a4] sm:$0xf] %v5366
        %5407 = vst [vmem:[#allocation3 + $0x1b0] sm:$0xf] %v5367
        %5408 = vst [vmem:[#allocation3 + $0x1bc] sm:$0xf] %v5368
        %5409 = vst [vmem:[#allocation3 + $0x1c8] sm:$0xf] %v5369
        %5410 = vst [vmem:[#allocation3 + $0x1d4] sm:$0xf] %v5370
        %v5411 = vld [vmem:[#allocation2] sm:$0xe]
        %v5412 = vld [vmem:[#allocation2 + $0x4] sm:$0xf]
        %v5413 = vld [vmem:[#allocation2 + $0x8] sm:$0x1]
        %v5414 = vld [vmem:[#allocation2 + $0xc] sm:$0xe]
        %v5415 = vld [vmem:[#allocation2 + $0x10] sm:$0xf]
        %v5416 = vld [vmem:[#allocation2 + $0x14] sm:$0x1]
        %v5417 = vld [vmem:[#allocation2 + $0x18] sm:$0xe]
        %v5418 = vld [vmem:[#allocation2 + $0x1c] sm:$0xf]
        %v5419 = vld [vmem:[#allocation2 + $0x20] sm:$0x1]
        %v5420 = vld [vmem:[#allocation2 + $0x24] sm:$0xe]
        %v5421 = vld [vmem:[#allocation2 + $0x28] sm:$0xf]
        %v5422 = vld [vmem:[#allocation2 + $0x2c] sm:$0x1]
        %v5423 = vld [vmem:[#allocation2 + $0x30] sm:$0xe]
        %v5424 = vld [vmem:[#allocation2 + $0x34] sm:$0xf]
        %v5425 = vld [vmem:[#allocation2 + $0x38] sm:$0x1]
        %v5426 = vld [vmem:[#allocation2 + $0x3c] sm:$0xe]
        %v5427 = vld [vmem:[#allocation2 + $0x40] sm:$0xf]
        %v5428 = vld [vmem:[#allocation2 + $0x44] sm:$0x1]
        %v5429 = vld [vmem:[#allocation2 + $0x48] sm:$0xe]
        %v5430 = vld [vmem:[#allocation2 + $0x4c] sm:$0xf]
        %v5431 = vld [vmem:[#allocation2 + $0x50] sm:$0x1]
        %v5432 = vld [vmem:[#allocation2 + $0x54] sm:$0xe]
        %v5433 = vld [vmem:[#allocation2 + $0x58] sm:$0xf]
        %v5434 = vld [vmem:[#allocation2 + $0x5c] sm:$0x1]
        %v5435 = vld [vmem:[#allocation2 + $0x60] sm:$0xe]
        %v5436 = vld [vmem:[#allocation2 + $0x64] sm:$0xf]
        %v5437 = vld [vmem:[#allocation2 + $0x68] sm:$0x1]
        %v5438 = vld [vmem:[#allocation2 + $0x6c] sm:$0xe]
        %v5439 = vld [vmem:[#allocation2 + $0x70] sm:$0xf]
        %v5440 = vld [vmem:[#allocation2 + $0x74] sm:$0x1]
        %v5441 = vld [vmem:[#allocation2 + $0x78] sm:$0xe]
        %v5442 = vld [vmem:[#allocation2 + $0x7c] sm:$0xf]
        %v5443 = vld [vmem:[#allocation2 + $0x80] sm:$0x1]
        %v5444 = vld [vmem:[#allocation2 + $0x84] sm:$0xe]
        %v5445 = vld [vmem:[#allocation2 + $0x88] sm:$0xf]
        %v5446 = vld [vmem:[#allocation2 + $0x8c] sm:$0x1]
        %v5447 = vld [vmem:[#allocation2 + $0x90] sm:$0xe]
        %v5448 = vld [vmem:[#allocation2 + $0x94] sm:$0xf]
        %v5449 = vld [vmem:[#allocation2 + $0x98] sm:$0x1]
        %v5450 = vld [vmem:[#allocation2 + $0x9c] sm:$0xe]
        %v5451 = vld [vmem:[#allocation2 + $0xa0] sm:$0xf]
        %v5452 = vld [vmem:[#allocation2 + $0xa4] sm:$0x1]
        %v5453 = vld [vmem:[#allocation2 + $0xa8] sm:$0xe]
        %v5454 = vld [vmem:[#allocation2 + $0xac] sm:$0xf]
        %v5455 = vld [vmem:[#allocation2 + $0xb0] sm:$0x1]
        %v5456 = vld [vmem:[#allocation2 + $0xb4] sm:$0xe]
        %v5457 = vld [vmem:[#allocation2 + $0xb8] sm:$0xf]
        %v5458 = vld [vmem:[#allocation2 + $0xbc] sm:$0x1]
        %v5459 = vld [vmem:[#allocation2 + $0xc0] sm:$0xe]
        %v5460 = vld [vmem:[#allocation2 + $0xc4] sm:$0xf]
        %v5461 = vld [vmem:[#allocation2 + $0xc8] sm:$0x1]
        %v5462 = vld [vmem:[#allocation2 + $0xcc] sm:$0xe]
        %v5463 = vld [vmem:[#allocation2 + $0xd0] sm:$0xf]
        %v5464 = vld [vmem:[#allocation2 + $0xd4] sm:$0x1]
        %v5465 = vld [vmem:[#allocation2 + $0xd8] sm:$0xe]
        %v5466 = vld [vmem:[#allocation2 + $0xdc] sm:$0xf]
        %v5467 = vld [vmem:[#allocation2 + $0xe0] sm:$0x1]
        %v5468 = vld [vmem:[#allocation2 + $0xe4] sm:$0xe]
        %v5469 = vld [vmem:[#allocation2 + $0xe8] sm:$0xf]
        %v5470 = vld [vmem:[#allocation2 + $0xec] sm:$0x1]
        %v5531 = vrot.slane %v5411, 5
        %v5532 = vrot.slane %v5531, 4
        %v5533 = vrot.slane %v5412, 5
        %v5534 = vsel %vm1791, %v5532, %v5533
        %v5535 = vrot.slane %v5533, 4
        %v5536 = vrot.slane %v5413, 5
        %v5537 = vsel %vm1791, %v5535, %v5536
        %v5538 = vrot.slane %v5414, 5
        %v5539 = vrot.slane %v5538, 4
        %v5540 = vrot.slane %v5415, 5
        %v5541 = vsel %vm1791, %v5539, %v5540
        %v5542 = vrot.slane %v5540, 4
        %v5543 = vrot.slane %v5416, 5
        %v5544 = vsel %vm1791, %v5542, %v5543
        %v5545 = vrot.slane %v5417, 5
        %v5546 = vrot.slane %v5545, 4
        %v5547 = vrot.slane %v5418, 5
        %v5548 = vsel %vm1791, %v5546, %v5547
        %v5549 = vrot.slane %v5547, 4
        %v5550 = vrot.slane %v5419, 5
        %v5551 = vsel %vm1791, %v5549, %v5550
        %v5552 = vrot.slane %v5420, 5
        %v5553 = vrot.slane %v5552, 4
        %v5554 = vrot.slane %v5421, 5
        %v5555 = vsel %vm1791, %v5553, %v5554
        %v5556 = vrot.slane %v5554, 4
        %v5557 = vrot.slane %v5422, 5
        %v5558 = vsel %vm1791, %v5556, %v5557
        %v5559 = vrot.slane %v5423, 5
        %v5560 = vrot.slane %v5559, 4
        %v5561 = vrot.slane %v5424, 5
        %v5562 = vsel %vm1791, %v5560, %v5561
        %v5563 = vrot.slane %v5561, 4
        %v5564 = vrot.slane %v5425, 5
        %v5565 = vsel %vm1791, %v5563, %v5564
        %v5566 = vrot.slane %v5426, 5
        %v5567 = vrot.slane %v5566, 4
        %v5568 = vrot.slane %v5427, 5
        %v5569 = vsel %vm1791, %v5567, %v5568
        %v5570 = vrot.slane %v5568, 4
        %v5571 = vrot.slane %v5428, 5
        %v5572 = vsel %vm1791, %v5570, %v5571
        %v5573 = vrot.slane %v5429, 5
        %v5574 = vrot.slane %v5573, 4
        %v5575 = vrot.slane %v5430, 5
        %v5576 = vsel %vm1791, %v5574, %v5575
        %v5577 = vrot.slane %v5575, 4
        %v5578 = vrot.slane %v5431, 5
        %v5579 = vsel %vm1791, %v5577, %v5578
        %v5580 = vrot.slane %v5432, 5
        %v5581 = vrot.slane %v5580, 4
        %v5582 = vrot.slane %v5433, 5
        %v5583 = vsel %vm1791, %v5581, %v5582
        %v5584 = vrot.slane %v5582, 4
        %v5585 = vrot.slane %v5434, 5
        %v5586 = vsel %vm1791, %v5584, %v5585
        %v5587 = vrot.slane %v5435, 5
        %v5588 = vrot.slane %v5587, 4
        %v5589 = vrot.slane %v5436, 5
        %v5590 = vsel %vm1791, %v5588, %v5589
        %v5591 = vrot.slane %v5589, 4
        %v5592 = vrot.slane %v5437, 5
        %v5593 = vsel %vm1791, %v5591, %v5592
        %v5594 = vrot.slane %v5438, 5
        %v5595 = vrot.slane %v5594, 4
        %v5596 = vrot.slane %v5439, 5
        %v5597 = vsel %vm1791, %v5595, %v5596
        %v5598 = vrot.slane %v5596, 4
        %v5599 = vrot.slane %v5440, 5
        %v5600 = vsel %vm1791, %v5598, %v5599
        %v5601 = vrot.slane %v5441, 5
        %v5602 = vrot.slane %v5601, 4
        %v5603 = vrot.slane %v5442, 5
        %v5604 = vsel %vm1791, %v5602, %v5603
        %v5605 = vrot.slane %v5603, 4
        %v5606 = vrot.slane %v5443, 5
        %v5607 = vsel %vm1791, %v5605, %v5606
        %v5608 = vrot.slane %v5444, 5
        %v5609 = vrot.slane %v5608, 4
        %v5610 = vrot.slane %v5445, 5
        %v5611 = vsel %vm1791, %v5609, %v5610
        %v5612 = vrot.slane %v5610, 4
        %v5613 = vrot.slane %v5446, 5
        %v5614 = vsel %vm1791, %v5612, %v5613
        %v5615 = vrot.slane %v5447, 5
        %v5616 = vrot.slane %v5615, 4
        %v5617 = vrot.slane %v5448, 5
        %v5618 = vsel %vm1791, %v5616, %v5617
        %v5619 = vrot.slane %v5617, 4
        %v5620 = vrot.slane %v5449, 5
        %v5621 = vsel %vm1791, %v5619, %v5620
        %v5622 = vrot.slane %v5450, 5
        %v5623 = vrot.slane %v5622, 4
        %v5624 = vrot.slane %v5451, 5
        %v5625 = vsel %vm1791, %v5623, %v5624
        %v5626 = vrot.slane %v5624, 4
        %v5627 = vrot.slane %v5452, 5
        %v5628 = vsel %vm1791, %v5626, %v5627
        %v5629 = vrot.slane %v5453, 5
        %v5630 = vrot.slane %v5629, 4
        %v5631 = vrot.slane %v5454, 5
        %v5632 = vsel %vm1791, %v5630, %v5631
        %v5633 = vrot.slane %v5631, 4
        %v5634 = vrot.slane %v5455, 5
        %v5635 = vsel %vm1791, %v5633, %v5634
        %v5636 = vrot.slane %v5456, 5
        %v5637 = vrot.slane %v5636, 4
        %v5638 = vrot.slane %v5457, 5
        %v5639 = vsel %vm1791, %v5637, %v5638
        %v5640 = vrot.slane %v5638, 4
        %v5641 = vrot.slane %v5458, 5
        %v5642 = vsel %vm1791, %v5640, %v5641
        %v5643 = vrot.slane %v5459, 5
        %v5644 = vrot.slane %v5643, 4
        %v5645 = vrot.slane %v5460, 5
        %v5646 = vsel %vm1791, %v5644, %v5645
        %v5647 = vrot.slane %v5645, 4
        %v5648 = vrot.slane %v5461, 5
        %v5649 = vsel %vm1791, %v5647, %v5648
        %v5650 = vrot.slane %v5462, 5
        %v5651 = vrot.slane %v5650, 4
        %v5652 = vrot.slane %v5463, 5
        %v5653 = vsel %vm1791, %v5651, %v5652
        %v5654 = vrot.slane %v5652, 4
        %v5655 = vrot.slane %v5464, 5
        %v5656 = vsel %vm1791, %v5654, %v5655
        %v5657 = vrot.slane %v5465, 5
        %v5658 = vrot.slane %v5657, 4
        %v5659 = vrot.slane %v5466, 5
        %v5660 = vsel %vm1791, %v5658, %v5659
        %v5661 = vrot.slane %v5659, 4
        %v5662 = vrot.slane %v5467, 5
        %v5663 = vsel %vm1791, %v5661, %v5662
        %v5664 = vrot.slane %v5468, 5
        %v5665 = vrot.slane %v5664, 4
        %v5666 = vrot.slane %v5469, 5
        %v5667 = vsel %vm1791, %v5665, %v5666
        %v5668 = vrot.slane %v5666, 4
        %v5669 = vrot.slane %v5470, 5
        %v5670 = vsel %vm1791, %v5668, %v5669
        %5711 = vst [vmem:[#allocation3 + $0x4] sm:$0xf] %v5534
        %5712 = vst [vmem:[#allocation3 + $0x10] sm:$0xf] %v5537
        %5713 = vst [vmem:[#allocation3 + $0x1c] sm:$0xf] %v5541
        %5714 = vst [vmem:[#allocation3 + $0x28] sm:$0xf] %v5544
        %5715 = vst [vmem:[#allocation3 + $0x34] sm:$0xf] %v5548
        %5716 = vst [vmem:[#allocation3 + $0x40] sm:$0xf] %v5551
        %5717 = vst [vmem:[#allocation3 + $0x4c] sm:$0xf] %v5555
        %5718 = vst [vmem:[#allocation3 + $0x58] sm:$0xf] %v5558
        %5719 = vst [vmem:[#allocation3 + $0x64] sm:$0xf] %v5562
        %5720 = vst [vmem:[#allocation3 + $0x70] sm:$0xf] %v5565
        %5721 = vst [vmem:[#allocation3 + $0x7c] sm:$0xf] %v5569
        %5722 = vst [vmem:[#allocation3 + $0x88] sm:$0xf] %v5572
        %5723 = vst [vmem:[#allocation3 + $0x94] sm:$0xf] %v5576
        %5724 = vst [vmem:[#allocation3 + $0xa0] sm:$0xf] %v5579
        %5725 = vst [vmem:[#allocation3 + $0xac] sm:$0xf] %v5583
        %5726 = vst [vmem:[#allocation3 + $0xb8] sm:$0xf] %v5586
        %5727 = vst [vmem:[#allocation3 + $0xc4] sm:$0xf] %v5590
        %5728 = vst [vmem:[#allocation3 + $0xd0] sm:$0xf] %v5593
        %5729 = vst [vmem:[#allocation3 + $0xdc] sm:$0xf] %v5597
        %5730 = vst [vmem:[#allocation3 + $0xe8] sm:$0xf] %v5600
        %5731 = vst [vmem:[#allocation3 + $0xf4] sm:$0xf] %v5604
        %5732 = vst [vmem:[#allocation3 + $0x100] sm:$0xf] %v5607
        %5733 = vst [vmem:[#allocation3 + $0x10c] sm:$0xf] %v5611
        %5734 = vst [vmem:[#allocation3 + $0x118] sm:$0xf] %v5614
        %5735 = vst [vmem:[#allocation3 + $0x124] sm:$0xf] %v5618
        %5736 = vst [vmem:[#allocation3 + $0x130] sm:$0xf] %v5621
        %5737 = vst [vmem:[#allocation3 + $0x13c] sm:$0xf] %v5625
        %5738 = vst [vmem:[#allocation3 + $0x148] sm:$0xf] %v5628
        %5739 = vst [vmem:[#allocation3 + $0x154] sm:$0xf] %v5632
        %5740 = vst [vmem:[#allocation3 + $0x160] sm:$0xf] %v5635
        %5741 = vst [vmem:[#allocation3 + $0x16c] sm:$0xf] %v5639
        %5742 = vst [vmem:[#allocation3 + $0x178] sm:$0xf] %v5642
        %5743 = vst [vmem:[#allocation3 + $0x184] sm:$0xf] %v5646
        %5744 = vst [vmem:[#allocation3 + $0x190] sm:$0xf] %v5649
        %5745 = vst [vmem:[#allocation3 + $0x19c] sm:$0xf] %v5653
        %5746 = vst [vmem:[#allocation3 + $0x1a8] sm:$0xf] %v5656
        %5747 = vst [vmem:[#allocation3 + $0x1b4] sm:$0xf] %v5660
        %5748 = vst [vmem:[#allocation3 + $0x1c0] sm:$0xf] %v5663
        %5749 = vst [vmem:[#allocation3 + $0x1cc] sm:$0xf] %v5667
        %5750 = vst [vmem:[#allocation3 + $0x1d8] sm:$0xf] %v5670
        %v5751 = vld [vmem:[#allocation2] sm:$0xc]
        %v5752 = vld [vmem:[#allocation2 + $0x4] sm:$0xf]
        %v5753 = vld [vmem:[#allocation2 + $0x8] sm:$0x3]
        %v5754 = vld [vmem:[#allocation2 + $0xc] sm:$0xc]
        %v5755 = vld [vmem:[#allocation2 + $0x10] sm:$0xf]
        %v5756 = vld [vmem:[#allocation2 + $0x14] sm:$0x3]
        %v5757 = vld [vmem:[#allocation2 + $0x18] sm:$0xc]
        %v5758 = vld [vmem:[#allocation2 + $0x1c] sm:$0xf]
        %v5759 = vld [vmem:[#allocation2 + $0x20] sm:$0x3]
        %v5760 = vld [vmem:[#allocation2 + $0x24] sm:$0xc]
        %v5761 = vld [vmem:[#allocation2 + $0x28] sm:$0xf]
        %v5762 = vld [vmem:[#allocation2 + $0x2c] sm:$0x3]
        %v5763 = vld [vmem:[#allocation2 + $0x30] sm:$0xc]
        %v5764 = vld [vmem:[#allocation2 + $0x34] sm:$0xf]
        %v5765 = vld [vmem:[#allocation2 + $0x38] sm:$0x3]
        %v5766 = vld [vmem:[#allocation2 + $0x3c] sm:$0xc]
        %v5767 = vld [vmem:[#allocation2 + $0x40] sm:$0xf]
        %v5768 = vld [vmem:[#allocation2 + $0x44] sm:$0x3]
        %v5769 = vld [vmem:[#allocation2 + $0x48] sm:$0xc]
        %v5770 = vld [vmem:[#allocation2 + $0x4c] sm:$0xf]
        %v5771 = vld [vmem:[#allocation2 + $0x50] sm:$0x3]
        %v5772 = vld [vmem:[#allocation2 + $0x54] sm:$0xc]
        %v5773 = vld [vmem:[#allocation2 + $0x58] sm:$0xf]
        %v5774 = vld [vmem:[#allocation2 + $0x5c] sm:$0x3]
        %v5775 = vld [vmem:[#allocation2 + $0x60] sm:$0xc]
        %v5776 = vld [vmem:[#allocation2 + $0x64] sm:$0xf]
        %v5777 = vld [vmem:[#allocation2 + $0x68] sm:$0x3]
        %v5778 = vld [vmem:[#allocation2 + $0x6c] sm:$0xc]
        %v5779 = vld [vmem:[#allocation2 + $0x70] sm:$0xf]
        %v5780 = vld [vmem:[#allocation2 + $0x74] sm:$0x3]
        %v5781 = vld [vmem:[#allocation2 + $0x78] sm:$0xc]
        %v5782 = vld [vmem:[#allocation2 + $0x7c] sm:$0xf]
        %v5783 = vld [vmem:[#allocation2 + $0x80] sm:$0x3]
        %v5784 = vld [vmem:[#allocation2 + $0x84] sm:$0xc]
        %v5785 = vld [vmem:[#allocation2 + $0x88] sm:$0xf]
        %v5786 = vld [vmem:[#allocation2 + $0x8c] sm:$0x3]
        %v5787 = vld [vmem:[#allocation2 + $0x90] sm:$0xc]
        %v5788 = vld [vmem:[#allocation2 + $0x94] sm:$0xf]
        %v5789 = vld [vmem:[#allocation2 + $0x98] sm:$0x3]
        %v5790 = vld [vmem:[#allocation2 + $0x9c] sm:$0xc]
        %v5791 = vld [vmem:[#allocation2 + $0xa0] sm:$0xf]
        %v5792 = vld [vmem:[#allocation2 + $0xa4] sm:$0x3]
        %v5793 = vld [vmem:[#allocation2 + $0xa8] sm:$0xc]
        %v5794 = vld [vmem:[#allocation2 + $0xac] sm:$0xf]
        %v5795 = vld [vmem:[#allocation2 + $0xb0] sm:$0x3]
        %v5796 = vld [vmem:[#allocation2 + $0xb4] sm:$0xc]
        %v5797 = vld [vmem:[#allocation2 + $0xb8] sm:$0xf]
        %v5798 = vld [vmem:[#allocation2 + $0xbc] sm:$0x3]
        %v5799 = vld [vmem:[#allocation2 + $0xc0] sm:$0xc]
        %v5800 = vld [vmem:[#allocation2 + $0xc4] sm:$0xf]
        %v5801 = vld [vmem:[#allocation2 + $0xc8] sm:$0x3]
        %v5802 = vld [vmem:[#allocation2 + $0xcc] sm:$0xc]
        %v5803 = vld [vmem:[#allocation2 + $0xd0] sm:$0xf]
        %v5804 = vld [vmem:[#allocation2 + $0xd4] sm:$0x3]
        %v5805 = vld [vmem:[#allocation2 + $0xd8] sm:$0xc]
        %v5806 = vld [vmem:[#allocation2 + $0xdc] sm:$0xf]
        %v5807 = vld [vmem:[#allocation2 + $0xe0] sm:$0x3]
        %v5808 = vld [vmem:[#allocation2 + $0xe4] sm:$0xc]
        %v5809 = vld [vmem:[#allocation2 + $0xe8] sm:$0xf]
        %v5810 = vld [vmem:[#allocation2 + $0xec] sm:$0x3]
        %vm5871 = vcmask 1041408
        %vm5872 = vcmask 1045508
        %vm5873 = vmor %vm5871, %vm5872
        %v5874 = vrot.slane %v5751, 6
        %v5875 = vrot.slane %v5874, 4
        %v5876 = vrot.slane %v5752, 6
        %v5877 = vsel %vm5873, %v5875, %v5876
        %v5878 = vrot.slane %v5876, 4
        %v5879 = vrot.slane %v5753, 6
        %v5880 = vsel %vm5873, %v5878, %v5879
        %v5881 = vrot.slane %v5754, 6
        %v5882 = vrot.slane %v5881, 4
        %v5883 = vrot.slane %v5755, 6
        %v5884 = vsel %vm5873, %v5882, %v5883
        %v5885 = vrot.slane %v5883, 4
        %v5886 = vrot.slane %v5756, 6
        %v5887 = vsel %vm5873, %v5885, %v5886
        %v5888 = vrot.slane %v5757, 6
        %v5889 = vrot.slane %v5888, 4
        %v5890 = vrot.slane %v5758, 6
        %v5891 = vsel %vm5873, %v5889, %v5890
        %v5892 = vrot.slane %v5890, 4
        %v5893 = vrot.slane %v5759, 6
        %v5894 = vsel %vm5873, %v5892, %v5893
        %v5895 = vrot.slane %v5760, 6
        %v5896 = vrot.slane %v5895, 4
        %v5897 = vrot.slane %v5761, 6
        %v5898 = vsel %vm5873, %v5896, %v5897
        %v5899 = vrot.slane %v5897, 4
        %v5900 = vrot.slane %v5762, 6
        %v5901 = vsel %vm5873, %v5899, %v5900
        %v5902 = vrot.slane %v5763, 6
        %v5903 = vrot.slane %v5902, 4
        %v5904 = vrot.slane %v5764, 6
        %v5905 = vsel %vm5873, %v5903, %v5904
        %v5906 = vrot.slane %v5904, 4
        %v5907 = vrot.slane %v5765, 6
        %v5908 = vsel %vm5873, %v5906, %v5907
        %v5909 = vrot.slane %v5766, 6
        %v5910 = vrot.slane %v5909, 4
        %v5911 = vrot.slane %v5767, 6
        %v5912 = vsel %vm5873, %v5910, %v5911
        %v5913 = vrot.slane %v5911, 4
        %v5914 = vrot.slane %v5768, 6
        %v5915 = vsel %vm5873, %v5913, %v5914
        %v5916 = vrot.slane %v5769, 6
        %v5917 = vrot.slane %v5916, 4
        %v5918 = vrot.slane %v5770, 6
        %v5919 = vsel %vm5873, %v5917, %v5918
        %v5920 = vrot.slane %v5918, 4
        %v5921 = vrot.slane %v5771, 6
        %v5922 = vsel %vm5873, %v5920, %v5921
        %v5923 = vrot.slane %v5772, 6
        %v5924 = vrot.slane %v5923, 4
        %v5925 = vrot.slane %v5773, 6
        %v5926 = vsel %vm5873, %v5924, %v5925
        %v5927 = vrot.slane %v5925, 4
        %v5928 = vrot.slane %v5774, 6
        %v5929 = vsel %vm5873, %v5927, %v5928
        %v5930 = vrot.slane %v5775, 6
        %v5931 = vrot.slane %v5930, 4
        %v5932 = vrot.slane %v5776, 6
        %v5933 = vsel %vm5873, %v5931, %v5932
        %v5934 = vrot.slane %v5932, 4
        %v5935 = vrot.slane %v5777, 6
        %v5936 = vsel %vm5873, %v5934, %v5935
        %v5937 = vrot.slane %v5778, 6
        %v5938 = vrot.slane %v5937, 4
        %v5939 = vrot.slane %v5779, 6
        %v5940 = vsel %vm5873, %v5938, %v5939
        %v5941 = vrot.slane %v5939, 4
        %v5942 = vrot.slane %v5780, 6
        %v5943 = vsel %vm5873, %v5941, %v5942
        %v5944 = vrot.slane %v5781, 6
        %v5945 = vrot.slane %v5944, 4
        %v5946 = vrot.slane %v5782, 6
        %v5947 = vsel %vm5873, %v5945, %v5946
        %v5948 = vrot.slane %v5946, 4
        %v5949 = vrot.slane %v5783, 6
        %v5950 = vsel %vm5873, %v5948, %v5949
        %v5951 = vrot.slane %v5784, 6
        %v5952 = vrot.slane %v5951, 4
        %v5953 = vrot.slane %v5785, 6
        %v5954 = vsel %vm5873, %v5952, %v5953
        %v5955 = vrot.slane %v5953, 4
        %v5956 = vrot.slane %v5786, 6
        %v5957 = vsel %vm5873, %v5955, %v5956
        %v5958 = vrot.slane %v5787, 6
        %v5959 = vrot.slane %v5958, 4
        %v5960 = vrot.slane %v5788, 6
        %v5961 = vsel %vm5873, %v5959, %v5960
        %v5962 = vrot.slane %v5960, 4
        %v5963 = vrot.slane %v5789, 6
        %v5964 = vsel %vm5873, %v5962, %v5963
        %v5965 = vrot.slane %v5790, 6
        %v5966 = vrot.slane %v5965, 4
        %v5967 = vrot.slane %v5791, 6
        %v5968 = vsel %vm5873, %v5966, %v5967
        %v5969 = vrot.slane %v5967, 4
        %v5970 = vrot.slane %v5792, 6
        %v5971 = vsel %vm5873, %v5969, %v5970
        %v5972 = vrot.slane %v5793, 6
        %v5973 = vrot.slane %v5972, 4
        %v5974 = vrot.slane %v5794, 6
        %v5975 = vsel %vm5873, %v5973, %v5974
        %v5976 = vrot.slane %v5974, 4
        %v5977 = vrot.slane %v5795, 6
        %v5978 = vsel %vm5873, %v5976, %v5977
        %v5979 = vrot.slane %v5796, 6
        %v5980 = vrot.slane %v5979, 4
        %v5981 = vrot.slane %v5797, 6
        %v5982 = vsel %vm5873, %v5980, %v5981
        %v5983 = vrot.slane %v5981, 4
        %v5984 = vrot.slane %v5798, 6
        %v5985 = vsel %vm5873, %v5983, %v5984
        %v5986 = vrot.slane %v5799, 6
        %v5987 = vrot.slane %v5986, 4
        %v5988 = vrot.slane %v5800, 6
        %v5989 = vsel %vm5873, %v5987, %v5988
        %v5990 = vrot.slane %v5988, 4
        %v5991 = vrot.slane %v5801, 6
        %v5992 = vsel %vm5873, %v5990, %v5991
        %v5993 = vrot.slane %v5802, 6
        %v5994 = vrot.slane %v5993, 4
        %v5995 = vrot.slane %v5803, 6
        %v5996 = vsel %vm5873, %v5994, %v5995
        %v5997 = vrot.slane %v5995, 4
        %v5998 = vrot.slane %v5804, 6
        %v5999 = vsel %vm5873, %v5997, %v5998
        %v6000 = vrot.slane %v5805, 6
        %v6001 = vrot.slane %v6000, 4
        %v6002 = vrot.slane %v5806, 6
        %v6003 = vsel %vm5873, %v6001, %v6002
        %v6004 = vrot.slane %v6002, 4
        %v6005 = vrot.slane %v5807, 6
        %v6006 = vsel %vm5873, %v6004, %v6005
        %v6007 = vrot.slane %v5808, 6
        %v6008 = vrot.slane %v6007, 4
        %v6009 = vrot.slane %v5809, 6
        %v6010 = vsel %vm5873, %v6008, %v6009
        %v6011 = vrot.slane %v6009, 4
        %v6012 = vrot.slane %v5810, 6
        %v6013 = vsel %vm5873, %v6011, %v6012
        %6054 = vst [vmem:[#allocation3 + $0x8] sm:$0xf] %v5877
        %6055 = vst [vmem:[#allocation3 + $0x14] sm:$0xf] %v5880
        %6056 = vst [vmem:[#allocation3 + $0x20] sm:$0xf] %v5884
        %6057 = vst [vmem:[#allocation3 + $0x2c] sm:$0xf] %v5887
        %6058 = vst [vmem:[#allocation3 + $0x38] sm:$0xf] %v5891
        %6059 = vst [vmem:[#allocation3 + $0x44] sm:$0xf] %v5894
        %6060 = vst [vmem:[#allocation3 + $0x50] sm:$0xf] %v5898
        %6061 = vst [vmem:[#allocation3 + $0x5c] sm:$0xf] %v5901
        %6062 = vst [vmem:[#allocation3 + $0x68] sm:$0xf] %v5905
        %6063 = vst [vmem:[#allocation3 + $0x74] sm:$0xf] %v5908
        %6064 = vst [vmem:[#allocation3 + $0x80] sm:$0xf] %v5912
        %6065 = vst [vmem:[#allocation3 + $0x8c] sm:$0xf] %v5915
        %6066 = vst [vmem:[#allocation3 + $0x98] sm:$0xf] %v5919
        %6067 = vst [vmem:[#allocation3 + $0xa4] sm:$0xf] %v5922
        %6068 = vst [vmem:[#allocation3 + $0xb0] sm:$0xf] %v5926
        %6069 = vst [vmem:[#allocation3 + $0xbc] sm:$0xf] %v5929
        %6070 = vst [vmem:[#allocation3 + $0xc8] sm:$0xf] %v5933
        %6071 = vst [vmem:[#allocation3 + $0xd4] sm:$0xf] %v5936
        %6072 = vst [vmem:[#allocation3 + $0xe0] sm:$0xf] %v5940
        %6073 = vst [vmem:[#allocation3 + $0xec] sm:$0xf] %v5943
        %6074 = vst [vmem:[#allocation3 + $0xf8] sm:$0xf] %v5947
        %6075 = vst [vmem:[#allocation3 + $0x104] sm:$0xf] %v5950
        %6076 = vst [vmem:[#allocation3 + $0x110] sm:$0xf] %v5954
        %6077 = vst [vmem:[#allocation3 + $0x11c] sm:$0xf] %v5957
        %6078 = vst [vmem:[#allocation3 + $0x128] sm:$0xf] %v5961
        %6079 = vst [vmem:[#allocation3 + $0x134] sm:$0xf] %v5964
        %6080 = vst [vmem:[#allocation3 + $0x140] sm:$0xf] %v5968
        %6081 = vst [vmem:[#allocation3 + $0x14c] sm:$0xf] %v5971
        %6082 = vst [vmem:[#allocation3 + $0x158] sm:$0xf] %v5975
        %6083 = vst [vmem:[#allocation3 + $0x164] sm:$0xf] %v5978
        %6084 = vst [vmem:[#allocation3 + $0x170] sm:$0xf] %v5982
        %6085 = vst [vmem:[#allocation3 + $0x17c] sm:$0xf] %v5985
        %6086 = vst [vmem:[#allocation3 + $0x188] sm:$0xf] %v5989
        %6087 = vst [vmem:[#allocation3 + $0x194] sm:$0xf] %v5992
        %6088 = vst [vmem:[#allocation3 + $0x1a0] sm:$0xf] %v5996
        %6089 = vst [vmem:[#allocation3 + $0x1ac] sm:$0xf] %v5999
        %6090 = vst [vmem:[#allocation3 + $0x1b8] sm:$0xf] %v6003
        %6091 = vst [vmem:[#allocation3 + $0x1c4] sm:$0xf] %v6006
        %6092 = vst [vmem:[#allocation3 + $0x1d0] sm:$0xf] %v6010
        %6093 = vst [vmem:[#allocation3 + $0x1dc] sm:$0xf] %v6013
        %v6094 = vld [vmem:[#allocation3] sm:$0xff]
        %v6095 = vld [vmem:[#allocation3 + $0x8] sm:$0xf]
        %v6096 = vld [vmem:[#allocation3 + $0xc] sm:$0xff]
        %v6097 = vld [vmem:[#allocation3 + $0x14] sm:$0xf]
        %v6098 = vld [vmem:[#allocation3 + $0x18] sm:$0xff]
        %v6099 = vld [vmem:[#allocation3 + $0x20] sm:$0xf]
        %v6100 = vld [vmem:[#allocation3 + $0x24] sm:$0xff]
        %v6101 = vld [vmem:[#allocation3 + $0x2c] sm:$0xf]
        %v6102 = vld [vmem:[#allocation3 + $0x30] sm:$0xff]
        %v6103 = vld [vmem:[#allocation3 + $0x38] sm:$0xf]
        %v6104 = vld [vmem:[#allocation3 + $0x3c] sm:$0xff]
        %v6105 = vld [vmem:[#allocation3 + $0x44] sm:$0xf]
        %v6106 = vld [vmem:[#allocation3 + $0x48] sm:$0xff]
        %v6107 = vld [vmem:[#allocation3 + $0x50] sm:$0xf]
        %v6108 = vld [vmem:[#allocation3 + $0x54] sm:$0xff]
        %v6109 = vld [vmem:[#allocation3 + $0x5c] sm:$0xf]
        %v6110 = vld [vmem:[#allocation3 + $0x60] sm:$0xff]
        %v6111 = vld [vmem:[#allocation3 + $0x68] sm:$0xf]
        %v6112 = vld [vmem:[#allocation3 + $0x6c] sm:$0xff]
        %v6113 = vld [vmem:[#allocation3 + $0x74] sm:$0xf]
        %v6114 = vld [vmem:[#allocation3 + $0x78] sm:$0xff]
        %v6115 = vld [vmem:[#allocation3 + $0x80] sm:$0xf]
        %v6116 = vld [vmem:[#allocation3 + $0x84] sm:$0xff]
        %v6117 = vld [vmem:[#allocation3 + $0x8c] sm:$0xf]
        %v6118 = vld [vmem:[#allocation3 + $0x90] sm:$0xff]
        %v6119 = vld [vmem:[#allocation3 + $0x98] sm:$0xf]
        %v6120 = vld [vmem:[#allocation3 + $0x9c] sm:$0xff]
        %v6121 = vld [vmem:[#allocation3 + $0xa4] sm:$0xf]
        %v6122 = vld [vmem:[#allocation3 + $0xa8] sm:$0xff]
        %v6123 = vld [vmem:[#allocation3 + $0xb0] sm:$0xf]
        %v6124 = vld [vmem:[#allocation3 + $0xb4] sm:$0xff]
        %v6125 = vld [vmem:[#allocation3 + $0xbc] sm:$0xf]
        %v6126 = vld [vmem:[#allocation3 + $0xc0] sm:$0xff]
        %v6127 = vld [vmem:[#allocation3 + $0xc8] sm:$0xf]
        %v6128 = vld [vmem:[#allocation3 + $0xcc] sm:$0xff]
        %v6129 = vld [vmem:[#allocation3 + $0xd4] sm:$0xf]
        %v6130 = vld [vmem:[#allocation3 + $0xd8] sm:$0xff]
        %v6131 = vld [vmem:[#allocation3 + $0xe0] sm:$0xf]
        %v6132 = vld [vmem:[#allocation3 + $0xe4] sm:$0xff]
        %v6133 = vld [vmem:[#allocation3 + $0xec] sm:$0xf]
        %v6134 = vld [vmem:[#allocation3 + $0xf0] sm:$0xff]
        %v6135 = vld [vmem:[#allocation3 + $0xf8] sm:$0xf]
        %v6136 = vld [vmem:[#allocation3 + $0xfc] sm:$0xff]
        %v6137 = vld [vmem:[#allocation3 + $0x104] sm:$0xf]
        %v6138 = vld [vmem:[#allocation3 + $0x108] sm:$0xff]
        %v6139 = vld [vmem:[#allocation3 + $0x110] sm:$0xf]
        %v6140 = vld [vmem:[#allocation3 + $0x114] sm:$0xff]
        %v6141 = vld [vmem:[#allocation3 + $0x11c] sm:$0xf]
        %v6142 = vld [vmem:[#allocation3 + $0x120] sm:$0xff]
        %v6143 = vld [vmem:[#allocation3 + $0x128] sm:$0xf]
        %v6144 = vld [vmem:[#allocation3 + $0x12c] sm:$0xff]
        %v6145 = vld [vmem:[#allocation3 + $0x134] sm:$0xf]
        %v6146 = vld [vmem:[#allocation3 + $0x138] sm:$0xff]
        %v6147 = vld [vmem:[#allocation3 + $0x140] sm:$0xf]
        %v6148 = vld [vmem:[#allocation3 + $0x144] sm:$0xff]
        %v6149 = vld [vmem:[#allocation3 + $0x14c] sm:$0xf]
        %v6150 = vld [vmem:[#allocation3 + $0x150] sm:$0xff]
        %v6151 = vld [vmem:[#allocation3 + $0x158] sm:$0xf]
        %v6152 = vld [vmem:[#allocation3 + $0x15c] sm:$0xff]
        %v6153 = vld [vmem:[#allocation3 + $0x164] sm:$0xf]
        %v6154 = vld [vmem:[#allocation3 + $0x168] sm:$0xff]
        %v6155 = vld [vmem:[#allocation3 + $0x170] sm:$0xf]
        %v6156 = vld [vmem:[#allocation3 + $0x174] sm:$0xff]
        %v6157 = vld [vmem:[#allocation3 + $0x17c] sm:$0xf]
        %v6158 = vld [vmem:[%s6] sm:$0xf]
        %v6159 = vld [vmem:[%s6 + $0x4] sm:$0xf]
        %v6160 = vld [vmem:[%s6 + $0x8] sm:$0xf]
        %v6161 = vld [vmem:[%s6 + $0xc] sm:$0xf]
        %v6162 = vld [vmem:[%s6 + $0x10] sm:$0xf]
        %v6163 = vld [vmem:[%s6 + $0x14] sm:$0xf]
        %v6164 = vld [vmem:[%s6 + $0x18] sm:$0xf]
        %v6165 = vld [vmem:[%s6 + $0x1c] sm:$0xf]
        %v6166 = vld [vmem:[%s6 + $0x20] sm:$0xf]
        %v6167 = vld [vmem:[%s6 + $0x24] sm:$0xf]
        %v6168 = vld [vmem:[%s6 + $0x28] sm:$0xf]
        %v6169 = vld [vmem:[%s6 + $0x2c] sm:$0xf]
        %v6170 = vld [vmem:[%s6 + $0x30] sm:$0xf]
        %v6171 = vld [vmem:[%s6 + $0x34] sm:$0xf]
        %v6172 = vld [vmem:[%s6 + $0x38] sm:$0xf]
        %v6173 = vld [vmem:[%s6 + $0x3c] sm:$0xf]
        %v6174 = vld [vmem:[%s6 + $0x40] sm:$0xf]
        %v6175 = vld [vmem:[%s6 + $0x44] sm:$0xf]
        %v6176 = vld [vmem:[%s6 + $0x48] sm:$0xf]
        %v6177 = vld [vmem:[%s6 + $0x4c] sm:$0xf]
        %v6178 = vld [vmem:[%s6 + $0x50] sm:$0xf]
        %v6179 = vld [vmem:[%s6 + $0x54] sm:$0xf]
        %v6180 = vld [vmem:[%s6 + $0x58] sm:$0xf]
        %v6181 = vld [vmem:[%s6 + $0x5c] sm:$0xf]
        %v6182 = vld [vmem:[%s6 + $0x60] sm:$0xf]
        %v6183 = vld [vmem:[%s6 + $0x64] sm:$0xf]
        %v6184 = vld [vmem:[%s6 + $0x68] sm:$0xf]
        %v6185 = vld [vmem:[%s6 + $0x6c] sm:$0xf]
        %v6186 = vld [vmem:[%s6 + $0x70] sm:$0xf]
        %v6187 = vld [vmem:[%s6 + $0x74] sm:$0xf]
        %v6188 = vld [vmem:[%s6 + $0x78] sm:$0xf]
        %v6189 = vld [vmem:[%s6 + $0x7c] sm:$0xf]
        %v6190 = vld [vmem:[%s6 + $0x80] sm:$0xf]
        %v6191 = vld [vmem:[%s6 + $0x84] sm:$0xf]
        %v6192 = vld [vmem:[%s6 + $0x88] sm:$0xf]
        %v6193 = vld [vmem:[%s6 + $0x8c] sm:$0xf]
        %v6194 = vld [vmem:[%s6 + $0x90] sm:$0xf]
        %v6195 = vld [vmem:[%s6 + $0x94] sm:$0xf]
        %v6196 = vld [vmem:[%s6 + $0x98] sm:$0xf]
        %v6197 = vld [vmem:[%s6 + $0x9c] sm:$0xf]
        %v6198 = vld [vmem:[%s6 + $0xa0] sm:$0xf]
        %v6199 = vld [vmem:[%s6 + $0xa4] sm:$0xf]
        %v6200 = vld [vmem:[%s6 + $0xa8] sm:$0xf]
        %v6201 = vld [vmem:[%s6 + $0xac] sm:$0xf]
        %v6202 = vld [vmem:[%s6 + $0xb0] sm:$0xf]
        %v6203 = vld [vmem:[%s6 + $0xb4] sm:$0xf]
        %v6204 = vld [vmem:[%s6 + $0xb8] sm:$0xf]
        %v6205 = vld [vmem:[%s6 + $0xbc] sm:$0xf]
        %v6206 = vld [vmem:[#allocation3 + $0x180] sm:$0xff]
        %v6207 = vld [vmem:[#allocation3 + $0x188] sm:$0xf]
        %v6208 = vld [vmem:[#allocation3 + $0x18c] sm:$0xff]
        %v6209 = vld [vmem:[#allocation3 + $0x194] sm:$0xf]
        %v6210 = vld [vmem:[#allocation3 + $0x198] sm:$0xff]
        %v6211 = vld [vmem:[#allocation3 + $0x1a0] sm:$0xf]
        %v6212 = vld [vmem:[#allocation3 + $0x1a4] sm:$0xff]
        %v6213 = vld [vmem:[#allocation3 + $0x1ac] sm:$0xf]
        %v6214 = vld [vmem:[%s6 + $0xc0] sm:$0xf]
        %v6215 = vld [vmem:[%s6 + $0xc4] sm:$0xf]
        %v6216 = vld [vmem:[%s6 + $0xc8] sm:$0xf]
        %v6217 = vld [vmem:[%s6 + $0xcc] sm:$0xf]
        %v6218 = vld [vmem:[%s6 + $0xd0] sm:$0xf]
        %v6219 = vld [vmem:[%s6 + $0xd4] sm:$0xf]
        %v6220 = vld [vmem:[%s6 + $0xd8] sm:$0xf]
        %v6221 = vld [vmem:[%s6 + $0xdc] sm:$0xf]
        %v6222 = vld [vmem:[%s6 + $0xe0] sm:$0xf]
        %v6223 = vld [vmem:[%s6 + $0xe4] sm:$0xf]
        %v6224 = vld [vmem:[%s6 + $0xe8] sm:$0xf]
        %v6225 = vld [vmem:[%s6 + $0xec] sm:$0xf]
        %v6226 = vld [vmem:[%s6 + $0xf0] sm:$0xf]
        %v6227 = vld [vmem:[%s6 + $0xf4] sm:$0xf]
        %v6228 = vld [vmem:[%s6 + $0xf8] sm:$0xf]
        %v6229 = vld [vmem:[%s6 + $0xfc] sm:$0xf]
        %v6230 = vld [vmem:[%s6 + $0x100] sm:$0xf]
        %v6231 = vld [vmem:[%s6 + $0x104] sm:$0xf]
        %v6232 = vld [vmem:[%s6 + $0x108] sm:$0xf]
        %v6233 = vld [vmem:[%s6 + $0x10c] sm:$0xf]
        %v6234 = vld [vmem:[%s6 + $0x110] sm:$0xf]
        %v6235 = vld [vmem:[%s6 + $0x114] sm:$0xf]
        %v6236 = vld [vmem:[%s6 + $0x118] sm:$0xf]
        %v6237 = vld [vmem:[%s6 + $0x11c] sm:$0xf]
        %v6238 = vld [vmem:[%s6 + $0x120] sm:$0xf]
        %v6239 = vld [vmem:[%s6 + $0x124] sm:$0xf]
        %v6240 = vld [vmem:[%s6 + $0x128] sm:$0xf]
        %v6241 = vld [vmem:[%s6 + $0x12c] sm:$0xf]
        %v6242 = vld [vmem:[%s6 + $0x130] sm:$0xf]
        %v6243 = vld [vmem:[%s6 + $0x134] sm:$0xf]
        %v6244 = vld [vmem:[%s6 + $0x138] sm:$0xf]
        %v6245 = vld [vmem:[%s6 + $0x13c] sm:$0xf]
        %v6246 = vld [vmem:[%s6 + $0x140] sm:$0xf]
        %v6247 = vld [vmem:[%s6 + $0x144] sm:$0xf]
        %v6248 = vld [vmem:[%s6 + $0x148] sm:$0xf]
        %v6249 = vld [vmem:[%s6 + $0x14c] sm:$0xf]
        %v6250 = vld [vmem:[%s6 + $0x150] sm:$0xf]
        %v6251 = vld [vmem:[%s6 + $0x154] sm:$0xf]
        %v6252 = vld [vmem:[%s6 + $0x158] sm:$0xf]
        %v6253 = vld [vmem:[%s6 + $0x15c] sm:$0xf]
        %v6254 = vld [vmem:[%s6 + $0x160] sm:$0xf]
        %v6255 = vld [vmem:[%s6 + $0x164] sm:$0xf]
        %v6256 = vld [vmem:[%s6 + $0x168] sm:$0xf]
        %v6257 = vld [vmem:[%s6 + $0x16c] sm:$0xf]
        %v6258 = vld [vmem:[%s6 + $0x170] sm:$0xf]
        %v6259 = vld [vmem:[%s6 + $0x174] sm:$0xf]
        %v6260 = vld [vmem:[%s6 + $0x178] sm:$0xf]
        %v6261 = vld [vmem:[%s6 + $0x17c] sm:$0xf]
        %v6326 = vunpack.c.l.b16 %v6102
        %v6327 = vunpack.c.h.b16 %v6102
        %v6328 = vunpack.c.l.b16 %v6103
        %v6329 = vunpack.c.l.b16 %v6104
        %v6330 = vunpack.c.h.b16 %v6104
        %v6331 = vunpack.c.l.b16 %v6105
        %v6332 = vunpack.c.l.b16 %v6106
        %v6333 = vunpack.c.h.b16 %v6106
        %v6334 = vunpack.c.l.b16 %v6107
        %v6335 = vunpack.c.l.b16 %v6108
        %v6336 = vunpack.c.h.b16 %v6108
        %v6337 = vunpack.c.l.b16 %v6109
        %v6338 = vunpack.c.l.b16 %v6110
        %v6339 = vunpack.c.h.b16 %v6110
        %v6340 = vunpack.c.l.b16 %v6111
        %v6341 = vunpack.c.l.b16 %v6112
        %v6342 = vunpack.c.h.b16 %v6112
        %v6343 = vunpack.c.l.b16 %v6113
        %v6344 = vunpack.c.l.b16 %v6114
        %v6345 = vunpack.c.h.b16 %v6114
        %v6346 = vunpack.c.l.b16 %v6115
        %v6347 = vunpack.c.l.b16 %v6116
        %v6348 = vunpack.c.h.b16 %v6116
        %v6349 = vunpack.c.l.b16 %v6117
        %v6350 = vunpack.c.l.b16 %v6118
        %v6351 = vunpack.c.h.b16 %v6118
        %v6352 = vunpack.c.l.b16 %v6119
        %v6353 = vunpack.c.l.b16 %v6120
        %v6354 = vunpack.c.h.b16 %v6120
        %v6355 = vunpack.c.l.b16 %v6121
        %v6356 = vunpack.c.l.b16 %v6122
        %v6357 = vunpack.c.h.b16 %v6122
        %v6358 = vunpack.c.l.b16 %v6123
        %v6359 = vunpack.c.l.b16 %v6124
        %v6360 = vunpack.c.h.b16 %v6124
        %v6361 = vunpack.c.l.b16 %v6125
        %v6362 = vunpack.c.l.b16 %v6126
        %v6363 = vunpack.c.h.b16 %v6126
        %v6364 = vunpack.c.l.b16 %v6127
        %v6365 = vunpack.c.l.b16 %v6128
        %v6366 = vunpack.c.h.b16 %v6128
        %v6367 = vunpack.c.l.b16 %v6129
        %v6368 = vunpack.c.l.b16 %v6130
        %v6369 = vunpack.c.h.b16 %v6130
        %v6370 = vunpack.c.l.b16 %v6131
        %v6371 = vunpack.c.l.b16 %v6132
        %v6372 = vunpack.c.h.b16 %v6132
        %v6373 = vunpack.c.l.b16 %v6133
        %v6374 = vunpack.c.l.b16 %v6134
        %v6375 = vunpack.c.h.b16 %v6134
        %v6376 = vunpack.c.l.b16 %v6135
        %v6377 = vunpack.c.l.b16 %v6136
        %v6378 = vunpack.c.h.b16 %v6136
        %v6379 = vunpack.c.l.b16 %v6137
        %v6380 = vunpack.c.l.b16 %v6138
        %v6381 = vunpack.c.h.b16 %v6138
        %v6382 = vunpack.c.l.b16 %v6139
        %v6383 = vunpack.c.l.b16 %v6140
        %v6384 = vunpack.c.h.b16 %v6140
        %v6385 = vunpack.c.l.b16 %v6141
        %v6386 = vunpack.c.l.b16 %v6142
        %v6387 = vunpack.c.h.b16 %v6142
        %v6388 = vunpack.c.l.b16 %v6143
        %v6389 = vunpack.c.l.b16 %v6144
        %v6390 = vunpack.c.h.b16 %v6144
        %v6391 = vunpack.c.l.b16 %v6145
        %v6392 = vunpack.c.l.b16 %v6146
        %v6393 = vunpack.c.h.b16 %v6146
        %v6394 = vunpack.c.l.b16 %v6147
        %v6395 = vunpack.c.l.b16 %v6148
        %v6396 = vunpack.c.h.b16 %v6148
        %v6397 = vunpack.c.l.b16 %v6149
        %v6398 = vunpack.c.l.b16 %v6150
        %v6399 = vunpack.c.h.b16 %v6150
        %v6400 = vunpack.c.l.b16 %v6151
        %v6401 = vunpack.c.l.b16 %v6152
        %v6402 = vunpack.c.h.b16 %v6152
        %v6403 = vunpack.c.l.b16 %v6153
        %v6404 = vunpack.c.l.b16 %v6154
        %v6405 = vunpack.c.h.b16 %v6154
        %v6406 = vunpack.c.l.b16 %v6155
        %v6407 = vunpack.c.l.b16 %v6156
        %v6408 = vunpack.c.h.b16 %v6156
        %v6409 = vunpack.c.l.b16 %v6157
        %v6410 = vunpack.c.l.b16 %v6206
        %v6411 = vunpack.c.h.b16 %v6206
        %v6412 = vunpack.c.l.b16 %v6207
        %v6413 = vunpack.c.l.b16 %v6208
        %v6414 = vunpack.c.h.b16 %v6208
        %v6415 = vunpack.c.l.b16 %v6209
        %v6416 = vunpack.c.l.b16 %v6210
        %v6417 = vunpack.c.h.b16 %v6210
        %v6418 = vunpack.c.l.b16 %v6211
        %v6419 = vunpack.c.l.b16 %v6212
        %v6420 = vunpack.c.h.b16 %v6212
        %v6421 = vunpack.c.l.b16 %v6213
        %v6422 = vpack.c.b16 %v6329, %v6326
        %v6423 = vpack.c.b16 %v6330, %v6327
        %v6424 = vpack.c.b16 %v6331, %v6328
        %v6425 = vpack.c.b16 %v6335, %v6332
        %v6426 = vpack.c.b16 %v6336, %v6333
        %v6427 = vpack.c.b16 %v6337, %v6334
        %v6428 = vpack.c.b16 %v6341, %v6338
        %v6429 = vpack.c.b16 %v6342, %v6339
        %v6430 = vpack.c.b16 %v6343, %v6340
        %v6431 = vpack.c.b16 %v6347, %v6344
        %v6432 = vpack.c.b16 %v6348, %v6345
        %v6433 = vpack.c.b16 %v6349, %v6346
        %v6434 = vpack.c.b16 %v6353, %v6350
        %v6435 = vpack.c.b16 %v6354, %v6351
        %v6436 = vpack.c.b16 %v6355, %v6352
        %v6437 = vpack.c.b16 %v6359, %v6356
        %v6438 = vpack.c.b16 %v6360, %v6357
        %v6439 = vpack.c.b16 %v6361, %v6358
        %v6440 = vpack.c.b16 %v6365, %v6362
        %v6441 = vpack.c.b16 %v6366, %v6363
        %v6442 = vpack.c.b16 %v6367, %v6364
        %v6443 = vpack.c.b16 %v6371, %v6368
        %v6444 = vpack.c.b16 %v6372, %v6369
        %v6445 = vpack.c.b16 %v6373, %v6370
        %v6446 = vpack.c.b16 %v6377, %v6374
        %v6447 = vpack.c.b16 %v6378, %v6375
        %v6448 = vpack.c.b16 %v6379, %v6376
        %v6449 = vpack.c.b16 %v6383, %v6380
        %v6450 = vpack.c.b16 %v6384, %v6381
        %v6451 = vpack.c.b16 %v6385, %v6382
        %v6452 = vpack.c.b16 %v6389, %v6386
        %v6453 = vpack.c.b16 %v6390, %v6387
        %v6454 = vpack.c.b16 %v6391, %v6388
        %v6455 = vpack.c.b16 %v6395, %v6392
        %v6456 = vpack.c.b16 %v6396, %v6393
        %v6457 = vpack.c.b16 %v6397, %v6394
        %v6458 = vpack.c.b16 %v6401, %v6398
        %v6459 = vpack.c.b16 %v6402, %v6399
        %v6460 = vpack.c.b16 %v6403, %v6400
        %v6461 = vpack.c.b16 %v6407, %v6404
        %v6462 = vpack.c.b16 %v6408, %v6405
        %v6463 = vpack.c.b16 %v6409, %v6406
        %v6464 = vpack.c.b16 %v6413, %v6410
        %v6465 = vpack.c.b16 %v6414, %v6411
        %v6466 = vpack.c.b16 %v6415, %v6412
        %v6467 = vpack.c.b16 %v6419, %v6416
        %v6468 = vpack.c.b16 %v6420, %v6417
        %v6469 = vpack.c.b16 %v6421, %v6418
        %v6566 = vunpack.c.l.b16 %v6214
        %v6567 = vunpack.c.l.b16 %v6215
        %v6568 = vunpack.c.l.b16 %v6216
        %v6569 = vunpack.c.l.b16 %v6217
        %v6570 = vunpack.c.l.b16 %v6218
        %v6571 = vunpack.c.l.b16 %v6219
        %v6572 = vunpack.c.l.b16 %v6220
        %v6573 = vunpack.c.l.b16 %v6221
        %v6574 = vunpack.c.l.b16 %v6222
        %v6575 = vunpack.c.l.b16 %v6223
        %v6576 = vunpack.c.l.b16 %v6224
        %v6577 = vunpack.c.l.b16 %v6225
        %v6578 = vunpack.c.l.b16 %v6226
        %v6579 = vunpack.c.l.b16 %v6227
        %v6580 = vunpack.c.l.b16 %v6228
        %v6581 = vunpack.c.l.b16 %v6229
        %v6582 = vunpack.c.l.b16 %v6230
        %v6583 = vunpack.c.l.b16 %v6231
        %v6584 = vunpack.c.l.b16 %v6232
        %v6585 = vunpack.c.l.b16 %v6233
        %v6586 = vunpack.c.l.b16 %v6234
        %v6587 = vunpack.c.l.b16 %v6235
        %v6588 = vunpack.c.l.b16 %v6236
        %v6589 = vunpack.c.l.b16 %v6237
        %v6590 = vunpack.c.l.b16 %v6238
        %v6591 = vunpack.c.l.b16 %v6239
        %v6592 = vunpack.c.l.b16 %v6240
        %v6593 = vunpack.c.l.b16 %v6241
        %v6594 = vunpack.c.l.b16 %v6242
        %v6595 = vunpack.c.l.b16 %v6243
        %v6596 = vunpack.c.l.b16 %v6244
        %v6597 = vunpack.c.l.b16 %v6245
        %v6598 = vunpack.c.l.b16 %v6246
        %v6599 = vunpack.c.l.b16 %v6247
        %v6600 = vunpack.c.l.b16 %v6248
        %v6601 = vunpack.c.l.b16 %v6249
        %v6602 = vunpack.c.l.b16 %v6250
        %v6603 = vunpack.c.l.b16 %v6251
        %v6604 = vunpack.c.l.b16 %v6252
        %v6605 = vunpack.c.l.b16 %v6253
        %v6606 = vunpack.c.l.b16 %v6254
        %v6607 = vunpack.c.l.b16 %v6255
        %v6608 = vunpack.c.l.b16 %v6256
        %v6609 = vunpack.c.l.b16 %v6257
        %v6610 = vunpack.c.l.b16 %v6258
        %v6611 = vunpack.c.l.b16 %v6259
        %v6612 = vunpack.c.l.b16 %v6260
        %v6613 = vunpack.c.l.b16 %v6261
        %v6614 = vpack.c.b16 %v6567, %v6566
        %v6615 = vpack.c.b16 %v6569, %v6568
        %v6616 = vpack.c.b16 %v6571, %v6570
        %v6617 = vpack.c.b16 %v6573, %v6572
        %v6618 = vpack.c.b16 %v6575, %v6574
        %v6619 = vpack.c.b16 %v6577, %v6576
        %v6620 = vpack.c.b16 %v6579, %v6578
        %v6621 = vpack.c.b16 %v6581, %v6580
        %v6622 = vpack.c.b16 %v6583, %v6582
        %v6623 = vpack.c.b16 %v6585, %v6584
        %v6624 = vpack.c.b16 %v6587, %v6586
        %v6625 = vpack.c.b16 %v6589, %v6588
        %v6626 = vpack.c.b16 %v6591, %v6590
        %v6627 = vpack.c.b16 %v6593, %v6592
        %v6628 = vpack.c.b16 %v6595, %v6594
        %v6629 = vpack.c.b16 %v6597, %v6596
        %v6630 = vpack.c.b16 %v6599, %v6598
        %v6631 = vpack.c.b16 %v6601, %v6600
        %v6632 = vpack.c.b16 %v6603, %v6602
        %v6633 = vpack.c.b16 %v6605, %v6604
        %v6634 = vpack.c.b16 %v6607, %v6606
        %v6635 = vpack.c.b16 %v6609, %v6608
        %v6636 = vpack.c.b16 %v6611, %v6610
        %v6637 = vpack.c.b16 %v6613, %v6612
        %6662 = vmatprep.subr.bf16.mxu0 0
        %6663 = vmatpush1.bf16.msra.mxu0 %v6621
        %6664 = vmatprep.subr.bf16.mxu0 0
        %6665 = vmatpush1.bf16.msra.mxu0 %v6620
        %6666 = vmatprep.subr.bf16.mxu0 0
        %6667 = vmatpush1.bf16.msra.mxu0 %v6619
        %6668 = vmatprep.subr.bf16.mxu0 0
        %6669 = vmatpush1.bf16.msra.mxu0 %v6618
        %6670 = vmatprep.subr.bf16.mxu0 0
        %6671 = vmatpush1.bf16.msra.mxu0 %v6617
        %6672 = vmatprep.subr.bf16.mxu0 0
        %6673 = vmatpush1.bf16.msra.mxu0 %v6616
        %6674 = vmatprep.subr.bf16.mxu0 0
        %6675 = vmatpush1.bf16.msra.mxu0 %v6615
        %6676 = vmatprep.subr.bf16.mxu0 0
        %6677 = vmatpush1.bf16.msra.mxu0 %v6614
        %6678 = vmatprep.subr.bf16.mxu0 0
        %6679 = vmatpush2.bf16.msra.mxu0 %v6629
        %6680 = vmatprep.subr.bf16.mxu0 0
        %6681 = vmatpush2.bf16.msra.mxu0 %v6628
        %6682 = vmatprep.subr.bf16.mxu0 0
        %6683 = vmatpush2.bf16.msra.mxu0 %v6627
        %6684 = vmatprep.subr.bf16.mxu0 0
        %6685 = vmatpush2.bf16.msra.mxu0 %v6626
        %6686 = vmatprep.subr.bf16.mxu0 0
        %6687 = vmatpush2.bf16.msra.mxu0 %v6625
        %6688 = vmatprep.subr.bf16.mxu0 0
        %6689 = vmatpush2.bf16.msra.mxu0 %v6624
        %6690 = vmatprep.subr.bf16.mxu0 0
        %6691 = vmatpush2.bf16.msra.mxu0 %v6623
        %6692 = vmatprep.subr.bf16.mxu0 0
        %6693 = vmatpush2.bf16.msra.mxu0 %v6622
        %6694 = vmatprep.mubr.bf16.mxu0 %v6423
        %6695 = vmatmul.mubr.bf16.gmra.mxu0 %v6422
        %v6696 = vpop.f32.mrf.mxu0
        %v6697 = vadd.f32 0.0, %v6696
        %v6698 = vpop.f32.mrf.mxu0
        %v6699 = vpop.f32.mrf.mxu0
        %v6700 = vadd.f32 0.0, %v6699
        %v6701 = vpop.f32.mrf.mxu0
        %6702 = vmatprep.mubr.bf16.mxu0 %v6426
        %6703 = vmatmul.mubr.bf16.gmra.mxu0 %v6425
        %v6704 = vpop.f32.mrf.mxu0
        %v6705 = vadd.f32 0.0, %v6704
        %v6706 = vpop.f32.mrf.mxu0
        %v6707 = vpop.f32.mrf.mxu0
        %v6708 = vadd.f32 0.0, %v6707
        %v6709 = vpop.f32.mrf.mxu0
        %6710 = vmatprep.mubr.bf16.mxu0 %v6429
        %6711 = vmatmul.mubr.bf16.gmra.mxu0 %v6428
        %v6712 = vpop.f32.mrf.mxu0
        %v6713 = vadd.f32 0.0, %v6712
        %v6714 = vpop.f32.mrf.mxu0
        %v6715 = vpop.f32.mrf.mxu0
        %v6716 = vadd.f32 0.0, %v6715
        %v6717 = vpop.f32.mrf.mxu0
        %6718 = vmatprep.mubr.bf16.mxu0 %v6432
        %6719 = vmatmul.mubr.bf16.gmra.mxu0 %v6431
        %v6720 = vpop.f32.mrf.mxu0
        %v6721 = vadd.f32 0.0, %v6720
        %v6722 = vpop.f32.mrf.mxu0
        %v6723 = vpop.f32.mrf.mxu0
        %v6724 = vadd.f32 0.0, %v6723
        %v6725 = vpop.f32.mrf.mxu0
        %6726 = vmatprep.mubr.bf16.mxu0 %v6435
        %6727 = vmatmul.mubr.bf16.gmra.mxu0 %v6434
        %v6728 = vpop.f32.mrf.mxu0
        %v6729 = vadd.f32 0.0, %v6728
        %v6730 = vpop.f32.mrf.mxu0
        %v6731 = vpop.f32.mrf.mxu0
        %v6732 = vadd.f32 0.0, %v6731
        %v6733 = vpop.f32.mrf.mxu0
        %6734 = vmatprep.mubr.bf16.mxu0 %v6438
        %6735 = vmatmul.mubr.bf16.gmra.mxu0 %v6437
        %v6736 = vpop.f32.mrf.mxu0
        %v6737 = vadd.f32 0.0, %v6736
        %v6738 = vpop.f32.mrf.mxu0
        %v6739 = vpop.f32.mrf.mxu0
        %v6740 = vadd.f32 0.0, %v6739
        %v6741 = vpop.f32.mrf.mxu0
        %6742 = vmatprep.mubr.bf16.mxu0 %v6441
        %6743 = vmatmul.mubr.bf16.gmra.mxu0 %v6440
        %v6744 = vpop.f32.mrf.mxu0
        %v6745 = vadd.f32 0.0, %v6744
        %v6746 = vpop.f32.mrf.mxu0
        %v6747 = vpop.f32.mrf.mxu0
        %v6748 = vadd.f32 0.0, %v6747
        %v6749 = vpop.f32.mrf.mxu0
        %6750 = vmatprep.mubr.bf16.mxu0 %v6444
        %6751 = vmatmul.mubr.bf16.gmra.mxu0 %v6443
        %v6752 = vpop.f32.mrf.mxu0
        %v6753 = vadd.f32 0.0, %v6752
        %v6754 = vpop.f32.mrf.mxu0
        %v6755 = vpop.f32.mrf.mxu0
        %v6756 = vadd.f32 0.0, %v6755
        %v6757 = vpop.f32.mrf.mxu0
        %6758 = vmatprep.mubr.bf16.mxu0 %v6447
        %6759 = vmatmul.mubr.bf16.gmra.mxu0 %v6446
        %v6760 = vpop.f32.mrf.mxu0
        %v6761 = vadd.f32 0.0, %v6760
        %v6762 = vpop.f32.mrf.mxu0
        %v6763 = vpop.f32.mrf.mxu0
        %v6764 = vadd.f32 0.0, %v6763
        %v6765 = vpop.f32.mrf.mxu0
        %6766 = vmatprep.mubr.bf16.mxu0 %v6450
        %6767 = vmatmul.mubr.bf16.gmra.mxu0 %v6449
        %v6768 = vpop.f32.mrf.mxu0
        %v6769 = vadd.f32 0.0, %v6768
        %v6770 = vpop.f32.mrf.mxu0
        %v6771 = vpop.f32.mrf.mxu0
        %v6772 = vadd.f32 0.0, %v6771
        %v6773 = vpop.f32.mrf.mxu0
        %6774 = vmatprep.mubr.bf16.mxu0 %v6453
        %6775 = vmatmul.mubr.bf16.gmra.mxu0 %v6452
        %v6776 = vpop.f32.mrf.mxu0
        %v6777 = vadd.f32 0.0, %v6776
        %v6778 = vpop.f32.mrf.mxu0
        %v6779 = vpop.f32.mrf.mxu0
        %v6780 = vadd.f32 0.0, %v6779
        %v6781 = vpop.f32.mrf.mxu0
        %6782 = vmatprep.mubr.bf16.mxu0 %v6456
        %6783 = vmatmul.mubr.bf16.gmra.mxu0 %v6455
        %v6784 = vpop.f32.mrf.mxu0
        %v6785 = vadd.f32 0.0, %v6784
        %v6786 = vpop.f32.mrf.mxu0
        %v6787 = vpop.f32.mrf.mxu0
        %v6788 = vadd.f32 0.0, %v6787
        %v6789 = vpop.f32.mrf.mxu0
        %6790 = vmatprep.mubr.bf16.mxu0 %v6459
        %6791 = vmatmul.mubr.bf16.gmra.mxu0 %v6458
        %v6792 = vpop.f32.mrf.mxu0
        %v6793 = vadd.f32 0.0, %v6792
        %v6794 = vpop.f32.mrf.mxu0
        %v6795 = vpop.f32.mrf.mxu0
        %v6796 = vadd.f32 0.0, %v6795
        %v6797 = vpop.f32.mrf.mxu0
        %6798 = vmatprep.mubr.bf16.mxu0 %v6462
        %6799 = vmatmul.mubr.bf16.gmra.mxu0 %v6461
        %v6800 = vpop.f32.mrf.mxu0
        %v6801 = vadd.f32 0.0, %v6800
        %v6802 = vpop.f32.mrf.mxu0
        %v6803 = vpop.f32.mrf.mxu0
        %v6804 = vadd.f32 0.0, %v6803
        %v6805 = vpop.f32.mrf.mxu0
        %6806 = vmatprep.mubr.bf16.mxu0 %v6465
        %6807 = vmatmul.mubr.bf16.gmra.mxu0 %v6464
        %v6808 = vpop.f32.mrf.mxu0
        %v6809 = vadd.f32 0.0, %v6808
        %v6810 = vpop.f32.mrf.mxu0
        %v6811 = vpop.f32.mrf.mxu0
        %v6812 = vadd.f32 0.0, %v6811
        %v6813 = vpop.f32.mrf.mxu0
        %6814 = vmatprep.mubr.bf16.mxu0 %v6468
        %6815 = vmatmul.mubr.bf16.gmra.mxu0 %v6467
        %v6816 = vpop.f32.mrf.mxu0
        %v6817 = vadd.f32 0.0, %v6816
        %v6818 = vpop.f32.mrf.mxu0
        %v6819 = vpop.f32.mrf.mxu0
        %v6820 = vadd.f32 0.0, %v6819
        %v6821 = vpop.f32.mrf.mxu0
        %6822 = vdwg.mxu0
        %6823 = vmatprep.subr.bf16.mxu0 0
        %6824 = vmatpush1.bf16.msra.mxu0 %v6637
        %6825 = vmatprep.subr.bf16.mxu0 0
        %6826 = vmatpush1.bf16.msra.mxu0 %v6636
        %6827 = vmatprep.subr.bf16.mxu0 0
        %6828 = vmatpush1.bf16.msra.mxu0 %v6635
        %6829 = vmatprep.subr.bf16.mxu0 0
        %6830 = vmatpush1.bf16.msra.mxu0 %v6634
        %6831 = vmatprep.subr.bf16.mxu0 0
        %6832 = vmatpush1.bf16.msra.mxu0 %v6633
        %6833 = vmatprep.subr.bf16.mxu0 0
        %6834 = vmatpush1.bf16.msra.mxu0 %v6632
        %6835 = vmatprep.subr.bf16.mxu0 0
        %6836 = vmatpush1.bf16.msra.mxu0 %v6631
        %6837 = vmatprep.subr.bf16.mxu0 0
        %6838 = vmatpush1.bf16.msra.mxu0 %v6630
        %6839 = vmatprep.subr.bf16.mxu0 0
        %6840 = vmatpush2.bf16.msra.mxu0 0
        %6841 = vmatprep.subr.bf16.mxu0 0
        %6842 = vmatpush2.bf16.msra.mxu0 0
        %6843 = vmatprep.subr.bf16.mxu0 0
        %6844 = vmatpush2.bf16.msra.mxu0 0
        %6845 = vmatprep.subr.bf16.mxu0 0
        %6846 = vmatpush2.bf16.msra.mxu0 0
        %6847 = vmatprep.subr.bf16.mxu0 0
        %6848 = vmatpush2.bf16.msra.mxu0 0
        %6849 = vmatprep.subr.bf16.mxu0 0
        %6850 = vmatpush2.bf16.msra.mxu0 0
        %6851 = vmatprep.subr.bf16.mxu0 0
        %6852 = vmatpush2.bf16.msra.mxu0 0
        %6853 = vmatprep.subr.bf16.mxu0 0
        %6854 = vmatpush2.bf16.msra.mxu0 0
        %6855 = vmatprep.mubr.bf16.mxu0 0
        %6856 = vmatmul.mubr.bf16.gmra.mxu0 %v6424
        %v6857 = vpop.f32.mrf.mxu0
        %v6858 = vadd.f32 %v6697, %v6857
        %v6859 = vpop.f32.mrf.mxu0
        %v6860 = vpop.f32.mrf.mxu0
        %v6861 = vadd.f32 %v6700, %v6860
        %v6862 = vpop.f32.mrf.mxu0
        %6863 = vmatprep.mubr.bf16.mxu0 0
        %6864 = vmatmul.mubr.bf16.gmra.mxu0 %v6427
        %v6865 = vpop.f32.mrf.mxu0
        %v6866 = vadd.f32 %v6705, %v6865
        %v6867 = vpop.f32.mrf.mxu0
        %v6868 = vpop.f32.mrf.mxu0
        %v6869 = vadd.f32 %v6708, %v6868
        %v6870 = vpop.f32.mrf.mxu0
        %6871 = vmatprep.mubr.bf16.mxu0 0
        %6872 = vmatmul.mubr.bf16.gmra.mxu0 %v6430
        %v6873 = vpop.f32.mrf.mxu0
        %v6874 = vadd.f32 %v6713, %v6873
        %v6875 = vpop.f32.mrf.mxu0
        %v6876 = vpop.f32.mrf.mxu0
        %v6877 = vadd.f32 %v6716, %v6876
        %v6878 = vpop.f32.mrf.mxu0
        %6879 = vmatprep.mubr.bf16.mxu0 0
        %6880 = vmatmul.mubr.bf16.gmra.mxu0 %v6433
        %v6881 = vpop.f32.mrf.mxu0
        %v6882 = vadd.f32 %v6721, %v6881
        %v6883 = vpop.f32.mrf.mxu0
        %v6884 = vpop.f32.mrf.mxu0
        %v6885 = vadd.f32 %v6724, %v6884
        %v6886 = vpop.f32.mrf.mxu0
        %6887 = vmatprep.mubr.bf16.mxu0 0
        %6888 = vmatmul.mubr.bf16.gmra.mxu0 %v6436
        %v6889 = vpop.f32.mrf.mxu0
        %v6890 = vadd.f32 %v6729, %v6889
        %v6891 = vpop.f32.mrf.mxu0
        %v6892 = vpop.f32.mrf.mxu0
        %v6893 = vadd.f32 %v6732, %v6892
        %v6894 = vpop.f32.mrf.mxu0
        %6895 = vmatprep.mubr.bf16.mxu0 0
        %6896 = vmatmul.mubr.bf16.gmra.mxu0 %v6439
        %v6897 = vpop.f32.mrf.mxu0
        %v6898 = vadd.f32 %v6737, %v6897
        %v6899 = vpop.f32.mrf.mxu0
        %v6900 = vpop.f32.mrf.mxu0
        %v6901 = vadd.f32 %v6740, %v6900
        %v6902 = vpop.f32.mrf.mxu0
        %6903 = vmatprep.mubr.bf16.mxu0 0
        %6904 = vmatmul.mubr.bf16.gmra.mxu0 %v6442
        %v6905 = vpop.f32.mrf.mxu0
        %v6906 = vadd.f32 %v6745, %v6905
        %v6907 = vpop.f32.mrf.mxu0
        %v6908 = vpop.f32.mrf.mxu0
        %v6909 = vadd.f32 %v6748, %v6908
        %v6910 = vpop.f32.mrf.mxu0
        %6911 = vmatprep.mubr.bf16.mxu0 0
        %6912 = vmatmul.mubr.bf16.gmra.mxu0 %v6445
        %v6913 = vpop.f32.mrf.mxu0
        %v6914 = vadd.f32 %v6753, %v6913
        %v6915 = vpop.f32.mrf.mxu0
        %v6916 = vpop.f32.mrf.mxu0
        %v6917 = vadd.f32 %v6756, %v6916
        %v6918 = vpop.f32.mrf.mxu0
        %6919 = vmatprep.mubr.bf16.mxu0 0
        %6920 = vmatmul.mubr.bf16.gmra.mxu0 %v6448
        %v6921 = vpop.f32.mrf.mxu0
        %v6922 = vadd.f32 %v6761, %v6921
        %v6923 = vpop.f32.mrf.mxu0
        %v6924 = vpop.f32.mrf.mxu0
        %v6925 = vadd.f32 %v6764, %v6924
        %v6926 = vpop.f32.mrf.mxu0
        %6927 = vmatprep.mubr.bf16.mxu0 0
        %6928 = vmatmul.mubr.bf16.gmra.mxu0 %v6451
        %v6929 = vpop.f32.mrf.mxu0
        %v6930 = vadd.f32 %v6769, %v6929
        %v6931 = vpop.f32.mrf.mxu0
        %v6932 = vpop.f32.mrf.mxu0
        %v6933 = vadd.f32 %v6772, %v6932
        %v6934 = vpop.f32.mrf.mxu0
        %6935 = vmatprep.mubr.bf16.mxu0 0
        %6936 = vmatmul.mubr.bf16.gmra.mxu0 %v6454
        %v6937 = vpop.f32.mrf.mxu0
        %v6938 = vadd.f32 %v6777, %v6937
        %v6939 = vpop.f32.mrf.mxu0
        %v6940 = vpop.f32.mrf.mxu0
        %v6941 = vadd.f32 %v6780, %v6940
        %v6942 = vpop.f32.mrf.mxu0
        %6943 = vmatprep.mubr.bf16.mxu0 0
        %6944 = vmatmul.mubr.bf16.gmra.mxu0 %v6457
        %v6945 = vpop.f32.mrf.mxu0
        %v6946 = vadd.f32 %v6785, %v6945
        %v6947 = vpop.f32.mrf.mxu0
        %v6948 = vpop.f32.mrf.mxu0
        %v6949 = vadd.f32 %v6788, %v6948
        %v6950 = vpop.f32.mrf.mxu0
        %6951 = vmatprep.mubr.bf16.mxu0 0
        %6952 = vmatmul.mubr.bf16.gmra.mxu0 %v6460
        %v6953 = vpop.f32.mrf.mxu0
        %v6954 = vadd.f32 %v6793, %v6953
        %v6955 = vpop.f32.mrf.mxu0
        %v6956 = vpop.f32.mrf.mxu0
        %v6957 = vadd.f32 %v6796, %v6956
        %v6958 = vpop.f32.mrf.mxu0
        %6959 = vmatprep.mubr.bf16.mxu0 0
        %6960 = vmatmul.mubr.bf16.gmra.mxu0 %v6463
        %v6961 = vpop.f32.mrf.mxu0
        %v6962 = vadd.f32 %v6801, %v6961
        %v6963 = vpop.f32.mrf.mxu0
        %v6964 = vpop.f32.mrf.mxu0
        %v6965 = vadd.f32 %v6804, %v6964
        %v6966 = vpop.f32.mrf.mxu0
        %6967 = vmatprep.mubr.bf16.mxu0 0
        %6968 = vmatmul.mubr.bf16.gmra.mxu0 %v6466
        %v6969 = vpop.f32.mrf.mxu0
        %v6970 = vadd.f32 %v6809, %v6969
        %v6971 = vpop.f32.mrf.mxu0
        %v6972 = vpop.f32.mrf.mxu0
        %v6973 = vadd.f32 %v6812, %v6972
        %v6974 = vpop.f32.mrf.mxu0
        %6975 = vmatprep.mubr.bf16.mxu0 0
        %6976 = vmatmul.mubr.bf16.gmra.mxu0 %v6469
        %v6977 = vpop.f32.mrf.mxu0
        %v6978 = vadd.f32 %v6817, %v6977
        %v6979 = vpop.f32.mrf.mxu0
        %v6980 = vpop.f32.mrf.mxu0
        %v6981 = vadd.f32 %v6820, %v6980
        %v6982 = vpop.f32.mrf.mxu0
        %6983 = vdwg.mxu0
        %v6992 = vunpack.c.l.b16 %v6094
        %v6993 = vunpack.c.h.b16 %v6094
        %v6994 = vunpack.c.l.b16 %v6095
        %v6995 = vunpack.c.l.b16 %v6096
        %v6996 = vunpack.c.h.b16 %v6096
        %v6997 = vunpack.c.l.b16 %v6097
        %v6998 = vunpack.c.l.b16 %v6098
        %v6999 = vunpack.c.h.b16 %v6098
        %v7000 = vunpack.c.l.b16 %v6099
        %v7001 = vunpack.c.l.b16 %v6100
        %v7002 = vunpack.c.h.b16 %v6100
        %v7003 = vunpack.c.l.b16 %v6101
        %v7004 = vpack.c.b16 %v6995, %v6992
        %v7005 = vpack.c.b16 %v6996, %v6993
        %v7006 = vpack.c.b16 %v6997, %v6994
        %v7007 = vpack.c.b16 %v7001, %v6998
        %v7008 = vpack.c.b16 %v7002, %v6999
        %v7009 = vpack.c.b16 %v7003, %v7000
        %v7064 = vunpack.c.l.b16 %v6158
        %v7065 = vunpack.c.l.b16 %v6159
        %v7066 = vunpack.c.l.b16 %v6160
        %v7067 = vunpack.c.l.b16 %v6161
        %v7068 = vunpack.c.l.b16 %v6162
        %v7069 = vunpack.c.l.b16 %v6163
        %v7070 = vunpack.c.l.b16 %v6164
        %v7071 = vunpack.c.l.b16 %v6165
        %v7072 = vunpack.c.l.b16 %v6166
        %v7073 = vunpack.c.l.b16 %v6167
        %v7074 = vunpack.c.l.b16 %v6168
        %v7075 = vunpack.c.l.b16 %v6169
        %v7076 = vunpack.c.l.b16 %v6170
        %v7077 = vunpack.c.l.b16 %v6171
        %v7078 = vunpack.c.l.b16 %v6172
        %v7079 = vunpack.c.l.b16 %v6173
        %v7080 = vunpack.c.l.b16 %v6174
        %v7081 = vunpack.c.l.b16 %v6175
        %v7082 = vunpack.c.l.b16 %v6176
        %v7083 = vunpack.c.l.b16 %v6177
        %v7084 = vunpack.c.l.b16 %v6178
        %v7085 = vunpack.c.l.b16 %v6179
        %v7086 = vunpack.c.l.b16 %v6180
        %v7087 = vunpack.c.l.b16 %v6181
        %v7088 = vunpack.c.l.b16 %v6182
        %v7089 = vunpack.c.l.b16 %v6183
        %v7090 = vunpack.c.l.b16 %v6184
        %v7091 = vunpack.c.l.b16 %v6185
        %v7092 = vunpack.c.l.b16 %v6186
        %v7093 = vunpack.c.l.b16 %v6187
        %v7094 = vunpack.c.l.b16 %v6188
        %v7095 = vunpack.c.l.b16 %v6189
        %v7096 = vunpack.c.l.b16 %v6190
        %v7097 = vunpack.c.l.b16 %v6191
        %v7098 = vunpack.c.l.b16 %v6192
        %v7099 = vunpack.c.l.b16 %v6193
        %v7100 = vunpack.c.l.b16 %v6194
        %v7101 = vunpack.c.l.b16 %v6195
        %v7102 = vunpack.c.l.b16 %v6196
        %v7103 = vunpack.c.l.b16 %v6197
        %v7104 = vunpack.c.l.b16 %v6198
        %v7105 = vunpack.c.l.b16 %v6199
        %v7106 = vunpack.c.l.b16 %v6200
        %v7107 = vunpack.c.l.b16 %v6201
        %v7108 = vunpack.c.l.b16 %v6202
        %v7109 = vunpack.c.l.b16 %v6203
        %v7110 = vunpack.c.l.b16 %v6204
        %v7111 = vunpack.c.l.b16 %v6205
        %v7112 = vpack.c.b16 %v7065, %v7064
        %v7113 = vpack.c.b16 %v7067, %v7066
        %v7114 = vpack.c.b16 %v7069, %v7068
        %v7115 = vpack.c.b16 %v7071, %v7070
        %v7116 = vpack.c.b16 %v7073, %v7072
        %v7117 = vpack.c.b16 %v7075, %v7074
        %v7118 = vpack.c.b16 %v7077, %v7076
        %v7119 = vpack.c.b16 %v7079, %v7078
        %v7120 = vpack.c.b16 %v7081, %v7080
        %v7121 = vpack.c.b16 %v7083, %v7082
        %v7122 = vpack.c.b16 %v7085, %v7084
        %v7123 = vpack.c.b16 %v7087, %v7086
        %v7124 = vpack.c.b16 %v7089, %v7088
        %v7125 = vpack.c.b16 %v7091, %v7090
        %v7126 = vpack.c.b16 %v7093, %v7092
        %v7127 = vpack.c.b16 %v7095, %v7094
        %v7128 = vpack.c.b16 %v7097, %v7096
        %v7129 = vpack.c.b16 %v7099, %v7098
        %v7130 = vpack.c.b16 %v7101, %v7100
        %v7131 = vpack.c.b16 %v7103, %v7102
        %v7132 = vpack.c.b16 %v7105, %v7104
        %v7133 = vpack.c.b16 %v7107, %v7106
        %v7134 = vpack.c.b16 %v7109, %v7108
        %v7135 = vpack.c.b16 %v7111, %v7110
        %7160 = vmatprep.subr.bf16.mxu0 0
        %7161 = vmatpush1.bf16.msra.mxu0 %v7119
        %7162 = vmatprep.subr.bf16.mxu0 0
        %7163 = vmatpush1.bf16.msra.mxu0 %v7118
        %7164 = vmatprep.subr.bf16.mxu0 0
        %7165 = vmatpush1.bf16.msra.mxu0 %v7117
        %7166 = vmatprep.subr.bf16.mxu0 0
        %7167 = vmatpush1.bf16.msra.mxu0 %v7116
        %7168 = vmatprep.subr.bf16.mxu0 0
        %7169 = vmatpush1.bf16.msra.mxu0 %v7115
        %7170 = vmatprep.subr.bf16.mxu0 0
        %7171 = vmatpush1.bf16.msra.mxu0 %v7114
        %7172 = vmatprep.subr.bf16.mxu0 0
        %7173 = vmatpush1.bf16.msra.mxu0 %v7113
        %7174 = vmatprep.subr.bf16.mxu0 0
        %7175 = vmatpush1.bf16.msra.mxu0 %v7112
        %7176 = vmatprep.subr.bf16.mxu0 0
        %7177 = vmatpush2.bf16.msra.mxu0 %v7127
        %7178 = vmatprep.subr.bf16.mxu0 0
        %7179 = vmatpush2.bf16.msra.mxu0 %v7126
        %7180 = vmatprep.subr.bf16.mxu0 0
        %7181 = vmatpush2.bf16.msra.mxu0 %v7125
        %7182 = vmatprep.subr.bf16.mxu0 0
        %7183 = vmatpush2.bf16.msra.mxu0 %v7124
        %7184 = vmatprep.subr.bf16.mxu0 0
        %7185 = vmatpush2.bf16.msra.mxu0 %v7123
        %7186 = vmatprep.subr.bf16.mxu0 0
        %7187 = vmatpush2.bf16.msra.mxu0 %v7122
        %7188 = vmatprep.subr.bf16.mxu0 0
        %7189 = vmatpush2.bf16.msra.mxu0 %v7121
        %7190 = vmatprep.subr.bf16.mxu0 0
        %7191 = vmatpush2.bf16.msra.mxu0 %v7120
        %7192 = vmatprep.mubr.bf16.mxu0 %v7005
        %7193 = vmatmul.mubr.bf16.gmra.mxu0 %v7004
        %v7194 = vpop.f32.mrf.mxu0
        %v7195 = vadd.f32 %v6858, %v7194
        %v7196 = vpop.f32.mrf.mxu0
        %v7197 = vpop.f32.mrf.mxu0
        %v7198 = vadd.f32 %v6861, %v7197
        %v7199 = vpop.f32.mrf.mxu0
        %7200 = vmatprep.mubr.bf16.mxu0 %v7008
        %7201 = vmatmul.mubr.bf16.gmra.mxu0 %v7007
        %v7202 = vpop.f32.mrf.mxu0
        %v7203 = vadd.f32 %v6866, %v7202
        %v7204 = vpop.f32.mrf.mxu0
        %v7205 = vpop.f32.mrf.mxu0
        %v7206 = vadd.f32 %v6869, %v7205
        %v7207 = vpop.f32.mrf.mxu0
        %7208 = vmatprep.mubr.bf16.mxu0 %v6423
        %7209 = vmatmul.mubr.bf16.gmra.mxu0 %v6422
        %v7210 = vpop.f32.mrf.mxu0
        %v7211 = vadd.f32 %v6874, %v7210
        %v7212 = vpop.f32.mrf.mxu0
        %v7213 = vpop.f32.mrf.mxu0
        %v7214 = vadd.f32 %v6877, %v7213
        %v7215 = vpop.f32.mrf.mxu0
        %7216 = vmatprep.mubr.bf16.mxu0 %v6426
        %7217 = vmatmul.mubr.bf16.gmra.mxu0 %v6425
        %v7218 = vpop.f32.mrf.mxu0
        %v7219 = vadd.f32 %v6882, %v7218
        %v7220 = vpop.f32.mrf.mxu0
        %v7221 = vpop.f32.mrf.mxu0
        %v7222 = vadd.f32 %v6885, %v7221
        %v7223 = vpop.f32.mrf.mxu0
        %7224 = vmatprep.mubr.bf16.mxu0 %v6429
        %7225 = vmatmul.mubr.bf16.gmra.mxu0 %v6428
        %v7226 = vpop.f32.mrf.mxu0
        %v7227 = vadd.f32 %v6890, %v7226
        %v7228 = vpop.f32.mrf.mxu0
        %v7229 = vpop.f32.mrf.mxu0
        %v7230 = vadd.f32 %v6893, %v7229
        %v7231 = vpop.f32.mrf.mxu0
        %7232 = vmatprep.mubr.bf16.mxu0 %v6432
        %7233 = vmatmul.mubr.bf16.gmra.mxu0 %v6431
        %v7234 = vpop.f32.mrf.mxu0
        %v7235 = vadd.f32 %v6898, %v7234
        %v7236 = vpop.f32.mrf.mxu0
        %v7237 = vpop.f32.mrf.mxu0
        %v7238 = vadd.f32 %v6901, %v7237
        %v7239 = vpop.f32.mrf.mxu0
        %7240 = vmatprep.mubr.bf16.mxu0 %v6435
        %7241 = vmatmul.mubr.bf16.gmra.mxu0 %v6434
        %v7242 = vpop.f32.mrf.mxu0
        %v7243 = vadd.f32 %v6906, %v7242
        %v7244 = vpop.f32.mrf.mxu0
        %v7245 = vpop.f32.mrf.mxu0
        %v7246 = vadd.f32 %v6909, %v7245
        %v7247 = vpop.f32.mrf.mxu0
        %7248 = vmatprep.mubr.bf16.mxu0 %v6438
        %7249 = vmatmul.mubr.bf16.gmra.mxu0 %v6437
        %v7250 = vpop.f32.mrf.mxu0
        %v7251 = vadd.f32 %v6914, %v7250
        %v7252 = vpop.f32.mrf.mxu0
        %v7253 = vpop.f32.mrf.mxu0
        %v7254 = vadd.f32 %v6917, %v7253
        %v7255 = vpop.f32.mrf.mxu0
        %7256 = vmatprep.mubr.bf16.mxu0 %v6441
        %7257 = vmatmul.mubr.bf16.gmra.mxu0 %v6440
        %v7258 = vpop.f32.mrf.mxu0
        %v7259 = vadd.f32 %v6922, %v7258
        %v7260 = vpop.f32.mrf.mxu0
        %v7261 = vpop.f32.mrf.mxu0
        %v7262 = vadd.f32 %v6925, %v7261
        %v7263 = vpop.f32.mrf.mxu0
        %7264 = vmatprep.mubr.bf16.mxu0 %v6444
        %7265 = vmatmul.mubr.bf16.gmra.mxu0 %v6443
        %v7266 = vpop.f32.mrf.mxu0
        %v7267 = vadd.f32 %v6930, %v7266
        %v7268 = vpop.f32.mrf.mxu0
        %v7269 = vpop.f32.mrf.mxu0
        %v7270 = vadd.f32 %v6933, %v7269
        %v7271 = vpop.f32.mrf.mxu0
        %7272 = vmatprep.mubr.bf16.mxu0 %v6447
        %7273 = vmatmul.mubr.bf16.gmra.mxu0 %v6446
        %v7274 = vpop.f32.mrf.mxu0
        %v7275 = vadd.f32 %v6938, %v7274
        %v7276 = vpop.f32.mrf.mxu0
        %v7277 = vpop.f32.mrf.mxu0
        %v7278 = vadd.f32 %v6941, %v7277
        %v7279 = vpop.f32.mrf.mxu0
        %7280 = vmatprep.mubr.bf16.mxu0 %v6450
        %7281 = vmatmul.mubr.bf16.gmra.mxu0 %v6449
        %v7282 = vpop.f32.mrf.mxu0
        %v7283 = vadd.f32 %v6946, %v7282
        %v7284 = vpop.f32.mrf.mxu0
        %v7285 = vpop.f32.mrf.mxu0
        %v7286 = vadd.f32 %v6949, %v7285
        %v7287 = vpop.f32.mrf.mxu0
        %7288 = vmatprep.mubr.bf16.mxu0 %v6453
        %7289 = vmatmul.mubr.bf16.gmra.mxu0 %v6452
        %v7290 = vpop.f32.mrf.mxu0
        %v7291 = vadd.f32 %v6954, %v7290
        %v7292 = vpop.f32.mrf.mxu0
        %v7293 = vpop.f32.mrf.mxu0
        %v7294 = vadd.f32 %v6957, %v7293
        %v7295 = vpop.f32.mrf.mxu0
        %7296 = vmatprep.mubr.bf16.mxu0 %v6456
        %7297 = vmatmul.mubr.bf16.gmra.mxu0 %v6455
        %v7298 = vpop.f32.mrf.mxu0
        %v7299 = vadd.f32 %v6962, %v7298
        %v7300 = vpop.f32.mrf.mxu0
        %v7301 = vpop.f32.mrf.mxu0
        %v7302 = vadd.f32 %v6965, %v7301
        %v7303 = vpop.f32.mrf.mxu0
        %7304 = vmatprep.mubr.bf16.mxu0 %v6459
        %7305 = vmatmul.mubr.bf16.gmra.mxu0 %v6458
        %v7306 = vpop.f32.mrf.mxu0
        %v7307 = vadd.f32 %v6970, %v7306
        %v7308 = vpop.f32.mrf.mxu0
        %v7309 = vpop.f32.mrf.mxu0
        %v7310 = vadd.f32 %v6973, %v7309
        %v7311 = vpop.f32.mrf.mxu0
        %7312 = vmatprep.mubr.bf16.mxu0 %v6462
        %7313 = vmatmul.mubr.bf16.gmra.mxu0 %v6461
        %v7314 = vpop.f32.mrf.mxu0
        %v7315 = vadd.f32 %v6978, %v7314
        %v7316 = vpop.f32.mrf.mxu0
        %v7317 = vpop.f32.mrf.mxu0
        %v7318 = vadd.f32 %v6981, %v7317
        %v7319 = vpop.f32.mrf.mxu0
        %7320 = vdwg.mxu0
        %7321 = vmatprep.subr.bf16.mxu0 0
        %7322 = vmatpush1.bf16.msra.mxu0 %v7135
        %7323 = vmatprep.subr.bf16.mxu0 0
        %7324 = vmatpush1.bf16.msra.mxu0 %v7134
        %7325 = vmatprep.subr.bf16.mxu0 0
        %7326 = vmatpush1.bf16.msra.mxu0 %v7133
        %7327 = vmatprep.subr.bf16.mxu0 0
        %7328 = vmatpush1.bf16.msra.mxu0 %v7132
        %7329 = vmatprep.subr.bf16.mxu0 0
        %7330 = vmatpush1.bf16.msra.mxu0 %v7131
        %7331 = vmatprep.subr.bf16.mxu0 0
        %7332 = vmatpush1.bf16.msra.mxu0 %v7130
        %7333 = vmatprep.subr.bf16.mxu0 0
        %7334 = vmatpush1.bf16.msra.mxu0 %v7129
        %7335 = vmatprep.subr.bf16.mxu0 0
        %7336 = vmatpush1.bf16.msra.mxu0 %v7128
        %7337 = vmatprep.subr.bf16.mxu0 0
        %7338 = vmatpush2.bf16.msra.mxu0 0
        %7339 = vmatprep.subr.bf16.mxu0 0
        %7340 = vmatpush2.bf16.msra.mxu0 0
        %7341 = vmatprep.subr.bf16.mxu0 0
        %7342 = vmatpush2.bf16.msra.mxu0 0
        %7343 = vmatprep.subr.bf16.mxu0 0
        %7344 = vmatpush2.bf16.msra.mxu0 0
        %7345 = vmatprep.subr.bf16.mxu0 0
        %7346 = vmatpush2.bf16.msra.mxu0 0
        %7347 = vmatprep.subr.bf16.mxu0 0
        %7348 = vmatpush2.bf16.msra.mxu0 0
        %7349 = vmatprep.subr.bf16.mxu0 0
        %7350 = vmatpush2.bf16.msra.mxu0 0
        %7351 = vmatprep.subr.bf16.mxu0 0
        %7352 = vmatpush2.bf16.msra.mxu0 0
        %7353 = vmatprep.mubr.bf16.mxu0 0
        %7354 = vmatmul.mubr.bf16.gmra.mxu0 %v7006
        %v7355 = vpop.f32.mrf.mxu0
        %v7356 = vadd.f32 %v7195, %v7355
        %v7357 = vpop.f32.mrf.mxu0
        %v7358 = vpop.f32.mrf.mxu0
        %v7359 = vadd.f32 %v7198, %v7358
        %v7360 = vpop.f32.mrf.mxu0
        %7361 = vmatprep.mubr.bf16.mxu0 0
        %7362 = vmatmul.mubr.bf16.gmra.mxu0 %v7009
        %v7363 = vpop.f32.mrf.mxu0
        %v7364 = vadd.f32 %v7203, %v7363
        %v7365 = vpop.f32.mrf.mxu0
        %v7366 = vpop.f32.mrf.mxu0
        %v7367 = vadd.f32 %v7206, %v7366
        %v7368 = vpop.f32.mrf.mxu0
        %7369 = vmatprep.mubr.bf16.mxu0 0
        %7370 = vmatmul.mubr.bf16.gmra.mxu0 %v6424
        %v7371 = vpop.f32.mrf.mxu0
        %v7372 = vadd.f32 %v7211, %v7371
        %v7373 = vpop.f32.mrf.mxu0
        %v7374 = vpop.f32.mrf.mxu0
        %v7375 = vadd.f32 %v7214, %v7374
        %v7376 = vpop.f32.mrf.mxu0
        %7377 = vmatprep.mubr.bf16.mxu0 0
        %7378 = vmatmul.mubr.bf16.gmra.mxu0 %v6427
        %v7379 = vpop.f32.mrf.mxu0
        %v7380 = vadd.f32 %v7219, %v7379
        %v7381 = vpop.f32.mrf.mxu0
        %v7382 = vpop.f32.mrf.mxu0
        %v7383 = vadd.f32 %v7222, %v7382
        %v7384 = vpop.f32.mrf.mxu0
        %7385 = vmatprep.mubr.bf16.mxu0 0
        %7386 = vmatmul.mubr.bf16.gmra.mxu0 %v6430
        %v7387 = vpop.f32.mrf.mxu0
        %v7388 = vadd.f32 %v7227, %v7387
        %v7389 = vpop.f32.mrf.mxu0
        %v7390 = vpop.f32.mrf.mxu0
        %v7391 = vadd.f32 %v7230, %v7390
        %v7392 = vpop.f32.mrf.mxu0
        %7393 = vmatprep.mubr.bf16.mxu0 0
        %7394 = vmatmul.mubr.bf16.gmra.mxu0 %v6433
        %v7395 = vpop.f32.mrf.mxu0
        %v7396 = vadd.f32 %v7235, %v7395
        %v7397 = vpop.f32.mrf.mxu0
        %v7398 = vpop.f32.mrf.mxu0
        %v7399 = vadd.f32 %v7238, %v7398
        %v7400 = vpop.f32.mrf.mxu0
        %7401 = vmatprep.mubr.bf16.mxu0 0
        %7402 = vmatmul.mubr.bf16.gmra.mxu0 %v6436
        %v7403 = vpop.f32.mrf.mxu0
        %v7404 = vadd.f32 %v7243, %v7403
        %v7405 = vpop.f32.mrf.mxu0
        %v7406 = vpop.f32.mrf.mxu0
        %v7407 = vadd.f32 %v7246, %v7406
        %v7408 = vpop.f32.mrf.mxu0
        %7409 = vmatprep.mubr.bf16.mxu0 0
        %7410 = vmatmul.mubr.bf16.gmra.mxu0 %v6439
        %v7411 = vpop.f32.mrf.mxu0
        %v7412 = vadd.f32 %v7251, %v7411
        %v7413 = vpop.f32.mrf.mxu0
        %v7414 = vpop.f32.mrf.mxu0
        %v7415 = vadd.f32 %v7254, %v7414
        %v7416 = vpop.f32.mrf.mxu0
        %7417 = vmatprep.mubr.bf16.mxu0 0
        %7418 = vmatmul.mubr.bf16.gmra.mxu0 %v6442
        %v7419 = vpop.f32.mrf.mxu0
        %v7420 = vadd.f32 %v7259, %v7419
        %v7421 = vpop.f32.mrf.mxu0
        %v7422 = vpop.f32.mrf.mxu0
        %v7423 = vadd.f32 %v7262, %v7422
        %v7424 = vpop.f32.mrf.mxu0
        %7425 = vmatprep.mubr.bf16.mxu0 0
        %7426 = vmatmul.mubr.bf16.gmra.mxu0 %v6445
        %v7427 = vpop.f32.mrf.mxu0
        %v7428 = vadd.f32 %v7267, %v7427
        %v7429 = vpop.f32.mrf.mxu0
        %v7430 = vpop.f32.mrf.mxu0
        %v7431 = vadd.f32 %v7270, %v7430
        %v7432 = vpop.f32.mrf.mxu0
        %7433 = vmatprep.mubr.bf16.mxu0 0
        %7434 = vmatmul.mubr.bf16.gmra.mxu0 %v6448
        %v7435 = vpop.f32.mrf.mxu0
        %v7436 = vadd.f32 %v7275, %v7435
        %v7437 = vpop.f32.mrf.mxu0
        %v7438 = vpop.f32.mrf.mxu0
        %v7439 = vadd.f32 %v7278, %v7438
        %v7440 = vpop.f32.mrf.mxu0
        %7441 = vmatprep.mubr.bf16.mxu0 0
        %7442 = vmatmul.mubr.bf16.gmra.mxu0 %v6451
        %v7443 = vpop.f32.mrf.mxu0
        %v7444 = vadd.f32 %v7283, %v7443
        %v7445 = vpop.f32.mrf.mxu0
        %v7446 = vpop.f32.mrf.mxu0
        %v7447 = vadd.f32 %v7286, %v7446
        %v7448 = vpop.f32.mrf.mxu0
        %7449 = vmatprep.mubr.bf16.mxu0 0
        %7450 = vmatmul.mubr.bf16.gmra.mxu0 %v6454
        %v7451 = vpop.f32.mrf.mxu0
        %v7452 = vadd.f32 %v7291, %v7451
        %v7453 = vpop.f32.mrf.mxu0
        %v7454 = vpop.f32.mrf.mxu0
        %v7455 = vadd.f32 %v7294, %v7454
        %v7456 = vpop.f32.mrf.mxu0
        %7457 = vmatprep.mubr.bf16.mxu0 0
        %7458 = vmatmul.mubr.bf16.gmra.mxu0 %v6457
        %v7459 = vpop.f32.mrf.mxu0
        %v7460 = vadd.f32 %v7299, %v7459
        %v7461 = vpop.f32.mrf.mxu0
        %v7462 = vpop.f32.mrf.mxu0
        %v7463 = vadd.f32 %v7302, %v7462
        %v7464 = vpop.f32.mrf.mxu0
        %7465 = vmatprep.mubr.bf16.mxu0 0
        %7466 = vmatmul.mubr.bf16.gmra.mxu0 %v6460
        %v7467 = vpop.f32.mrf.mxu0
        %v7468 = vadd.f32 %v7307, %v7467
        %v7469 = vpop.f32.mrf.mxu0
        %v7470 = vpop.f32.mrf.mxu0
        %v7471 = vadd.f32 %v7310, %v7470
        %v7472 = vpop.f32.mrf.mxu0
        %7473 = vmatprep.mubr.bf16.mxu0 0
        %7474 = vmatmul.mubr.bf16.gmra.mxu0 %v6463
        %v7475 = vpop.f32.mrf.mxu0
        %v7476 = vadd.f32 %v7315, %v7475
        %v7477 = vpop.f32.mrf.mxu0
        %v7478 = vpop.f32.mrf.mxu0
        %v7479 = vadd.f32 %v7318, %v7478
        %v7480 = vpop.f32.mrf.mxu0
        %7481 = vdwg.mxu0
        %v7482 = vld [vmem:[#allocation3 + $0x60] sm:$0xff]
        %v7483 = vld [vmem:[#allocation3 + $0x68] sm:$0xf]
        %v7484 = vld [vmem:[#allocation3 + $0x6c] sm:$0xff]
        %v7485 = vld [vmem:[#allocation3 + $0x74] sm:$0xf]
        %v7486 = vld [vmem:[#allocation3 + $0x78] sm:$0xff]
        %v7487 = vld [vmem:[#allocation3 + $0x80] sm:$0xf]
        %v7488 = vld [vmem:[#allocation3 + $0x84] sm:$0xff]
        %v7489 = vld [vmem:[#allocation3 + $0x8c] sm:$0xf]
        %v7490 = vld [vmem:[#allocation3 + $0x90] sm:$0xff]
        %v7491 = vld [vmem:[#allocation3 + $0x98] sm:$0xf]
        %v7492 = vld [vmem:[#allocation3 + $0x9c] sm:$0xff]
        %v7493 = vld [vmem:[#allocation3 + $0xa4] sm:$0xf]
        %v7494 = vld [vmem:[#allocation3 + $0xa8] sm:$0xff]
        %v7495 = vld [vmem:[#allocation3 + $0xb0] sm:$0xf]
        %v7496 = vld [vmem:[#allocation3 + $0xb4] sm:$0xff]
        %v7497 = vld [vmem:[#allocation3 + $0xbc] sm:$0xf]
        %v7498 = vld [vmem:[#allocation3 + $0xc0] sm:$0xff]
        %v7499 = vld [vmem:[#allocation3 + $0xc8] sm:$0xf]
        %v7500 = vld [vmem:[#allocation3 + $0xcc] sm:$0xff]
        %v7501 = vld [vmem:[#allocation3 + $0xd4] sm:$0xf]
        %v7502 = vld [vmem:[#allocation3 + $0xd8] sm:$0xff]
        %v7503 = vld [vmem:[#allocation3 + $0xe0] sm:$0xf]
        %v7504 = vld [vmem:[#allocation3 + $0xe4] sm:$0xff]
        %v7505 = vld [vmem:[#allocation3 + $0xec] sm:$0xf]
        %v7506 = vld [vmem:[#allocation3 + $0xf0] sm:$0xff]
        %v7507 = vld [vmem:[#allocation3 + $0xf8] sm:$0xf]
        %v7508 = vld [vmem:[#allocation3 + $0xfc] sm:$0xff]
        %v7509 = vld [vmem:[#allocation3 + $0x104] sm:$0xf]
        %v7510 = vld [vmem:[#allocation3 + $0x108] sm:$0xff]
        %v7511 = vld [vmem:[#allocation3 + $0x110] sm:$0xf]
        %v7512 = vld [vmem:[#allocation3 + $0x114] sm:$0xff]
        %v7513 = vld [vmem:[#allocation3 + $0x11c] sm:$0xf]
        %v7514 = vld [vmem:[#allocation3 + $0x120] sm:$0xff]
        %v7515 = vld [vmem:[#allocation3 + $0x128] sm:$0xf]
        %v7516 = vld [vmem:[#allocation3 + $0x12c] sm:$0xff]
        %v7517 = vld [vmem:[#allocation3 + $0x134] sm:$0xf]
        %v7518 = vld [vmem:[#allocation3 + $0x138] sm:$0xff]
        %v7519 = vld [vmem:[#allocation3 + $0x140] sm:$0xf]
        %v7520 = vld [vmem:[#allocation3 + $0x144] sm:$0xff]
        %v7521 = vld [vmem:[#allocation3 + $0x14c] sm:$0xf]
        %v7522 = vld [vmem:[#allocation3 + $0x150] sm:$0xff]
        %v7523 = vld [vmem:[#allocation3 + $0x158] sm:$0xf]
        %v7524 = vld [vmem:[#allocation3 + $0x15c] sm:$0xff]
        %v7525 = vld [vmem:[#allocation3 + $0x164] sm:$0xf]
        %v7526 = vld [vmem:[#allocation3 + $0x168] sm:$0xff]
        %v7527 = vld [vmem:[#allocation3 + $0x170] sm:$0xf]
        %v7528 = vld [vmem:[#allocation3 + $0x174] sm:$0xff]
        %v7529 = vld [vmem:[#allocation3 + $0x17c] sm:$0xf]
        %v7530 = vld [vmem:[#allocation3 + $0x180] sm:$0xff]
        %v7531 = vld [vmem:[#allocation3 + $0x188] sm:$0xf]
        %v7532 = vld [vmem:[#allocation3 + $0x18c] sm:$0xff]
        %v7533 = vld [vmem:[#allocation3 + $0x194] sm:$0xf]
        %v7534 = vld [vmem:[#allocation3 + $0x198] sm:$0xff]
        %v7535 = vld [vmem:[#allocation3 + $0x1a0] sm:$0xf]
        %v7536 = vld [vmem:[#allocation3 + $0x1a4] sm:$0xff]
        %v7537 = vld [vmem:[#allocation3 + $0x1ac] sm:$0xf]
        %v7538 = vld [vmem:[#allocation3 + $0x1b0] sm:$0xff]
        %v7539 = vld [vmem:[#allocation3 + $0x1b8] sm:$0xf]
        %v7540 = vld [vmem:[#allocation3 + $0x1bc] sm:$0xff]
        %v7541 = vld [vmem:[#allocation3 + $0x1c4] sm:$0xf]
        %v7542 = vld [vmem:[#allocation3 + $0x1c8] sm:$0xff]
        %v7543 = vld [vmem:[#allocation3 + $0x1d0] sm:$0xf]
        %v7544 = vld [vmem:[#allocation3 + $0x1d4] sm:$0xff]
        %v7545 = vld [vmem:[#allocation3 + $0x1dc] sm:$0xf]
        %v7546 = vld [vmem:[%s6 + $0x180] sm:$0xf]
        %v7547 = vld [vmem:[%s6 + $0x184] sm:$0xf]
        %v7548 = vld [vmem:[%s6 + $0x188] sm:$0xf]
        %v7549 = vld [vmem:[%s6 + $0x18c] sm:$0xf]
        %v7550 = vld [vmem:[%s6 + $0x190] sm:$0xf]
        %v7551 = vld [vmem:[%s6 + $0x194] sm:$0xf]
        %v7552 = vld [vmem:[%s6 + $0x198] sm:$0xf]
        %v7553 = vld [vmem:[%s6 + $0x19c] sm:$0xf]
        %v7554 = vld [vmem:[%s6 + $0x1a0] sm:$0xf]
        %v7555 = vld [vmem:[%s6 + $0x1a4] sm:$0xf]
        %v7556 = vld [vmem:[%s6 + $0x1a8] sm:$0xf]
        %v7557 = vld [vmem:[%s6 + $0x1ac] sm:$0xf]
        %v7558 = vld [vmem:[%s6 + $0x1b0] sm:$0xf]
        %v7559 = vld [vmem:[%s6 + $0x1b4] sm:$0xf]
        %v7560 = vld [vmem:[%s6 + $0x1b8] sm:$0xf]
        %v7561 = vld [vmem:[%s6 + $0x1bc] sm:$0xf]
        %v7562 = vld [vmem:[%s6 + $0x1c0] sm:$0xf]
        %v7563 = vld [vmem:[%s6 + $0x1c4] sm:$0xf]
        %v7564 = vld [vmem:[%s6 + $0x1c8] sm:$0xf]
        %v7565 = vld [vmem:[%s6 + $0x1cc] sm:$0xf]
        %v7566 = vld [vmem:[%s6 + $0x1d0] sm:$0xf]
        %v7567 = vld [vmem:[%s6 + $0x1d4] sm:$0xf]
        %v7568 = vld [vmem:[%s6 + $0x1d8] sm:$0xf]
        %v7569 = vld [vmem:[%s6 + $0x1dc] sm:$0xf]
        %v7570 = vld [vmem:[%s6 + $0x1e0] sm:$0xf]
        %v7571 = vld [vmem:[%s6 + $0x1e4] sm:$0xf]
        %v7572 = vld [vmem:[%s6 + $0x1e8] sm:$0xf]
        %v7573 = vld [vmem:[%s6 + $0x1ec] sm:$0xf]
        %v7574 = vld [vmem:[%s6 + $0x1f0] sm:$0xf]
        %v7575 = vld [vmem:[%s6 + $0x1f4] sm:$0xf]
        %v7576 = vld [vmem:[%s6 + $0x1f8] sm:$0xf]
        %v7577 = vld [vmem:[%s6 + $0x1fc] sm:$0xf]
        %v7578 = vld [vmem:[%s6 + $0x200] sm:$0xf]
        %v7579 = vld [vmem:[%s6 + $0x204] sm:$0xf]
        %v7580 = vld [vmem:[%s6 + $0x208] sm:$0xf]
        %v7581 = vld [vmem:[%s6 + $0x20c] sm:$0xf]
        %v7582 = vld [vmem:[%s6 + $0x210] sm:$0xf]
        %v7583 = vld [vmem:[%s6 + $0x214] sm:$0xf]
        %v7584 = vld [vmem:[%s6 + $0x218] sm:$0xf]
        %v7585 = vld [vmem:[%s6 + $0x21c] sm:$0xf]
        %v7586 = vld [vmem:[%s6 + $0x220] sm:$0xf]
        %v7587 = vld [vmem:[%s6 + $0x224] sm:$0xf]
        %v7588 = vld [vmem:[%s6 + $0x228] sm:$0xf]
        %v7589 = vld [vmem:[%s6 + $0x22c] sm:$0xf]
        %v7590 = vld [vmem:[%s6 + $0x230] sm:$0xf]
        %v7591 = vld [vmem:[%s6 + $0x234] sm:$0xf]
        %v7592 = vld [vmem:[%s6 + $0x238] sm:$0xf]
        %v7593 = vld [vmem:[%s6 + $0x23c] sm:$0xf]
        %v7658 = vunpack.c.l.b16 %v7482
        %v7659 = vunpack.c.h.b16 %v7482
        %v7660 = vunpack.c.l.b16 %v7483
        %v7661 = vunpack.c.l.b16 %v7484
        %v7662 = vunpack.c.h.b16 %v7484
        %v7663 = vunpack.c.l.b16 %v7485
        %v7664 = vunpack.c.l.b16 %v7486
        %v7665 = vunpack.c.h.b16 %v7486
        %v7666 = vunpack.c.l.b16 %v7487
        %v7667 = vunpack.c.l.b16 %v7488
        %v7668 = vunpack.c.h.b16 %v7488
        %v7669 = vunpack.c.l.b16 %v7489
        %v7670 = vunpack.c.l.b16 %v7490
        %v7671 = vunpack.c.h.b16 %v7490
        %v7672 = vunpack.c.l.b16 %v7491
        %v7673 = vunpack.c.l.b16 %v7492
        %v7674 = vunpack.c.h.b16 %v7492
        %v7675 = vunpack.c.l.b16 %v7493
        %v7676 = vunpack.c.l.b16 %v7494
        %v7677 = vunpack.c.h.b16 %v7494
        %v7678 = vunpack.c.l.b16 %v7495
        %v7679 = vunpack.c.l.b16 %v7496
        %v7680 = vunpack.c.h.b16 %v7496
        %v7681 = vunpack.c.l.b16 %v7497
        %v7682 = vunpack.c.l.b16 %v7498
        %v7683 = vunpack.c.h.b16 %v7498
        %v7684 = vunpack.c.l.b16 %v7499
        %v7685 = vunpack.c.l.b16 %v7500
        %v7686 = vunpack.c.h.b16 %v7500
        %v7687 = vunpack.c.l.b16 %v7501
        %v7688 = vunpack.c.l.b16 %v7502
        %v7689 = vunpack.c.h.b16 %v7502
        %v7690 = vunpack.c.l.b16 %v7503
        %v7691 = vunpack.c.l.b16 %v7504
        %v7692 = vunpack.c.h.b16 %v7504
        %v7693 = vunpack.c.l.b16 %v7505
        %v7694 = vunpack.c.l.b16 %v7506
        %v7695 = vunpack.c.h.b16 %v7506
        %v7696 = vunpack.c.l.b16 %v7507
        %v7697 = vunpack.c.l.b16 %v7508
        %v7698 = vunpack.c.h.b16 %v7508
        %v7699 = vunpack.c.l.b16 %v7509
        %v7700 = vunpack.c.l.b16 %v7510
        %v7701 = vunpack.c.h.b16 %v7510
        %v7702 = vunpack.c.l.b16 %v7511
        %v7703 = vunpack.c.l.b16 %v7512
        %v7704 = vunpack.c.h.b16 %v7512
        %v7705 = vunpack.c.l.b16 %v7513
        %v7706 = vunpack.c.l.b16 %v7514
        %v7707 = vunpack.c.h.b16 %v7514
        %v7708 = vunpack.c.l.b16 %v7515
        %v7709 = vunpack.c.l.b16 %v7516
        %v7710 = vunpack.c.h.b16 %v7516
        %v7711 = vunpack.c.l.b16 %v7517
        %v7712 = vunpack.c.l.b16 %v7518
        %v7713 = vunpack.c.h.b16 %v7518
        %v7714 = vunpack.c.l.b16 %v7519
        %v7715 = vunpack.c.l.b16 %v7520
        %v7716 = vunpack.c.h.b16 %v7520
        %v7717 = vunpack.c.l.b16 %v7521
        %v7718 = vunpack.c.l.b16 %v7522
        %v7719 = vunpack.c.h.b16 %v7522
        %v7720 = vunpack.c.l.b16 %v7523
        %v7721 = vunpack.c.l.b16 %v7524
        %v7722 = vunpack.c.h.b16 %v7524
        %v7723 = vunpack.c.l.b16 %v7525
        %v7724 = vunpack.c.l.b16 %v7526
        %v7725 = vunpack.c.h.b16 %v7526
        %v7726 = vunpack.c.l.b16 %v7527
        %v7727 = vunpack.c.l.b16 %v7528
        %v7728 = vunpack.c.h.b16 %v7528
        %v7729 = vunpack.c.l.b16 %v7529
        %v7730 = vunpack.c.l.b16 %v7530
        %v7731 = vunpack.c.h.b16 %v7530
        %v7732 = vunpack.c.l.b16 %v7531
        %v7733 = vunpack.c.l.b16 %v7532
        %v7734 = vunpack.c.h.b16 %v7532
        %v7735 = vunpack.c.l.b16 %v7533
        %v7736 = vunpack.c.l.b16 %v7534
        %v7737 = vunpack.c.h.b16 %v7534
        %v7738 = vunpack.c.l.b16 %v7535
        %v7739 = vunpack.c.l.b16 %v7536
        %v7740 = vunpack.c.h.b16 %v7536
        %v7741 = vunpack.c.l.b16 %v7537
        %v7742 = vunpack.c.l.b16 %v7538
        %v7743 = vunpack.c.h.b16 %v7538
        %v7744 = vunpack.c.l.b16 %v7539
        %v7745 = vunpack.c.l.b16 %v7540
        %v7746 = vunpack.c.h.b16 %v7540
        %v7747 = vunpack.c.l.b16 %v7541
        %v7748 = vunpack.c.l.b16 %v7542
        %v7749 = vunpack.c.h.b16 %v7542
        %v7750 = vunpack.c.l.b16 %v7543
        %v7751 = vunpack.c.l.b16 %v7544
        %v7752 = vunpack.c.h.b16 %v7544
        %v7753 = vunpack.c.l.b16 %v7545
        %v7754 = vpack.c.b16 %v7661, %v7658
        %v7755 = vpack.c.b16 %v7662, %v7659
        %v7756 = vpack.c.b16 %v7663, %v7660
        %v7757 = vpack.c.b16 %v7667, %v7664
        %v7758 = vpack.c.b16 %v7668, %v7665
        %v7759 = vpack.c.b16 %v7669, %v7666
        %v7760 = vpack.c.b16 %v7673, %v7670
        %v7761 = vpack.c.b16 %v7674, %v7671
        %v7762 = vpack.c.b16 %v7675, %v7672
        %v7763 = vpack.c.b16 %v7679, %v7676
        %v7764 = vpack.c.b16 %v7680, %v7677
        %v7765 = vpack.c.b16 %v7681, %v7678
        %v7766 = vpack.c.b16 %v7685, %v7682
        %v7767 = vpack.c.b16 %v7686, %v7683
        %v7768 = vpack.c.b16 %v7687, %v7684
        %v7769 = vpack.c.b16 %v7691, %v7688
        %v7770 = vpack.c.b16 %v7692, %v7689
        %v7771 = vpack.c.b16 %v7693, %v7690
        %v7772 = vpack.c.b16 %v7697, %v7694
        %v7773 = vpack.c.b16 %v7698, %v7695
        %v7774 = vpack.c.b16 %v7699, %v7696
        %v7775 = vpack.c.b16 %v7703, %v7700
        %v7776 = vpack.c.b16 %v7704, %v7701
        %v7777 = vpack.c.b16 %v7705, %v7702
        %v7778 = vpack.c.b16 %v7709, %v7706
        %v7779 = vpack.c.b16 %v7710, %v7707
        %v7780 = vpack.c.b16 %v7711, %v7708
        %v7781 = vpack.c.b16 %v7715, %v7712
        %v7782 = vpack.c.b16 %v7716, %v7713
        %v7783 = vpack.c.b16 %v7717, %v7714
        %v7784 = vpack.c.b16 %v7721, %v7718
        %v7785 = vpack.c.b16 %v7722, %v7719
        %v7786 = vpack.c.b16 %v7723, %v7720
        %v7787 = vpack.c.b16 %v7727, %v7724
        %v7788 = vpack.c.b16 %v7728, %v7725
        %v7789 = vpack.c.b16 %v7729, %v7726
        %v7790 = vpack.c.b16 %v7733, %v7730
        %v7791 = vpack.c.b16 %v7734, %v7731
        %v7792 = vpack.c.b16 %v7735, %v7732
        %v7793 = vpack.c.b16 %v7739, %v7736
        %v7794 = vpack.c.b16 %v7740, %v7737
        %v7795 = vpack.c.b16 %v7741, %v7738
        %v7796 = vpack.c.b16 %v7745, %v7742
        %v7797 = vpack.c.b16 %v7746, %v7743
        %v7798 = vpack.c.b16 %v7747, %v7744
        %v7799 = vpack.c.b16 %v7751, %v7748
        %v7800 = vpack.c.b16 %v7752, %v7749
        %v7801 = vpack.c.b16 %v7753, %v7750
        %v7898 = vunpack.c.l.b16 %v7546
        %v7899 = vunpack.c.l.b16 %v7547
        %v7900 = vunpack.c.l.b16 %v7548
        %v7901 = vunpack.c.l.b16 %v7549
        %v7902 = vunpack.c.l.b16 %v7550
        %v7903 = vunpack.c.l.b16 %v7551
        %v7904 = vunpack.c.l.b16 %v7552
        %v7905 = vunpack.c.l.b16 %v7553
        %v7906 = vunpack.c.l.b16 %v7554
        %v7907 = vunpack.c.l.b16 %v7555
        %v7908 = vunpack.c.l.b16 %v7556
        %v7909 = vunpack.c.l.b16 %v7557
        %v7910 = vunpack.c.l.b16 %v7558
        %v7911 = vunpack.c.l.b16 %v7559
        %v7912 = vunpack.c.l.b16 %v7560
        %v7913 = vunpack.c.l.b16 %v7561
        %v7914 = vunpack.c.l.b16 %v7562
        %v7915 = vunpack.c.l.b16 %v7563
        %v7916 = vunpack.c.l.b16 %v7564
        %v7917 = vunpack.c.l.b16 %v7565
        %v7918 = vunpack.c.l.b16 %v7566
        %v7919 = vunpack.c.l.b16 %v7567
        %v7920 = vunpack.c.l.b16 %v7568
        %v7921 = vunpack.c.l.b16 %v7569
        %v7922 = vunpack.c.l.b16 %v7570
        %v7923 = vunpack.c.l.b16 %v7571
        %v7924 = vunpack.c.l.b16 %v7572
        %v7925 = vunpack.c.l.b16 %v7573
        %v7926 = vunpack.c.l.b16 %v7574
        %v7927 = vunpack.c.l.b16 %v7575
        %v7928 = vunpack.c.l.b16 %v7576
        %v7929 = vunpack.c.l.b16 %v7577
        %v7930 = vunpack.c.l.b16 %v7578
        %v7931 = vunpack.c.l.b16 %v7579
        %v7932 = vunpack.c.l.b16 %v7580
        %v7933 = vunpack.c.l.b16 %v7581
        %v7934 = vunpack.c.l.b16 %v7582
        %v7935 = vunpack.c.l.b16 %v7583
        %v7936 = vunpack.c.l.b16 %v7584
        %v7937 = vunpack.c.l.b16 %v7585
        %v7938 = vunpack.c.l.b16 %v7586
        %v7939 = vunpack.c.l.b16 %v7587
        %v7940 = vunpack.c.l.b16 %v7588
        %v7941 = vunpack.c.l.b16 %v7589
        %v7942 = vunpack.c.l.b16 %v7590
        %v7943 = vunpack.c.l.b16 %v7591
        %v7944 = vunpack.c.l.b16 %v7592
        %v7945 = vunpack.c.l.b16 %v7593
        %v7946 = vpack.c.b16 %v7899, %v7898
        %v7947 = vpack.c.b16 %v7901, %v7900
        %v7948 = vpack.c.b16 %v7903, %v7902
        %v7949 = vpack.c.b16 %v7905, %v7904
        %v7950 = vpack.c.b16 %v7907, %v7906
        %v7951 = vpack.c.b16 %v7909, %v7908
        %v7952 = vpack.c.b16 %v7911, %v7910
        %v7953 = vpack.c.b16 %v7913, %v7912
        %v7954 = vpack.c.b16 %v7915, %v7914
        %v7955 = vpack.c.b16 %v7917, %v7916
        %v7956 = vpack.c.b16 %v7919, %v7918
        %v7957 = vpack.c.b16 %v7921, %v7920
        %v7958 = vpack.c.b16 %v7923, %v7922
        %v7959 = vpack.c.b16 %v7925, %v7924
        %v7960 = vpack.c.b16 %v7927, %v7926
        %v7961 = vpack.c.b16 %v7929, %v7928
        %v7962 = vpack.c.b16 %v7931, %v7930
        %v7963 = vpack.c.b16 %v7933, %v7932
        %v7964 = vpack.c.b16 %v7935, %v7934
        %v7965 = vpack.c.b16 %v7937, %v7936
        %v7966 = vpack.c.b16 %v7939, %v7938
        %v7967 = vpack.c.b16 %v7941, %v7940
        %v7968 = vpack.c.b16 %v7943, %v7942
        %v7969 = vpack.c.b16 %v7945, %v7944
        %7994 = vmatprep.subr.bf16.mxu0 0
        %7995 = vmatpush1.bf16.msra.mxu0 %v7953
        %7996 = vmatprep.subr.bf16.mxu0 0
        %7997 = vmatpush1.bf16.msra.mxu0 %v7952
        %7998 = vmatprep.subr.bf16.mxu0 0
        %7999 = vmatpush1.bf16.msra.mxu0 %v7951
        %8000 = vmatprep.subr.bf16.mxu0 0
        %8001 = vmatpush1.bf16.msra.mxu0 %v7950
        %8002 = vmatprep.subr.bf16.mxu0 0
        %8003 = vmatpush1.bf16.msra.mxu0 %v7949
        %8004 = vmatprep.subr.bf16.mxu0 0
        %8005 = vmatpush1.bf16.msra.mxu0 %v7948
        %8006 = vmatprep.subr.bf16.mxu0 0
        %8007 = vmatpush1.bf16.msra.mxu0 %v7947
        %8008 = vmatprep.subr.bf16.mxu0 0
        %8009 = vmatpush1.bf16.msra.mxu0 %v7946
        %8010 = vmatprep.subr.bf16.mxu0 0
        %8011 = vmatpush2.bf16.msra.mxu0 %v7961
        %8012 = vmatprep.subr.bf16.mxu0 0
        %8013 = vmatpush2.bf16.msra.mxu0 %v7960
        %8014 = vmatprep.subr.bf16.mxu0 0
        %8015 = vmatpush2.bf16.msra.mxu0 %v7959
        %8016 = vmatprep.subr.bf16.mxu0 0
        %8017 = vmatpush2.bf16.msra.mxu0 %v7958
        %8018 = vmatprep.subr.bf16.mxu0 0
        %8019 = vmatpush2.bf16.msra.mxu0 %v7957
        %8020 = vmatprep.subr.bf16.mxu0 0
        %8021 = vmatpush2.bf16.msra.mxu0 %v7956
        %8022 = vmatprep.subr.bf16.mxu0 0
        %8023 = vmatpush2.bf16.msra.mxu0 %v7955
        %8024 = vmatprep.subr.bf16.mxu0 0
        %8025 = vmatpush2.bf16.msra.mxu0 %v7954
        %8026 = vmatprep.mubr.bf16.mxu0 %v7755
        %8027 = vmatmul.mubr.bf16.gmra.mxu0 %v7754
        %v8028 = vpop.f32.mrf.mxu0
        %v8029 = vadd.f32 0.0, %v8028
        %v8030 = vpop.f32.mrf.mxu0
        %v8031 = vpop.f32.mrf.mxu0
        %v8032 = vadd.f32 0.0, %v8031
        %v8033 = vpop.f32.mrf.mxu0
        %8034 = vmatprep.mubr.bf16.mxu0 %v7758
        %8035 = vmatmul.mubr.bf16.gmra.mxu0 %v7757
        %v8036 = vpop.f32.mrf.mxu0
        %v8037 = vadd.f32 0.0, %v8036
        %v8038 = vpop.f32.mrf.mxu0
        %v8039 = vpop.f32.mrf.mxu0
        %v8040 = vadd.f32 0.0, %v8039
        %v8041 = vpop.f32.mrf.mxu0
        %8042 = vmatprep.mubr.bf16.mxu0 %v7761
        %8043 = vmatmul.mubr.bf16.gmra.mxu0 %v7760
        %v8044 = vpop.f32.mrf.mxu0
        %v8045 = vadd.f32 0.0, %v8044
        %v8046 = vpop.f32.mrf.mxu0
        %v8047 = vpop.f32.mrf.mxu0
        %v8048 = vadd.f32 0.0, %v8047
        %v8049 = vpop.f32.mrf.mxu0
        %8050 = vmatprep.mubr.bf16.mxu0 %v7764
        %8051 = vmatmul.mubr.bf16.gmra.mxu0 %v7763
        %v8052 = vpop.f32.mrf.mxu0
        %v8053 = vadd.f32 0.0, %v8052
        %v8054 = vpop.f32.mrf.mxu0
        %v8055 = vpop.f32.mrf.mxu0
        %v8056 = vadd.f32 0.0, %v8055
        %v8057 = vpop.f32.mrf.mxu0
        %8058 = vmatprep.mubr.bf16.mxu0 %v7767
        %8059 = vmatmul.mubr.bf16.gmra.mxu0 %v7766
        %v8060 = vpop.f32.mrf.mxu0
        %v8061 = vadd.f32 0.0, %v8060
        %v8062 = vpop.f32.mrf.mxu0
        %v8063 = vpop.f32.mrf.mxu0
        %v8064 = vadd.f32 0.0, %v8063
        %v8065 = vpop.f32.mrf.mxu0
        %8066 = vmatprep.mubr.bf16.mxu0 %v7770
        %8067 = vmatmul.mubr.bf16.gmra.mxu0 %v7769
        %v8068 = vpop.f32.mrf.mxu0
        %v8069 = vadd.f32 0.0, %v8068
        %v8070 = vpop.f32.mrf.mxu0
        %v8071 = vpop.f32.mrf.mxu0
        %v8072 = vadd.f32 0.0, %v8071
        %v8073 = vpop.f32.mrf.mxu0
        %8074 = vmatprep.mubr.bf16.mxu0 %v7773
        %8075 = vmatmul.mubr.bf16.gmra.mxu0 %v7772
        %v8076 = vpop.f32.mrf.mxu0
        %v8077 = vadd.f32 0.0, %v8076
        %v8078 = vpop.f32.mrf.mxu0
        %v8079 = vpop.f32.mrf.mxu0
        %v8080 = vadd.f32 0.0, %v8079
        %v8081 = vpop.f32.mrf.mxu0
        %8082 = vmatprep.mubr.bf16.mxu0 %v7776
        %8083 = vmatmul.mubr.bf16.gmra.mxu0 %v7775
        %v8084 = vpop.f32.mrf.mxu0
        %v8085 = vadd.f32 0.0, %v8084
        %v8086 = vpop.f32.mrf.mxu0
        %v8087 = vpop.f32.mrf.mxu0
        %v8088 = vadd.f32 0.0, %v8087
        %v8089 = vpop.f32.mrf.mxu0
        %8090 = vmatprep.mubr.bf16.mxu0 %v7779
        %8091 = vmatmul.mubr.bf16.gmra.mxu0 %v7778
        %v8092 = vpop.f32.mrf.mxu0
        %v8093 = vadd.f32 0.0, %v8092
        %v8094 = vpop.f32.mrf.mxu0
        %v8095 = vpop.f32.mrf.mxu0
        %v8096 = vadd.f32 0.0, %v8095
        %v8097 = vpop.f32.mrf.mxu0
        %8098 = vmatprep.mubr.bf16.mxu0 %v7782
        %8099 = vmatmul.mubr.bf16.gmra.mxu0 %v7781
        %v8100 = vpop.f32.mrf.mxu0
        %v8101 = vadd.f32 0.0, %v8100
        %v8102 = vpop.f32.mrf.mxu0
        %v8103 = vpop.f32.mrf.mxu0
        %v8104 = vadd.f32 0.0, %v8103
        %v8105 = vpop.f32.mrf.mxu0
        %8106 = vmatprep.mubr.bf16.mxu0 %v7785
        %8107 = vmatmul.mubr.bf16.gmra.mxu0 %v7784
        %v8108 = vpop.f32.mrf.mxu0
        %v8109 = vadd.f32 0.0, %v8108
        %v8110 = vpop.f32.mrf.mxu0
        %v8111 = vpop.f32.mrf.mxu0
        %v8112 = vadd.f32 0.0, %v8111
        %v8113 = vpop.f32.mrf.mxu0
        %8114 = vmatprep.mubr.bf16.mxu0 %v7788
        %8115 = vmatmul.mubr.bf16.gmra.mxu0 %v7787
        %v8116 = vpop.f32.mrf.mxu0
        %v8117 = vadd.f32 0.0, %v8116
        %v8118 = vpop.f32.mrf.mxu0
        %v8119 = vpop.f32.mrf.mxu0
        %v8120 = vadd.f32 0.0, %v8119
        %v8121 = vpop.f32.mrf.mxu0
        %8122 = vmatprep.mubr.bf16.mxu0 %v7791
        %8123 = vmatmul.mubr.bf16.gmra.mxu0 %v7790
        %v8124 = vpop.f32.mrf.mxu0
        %v8125 = vadd.f32 0.0, %v8124
        %v8126 = vpop.f32.mrf.mxu0
        %v8127 = vpop.f32.mrf.mxu0
        %v8128 = vadd.f32 0.0, %v8127
        %v8129 = vpop.f32.mrf.mxu0
        %8130 = vmatprep.mubr.bf16.mxu0 %v7794
        %8131 = vmatmul.mubr.bf16.gmra.mxu0 %v7793
        %v8132 = vpop.f32.mrf.mxu0
        %v8133 = vadd.f32 0.0, %v8132
        %v8134 = vpop.f32.mrf.mxu0
        %v8135 = vpop.f32.mrf.mxu0
        %v8136 = vadd.f32 0.0, %v8135
        %v8137 = vpop.f32.mrf.mxu0
        %8138 = vmatprep.mubr.bf16.mxu0 %v7797
        %8139 = vmatmul.mubr.bf16.gmra.mxu0 %v7796
        %v8140 = vpop.f32.mrf.mxu0
        %v8141 = vadd.f32 0.0, %v8140
        %v8142 = vpop.f32.mrf.mxu0
        %v8143 = vpop.f32.mrf.mxu0
        %v8144 = vadd.f32 0.0, %v8143
        %v8145 = vpop.f32.mrf.mxu0
        %8146 = vmatprep.mubr.bf16.mxu0 %v7800
        %8147 = vmatmul.mubr.bf16.gmra.mxu0 %v7799
        %v8148 = vpop.f32.mrf.mxu0
        %v8149 = vadd.f32 0.0, %v8148
        %v8150 = vpop.f32.mrf.mxu0
        %v8151 = vpop.f32.mrf.mxu0
        %v8152 = vadd.f32 0.0, %v8151
        %v8153 = vpop.f32.mrf.mxu0
        %8154 = vdwg.mxu0
        %8155 = vmatprep.subr.bf16.mxu0 0
        %8156 = vmatpush1.bf16.msra.mxu0 %v7969
        %8157 = vmatprep.subr.bf16.mxu0 0
        %8158 = vmatpush1.bf16.msra.mxu0 %v7968
        %8159 = vmatprep.subr.bf16.mxu0 0
        %8160 = vmatpush1.bf16.msra.mxu0 %v7967
        %8161 = vmatprep.subr.bf16.mxu0 0
        %8162 = vmatpush1.bf16.msra.mxu0 %v7966
        %8163 = vmatprep.subr.bf16.mxu0 0
        %8164 = vmatpush1.bf16.msra.mxu0 %v7965
        %8165 = vmatprep.subr.bf16.mxu0 0
        %8166 = vmatpush1.bf16.msra.mxu0 %v7964
        %8167 = vmatprep.subr.bf16.mxu0 0
        %8168 = vmatpush1.bf16.msra.mxu0 %v7963
        %8169 = vmatprep.subr.bf16.mxu0 0
        %8170 = vmatpush1.bf16.msra.mxu0 %v7962
        %8171 = vmatprep.subr.bf16.mxu0 0
        %8172 = vmatpush2.bf16.msra.mxu0 0
        %8173 = vmatprep.subr.bf16.mxu0 0
        %8174 = vmatpush2.bf16.msra.mxu0 0
        %8175 = vmatprep.subr.bf16.mxu0 0
        %8176 = vmatpush2.bf16.msra.mxu0 0
        %8177 = vmatprep.subr.bf16.mxu0 0
        %8178 = vmatpush2.bf16.msra.mxu0 0
        %8179 = vmatprep.subr.bf16.mxu0 0
        %8180 = vmatpush2.bf16.msra.mxu0 0
        %8181 = vmatprep.subr.bf16.mxu0 0
        %8182 = vmatpush2.bf16.msra.mxu0 0
        %8183 = vmatprep.subr.bf16.mxu0 0
        %8184 = vmatpush2.bf16.msra.mxu0 0
        %8185 = vmatprep.subr.bf16.mxu0 0
        %8186 = vmatpush2.bf16.msra.mxu0 0
        %8187 = vmatprep.mubr.bf16.mxu0 0
        %8188 = vmatmul.mubr.bf16.gmra.mxu0 %v7756
        %v8189 = vpop.f32.mrf.mxu0
        %v8190 = vadd.f32 %v8029, %v8189
        %v8191 = vpop.f32.mrf.mxu0
        %v8192 = vpop.f32.mrf.mxu0
        %v8193 = vadd.f32 %v8032, %v8192
        %v8194 = vpop.f32.mrf.mxu0
        %8195 = vmatprep.mubr.bf16.mxu0 0
        %8196 = vmatmul.mubr.bf16.gmra.mxu0 %v7759
        %v8197 = vpop.f32.mrf.mxu0
        %v8198 = vadd.f32 %v8037, %v8197
        %v8199 = vpop.f32.mrf.mxu0
        %v8200 = vpop.f32.mrf.mxu0
        %v8201 = vadd.f32 %v8040, %v8200
        %v8202 = vpop.f32.mrf.mxu0
        %8203 = vmatprep.mubr.bf16.mxu0 0
        %8204 = vmatmul.mubr.bf16.gmra.mxu0 %v7762
        %v8205 = vpop.f32.mrf.mxu0
        %v8206 = vadd.f32 %v8045, %v8205
        %v8207 = vpop.f32.mrf.mxu0
        %v8208 = vpop.f32.mrf.mxu0
        %v8209 = vadd.f32 %v8048, %v8208
        %v8210 = vpop.f32.mrf.mxu0
        %8211 = vmatprep.mubr.bf16.mxu0 0
        %8212 = vmatmul.mubr.bf16.gmra.mxu0 %v7765
        %v8213 = vpop.f32.mrf.mxu0
        %v8214 = vadd.f32 %v8053, %v8213
        %v8215 = vpop.f32.mrf.mxu0
        %v8216 = vpop.f32.mrf.mxu0
        %v8217 = vadd.f32 %v8056, %v8216
        %v8218 = vpop.f32.mrf.mxu0
        %8219 = vmatprep.mubr.bf16.mxu0 0
        %8220 = vmatmul.mubr.bf16.gmra.mxu0 %v7768
        %v8221 = vpop.f32.mrf.mxu0
        %v8222 = vadd.f32 %v8061, %v8221
        %v8223 = vpop.f32.mrf.mxu0
        %v8224 = vpop.f32.mrf.mxu0
        %v8225 = vadd.f32 %v8064, %v8224
        %v8226 = vpop.f32.mrf.mxu0
        %8227 = vmatprep.mubr.bf16.mxu0 0
        %8228 = vmatmul.mubr.bf16.gmra.mxu0 %v7771
        %v8229 = vpop.f32.mrf.mxu0
        %v8230 = vadd.f32 %v8069, %v8229
        %v8231 = vpop.f32.mrf.mxu0
        %v8232 = vpop.f32.mrf.mxu0
        %v8233 = vadd.f32 %v8072, %v8232
        %v8234 = vpop.f32.mrf.mxu0
        %8235 = vmatprep.mubr.bf16.mxu0 0
        %8236 = vmatmul.mubr.bf16.gmra.mxu0 %v7774
        %v8237 = vpop.f32.mrf.mxu0
        %v8238 = vadd.f32 %v8077, %v8237
        %v8239 = vpop.f32.mrf.mxu0
        %v8240 = vpop.f32.mrf.mxu0
        %v8241 = vadd.f32 %v8080, %v8240
        %v8242 = vpop.f32.mrf.mxu0
        %8243 = vmatprep.mubr.bf16.mxu0 0
        %8244 = vmatmul.mubr.bf16.gmra.mxu0 %v7777
        %v8245 = vpop.f32.mrf.mxu0
        %v8246 = vadd.f32 %v8085, %v8245
        %v8247 = vpop.f32.mrf.mxu0
        %v8248 = vpop.f32.mrf.mxu0
        %v8249 = vadd.f32 %v8088, %v8248
        %v8250 = vpop.f32.mrf.mxu0
        %8251 = vmatprep.mubr.bf16.mxu0 0
        %8252 = vmatmul.mubr.bf16.gmra.mxu0 %v7780
        %v8253 = vpop.f32.mrf.mxu0
        %v8254 = vadd.f32 %v8093, %v8253
        %v8255 = vpop.f32.mrf.mxu0
        %v8256 = vpop.f32.mrf.mxu0
        %v8257 = vadd.f32 %v8096, %v8256
        %v8258 = vpop.f32.mrf.mxu0
        %8259 = vmatprep.mubr.bf16.mxu0 0
        %8260 = vmatmul.mubr.bf16.gmra.mxu0 %v7783
        %v8261 = vpop.f32.mrf.mxu0
        %v8262 = vadd.f32 %v8101, %v8261
        %v8263 = vpop.f32.mrf.mxu0
        %v8264 = vpop.f32.mrf.mxu0
        %v8265 = vadd.f32 %v8104, %v8264
        %v8266 = vpop.f32.mrf.mxu0
        %8267 = vmatprep.mubr.bf16.mxu0 0
        %8268 = vmatmul.mubr.bf16.gmra.mxu0 %v7786
        %v8269 = vpop.f32.mrf.mxu0
        %v8270 = vadd.f32 %v8109, %v8269
        %v8271 = vpop.f32.mrf.mxu0
        %v8272 = vpop.f32.mrf.mxu0
        %v8273 = vadd.f32 %v8112, %v8272
        %v8274 = vpop.f32.mrf.mxu0
        %8275 = vmatprep.mubr.bf16.mxu0 0
        %8276 = vmatmul.mubr.bf16.gmra.mxu0 %v7789
        %v8277 = vpop.f32.mrf.mxu0
        %v8278 = vadd.f32 %v8117, %v8277
        %v8279 = vpop.f32.mrf.mxu0
        %v8280 = vpop.f32.mrf.mxu0
        %v8281 = vadd.f32 %v8120, %v8280
        %v8282 = vpop.f32.mrf.mxu0
        %8283 = vmatprep.mubr.bf16.mxu0 0
        %8284 = vmatmul.mubr.bf16.gmra.mxu0 %v7792
        %v8285 = vpop.f32.mrf.mxu0
        %v8286 = vadd.f32 %v8125, %v8285
        %v8287 = vpop.f32.mrf.mxu0
        %v8288 = vpop.f32.mrf.mxu0
        %v8289 = vadd.f32 %v8128, %v8288
        %v8290 = vpop.f32.mrf.mxu0
        %8291 = vmatprep.mubr.bf16.mxu0 0
        %8292 = vmatmul.mubr.bf16.gmra.mxu0 %v7795
        %v8293 = vpop.f32.mrf.mxu0
        %v8294 = vadd.f32 %v8133, %v8293
        %v8295 = vpop.f32.mrf.mxu0
        %v8296 = vpop.f32.mrf.mxu0
        %v8297 = vadd.f32 %v8136, %v8296
        %v8298 = vpop.f32.mrf.mxu0
        %8299 = vmatprep.mubr.bf16.mxu0 0
        %8300 = vmatmul.mubr.bf16.gmra.mxu0 %v7798
        %v8301 = vpop.f32.mrf.mxu0
        %v8302 = vadd.f32 %v8141, %v8301
        %v8303 = vpop.f32.mrf.mxu0
        %v8304 = vpop.f32.mrf.mxu0
        %v8305 = vadd.f32 %v8144, %v8304
        %v8306 = vpop.f32.mrf.mxu0
        %8307 = vmatprep.mubr.bf16.mxu0 0
        %8308 = vmatmul.mubr.bf16.gmra.mxu0 %v7801
        %v8309 = vpop.f32.mrf.mxu0
        %v8310 = vadd.f32 %v8149, %v8309
        %v8311 = vpop.f32.mrf.mxu0
        %v8312 = vpop.f32.mrf.mxu0
        %v8313 = vadd.f32 %v8152, %v8312
        %v8314 = vpop.f32.mrf.mxu0
        %8315 = vdwg.mxu0
        %v8316 = vadd.f32 %v7356, %v8190
        %v8317 = vadd.f32 %v7359, %v8193
        %v8318 = vadd.f32 %v7364, %v8198
        %v8319 = vadd.f32 %v7367, %v8201
        %v8320 = vadd.f32 %v7372, %v8206
        %v8321 = vadd.f32 %v7375, %v8209
        %v8322 = vadd.f32 %v7380, %v8214
        %v8323 = vadd.f32 %v7383, %v8217
        %v8324 = vadd.f32 %v7388, %v8222
        %v8325 = vadd.f32 %v7391, %v8225
        %v8326 = vadd.f32 %v7396, %v8230
        %v8327 = vadd.f32 %v7399, %v8233
        %v8328 = vadd.f32 %v7404, %v8238
        %v8329 = vadd.f32 %v7407, %v8241
        %v8330 = vadd.f32 %v7412, %v8246
        %v8331 = vadd.f32 %v7415, %v8249
        %v8332 = vadd.f32 %v7420, %v8254
        %v8333 = vadd.f32 %v7423, %v8257
        %v8334 = vadd.f32 %v7428, %v8262
        %v8335 = vadd.f32 %v7431, %v8265
        %v8336 = vadd.f32 %v7436, %v8270
        %v8337 = vadd.f32 %v7439, %v8273
        %v8338 = vadd.f32 %v7444, %v8278
        %v8339 = vadd.f32 %v7447, %v8281
        %v8340 = vadd.f32 %v7452, %v8286
        %v8341 = vadd.f32 %v7455, %v8289
        %v8342 = vadd.f32 %v7460, %v8294
        %v8343 = vadd.f32 %v7463, %v8297
        %v8344 = vadd.f32 %v7468, %v8302
        %v8345 = vadd.f32 %v7471, %v8305
        %v8346 = vadd.f32 %v7476, %v8310
        %v8347 = vadd.f32 %v7479, %v8313
        %v8349 = vlaneseq
        %v8350 = vshrl.u32 %v8349, 7
        %v8351 = vsub.s32 0, %v8350
        %v8352 = vrot.slane %v5329, %v8351
        %v8354 = vmul.f32 %v8316, %v8352
        %v8355 = vmul.f32 %v8317, %v8352
        %v8356 = vmul.f32 %v8318, %v8352
        %v8357 = vmul.f32 %v8319, %v8352
        %v8358 = vmul.f32 %v8320, %v8352
        %v8359 = vmul.f32 %v8321, %v8352
        %v8360 = vmul.f32 %v8322, %v8352
        %v8361 = vmul.f32 %v8323, %v8352
        %v8362 = vmul.f32 %v8324, %v8352
        %v8363 = vmul.f32 %v8325, %v8352
        %v8364 = vmul.f32 %v8326, %v8352
        %v8365 = vmul.f32 %v8327, %v8352
        %v8366 = vmul.f32 %v8328, %v8352
        %v8367 = vmul.f32 %v8329, %v8352
        %v8368 = vmul.f32 %v8330, %v8352
        %v8369 = vmul.f32 %v8331, %v8352
        %v8370 = vmul.f32 %v8332, %v8352
        %v8371 = vmul.f32 %v8333, %v8352
        %v8372 = vmul.f32 %v8334, %v8352
        %v8373 = vmul.f32 %v8335, %v8352
        %v8374 = vmul.f32 %v8336, %v8352
        %v8375 = vmul.f32 %v8337, %v8352
        %v8376 = vmul.f32 %v8338, %v8352
        %v8377 = vmul.f32 %v8339, %v8352
        %v8378 = vmul.f32 %v8340, %v8352
        %v8379 = vmul.f32 %v8341, %v8352
        %v8380 = vmul.f32 %v8342, %v8352
        %v8381 = vmul.f32 %v8343, %v8352
        %v8382 = vmul.f32 %v8344, %v8352
        %v8383 = vmul.f32 %v8345, %v8352
        %v8384 = vmul.f32 %v8346, %v8352
        %v8385 = vmul.f32 %v8347, %v8352
        %v8387 = vlaneseq
        %v8388 = vshrl.u32 %v8387, 7
        %v8389 = vsub.s32 0, %v8388
        %v8390 = vrot.slane %v5330, %v8389
        %v8392 = vadd.f32 %v8354, %v8390
        %v8393 = vadd.f32 %v8355, %v8390
        %v8394 = vadd.f32 %v8356, %v8390
        %v8395 = vadd.f32 %v8357, %v8390
        %v8396 = vadd.f32 %v8358, %v8390
        %v8397 = vadd.f32 %v8359, %v8390
        %v8398 = vadd.f32 %v8360, %v8390
        %v8399 = vadd.f32 %v8361, %v8390
        %v8400 = vadd.f32 %v8362, %v8390
        %v8401 = vadd.f32 %v8363, %v8390
        %v8402 = vadd.f32 %v8364, %v8390
        %v8403 = vadd.f32 %v8365, %v8390
        %v8404 = vadd.f32 %v8366, %v8390
        %v8405 = vadd.f32 %v8367, %v8390
        %v8406 = vadd.f32 %v8368, %v8390
        %v8407 = vadd.f32 %v8369, %v8390
        %v8408 = vadd.f32 %v8370, %v8390
        %v8409 = vadd.f32 %v8371, %v8390
        %v8410 = vadd.f32 %v8372, %v8390
        %v8411 = vadd.f32 %v8373, %v8390
        %v8412 = vadd.f32 %v8374, %v8390
        %v8413 = vadd.f32 %v8375, %v8390
        %v8414 = vadd.f32 %v8376, %v8390
        %v8415 = vadd.f32 %v8377, %v8390
        %v8416 = vadd.f32 %v8378, %v8390
        %v8417 = vadd.f32 %v8379, %v8390
        %v8418 = vadd.f32 %v8380, %v8390
        %v8419 = vadd.f32 %v8381, %v8390
        %v8420 = vadd.f32 %v8382, %v8390
        %v8421 = vadd.f32 %v8383, %v8390
        %v8422 = vadd.f32 %v8384, %v8390
        %v8423 = vadd.f32 %v8385, %v8390
        %v8424 = vmax.f32 %v8392, 0.0
        %v8425 = vmax.f32 %v8393, 0.0
        %v8426 = vmax.f32 %v8394, 0.0
        %v8427 = vmax.f32 %v8395, 0.0
        %v8428 = vmax.f32 %v8396, 0.0
        %v8429 = vmax.f32 %v8397, 0.0
        %v8430 = vmax.f32 %v8398, 0.0
        %v8431 = vmax.f32 %v8399, 0.0
        %v8432 = vmax.f32 %v8400, 0.0
        %v8433 = vmax.f32 %v8401, 0.0
        %v8434 = vmax.f32 %v8402, 0.0
        %v8435 = vmax.f32 %v8403, 0.0
        %v8436 = vmax.f32 %v8404, 0.0
        %v8437 = vmax.f32 %v8405, 0.0
        %v8438 = vmax.f32 %v8406, 0.0
        %v8439 = vmax.f32 %v8407, 0.0
        %v8440 = vmax.f32 %v8408, 0.0
        %v8441 = vmax.f32 %v8409, 0.0
        %v8442 = vmax.f32 %v8410, 0.0
        %v8443 = vmax.f32 %v8411, 0.0
        %v8444 = vmax.f32 %v8412, 0.0
        %v8445 = vmax.f32 %v8413, 0.0
        %v8446 = vmax.f32 %v8414, 0.0
        %v8447 = vmax.f32 %v8415, 0.0
        %v8448 = vmax.f32 %v8416, 0.0
        %v8449 = vmax.f32 %v8417, 0.0
        %v8450 = vmax.f32 %v8418, 0.0
        %v8451 = vmax.f32 %v8419, 0.0
        %v8452 = vmax.f32 %v8420, 0.0
        %v8453 = vmax.f32 %v8421, 0.0
        %v8454 = vmax.f32 %v8422, 0.0
        %v8455 = vmax.f32 %v8423, 0.0
        %v8456 = vld [vmem:[%s347] sm:$0xf]
        %v8457 = vld [vmem:[%s347 + $0x4] sm:$0xf]
        %v8458 = vld [vmem:[%s347 + $0x8] sm:$0xf]
        %v8459 = vld [vmem:[%s347 + $0xc] sm:$0xf]
        %v8460 = vld [vmem:[%s347 + $0x10] sm:$0xf]
        %v8461 = vld [vmem:[%s347 + $0x14] sm:$0xf]
        %v8462 = vld [vmem:[%s347 + $0x18] sm:$0xf]
        %v8463 = vld [vmem:[%s347 + $0x1c] sm:$0xf]
        %v8464 = vld [vmem:[%s347 + $0x20] sm:$0xf]
        %v8465 = vld [vmem:[%s347 + $0x24] sm:$0xf]
        %v8466 = vld [vmem:[%s347 + $0x28] sm:$0xf]
        %v8467 = vld [vmem:[%s347 + $0x2c] sm:$0xf]
        %v8468 = vld [vmem:[%s347 + $0x30] sm:$0xf]
        %v8469 = vld [vmem:[%s347 + $0x34] sm:$0xf]
        %v8470 = vld [vmem:[%s347 + $0x38] sm:$0xf]
        %v8471 = vld [vmem:[%s347 + $0x3c] sm:$0xf]
        %v8472 = vld [vmem:[%s347 + $0x40] sm:$0xf]
        %v8473 = vld [vmem:[%s347 + $0x44] sm:$0xf]
        %v8474 = vld [vmem:[%s347 + $0x48] sm:$0xf]
        %v8475 = vld [vmem:[%s347 + $0x4c] sm:$0xf]
        %v8476 = vld [vmem:[%s347 + $0x50] sm:$0xf]
        %v8477 = vld [vmem:[%s347 + $0x54] sm:$0xf]
        %v8478 = vld [vmem:[%s347 + $0x58] sm:$0xf]
        %v8479 = vld [vmem:[%s347 + $0x5c] sm:$0xf]
        %v8480 = vld [vmem:[%s347 + $0x60] sm:$0xf]
        %v8481 = vld [vmem:[%s347 + $0x64] sm:$0xf]
        %v8482 = vld [vmem:[%s347 + $0x68] sm:$0xf]
        %v8483 = vld [vmem:[%s347 + $0x6c] sm:$0xf]
        %v8484 = vld [vmem:[%s347 + $0x70] sm:$0xf]
        %v8485 = vld [vmem:[%s347 + $0x74] sm:$0xf]
        %v8486 = vld [vmem:[%s347 + $0x78] sm:$0xf]
        %v8487 = vld [vmem:[%s347 + $0x7c] sm:$0xf]
        %v8488 = vunpack.c.l.bf16 %v8456
        %v8489 = vunpack.c.l.bf16 %v8457
        %v8490 = vunpack.c.l.bf16 %v8458
        %v8491 = vunpack.c.l.bf16 %v8459
        %v8492 = vunpack.c.l.bf16 %v8460
        %v8493 = vunpack.c.l.bf16 %v8461
        %v8494 = vunpack.c.l.bf16 %v8462
        %v8495 = vunpack.c.l.bf16 %v8463
        %v8496 = vunpack.c.l.bf16 %v8464
        %v8497 = vunpack.c.l.bf16 %v8465
        %v8498 = vunpack.c.l.bf16 %v8466
        %v8499 = vunpack.c.l.bf16 %v8467
        %v8500 = vunpack.c.l.bf16 %v8468
        %v8501 = vunpack.c.l.bf16 %v8469
        %v8502 = vunpack.c.l.bf16 %v8470
        %v8503 = vunpack.c.l.bf16 %v8471
        %v8504 = vunpack.c.l.bf16 %v8472
        %v8505 = vunpack.c.l.bf16 %v8473
        %v8506 = vunpack.c.l.bf16 %v8474
        %v8507 = vunpack.c.l.bf16 %v8475
        %v8508 = vunpack.c.l.bf16 %v8476
        %v8509 = vunpack.c.l.bf16 %v8477
        %v8510 = vunpack.c.l.bf16 %v8478
        %v8511 = vunpack.c.l.bf16 %v8479
        %v8512 = vunpack.c.l.bf16 %v8480
        %v8513 = vunpack.c.l.bf16 %v8481
        %v8514 = vunpack.c.l.bf16 %v8482
        %v8515 = vunpack.c.l.bf16 %v8483
        %v8516 = vunpack.c.l.bf16 %v8484
        %v8517 = vunpack.c.l.bf16 %v8485
        %v8518 = vunpack.c.l.bf16 %v8486
        %v8519 = vunpack.c.l.bf16 %v8487
        %v8520 = vadd.f32 %v8488, %v8424
        %v8521 = vadd.f32 %v8489, %v8425
        %v8522 = vadd.f32 %v8490, %v8426
        %v8523 = vadd.f32 %v8491, %v8427
        %v8524 = vadd.f32 %v8492, %v8428
        %v8525 = vadd.f32 %v8493, %v8429
        %v8526 = vadd.f32 %v8494, %v8430
        %v8527 = vadd.f32 %v8495, %v8431
        %v8528 = vadd.f32 %v8496, %v8432
        %v8529 = vadd.f32 %v8497, %v8433
        %v8530 = vadd.f32 %v8498, %v8434
        %v8531 = vadd.f32 %v8499, %v8435
        %v8532 = vadd.f32 %v8500, %v8436
        %v8533 = vadd.f32 %v8501, %v8437
        %v8534 = vadd.f32 %v8502, %v8438
        %v8535 = vadd.f32 %v8503, %v8439
        %v8536 = vadd.f32 %v8504, %v8440
        %v8537 = vadd.f32 %v8505, %v8441
        %v8538 = vadd.f32 %v8506, %v8442
        %v8539 = vadd.f32 %v8507, %v8443
        %v8540 = vadd.f32 %v8508, %v8444
        %v8541 = vadd.f32 %v8509, %v8445
        %v8542 = vadd.f32 %v8510, %v8446
        %v8543 = vadd.f32 %v8511, %v8447
        %v8544 = vadd.f32 %v8512, %v8448
        %v8545 = vadd.f32 %v8513, %v8449
        %v8546 = vadd.f32 %v8514, %v8450
        %v8547 = vadd.f32 %v8515, %v8451
        %v8548 = vadd.f32 %v8516, %v8452
        %v8549 = vadd.f32 %v8517, %v8453
        %v8550 = vadd.f32 %v8518, %v8454
        %v8551 = vadd.f32 %v8519, %v8455
        %v8552 = vpack.c.bf16 %v8521, %v8520
        %v8553 = vpack.c.bf16 %v8523, %v8522
        %v8554 = vpack.c.bf16 %v8525, %v8524
        %v8555 = vpack.c.bf16 %v8527, %v8526
        %v8556 = vpack.c.bf16 %v8529, %v8528
        %v8557 = vpack.c.bf16 %v8531, %v8530
        %v8558 = vpack.c.bf16 %v8533, %v8532
        %v8559 = vpack.c.bf16 %v8535, %v8534
        %v8560 = vpack.c.bf16 %v8537, %v8536
        %v8561 = vpack.c.bf16 %v8539, %v8538
        %v8562 = vpack.c.bf16 %v8541, %v8540
        %v8563 = vpack.c.bf16 %v8543, %v8542
        %v8564 = vpack.c.bf16 %v8545, %v8544
        %v8565 = vpack.c.bf16 %v8547, %v8546
        %v8566 = vpack.c.bf16 %v8549, %v8548
        %v8567 = vpack.c.bf16 %v8551, %v8550
        %v8584 = vunpack.c.l.b16 %v8552
        %v8585 = vunpack.c.h.b16 %v8552
        %v8586 = vunpack.c.l.b16 %v8553
        %v8587 = vunpack.c.h.b16 %v8553
        %v8588 = vunpack.c.l.b16 %v8554
        %v8589 = vunpack.c.h.b16 %v8554
        %v8590 = vunpack.c.l.b16 %v8555
        %v8591 = vunpack.c.h.b16 %v8555
        %v8592 = vunpack.c.l.b16 %v8556
        %v8593 = vunpack.c.h.b16 %v8556
        %v8594 = vunpack.c.l.b16 %v8557
        %v8595 = vunpack.c.h.b16 %v8557
        %v8596 = vunpack.c.l.b16 %v8558
        %v8597 = vunpack.c.h.b16 %v8558
        %v8598 = vunpack.c.l.b16 %v8559
        %v8599 = vunpack.c.h.b16 %v8559
        %v8600 = vunpack.c.l.b16 %v8560
        %v8601 = vunpack.c.h.b16 %v8560
        %v8602 = vunpack.c.l.b16 %v8561
        %v8603 = vunpack.c.h.b16 %v8561
        %v8604 = vunpack.c.l.b16 %v8562
        %v8605 = vunpack.c.h.b16 %v8562
        %v8606 = vunpack.c.l.b16 %v8563
        %v8607 = vunpack.c.h.b16 %v8563
        %v8608 = vunpack.c.l.b16 %v8564
        %v8609 = vunpack.c.h.b16 %v8564
        %v8610 = vunpack.c.l.b16 %v8565
        %v8611 = vunpack.c.h.b16 %v8565
        %v8612 = vunpack.c.l.b16 %v8566
        %v8613 = vunpack.c.h.b16 %v8566
        %v8614 = vunpack.c.l.b16 %v8567
        %v8615 = vunpack.c.h.b16 %v8567
        %v8616 = vpack.c.b16 %v8584, %v8584
        %v8617 = vpack.c.b16 %v8585, %v8585
        %v8618 = vpack.c.b16 %v8586, %v8586
        %v8619 = vpack.c.b16 %v8587, %v8587
        %v8620 = vpack.c.b16 %v8588, %v8588
        %v8621 = vpack.c.b16 %v8589, %v8589
        %v8622 = vpack.c.b16 %v8590, %v8590
        %v8623 = vpack.c.b16 %v8591, %v8591
        %v8624 = vpack.c.b16 %v8592, %v8592
        %v8625 = vpack.c.b16 %v8593, %v8593
        %v8626 = vpack.c.b16 %v8594, %v8594
        %v8627 = vpack.c.b16 %v8595, %v8595
        %v8628 = vpack.c.b16 %v8596, %v8596
        %v8629 = vpack.c.b16 %v8597, %v8597
        %v8630 = vpack.c.b16 %v8598, %v8598
        %v8631 = vpack.c.b16 %v8599, %v8599
        %v8632 = vpack.c.b16 %v8600, %v8600
        %v8633 = vpack.c.b16 %v8601, %v8601
        %v8634 = vpack.c.b16 %v8602, %v8602
        %v8635 = vpack.c.b16 %v8603, %v8603
        %v8636 = vpack.c.b16 %v8604, %v8604
        %v8637 = vpack.c.b16 %v8605, %v8605
        %v8638 = vpack.c.b16 %v8606, %v8606
        %v8639 = vpack.c.b16 %v8607, %v8607
        %v8640 = vpack.c.b16 %v8608, %v8608
        %v8641 = vpack.c.b16 %v8609, %v8609
        %v8642 = vpack.c.b16 %v8610, %v8610
        %v8643 = vpack.c.b16 %v8611, %v8611
        %v8644 = vpack.c.b16 %v8612, %v8612
        %v8645 = vpack.c.b16 %v8613, %v8613
        %v8646 = vpack.c.b16 %v8614, %v8614
        %v8647 = vpack.c.b16 %v8615, %v8615
        %8680 = vst [vmem:[%s347] sm:$0xf] %v8616
        %8681 = vst [vmem:[%s347 + $0x4] sm:$0xf] %v8617
        %8682 = vst [vmem:[%s347 + $0x8] sm:$0xf] %v8618
        %8683 = vst [vmem:[%s347 + $0xc] sm:$0xf] %v8619
        %8684 = vst [vmem:[%s347 + $0x10] sm:$0xf] %v8620
        %8685 = vst [vmem:[%s347 + $0x14] sm:$0xf] %v8621
        %8686 = vst [vmem:[%s347 + $0x18] sm:$0xf] %v8622
        %8687 = vst [vmem:[%s347 + $0x1c] sm:$0xf] %v8623
        %8688 = vst [vmem:[%s347 + $0x20] sm:$0xf] %v8624
        %8689 = vst [vmem:[%s347 + $0x24] sm:$0xf] %v8625
        %8690 = vst [vmem:[%s347 + $0x28] sm:$0xf] %v8626
        %8691 = vst [vmem:[%s347 + $0x2c] sm:$0xf] %v8627
        %8692 = vst [vmem:[%s347 + $0x30] sm:$0xf] %v8628
        %8693 = vst [vmem:[%s347 + $0x34] sm:$0xf] %v8629
        %8694 = vst [vmem:[%s347 + $0x38] sm:$0xf] %v8630
        %8695 = vst [vmem:[%s347 + $0x3c] sm:$0xf] %v8631
        %8696 = vst [vmem:[%s347 + $0x40] sm:$0xf] %v8632
        %8697 = vst [vmem:[%s347 + $0x44] sm:$0xf] %v8633
        %8698 = vst [vmem:[%s347 + $0x48] sm:$0xf] %v8634
        %8699 = vst [vmem:[%s347 + $0x4c] sm:$0xf] %v8635
        %8700 = vst [vmem:[%s347 + $0x50] sm:$0xf] %v8636
        %8701 = vst [vmem:[%s347 + $0x54] sm:$0xf] %v8637
        %8702 = vst [vmem:[%s347 + $0x58] sm:$0xf] %v8638
        %8703 = vst [vmem:[%s347 + $0x5c] sm:$0xf] %v8639
        %8704 = vst [vmem:[%s347 + $0x60] sm:$0xf] %v8640
        %8705 = vst [vmem:[%s347 + $0x64] sm:$0xf] %v8641
        %8706 = vst [vmem:[%s347 + $0x68] sm:$0xf] %v8642
        %8707 = vst [vmem:[%s347 + $0x6c] sm:$0xf] %v8643
        %8708 = vst [vmem:[%s347 + $0x70] sm:$0xf] %v8644
        %8709 = vst [vmem:[%s347 + $0x74] sm:$0xf] %v8645
        %8710 = vst [vmem:[%s347 + $0x78] sm:$0xf] %v8646
        %8711 = vst [vmem:[%s347 + $0x7c] sm:$0xf] %v8647
        %p8712 = scmp.lt.s32.totalorder %s21, 1
        %s8713 = scalar_select %p8712, %s21, 1
        %s8714 = smul.addr %s8713, 32
        %s8715 = smul.addr %s8714, 4
        %s8716 = scalar_lea.vmem %s9, %s8715
        // Predicated region
        $region61: #{refinement_stage_block.1} parent=55 // pred_check
          %p8717 = pneg %p233
        $region62: #{refinement_stage_block.1} parent=55 // pred_check_branch
          %8719 = sbr.rel (%p8717) target = $region64
        $region63: #{refinement_stage_block.1} parent=55 // pred_region
          _
        $region64: #{refinement_stage_block.1} parent=55 // pred_fallthru
          _
      $region56: #{refinement_stage_block.1} parent=5 // pred_fallthru
        _
      %p8720 = scmp.le.s32.totalorder 2, %s16
      // Predicated region
      $region65: #{refinement_stage_block.1} parent=5 // pred_check
        %p8721 = pneg %p8720
      $region66: #{refinement_stage_block.1} parent=5 // pred_check_branch
        %8723 = sbr.rel (%p8721) target = $region68
      $region67: #{refinement_stage_block.1} parent=5 // pred_region
        %s8724 = ssub.s32 %s16, 2
        // Predicated region
        $region69: #{refinement_stage_block.1} parent=67 // pred_check
          %p8725 = pneg %p239
        $region70: #{refinement_stage_block.1} parent=67 // pred_check_branch
          %8727 = sbr.rel (%p8725) target = $region72
        $region71: #{refinement_stage_block.1} parent=67 // pred_region
          %p8728 = scmp.lt.s32.totalorder %s22, 1
          %s8729 = scalar_select %p8728, %s22, 1
          %s8730 = smul.addr %s8729, 32
          %s8731 = smul.addr %s8730, 4
          %s8732 = scalar_lea.vmem %s9, %s8731
        $region72: #{refinement_stage_block.1} parent=67 // pred_fallthru
          _
      $region68: #{refinement_stage_block.1} parent=5 // pred_fallthru
        _
    $region6: #{refinement_stage_block.1} parent=1 // loop_footer
      %s20 = sadd.s32 1, %s16
    $region7: #{refinement_stage_block.1} parent=1 // loop_footer_branch
      %15 = sbr.rel target = $region3
    $region8: #{refinement_stage_block.1} parent=1 // loop_exit
      _
    %8733 = vsyncpa [#allocation5], 1
    %s8734 = scalar_lea.sflag [#allocation5], 1
    %8735 = vsyncpa %s8734, 1

</llo_original>
